<compile_context>
chip_gen: v7x
topology: tpu7x:2x2x1
jax: 0.10.0
libtpu: 0.0.40
codegen_flags: <defaults>
</compile_context>

<pallas_src>
import math
import functools

import jax
import jax.numpy as jnp
from jax.experimental import pallas as pl
from jax.experimental.pallas import tpu as pltpu


_COMPILER_PARAMS = pltpu.CompilerParams(dimension_semantics=("parallel",))

# Order in which stacked weights are passed to the fused kernel.
_WEIGHT_NAMES = (
    "e_wqkv", "e_bqkv", "e_wo", "e_bo", "e_w1", "e_b1", "e_w2", "e_b2",
    "e_ln", "enc_norm",
    "d_wqkv", "d_bqkv", "d_wo_s", "d_bo_s",
    "d_wq_c", "d_bq_c", "d_wkv_c", "d_bkv_c", "d_wo_c", "d_bo_c",
    "d_w1", "d_b1", "d_w2", "d_b2", "d_ln", "dec_norm",
    "out_w", "out_b",
)


# --------------------------- in-kernel helpers ------------------------------

def _layer_norm(x, g, b, eps=1e-5):
    """LayerNorm over the last dim in f32.  g/b are (1, D) and broadcast."""
    mean = jnp.mean(x, axis=-1, keepdims=True)
    var = jnp.mean(jnp.square(x - mean), axis=-1, keepdims=True)
    return (x - mean) * jax.lax.rsqrt(var + eps) * g + b


def _sdpa(q, k, v, nhead, scale, add_mask):
    """Per-head softmax(q k^T) v on full-width (N, D) f32 q/k/v.

    Heads are static lane slices; outputs are concatenated back to (Tq, D)."""
    Tq, D = q.shape
    Dh = D // nhead
    q = q * scale                                    # fold 1/sqrt(Dh) once
    heads = []
    for h in range(nhead):
        sl = slice(h * Dh, (h + 1) * Dh)
        qh = q[:, sl].astype(jnp.bfloat16)
        kh = k[:, sl].astype(jnp.bfloat16)
        vh = v[:, sl].astype(jnp.bfloat16)
        s = jax.lax.dot_general(qh, kh, (((1,), (1,)), ((), ())),
                                preferred_element_type=jnp.float32)   # (Tq, S)
        if add_mask is not None:
            s = s + add_mask
        s = s - jnp.max(s, axis=-1, keepdims=True)
        p = jnp.exp(s)
        p = p * pl.reciprocal(jnp.sum(p, axis=-1, keepdims=True), approx=True)
        heads.append(jnp.dot(p.astype(jnp.bfloat16), vh,
                             preferred_element_type=jnp.float32))     # (Tq, Dh)
    return jnp.concatenate(heads, axis=-1)                            # (Tq, D)


def _full_spec(arr):
    """Whole-array BlockSpec (weights shared by every grid step)."""
    nd = arr.ndim
    return pl.BlockSpec(arr.shape, lambda b, _nd=nd: (0,) * _nd)


# ----------------------------- fused kernel ---------------------------------

def _fused_transformer_kernel(*refs, nhead, use_src_kpm, use_tgt_kpm):
    it = iter(refs)
    src_ref = next(it)           # (1, S, D)
    tgt_ref = next(it)           # (1, T, D)
    e_wqkv = next(it); e_bqkv = next(it); e_wo = next(it); e_bo = next(it)
    e_w1 = next(it); e_b1 = next(it); e_w2 = next(it); e_b2 = next(it)
    e_ln = next(it); enc_norm = next(it)
    d_wqkv = next(it); d_bqkv = next(it); d_wo_s = next(it); d_bo_s = next(it)
    d_wq_c = next(it); d_bq_c = next(it); d_wkv_c = next(it); d_bkv_c = next(it)
    d_wo_c = next(it); d_bo_c = next(it)
    d_w1 = next(it); d_b1 = next(it); d_w2 = next(it); d_b2 = next(it)
    d_ln = next(it); dec_norm = next(it)
    out_w = next(it); out_b = next(it)
    src_kpm_ref = next(it) if use_src_kpm else None
    tgt_kpm_ref = next(it) if use_tgt_kpm else None
    o_ref = next(it)             # (1, T, Vp)

    S, D = src_ref.shape[1], src_ref.shape[2]
    T = tgt_ref.shape[1]
    num_enc = e_wqkv.shape[0]
    num_dec = d_wqkv.shape[0]
    Dh = D // nhead
    scale = 1.0 / math.sqrt(Dh)

    # ---- masks (built once) ----
    src_mask = src_kpm_ref[0] if use_src_kpm else None     # (1, S) additive
    row = jax.lax.broadcasted_iota(jnp.int32, (T, T), 0)
    col = jax.lax.broadcasted_iota(jnp.int32, (T, T), 1)
    tgt_mask = jnp.where(col > row, jnp.float32(-1e9), jnp.float32(0.0))
    if use_tgt_kpm:
        tgt_mask = tgt_mask + tgt_kpm_ref[0]                # (1, T) -> (T, T)

    # ---- encoder stack (post-norm) + final encoder LayerNorm ----
    x = src_ref[0].astype(jnp.float32)                      # (S, D) residual stream
    for l in range(num_enc):
        ln = e_ln[l]                                        # (4, D)
        xb = x.astype(jnp.bfloat16)
        qkv = jnp.dot(xb, e_wqkv[l],
                      preferred_element_type=jnp.float32) + e_bqkv[l]   # (S, 3D)
        att = _sdpa(qkv[:, :D], qkv[:, D:2 * D], qkv[:, 2 * D:],
                    nhead, scale, src_mask)
        att = jnp.dot(att.astype(jnp.bfloat16), e_wo[l],
                      preferred_element_type=jnp.float32) + e_bo[l]
        x = _layer_norm(x + att, ln[0:1], ln[1:2])

        xb = x.astype(jnp.bfloat16)
        h = jnp.maximum(jnp.dot(xb, e_w1[l],
                                preferred_element_type=jnp.float32) + e_b1[l], 0.0)
        y = jnp.dot(h.astype(jnp.bfloat16), e_w2[l],
                    preferred_element_type=jnp.float32) + e_b2[l]
        x = _layer_norm(x + y, ln[2:3], ln[3:4])

    en = enc_norm[...]                                      # (2, D)
    mem = _layer_norm(x, en[0:1], en[1:2])                  # (S, D)
    mem_b = mem.astype(jnp.bfloat16)                        # hoisted cast

    # ---- decoder stack (post-norm); memory_key_padding_mask is None ----
    y = tgt_ref[0].astype(jnp.float32)                      # (T, D)
    for l in range(num_dec):
        ln = d_ln[l]                                        # (6, D)

        # causal self-attention
        yb = y.astype(jnp.bfloat16)
        qkv = jnp.dot(yb, d_wqkv[l],
                      preferred_element_type=jnp.float32) + d_bqkv[l]
        att = _sdpa(qkv[:, :D], qkv[:, D:2 * D], qkv[:, 2 * D:],
                    nhead, scale, tgt_mask)
        att = jnp.dot(att.astype(jnp.bfloat16), d_wo_s[l],
                      preferred_element_type=jnp.float32) + d_bo_s[l]
        y = _layer_norm(y + att, ln[0:1], ln[1:2])

        # cross-attention over encoder memory
        yb = y.astype(jnp.bfloat16)
        qc = jnp.dot(yb, d_wq_c[l],
                     preferred_element_type=jnp.float32) + d_bq_c[l]     # (T, D)
        kv = jnp.dot(mem_b, d_wkv_c[l],
                     preferred_element_type=jnp.float32) + d_bkv_c[l]    # (S, 2D)
        att = _sdpa(qc, kv[:, :D], kv[:, D:], nhead, scale, None)
        att = jnp.dot(att.astype(jnp.bfloat16), d_wo_c[l],
                      preferred_element_type=jnp.float32) + d_bo_c[l]
        y = _layer_norm(y + att, ln[2:3], ln[3:4])

        # feed-forward
        yb = y.astype(jnp.bfloat16)
        h = jnp.maximum(jnp.dot(yb, d_w1[l],
                                preferred_element_type=jnp.float32) + d_b1[l], 0.0)
        z = jnp.dot(h.astype(jnp.bfloat16), d_w2[l],
                    preferred_element_type=jnp.float32) + d_b2[l]
        y = _layer_norm(y + z, ln[4:5], ln[5:6])

    # ---- final decoder LayerNorm + lane-dense (padded) vocab projection ----
    dn = dec_norm[...]
    yn = _layer_norm(y, dn[0:1], dn[1:2])
    o_ref[0] = (jnp.dot(yn.astype(jnp.bfloat16), out_w[...],
                        preferred_element_type=jnp.float32)
                + out_b[...]).astype(o_ref.dtype)


# ----------------------------- Model forward --------------------------------

def transformer_model_forward(params, src, tgt, *, nhead, vocab_size,
                              src_key_padding_mask=None, tgt_key_padding_mask=None):
    """src, tgt: int32 token ids (B, S) / (B, T).  Returns (B, T, vocab) logits."""
    emb = params["embedding"]
    d_model = emb.shape[1]
    scale = math.sqrt(d_model)
    pe = params["pe"]

    B, S = src.shape
    T = tgt.shape[1]
    Vp = params["out_w"].shape[1]

    # embedding + positional encoding (single fused XLA gather/add; dropout = id)
    src_e = jnp.take(emb, src, axis=0) * scale + pe[None, :S, :]
    tgt_e = jnp.take(emb, tgt, axis=0) * scale + pe[None, :T, :]

    use_src_kpm = src_key_padding_mask is not None
    use_tgt_kpm = tgt_key_padding_mask is not None

    args = [src_e, tgt_e] + [params[n] for n in _WEIGHT_NAMES]
    in_specs = [
        pl.BlockSpec((1, S, d_model), lambda b: (b, 0, 0)),
        pl.BlockSpec((1, T, d_model), lambda b: (b, 0, 0)),
    ] + [_full_spec(params[n]) for n in _WEIGHT_NAMES]

    if use_src_kpm:  # additive float masks built ONCE here, not per layer
        kpm = jnp.where(src_key_padding_mask, jnp.float32(-1e9),
                        jnp.float32(0.0)).reshape(B, 1, S)
        args.append(kpm)
        in_specs.append(pl.BlockSpec((1, 1, S), lambda b: (b, 0, 0)))
    if use_tgt_kpm:
        kpm = jnp.where(tgt_key_padding_mask, jnp.float32(-1e9),
                        jnp.float32(0.0)).reshape(B, 1, T)
        args.append(kpm)
        in_specs.append(pl.BlockSpec((1, 1, T), lambda b: (b, 0, 0)))

    logits = pl.pallas_call(
        functools.partial(_fused_transformer_kernel, nhead=nhead,
                          use_src_kpm=use_src_kpm, use_tgt_kpm=use_tgt_kpm),
        out_shape=jax.ShapeDtypeStruct((B, T, Vp), jnp.float32),
        grid=(B,),
        in_specs=in_specs,
        out_specs=pl.BlockSpec((1, T, Vp), lambda b: (b, 0, 0)),
        compiler_params=_COMPILER_PARAMS,
    )(*args)

    return logits[:, :, :vocab_size]


# ----------------------------- Param init ----------------------------------

def init_params(key, vocab_size, d_model, nhead, num_enc, num_dec, d_ff, max_len):
    keys = iter(jax.random.split(key, 256))

    def nrm(shape, s=0.05, dtype=jnp.float32):
        return (s * jax.random.normal(next(keys), shape, jnp.float32)).astype(dtype)

    def stk(fn, n):
        return jnp.stack([fn() for _ in range(n)], axis=0)

    D, F = d_model, d_ff
    ln_pair = jnp.stack([jnp.ones((D,), jnp.float32),
                         jnp.zeros((D,), jnp.float32)], axis=0)          # (2, D)

    params = {
        # encoder (stacked over layers)
        "e_wqkv": stk(lambda: nrm((D, 3 * D), dtype=jnp.bfloat16), num_enc),
        "e_bqkv": stk(lambda: nrm((1, 3 * D)), num_enc),
        "e_wo":   stk(lambda: nrm((D, D), dtype=jnp.bfloat16), num_enc),
        "e_bo":   stk(lambda: nrm((1, D)), num_enc),
        "e_w1":   stk(lambda: nrm((D, F), dtype=jnp.bfloat16), num_enc),
        "e_b1":   stk(lambda: nrm((1, F)), num_enc),
        "e_w2":   stk(lambda: nrm((F, D), dtype=jnp.bfloat16), num_enc),
        "e_b2":   stk(lambda: nrm((1, D)), num_enc),
        "e_ln":   jnp.tile(jnp.concatenate([ln_pair, ln_pair], 0)[None],
                           (num_enc, 1, 1)),                             # (L,4,D)
        "enc_norm": ln_pair,
        # decoder (stacked over layers)
        "d_wqkv":  stk(lambda: nrm((D, 3 * D), dtype=jnp.bfloat16), num_dec),
        "d_bqkv":  stk(lambda: nrm((1, 3 * D)), num_dec),
        "d_wo_s":  stk(lambda: nrm((D, D), dtype=jnp.bfloat16), num_dec),
        "d_bo_s":  stk(lambda: nrm((1, D)), num_dec),
        "d_wq_c":  stk(lambda: nrm((D, D), dtype=jnp.bfloat16), num_dec),
        "d_bq_c":  stk(lambda: nrm((1, D)), num_dec),
        "d_wkv_c": stk(lambda: nrm((D, 2 * D), dtype=jnp.bfloat16), num_dec),
        "d_bkv_c": stk(lambda: nrm((1, 2 * D)), num_dec),
        "d_wo_c":  stk(lambda: nrm((D, D), dtype=jnp.bfloat16), num_dec),
        "d_bo_c":  stk(lambda: nrm((1, D)), num_dec),
        "d_w1":    stk(lambda: nrm((D, F), dtype=jnp.bfloat16), num_dec),
        "d_b1":    stk(lambda: nrm((1, F)), num_dec),
        "d_w2":    stk(lambda: nrm((F, D), dtype=jnp.bfloat16), num_dec),
        "d_b2":    stk(lambda: nrm((1, D)), num_dec),
        "d_ln":    jnp.tile(jnp.concatenate([ln_pair, ln_pair, ln_pair], 0)[None],
                            (num_dec, 1, 1)),                            # (L,6,D)
        "dec_norm": ln_pair,
    }

    # sinusoidal positional-encoding table (matches PositionalEncoding buffer)
    position = jnp.arange(max_len, dtype=jnp.float32)[:, None]
    div_term = jnp.exp(jnp.arange(0, D, 2, dtype=jnp.float32)
                       * -(math.log(10000.0) / D))
    pe = jnp.zeros((max_len, D), jnp.float32)
    pe = pe.at[:, 0::2].set(jnp.sin(position * div_term))
    pe = pe.at[:, 1::2].set(jnp.cos(position * div_term))

    # vocab projection padded to a lane-dense multiple of 128 (sliced back in fwd)
    v_pad = ((vocab_size + 127) // 128) * 128
    out_w = jnp.zeros((D, v_pad), jnp.float32)
    out_w = out_w.at[:, :vocab_size].set(nrm((D, vocab_size)))
    out_b = jnp.zeros((1, v_pad), jnp.float32)
    out_b = out_b.at[:, :vocab_size].set(nrm((1, vocab_size)))

    params["embedding"] = nrm((vocab_size, D), s=1.0)
    params["pe"] = pe
    params["out_w"] = out_w.astype(jnp.bfloat16)
    params["out_b"] = out_b
    return params


# ------------------------------- Main ---------------------------------------

if __name__ == "__main__":
    VOCAB = 50
    D_MODEL = 32
    NHEAD = 4
    N_ENC = 2
    N_DEC = 2
    D_FF = 64
    MAX_LEN = 64
    B, S_LEN, T_LEN = 2, 8, 8

    root = jax.random.PRNGKey(0)
    k_param, k_src, k_tgt = jax.random.split(root, 3)

    params = init_params(k_param, VOCAB, D_MODEL, NHEAD, N_ENC, N_DEC, D_FF, MAX_LEN)
    src = jax.random.randint(k_src, (B, S_LEN), 0, VOCAB, dtype=jnp.int32)
    tgt = jax.random.randint(k_tgt, (B, T_LEN), 0, VOCAB, dtype=jnp.int32)

    fwd = jax.jit(functools.partial(transformer_model_forward,
                                    nhead=NHEAD, vocab_size=VOCAB))
    logits = jax.block_until_ready(fwd(params, src, tgt))

    assert logits.shape == (B, T_LEN, VOCAB), logits.shape
    assert bool(jnp.all(jnp.isfinite(logits)))
    print("KERNEL_OK")
</pallas_src>

<mosaic_0001>
module attributes {stable_mosaic.version = 11 : i64} {
  func.func @_fused_transformer_kernel(%arg0: i32, %arg1: memref<1x8x32xf32, #tpu.memory_space<vmem>>, %arg2: memref<1x8x32xf32, #tpu.memory_space<vmem>>, %arg3: memref<2x32x96xbf16, #tpu.memory_space<vmem>>, %arg4: memref<2x1x96xf32, #tpu.memory_space<vmem>>, %arg5: memref<2x32x32xbf16, #tpu.memory_space<vmem>>, %arg6: memref<2x1x32xf32, #tpu.memory_space<vmem>>, %arg7: memref<2x32x64xbf16, #tpu.memory_space<vmem>>, %arg8: memref<2x1x64xf32, #tpu.memory_space<vmem>>, %arg9: memref<2x64x32xbf16, #tpu.memory_space<vmem>>, %arg10: memref<2x1x32xf32, #tpu.memory_space<vmem>>, %arg11: memref<2x4x32xf32, #tpu.memory_space<vmem>>, %arg12: memref<2x32xf32, #tpu.memory_space<vmem>>, %arg13: memref<2x32x96xbf16, #tpu.memory_space<vmem>>, %arg14: memref<2x1x96xf32, #tpu.memory_space<vmem>>, %arg15: memref<2x32x32xbf16, #tpu.memory_space<vmem>>, %arg16: memref<2x1x32xf32, #tpu.memory_space<vmem>>, %arg17: memref<2x32x32xbf16, #tpu.memory_space<vmem>>, %arg18: memref<2x1x32xf32, #tpu.memory_space<vmem>>, %arg19: memref<2x32x64xbf16, #tpu.memory_space<vmem>>, %arg20: memref<2x1x64xf32, #tpu.memory_space<vmem>>, %arg21: memref<2x32x32xbf16, #tpu.memory_space<vmem>>, %arg22: memref<2x1x32xf32, #tpu.memory_space<vmem>>, %arg23: memref<2x32x64xbf16, #tpu.memory_space<vmem>>, %arg24: memref<2x1x64xf32, #tpu.memory_space<vmem>>, %arg25: memref<2x64x32xbf16, #tpu.memory_space<vmem>>, %arg26: memref<2x1x32xf32, #tpu.memory_space<vmem>>, %arg27: memref<2x6x32xf32, #tpu.memory_space<vmem>>, %arg28: memref<2x32xf32, #tpu.memory_space<vmem>>, %arg29: memref<32x128xbf16, #tpu.memory_space<vmem>>, %arg30: memref<1x128xf32, #tpu.memory_space<vmem>>, %arg31: memref<1x8x128xf32, #tpu.memory_space<vmem>>) attributes {dimension_semantics = [#tpu.dimension_semantics<parallel>], iteration_bounds = array<i64: 2>, scalar_prefetch = 0 : i64, scratch_operands = 0 : i64, tpu.core_type = #tpu.core_type<tc>, window_params = [{transform_indices = @transform_0, window_bounds = array<i64: 1, 8, 32>}, {transform_indices = @transform_1, window_bounds = array<i64: 1, 8, 32>}, {pipeline_mode = #tpu.pipeline_mode<synchronous>, transform_indices = @transform_2, window_bounds = array<i64: 2, 32, 96>}, {pipeline_mode = #tpu.pipeline_mode<synchronous>, transform_indices = @transform_3, window_bounds = array<i64: 2, 1, 96>}, {pipeline_mode = #tpu.pipeline_mode<synchronous>, transform_indices = @transform_4, window_bounds = array<i64: 2, 32, 32>}, {pipeline_mode = #tpu.pipeline_mode<synchronous>, transform_indices = @transform_5, window_bounds = array<i64: 2, 1, 32>}, {pipeline_mode = #tpu.pipeline_mode<synchronous>, transform_indices = @transform_6, window_bounds = array<i64: 2, 32, 64>}, {pipeline_mode = #tpu.pipeline_mode<synchronous>, transform_indices = @transform_7, window_bounds = array<i64: 2, 1, 64>}, {pipeline_mode = #tpu.pipeline_mode<synchronous>, transform_indices = @transform_8, window_bounds = array<i64: 2, 64, 32>}, {pipeline_mode = #tpu.pipeline_mode<synchronous>, transform_indices = @transform_9, window_bounds = array<i64: 2, 1, 32>}, {pipeline_mode = #tpu.pipeline_mode<synchronous>, transform_indices = @transform_10, window_bounds = array<i64: 2, 4, 32>}, {pipeline_mode = #tpu.pipeline_mode<synchronous>, transform_indices = @transform_11, window_bounds = array<i64: 2, 32>}, {pipeline_mode = #tpu.pipeline_mode<synchronous>, transform_indices = @transform_12, window_bounds = array<i64: 2, 32, 96>}, {pipeline_mode = #tpu.pipeline_mode<synchronous>, transform_indices = @transform_13, window_bounds = array<i64: 2, 1, 96>}, {pipeline_mode = #tpu.pipeline_mode<synchronous>, transform_indices = @transform_14, window_bounds = array<i64: 2, 32, 32>}, {pipeline_mode = #tpu.pipeline_mode<synchronous>, transform_indices = @transform_15, window_bounds = array<i64: 2, 1, 32>}, {pipeline_mode = #tpu.pipeline_mode<synchronous>, transform_indices = @transform_16, window_bounds = array<i64: 2, 32, 32>}, {pipeline_mode = #tpu.pipeline_mode<synchronous>, transform_indices = @transform_17, window_bounds = array<i64: 2, 1, 32>}, {pipeline_mode = #tpu.pipeline_mode<synchronous>, transform_indices = @transform_18, window_bounds = array<i64: 2, 32, 64>}, {pipeline_mode = #tpu.pipeline_mode<synchronous>, transform_indices = @transform_19, window_bounds = array<i64: 2, 1, 64>}, {pipeline_mode = #tpu.pipeline_mode<synchronous>, transform_indices = @transform_20, window_bounds = array<i64: 2, 32, 32>}, {pipeline_mode = #tpu.pipeline_mode<synchronous>, transform_indices = @transform_21, window_bounds = array<i64: 2, 1, 32>}, {pipeline_mode = #tpu.pipeline_mode<synchronous>, transform_indices = @transform_22, window_bounds = array<i64: 2, 32, 64>}, {pipeline_mode = #tpu.pipeline_mode<synchronous>, transform_indices = @transform_23, window_bounds = array<i64: 2, 1, 64>}, {pipeline_mode = #tpu.pipeline_mode<synchronous>, transform_indices = @transform_24, window_bounds = array<i64: 2, 64, 32>}, {pipeline_mode = #tpu.pipeline_mode<synchronous>, transform_indices = @transform_25, window_bounds = array<i64: 2, 1, 32>}, {pipeline_mode = #tpu.pipeline_mode<synchronous>, transform_indices = @transform_26, window_bounds = array<i64: 2, 6, 32>}, {pipeline_mode = #tpu.pipeline_mode<synchronous>, transform_indices = @transform_27, window_bounds = array<i64: 2, 32>}, {pipeline_mode = #tpu.pipeline_mode<synchronous>, transform_indices = @transform_28, window_bounds = array<i64: 32, 128>}, {pipeline_mode = #tpu.pipeline_mode<synchronous>, transform_indices = @transform_29, window_bounds = array<i64: 1, 128>}, {transform_indices = @transform_30, window_bounds = array<i64: 1, 8, 128>}]} {
    %0 = tpu.iota {dimensions = array<i32: 0>} : vector<8x8xi32>
    %1 = tpu.iota {dimensions = array<i32: 1>} : vector<8x8xi32>
    %2 = arith.cmpi sgt, %1, %0 : vector<8x8xi32>
    %cst = arith.constant -1.000000e+09 : f32
    %cst_0 = arith.constant 0.000000e+00 : f32
    %3 = vector.broadcast %cst : f32 to vector<8x8xf32>
    %4 = vector.broadcast %cst_0 : f32 to vector<8x8xf32>
    %5 = arith.select %2, %3, %4 : vector<8x8xi1>, vector<8x8xf32>
    %c0 = arith.constant 0 : index
    %c0_1 = arith.constant 0 : index
    %c0_2 = arith.constant 0 : index
    %6 = vector.load %arg1[%c0, %c0_1, %c0_2] : memref<1x8x32xf32, #tpu.memory_space<vmem>>, vector<1x8x32xf32>
    %7 = vector.shape_cast %6 : vector<1x8x32xf32> to vector<8x32xf32>
    %c0_3 = arith.constant 0 : index
    %c0_4 = arith.constant 0 : index
    %c0_5 = arith.constant 0 : index
    %8 = vector.load %arg11[%c0_3, %c0_4, %c0_5] : memref<2x4x32xf32, #tpu.memory_space<vmem>>, vector<1x4x32xf32>
    %9 = vector.shape_cast %8 : vector<1x4x32xf32> to vector<4x32xf32>
    %10 = arith.truncf %7 : vector<8x32xf32> to vector<8x32xbf16>
    %c0_6 = arith.constant 0 : index
    %c0_7 = arith.constant 0 : index
    %c0_8 = arith.constant 0 : index
    %11 = vector.load %arg3[%c0_6, %c0_7, %c0_8] : memref<2x32x96xbf16, #tpu.memory_space<vmem>>, vector<1x32x96xbf16>
    %12 = vector.shape_cast %11 : vector<1x32x96xbf16> to vector<32x96xbf16>
    %cst_9 = arith.constant dense<0.000000e+00> : vector<8x96xf32>
    %13 = tpu.matmul %10, %12, %cst_9 {dimension_numbers = #tpu.dot_dimension_numbers<[1], [0], [0], [1], [0, 0, 1, 1], [], []>} : vector<8x32xbf16>, vector<32x96xbf16>, vector<8x96xf32> -> vector<8x96xf32>
    %c0_10 = arith.constant 0 : index
    %c0_11 = arith.constant 0 : index
    %c0_12 = arith.constant 0 : index
    %14 = vector.load %arg4[%c0_10, %c0_11, %c0_12] : memref<2x1x96xf32, #tpu.memory_space<vmem>>, vector<1x1x96xf32>
    %15 = vector.shape_cast %14 : vector<1x1x96xf32> to vector<1x96xf32>
    %16 = vector.broadcast %15 : vector<1x96xf32> to vector<8x96xf32>
    %17 = arith.addf %13, %16 : vector<8x96xf32>
    %18 = vector.extract_strided_slice %17 {offsets = [0, 0], sizes = [8, 32], strides = [1, 1]} : vector<8x96xf32> to vector<8x32xf32>
    %19 = vector.extract_strided_slice %17 {offsets = [0, 32], sizes = [8, 32], strides = [1, 1]} : vector<8x96xf32> to vector<8x32xf32>
    %20 = vector.extract_strided_slice %17 {offsets = [0, 64], sizes = [8, 32], strides = [1, 1]} : vector<8x96xf32> to vector<8x32xf32>
    %cst_13 = arith.constant 0.353553385 : f32
    %21 = vector.broadcast %cst_13 : f32 to vector<8x32xf32>
    %22 = arith.mulf %18, %21 : vector<8x32xf32>
    %23 = vector.extract_strided_slice %22 {offsets = [0, 0], sizes = [8, 8], strides = [1, 1]} : vector<8x32xf32> to vector<8x8xf32>
    %24 = arith.truncf %23 : vector<8x8xf32> to vector<8x8xbf16>
    %25 = vector.extract_strided_slice %19 {offsets = [0, 0], sizes = [8, 8], strides = [1, 1]} : vector<8x32xf32> to vector<8x8xf32>
    %26 = arith.truncf %25 : vector<8x8xf32> to vector<8x8xbf16>
    %27 = vector.extract_strided_slice %20 {offsets = [0, 0], sizes = [8, 8], strides = [1, 1]} : vector<8x32xf32> to vector<8x8xf32>
    %28 = arith.truncf %27 : vector<8x8xf32> to vector<8x8xbf16>
    %cst_14 = arith.constant dense<0.000000e+00> : vector<8x8xf32>
    %29 = tpu.matmul %24, %26, %cst_14 {dimension_numbers = #tpu.dot_dimension_numbers<[1], [1], [0], [0], [0, 0, 1, 0], [], []>} : vector<8x8xbf16>, vector<8x8xbf16>, vector<8x8xf32> -> vector<8x8xf32>
    %cst_15 = arith.constant dense<0xFF800000> : vector<8xf32>
    %30 = vector.multi_reduction <maximumf>, %29, %cst_15 [1] : vector<8x8xf32> to vector<8xf32>
    %31 = vector.shape_cast %30 : vector<8xf32> to vector<8x1xf32>
    %32 = vector.broadcast %31 : vector<8x1xf32> to vector<8x8xf32>
    %33 = arith.subf %29, %32 : vector<8x8xf32>
    %34 = math.exp %33 : vector<8x8xf32>
    %cst_16 = arith.constant dense<0.000000e+00> : vector<8xf32>
    %35 = vector.multi_reduction <add>, %34, %cst_16 [1] : vector<8x8xf32> to vector<8xf32>
    %36 = vector.shape_cast %35 : vector<8xf32> to vector<8x1xf32>
    %37 = tpu.reciprocal %36 {approx = true} : vector<8x1xf32> -> vector<8x1xf32>
    %38 = vector.broadcast %37 : vector<8x1xf32> to vector<8x8xf32>
    %39 = arith.mulf %34, %38 : vector<8x8xf32>
    %40 = arith.truncf %39 : vector<8x8xf32> to vector<8x8xbf16>
    %cst_17 = arith.constant dense<0.000000e+00> : vector<8x8xf32>
    %41 = tpu.matmul %40, %28, %cst_17 {dimension_numbers = #tpu.dot_dimension_numbers<[1], [0], [0], [1], [0, 0, 1, 1], [], []>} : vector<8x8xbf16>, vector<8x8xbf16>, vector<8x8xf32> -> vector<8x8xf32>
    %42 = vector.extract_strided_slice %22 {offsets = [0, 8], sizes = [8, 8], strides = [1, 1]} : vector<8x32xf32> to vector<8x8xf32>
    %43 = arith.truncf %42 : vector<8x8xf32> to vector<8x8xbf16>
    %44 = vector.extract_strided_slice %19 {offsets = [0, 8], sizes = [8, 8], strides = [1, 1]} : vector<8x32xf32> to vector<8x8xf32>
    %45 = arith.truncf %44 : vector<8x8xf32> to vector<8x8xbf16>
    %46 = vector.extract_strided_slice %20 {offsets = [0, 8], sizes = [8, 8], strides = [1, 1]} : vector<8x32xf32> to vector<8x8xf32>
    %47 = arith.truncf %46 : vector<8x8xf32> to vector<8x8xbf16>
    %cst_18 = arith.constant dense<0.000000e+00> : vector<8x8xf32>
    %48 = tpu.matmul %43, %45, %cst_18 {dimension_numbers = #tpu.dot_dimension_numbers<[1], [1], [0], [0], [0, 0, 1, 0], [], []>} : vector<8x8xbf16>, vector<8x8xbf16>, vector<8x8xf32> -> vector<8x8xf32>
    %cst_19 = arith.constant dense<0xFF800000> : vector<8xf32>
    %49 = vector.multi_reduction <maximumf>, %48, %cst_19 [1] : vector<8x8xf32> to vector<8xf32>
    %50 = vector.shape_cast %49 : vector<8xf32> to vector<8x1xf32>
    %51 = vector.broadcast %50 : vector<8x1xf32> to vector<8x8xf32>
    %52 = arith.subf %48, %51 : vector<8x8xf32>
    %53 = math.exp %52 : vector<8x8xf32>
    %cst_20 = arith.constant dense<0.000000e+00> : vector<8xf32>
    %54 = vector.multi_reduction <add>, %53, %cst_20 [1] : vector<8x8xf32> to vector<8xf32>
    %55 = vector.shape_cast %54 : vector<8xf32> to vector<8x1xf32>
    %56 = tpu.reciprocal %55 {approx = true} : vector<8x1xf32> -> vector<8x1xf32>
    %57 = vector.broadcast %56 : vector<8x1xf32> to vector<8x8xf32>
    %58 = arith.mulf %53, %57 : vector<8x8xf32>
    %59 = arith.truncf %58 : vector<8x8xf32> to vector<8x8xbf16>
    %cst_21 = arith.constant dense<0.000000e+00> : vector<8x8xf32>
    %60 = tpu.matmul %59, %47, %cst_21 {dimension_numbers = #tpu.dot_dimension_numbers<[1], [0], [0], [1], [0, 0, 1, 1], [], []>} : vector<8x8xbf16>, vector<8x8xbf16>, vector<8x8xf32> -> vector<8x8xf32>
    %61 = vector.extract_strided_slice %22 {offsets = [0, 16], sizes = [8, 8], strides = [1, 1]} : vector<8x32xf32> to vector<8x8xf32>
    %62 = arith.truncf %61 : vector<8x8xf32> to vector<8x8xbf16>
    %63 = vector.extract_strided_slice %19 {offsets = [0, 16], sizes = [8, 8], strides = [1, 1]} : vector<8x32xf32> to vector<8x8xf32>
    %64 = arith.truncf %63 : vector<8x8xf32> to vector<8x8xbf16>
    %65 = vector.extract_strided_slice %20 {offsets = [0, 16], sizes = [8, 8], strides = [1, 1]} : vector<8x32xf32> to vector<8x8xf32>
    %66 = arith.truncf %65 : vector<8x8xf32> to vector<8x8xbf16>
    %cst_22 = arith.constant dense<0.000000e+00> : vector<8x8xf32>
    %67 = tpu.matmul %62, %64, %cst_22 {dimension_numbers = #tpu.dot_dimension_numbers<[1], [1], [0], [0], [0, 0, 1, 0], [], []>} : vector<8x8xbf16>, vector<8x8xbf16>, vector<8x8xf32> -> vector<8x8xf32>
    %cst_23 = arith.constant dense<0xFF800000> : vector<8xf32>
    %68 = vector.multi_reduction <maximumf>, %67, %cst_23 [1] : vector<8x8xf32> to vector<8xf32>
    %69 = vector.shape_cast %68 : vector<8xf32> to vector<8x1xf32>
    %70 = vector.broadcast %69 : vector<8x1xf32> to vector<8x8xf32>
    %71 = arith.subf %67, %70 : vector<8x8xf32>
    %72 = math.exp %71 : vector<8x8xf32>
    %cst_24 = arith.constant dense<0.000000e+00> : vector<8xf32>
    %73 = vector.multi_reduction <add>, %72, %cst_24 [1] : vector<8x8xf32> to vector<8xf32>
    %74 = vector.shape_cast %73 : vector<8xf32> to vector<8x1xf32>
    %75 = tpu.reciprocal %74 {approx = true} : vector<8x1xf32> -> vector<8x1xf32>
    %76 = vector.broadcast %75 : vector<8x1xf32> to vector<8x8xf32>
    %77 = arith.mulf %72, %76 : vector<8x8xf32>
    %78 = arith.truncf %77 : vector<8x8xf32> to vector<8x8xbf16>
    %cst_25 = arith.constant dense<0.000000e+00> : vector<8x8xf32>
    %79 = tpu.matmul %78, %66, %cst_25 {dimension_numbers = #tpu.dot_dimension_numbers<[1], [0], [0], [1], [0, 0, 1, 1], [], []>} : vector<8x8xbf16>, vector<8x8xbf16>, vector<8x8xf32> -> vector<8x8xf32>
    %80 = vector.extract_strided_slice %22 {offsets = [0, 24], sizes = [8, 8], strides = [1, 1]} : vector<8x32xf32> to vector<8x8xf32>
    %81 = arith.truncf %80 : vector<8x8xf32> to vector<8x8xbf16>
    %82 = vector.extract_strided_slice %19 {offsets = [0, 24], sizes = [8, 8], strides = [1, 1]} : vector<8x32xf32> to vector<8x8xf32>
    %83 = arith.truncf %82 : vector<8x8xf32> to vector<8x8xbf16>
    %84 = vector.extract_strided_slice %20 {offsets = [0, 24], sizes = [8, 8], strides = [1, 1]} : vector<8x32xf32> to vector<8x8xf32>
    %85 = arith.truncf %84 : vector<8x8xf32> to vector<8x8xbf16>
    %cst_26 = arith.constant dense<0.000000e+00> : vector<8x8xf32>
    %86 = tpu.matmul %81, %83, %cst_26 {dimension_numbers = #tpu.dot_dimension_numbers<[1], [1], [0], [0], [0, 0, 1, 0], [], []>} : vector<8x8xbf16>, vector<8x8xbf16>, vector<8x8xf32> -> vector<8x8xf32>
    %cst_27 = arith.constant dense<0xFF800000> : vector<8xf32>
    %87 = vector.multi_reduction <maximumf>, %86, %cst_27 [1] : vector<8x8xf32> to vector<8xf32>
    %88 = vector.shape_cast %87 : vector<8xf32> to vector<8x1xf32>
    %89 = vector.broadcast %88 : vector<8x1xf32> to vector<8x8xf32>
    %90 = arith.subf %86, %89 : vector<8x8xf32>
    %91 = math.exp %90 : vector<8x8xf32>
    %cst_28 = arith.constant dense<0.000000e+00> : vector<8xf32>
    %92 = vector.multi_reduction <add>, %91, %cst_28 [1] : vector<8x8xf32> to vector<8xf32>
    %93 = vector.shape_cast %92 : vector<8xf32> to vector<8x1xf32>
    %94 = tpu.reciprocal %93 {approx = true} : vector<8x1xf32> -> vector<8x1xf32>
    %95 = vector.broadcast %94 : vector<8x1xf32> to vector<8x8xf32>
    %96 = arith.mulf %91, %95 : vector<8x8xf32>
    %97 = arith.truncf %96 : vector<8x8xf32> to vector<8x8xbf16>
    %cst_29 = arith.constant dense<0.000000e+00> : vector<8x8xf32>
    %98 = tpu.matmul %97, %85, %cst_29 {dimension_numbers = #tpu.dot_dimension_numbers<[1], [0], [0], [1], [0, 0, 1, 1], [], []>} : vector<8x8xbf16>, vector<8x8xbf16>, vector<8x8xf32> -> vector<8x8xf32>
    %99 = tpu.concatenate %41, %60, %79, %98 in 1 : vector<8x8xf32>, vector<8x8xf32>, vector<8x8xf32>, vector<8x8xf32> -> vector<8x32xf32>
    %100 = arith.truncf %99 : vector<8x32xf32> to vector<8x32xbf16>
    %c0_30 = arith.constant 0 : index
    %c0_31 = arith.constant 0 : index
    %c0_32 = arith.constant 0 : index
    %101 = vector.load %arg5[%c0_30, %c0_31, %c0_32] : memref<2x32x32xbf16, #tpu.memory_space<vmem>>, vector<1x32x32xbf16>
    %102 = vector.shape_cast %101 : vector<1x32x32xbf16> to vector<32x32xbf16>
    %cst_33 = arith.constant dense<0.000000e+00> : vector<8x32xf32>
    %103 = tpu.matmul %100, %102, %cst_33 {dimension_numbers = #tpu.dot_dimension_numbers<[1], [0], [0], [1], [0, 0, 1, 1], [], []>} : vector<8x32xbf16>, vector<32x32xbf16>, vector<8x32xf32> -> vector<8x32xf32>
    %c0_34 = arith.constant 0 : index
    %c0_35 = arith.constant 0 : index
    %c0_36 = arith.constant 0 : index
    %104 = vector.load %arg6[%c0_34, %c0_35, %c0_36] : memref<2x1x32xf32, #tpu.memory_space<vmem>>, vector<1x1x32xf32>
    %105 = vector.shape_cast %104 : vector<1x1x32xf32> to vector<1x32xf32>
    %106 = vector.broadcast %105 : vector<1x32xf32> to vector<8x32xf32>
    %107 = arith.addf %103, %106 : vector<8x32xf32>
    %108 = arith.addf %7, %107 : vector<8x32xf32>
    %109 = vector.extract_strided_slice %9 {offsets = [0, 0], sizes = [1, 32], strides = [1, 1]} : vector<4x32xf32> to vector<1x32xf32>
    %110 = vector.extract_strided_slice %9 {offsets = [1, 0], sizes = [1, 32], strides = [1, 1]} : vector<4x32xf32> to vector<1x32xf32>
    %cst_37 = arith.constant dense<0.000000e+00> : vector<8xf32>
    %111 = vector.multi_reduction <add>, %108, %cst_37 [1] : vector<8x32xf32> to vector<8xf32>
    %112 = vector.shape_cast %111 : vector<8xf32> to vector<8x1xf32>
    %cst_38 = arith.constant 3.200000e+01 : f32
    %113 = vector.broadcast %cst_38 : f32 to vector<8x1xf32>
    %114 = arith.divf %112, %113 : vector<8x1xf32>
    %115 = vector.broadcast %114 : vector<8x1xf32> to vector<8x32xf32>
    %116 = arith.subf %108, %115 : vector<8x32xf32>
    %117 = arith.mulf %116, %116 : vector<8x32xf32>
    %cst_39 = arith.constant dense<0.000000e+00> : vector<8xf32>
    %118 = vector.multi_reduction <add>, %117, %cst_39 [1] : vector<8x32xf32> to vector<8xf32>
    %119 = vector.shape_cast %118 : vector<8xf32> to vector<8x1xf32>
    %cst_40 = arith.constant 3.200000e+01 : f32
    %120 = vector.broadcast %cst_40 : f32 to vector<8x1xf32>
    %121 = arith.divf %119, %120 : vector<8x1xf32>
    %122 = vector.broadcast %114 : vector<8x1xf32> to vector<8x32xf32>
    %123 = arith.subf %108, %122 : vector<8x32xf32>
    %cst_41 = arith.constant 9.99999974E-6 : f32
    %124 = vector.broadcast %cst_41 : f32 to vector<8x1xf32>
    %125 = arith.addf %121, %124 : vector<8x1xf32>
    %126 = math.rsqrt %125 : vector<8x1xf32>
    %127 = vector.broadcast %126 : vector<8x1xf32> to vector<8x32xf32>
    %128 = arith.mulf %123, %127 : vector<8x32xf32>
    %129 = vector.broadcast %109 : vector<1x32xf32> to vector<8x32xf32>
    %130 = arith.mulf %128, %129 : vector<8x32xf32>
    %131 = vector.broadcast %110 : vector<1x32xf32> to vector<8x32xf32>
    %132 = arith.addf %130, %131 : vector<8x32xf32>
    %133 = arith.truncf %132 : vector<8x32xf32> to vector<8x32xbf16>
    %c0_42 = arith.constant 0 : index
    %c0_43 = arith.constant 0 : index
    %c0_44 = arith.constant 0 : index
    %134 = vector.load %arg7[%c0_42, %c0_43, %c0_44] : memref<2x32x64xbf16, #tpu.memory_space<vmem>>, vector<1x32x64xbf16>
    %135 = vector.shape_cast %134 : vector<1x32x64xbf16> to vector<32x64xbf16>
    %cst_45 = arith.constant dense<0.000000e+00> : vector<8x64xf32>
    %136 = tpu.matmul %133, %135, %cst_45 {dimension_numbers = #tpu.dot_dimension_numbers<[1], [0], [0], [1], [0, 0, 1, 1], [], []>} : vector<8x32xbf16>, vector<32x64xbf16>, vector<8x64xf32> -> vector<8x64xf32>
    %c0_46 = arith.constant 0 : index
    %c0_47 = arith.constant 0 : index
    %c0_48 = arith.constant 0 : index
    %137 = vector.load %arg8[%c0_46, %c0_47, %c0_48] : memref<2x1x64xf32, #tpu.memory_space<vmem>>, vector<1x1x64xf32>
    %138 = vector.shape_cast %137 : vector<1x1x64xf32> to vector<1x64xf32>
    %139 = vector.broadcast %138 : vector<1x64xf32> to vector<8x64xf32>
    %140 = arith.addf %136, %139 : vector<8x64xf32>
    %cst_49 = arith.constant 0.000000e+00 : f32
    %141 = vector.broadcast %cst_49 : f32 to vector<8x64xf32>
    %142 = arith.maximumf %140, %141 : vector<8x64xf32>
    %143 = arith.truncf %142 : vector<8x64xf32> to vector<8x64xbf16>
    %c0_50 = arith.constant 0 : index
    %c0_51 = arith.constant 0 : index
    %c0_52 = arith.constant 0 : index
    %144 = vector.load %arg9[%c0_50, %c0_51, %c0_52] : memref<2x64x32xbf16, #tpu.memory_space<vmem>>, vector<1x64x32xbf16>
    %145 = vector.shape_cast %144 : vector<1x64x32xbf16> to vector<64x32xbf16>
    %cst_53 = arith.constant dense<0.000000e+00> : vector<8x32xf32>
    %146 = tpu.matmul %143, %145, %cst_53 {dimension_numbers = #tpu.dot_dimension_numbers<[1], [0], [0], [1], [0, 0, 1, 1], [], []>} : vector<8x64xbf16>, vector<64x32xbf16>, vector<8x32xf32> -> vector<8x32xf32>
    %c0_54 = arith.constant 0 : index
    %c0_55 = arith.constant 0 : index
    %c0_56 = arith.constant 0 : index
    %147 = vector.load %arg10[%c0_54, %c0_55, %c0_56] : memref<2x1x32xf32, #tpu.memory_space<vmem>>, vector<1x1x32xf32>
    %148 = vector.shape_cast %147 : vector<1x1x32xf32> to vector<1x32xf32>
    %149 = vector.broadcast %148 : vector<1x32xf32> to vector<8x32xf32>
    %150 = arith.addf %146, %149 : vector<8x32xf32>
    %151 = arith.addf %132, %150 : vector<8x32xf32>
    %152 = vector.extract_strided_slice %9 {offsets = [2, 0], sizes = [1, 32], strides = [1, 1]} : vector<4x32xf32> to vector<1x32xf32>
    %153 = vector.extract_strided_slice %9 {offsets = [3, 0], sizes = [1, 32], strides = [1, 1]} : vector<4x32xf32> to vector<1x32xf32>
    %cst_57 = arith.constant dense<0.000000e+00> : vector<8xf32>
    %154 = vector.multi_reduction <add>, %151, %cst_57 [1] : vector<8x32xf32> to vector<8xf32>
    %155 = vector.shape_cast %154 : vector<8xf32> to vector<8x1xf32>
    %cst_58 = arith.constant 3.200000e+01 : f32
    %156 = vector.broadcast %cst_58 : f32 to vector<8x1xf32>
    %157 = arith.divf %155, %156 : vector<8x1xf32>
    %158 = vector.broadcast %157 : vector<8x1xf32> to vector<8x32xf32>
    %159 = arith.subf %151, %158 : vector<8x32xf32>
    %160 = arith.mulf %159, %159 : vector<8x32xf32>
    %cst_59 = arith.constant dense<0.000000e+00> : vector<8xf32>
    %161 = vector.multi_reduction <add>, %160, %cst_59 [1] : vector<8x32xf32> to vector<8xf32>
    %162 = vector.shape_cast %161 : vector<8xf32> to vector<8x1xf32>
    %cst_60 = arith.constant 3.200000e+01 : f32
    %163 = vector.broadcast %cst_60 : f32 to vector<8x1xf32>
    %164 = arith.divf %162, %163 : vector<8x1xf32>
    %165 = vector.broadcast %157 : vector<8x1xf32> to vector<8x32xf32>
    %166 = arith.subf %151, %165 : vector<8x32xf32>
    %cst_61 = arith.constant 9.99999974E-6 : f32
    %167 = vector.broadcast %cst_61 : f32 to vector<8x1xf32>
    %168 = arith.addf %164, %167 : vector<8x1xf32>
    %169 = math.rsqrt %168 : vector<8x1xf32>
    %170 = vector.broadcast %169 : vector<8x1xf32> to vector<8x32xf32>
    %171 = arith.mulf %166, %170 : vector<8x32xf32>
    %172 = vector.broadcast %152 : vector<1x32xf32> to vector<8x32xf32>
    %173 = arith.mulf %171, %172 : vector<8x32xf32>
    %174 = vector.broadcast %153 : vector<1x32xf32> to vector<8x32xf32>
    %175 = arith.addf %173, %174 : vector<8x32xf32>
    %c1 = arith.constant 1 : index
    %c0_62 = arith.constant 0 : index
    %c0_63 = arith.constant 0 : index
    %176 = vector.load %arg11[%c1, %c0_62, %c0_63] : memref<2x4x32xf32, #tpu.memory_space<vmem>>, vector<1x4x32xf32>
    %177 = vector.shape_cast %176 : vector<1x4x32xf32> to vector<4x32xf32>
    %178 = arith.truncf %175 : vector<8x32xf32> to vector<8x32xbf16>
    %c1_64 = arith.constant 1 : index
    %c0_65 = arith.constant 0 : index
    %c0_66 = arith.constant 0 : index
    %179 = vector.load %arg3[%c1_64, %c0_65, %c0_66] : memref<2x32x96xbf16, #tpu.memory_space<vmem>>, vector<1x32x96xbf16>
    %180 = vector.shape_cast %179 : vector<1x32x96xbf16> to vector<32x96xbf16>
    %cst_67 = arith.constant dense<0.000000e+00> : vector<8x96xf32>
    %181 = tpu.matmul %178, %180, %cst_67 {dimension_numbers = #tpu.dot_dimension_numbers<[1], [0], [0], [1], [0, 0, 1, 1], [], []>} : vector<8x32xbf16>, vector<32x96xbf16>, vector<8x96xf32> -> vector<8x96xf32>
    %c1_68 = arith.constant 1 : index
    %c0_69 = arith.constant 0 : index
    %c0_70 = arith.constant 0 : index
    %182 = vector.load %arg4[%c1_68, %c0_69, %c0_70] : memref<2x1x96xf32, #tpu.memory_space<vmem>>, vector<1x1x96xf32>
    %183 = vector.shape_cast %182 : vector<1x1x96xf32> to vector<1x96xf32>
    %184 = vector.broadcast %183 : vector<1x96xf32> to vector<8x96xf32>
    %185 = arith.addf %181, %184 : vector<8x96xf32>
    %186 = vector.extract_strided_slice %185 {offsets = [0, 0], sizes = [8, 32], strides = [1, 1]} : vector<8x96xf32> to vector<8x32xf32>
    %187 = vector.extract_strided_slice %185 {offsets = [0, 32], sizes = [8, 32], strides = [1, 1]} : vector<8x96xf32> to vector<8x32xf32>
    %188 = vector.extract_strided_slice %185 {offsets = [0, 64], sizes = [8, 32], strides = [1, 1]} : vector<8x96xf32> to vector<8x32xf32>
    %cst_71 = arith.constant 0.353553385 : f32
    %189 = vector.broadcast %cst_71 : f32 to vector<8x32xf32>
    %190 = arith.mulf %186, %189 : vector<8x32xf32>
    %191 = vector.extract_strided_slice %190 {offsets = [0, 0], sizes = [8, 8], strides = [1, 1]} : vector<8x32xf32> to vector<8x8xf32>
    %192 = arith.truncf %191 : vector<8x8xf32> to vector<8x8xbf16>
    %193 = vector.extract_strided_slice %187 {offsets = [0, 0], sizes = [8, 8], strides = [1, 1]} : vector<8x32xf32> to vector<8x8xf32>
    %194 = arith.truncf %193 : vector<8x8xf32> to vector<8x8xbf16>
    %195 = vector.extract_strided_slice %188 {offsets = [0, 0], sizes = [8, 8], strides = [1, 1]} : vector<8x32xf32> to vector<8x8xf32>
    %196 = arith.truncf %195 : vector<8x8xf32> to vector<8x8xbf16>
    %cst_72 = arith.constant dense<0.000000e+00> : vector<8x8xf32>
    %197 = tpu.matmul %192, %194, %cst_72 {dimension_numbers = #tpu.dot_dimension_numbers<[1], [1], [0], [0], [0, 0, 1, 0], [], []>} : vector<8x8xbf16>, vector<8x8xbf16>, vector<8x8xf32> -> vector<8x8xf32>
    %cst_73 = arith.constant dense<0xFF800000> : vector<8xf32>
    %198 = vector.multi_reduction <maximumf>, %197, %cst_73 [1] : vector<8x8xf32> to vector<8xf32>
    %199 = vector.shape_cast %198 : vector<8xf32> to vector<8x1xf32>
    %200 = vector.broadcast %199 : vector<8x1xf32> to vector<8x8xf32>
    %201 = arith.subf %197, %200 : vector<8x8xf32>
    %202 = math.exp %201 : vector<8x8xf32>
    %cst_74 = arith.constant dense<0.000000e+00> : vector<8xf32>
    %203 = vector.multi_reduction <add>, %202, %cst_74 [1] : vector<8x8xf32> to vector<8xf32>
    %204 = vector.shape_cast %203 : vector<8xf32> to vector<8x1xf32>
    %205 = tpu.reciprocal %204 {approx = true} : vector<8x1xf32> -> vector<8x1xf32>
    %206 = vector.broadcast %205 : vector<8x1xf32> to vector<8x8xf32>
    %207 = arith.mulf %202, %206 : vector<8x8xf32>
    %208 = arith.truncf %207 : vector<8x8xf32> to vector<8x8xbf16>
    %cst_75 = arith.constant dense<0.000000e+00> : vector<8x8xf32>
    %209 = tpu.matmul %208, %196, %cst_75 {dimension_numbers = #tpu.dot_dimension_numbers<[1], [0], [0], [1], [0, 0, 1, 1], [], []>} : vector<8x8xbf16>, vector<8x8xbf16>, vector<8x8xf32> -> vector<8x8xf32>
    %210 = vector.extract_strided_slice %190 {offsets = [0, 8], sizes = [8, 8], strides = [1, 1]} : vector<8x32xf32> to vector<8x8xf32>
    %211 = arith.truncf %210 : vector<8x8xf32> to vector<8x8xbf16>
    %212 = vector.extract_strided_slice %187 {offsets = [0, 8], sizes = [8, 8], strides = [1, 1]} : vector<8x32xf32> to vector<8x8xf32>
    %213 = arith.truncf %212 : vector<8x8xf32> to vector<8x8xbf16>
    %214 = vector.extract_strided_slice %188 {offsets = [0, 8], sizes = [8, 8], strides = [1, 1]} : vector<8x32xf32> to vector<8x8xf32>
    %215 = arith.truncf %214 : vector<8x8xf32> to vector<8x8xbf16>
    %cst_76 = arith.constant dense<0.000000e+00> : vector<8x8xf32>
    %216 = tpu.matmul %211, %213, %cst_76 {dimension_numbers = #tpu.dot_dimension_numbers<[1], [1], [0], [0], [0, 0, 1, 0], [], []>} : vector<8x8xbf16>, vector<8x8xbf16>, vector<8x8xf32> -> vector<8x8xf32>
    %cst_77 = arith.constant dense<0xFF800000> : vector<8xf32>
    %217 = vector.multi_reduction <maximumf>, %216, %cst_77 [1] : vector<8x8xf32> to vector<8xf32>
    %218 = vector.shape_cast %217 : vector<8xf32> to vector<8x1xf32>
    %219 = vector.broadcast %218 : vector<8x1xf32> to vector<8x8xf32>
    %220 = arith.subf %216, %219 : vector<8x8xf32>
    %221 = math.exp %220 : vector<8x8xf32>
    %cst_78 = arith.constant dense<0.000000e+00> : vector<8xf32>
    %222 = vector.multi_reduction <add>, %221, %cst_78 [1] : vector<8x8xf32> to vector<8xf32>
    %223 = vector.shape_cast %222 : vector<8xf32> to vector<8x1xf32>
    %224 = tpu.reciprocal %223 {approx = true} : vector<8x1xf32> -> vector<8x1xf32>
    %225 = vector.broadcast %224 : vector<8x1xf32> to vector<8x8xf32>
    %226 = arith.mulf %221, %225 : vector<8x8xf32>
    %227 = arith.truncf %226 : vector<8x8xf32> to vector<8x8xbf16>
    %cst_79 = arith.constant dense<0.000000e+00> : vector<8x8xf32>
    %228 = tpu.matmul %227, %215, %cst_79 {dimension_numbers = #tpu.dot_dimension_numbers<[1], [0], [0], [1], [0, 0, 1, 1], [], []>} : vector<8x8xbf16>, vector<8x8xbf16>, vector<8x8xf32> -> vector<8x8xf32>
    %229 = vector.extract_strided_slice %190 {offsets = [0, 16], sizes = [8, 8], strides = [1, 1]} : vector<8x32xf32> to vector<8x8xf32>
    %230 = arith.truncf %229 : vector<8x8xf32> to vector<8x8xbf16>
    %231 = vector.extract_strided_slice %187 {offsets = [0, 16], sizes = [8, 8], strides = [1, 1]} : vector<8x32xf32> to vector<8x8xf32>
    %232 = arith.truncf %231 : vector<8x8xf32> to vector<8x8xbf16>
    %233 = vector.extract_strided_slice %188 {offsets = [0, 16], sizes = [8, 8], strides = [1, 1]} : vector<8x32xf32> to vector<8x8xf32>
    %234 = arith.truncf %233 : vector<8x8xf32> to vector<8x8xbf16>
    %cst_80 = arith.constant dense<0.000000e+00> : vector<8x8xf32>
    %235 = tpu.matmul %230, %232, %cst_80 {dimension_numbers = #tpu.dot_dimension_numbers<[1], [1], [0], [0], [0, 0, 1, 0], [], []>} : vector<8x8xbf16>, vector<8x8xbf16>, vector<8x8xf32> -> vector<8x8xf32>
    %cst_81 = arith.constant dense<0xFF800000> : vector<8xf32>
    %236 = vector.multi_reduction <maximumf>, %235, %cst_81 [1] : vector<8x8xf32> to vector<8xf32>
    %237 = vector.shape_cast %236 : vector<8xf32> to vector<8x1xf32>
    %238 = vector.broadcast %237 : vector<8x1xf32> to vector<8x8xf32>
    %239 = arith.subf %235, %238 : vector<8x8xf32>
    %240 = math.exp %239 : vector<8x8xf32>
    %cst_82 = arith.constant dense<0.000000e+00> : vector<8xf32>
    %241 = vector.multi_reduction <add>, %240, %cst_82 [1] : vector<8x8xf32> to vector<8xf32>
    %242 = vector.shape_cast %241 : vector<8xf32> to vector<8x1xf32>
    %243 = tpu.reciprocal %242 {approx = true} : vector<8x1xf32> -> vector<8x1xf32>
    %244 = vector.broadcast %243 : vector<8x1xf32> to vector<8x8xf32>
    %245 = arith.mulf %240, %244 : vector<8x8xf32>
    %246 = arith.truncf %245 : vector<8x8xf32> to vector<8x8xbf16>
    %cst_83 = arith.constant dense<0.000000e+00> : vector<8x8xf32>
    %247 = tpu.matmul %246, %234, %cst_83 {dimension_numbers = #tpu.dot_dimension_numbers<[1], [0], [0], [1], [0, 0, 1, 1], [], []>} : vector<8x8xbf16>, vector<8x8xbf16>, vector<8x8xf32> -> vector<8x8xf32>
    %248 = vector.extract_strided_slice %190 {offsets = [0, 24], sizes = [8, 8], strides = [1, 1]} : vector<8x32xf32> to vector<8x8xf32>
    %249 = arith.truncf %248 : vector<8x8xf32> to vector<8x8xbf16>
    %250 = vector.extract_strided_slice %187 {offsets = [0, 24], sizes = [8, 8], strides = [1, 1]} : vector<8x32xf32> to vector<8x8xf32>
    %251 = arith.truncf %250 : vector<8x8xf32> to vector<8x8xbf16>
    %252 = vector.extract_strided_slice %188 {offsets = [0, 24], sizes = [8, 8], strides = [1, 1]} : vector<8x32xf32> to vector<8x8xf32>
    %253 = arith.truncf %252 : vector<8x8xf32> to vector<8x8xbf16>
    %cst_84 = arith.constant dense<0.000000e+00> : vector<8x8xf32>
    %254 = tpu.matmul %249, %251, %cst_84 {dimension_numbers = #tpu.dot_dimension_numbers<[1], [1], [0], [0], [0, 0, 1, 0], [], []>} : vector<8x8xbf16>, vector<8x8xbf16>, vector<8x8xf32> -> vector<8x8xf32>
    %cst_85 = arith.constant dense<0xFF800000> : vector<8xf32>
    %255 = vector.multi_reduction <maximumf>, %254, %cst_85 [1] : vector<8x8xf32> to vector<8xf32>
    %256 = vector.shape_cast %255 : vector<8xf32> to vector<8x1xf32>
    %257 = vector.broadcast %256 : vector<8x1xf32> to vector<8x8xf32>
    %258 = arith.subf %254, %257 : vector<8x8xf32>
    %259 = math.exp %258 : vector<8x8xf32>
    %cst_86 = arith.constant dense<0.000000e+00> : vector<8xf32>
    %260 = vector.multi_reduction <add>, %259, %cst_86 [1] : vector<8x8xf32> to vector<8xf32>
    %261 = vector.shape_cast %260 : vector<8xf32> to vector<8x1xf32>
    %262 = tpu.reciprocal %261 {approx = true} : vector<8x1xf32> -> vector<8x1xf32>
    %263 = vector.broadcast %262 : vector<8x1xf32> to vector<8x8xf32>
    %264 = arith.mulf %259, %263 : vector<8x8xf32>
    %265 = arith.truncf %264 : vector<8x8xf32> to vector<8x8xbf16>
    %cst_87 = arith.constant dense<0.000000e+00> : vector<8x8xf32>
    %266 = tpu.matmul %265, %253, %cst_87 {dimension_numbers = #tpu.dot_dimension_numbers<[1], [0], [0], [1], [0, 0, 1, 1], [], []>} : vector<8x8xbf16>, vector<8x8xbf16>, vector<8x8xf32> -> vector<8x8xf32>
    %267 = tpu.concatenate %209, %228, %247, %266 in 1 : vector<8x8xf32>, vector<8x8xf32>, vector<8x8xf32>, vector<8x8xf32> -> vector<8x32xf32>
    %268 = arith.truncf %267 : vector<8x32xf32> to vector<8x32xbf16>
    %c1_88 = arith.constant 1 : index
    %c0_89 = arith.constant 0 : index
    %c0_90 = arith.constant 0 : index
    %269 = vector.load %arg5[%c1_88, %c0_89, %c0_90] : memref<2x32x32xbf16, #tpu.memory_space<vmem>>, vector<1x32x32xbf16>
    %270 = vector.shape_cast %269 : vector<1x32x32xbf16> to vector<32x32xbf16>
    %cst_91 = arith.constant dense<0.000000e+00> : vector<8x32xf32>
    %271 = tpu.matmul %268, %270, %cst_91 {dimension_numbers = #tpu.dot_dimension_numbers<[1], [0], [0], [1], [0, 0, 1, 1], [], []>} : vector<8x32xbf16>, vector<32x32xbf16>, vector<8x32xf32> -> vector<8x32xf32>
    %c1_92 = arith.constant 1 : index
    %c0_93 = arith.constant 0 : index
    %c0_94 = arith.constant 0 : index
    %272 = vector.load %arg6[%c1_92, %c0_93, %c0_94] : memref<2x1x32xf32, #tpu.memory_space<vmem>>, vector<1x1x32xf32>
    %273 = vector.shape_cast %272 : vector<1x1x32xf32> to vector<1x32xf32>
    %274 = vector.broadcast %273 : vector<1x32xf32> to vector<8x32xf32>
    %275 = arith.addf %271, %274 : vector<8x32xf32>
    %276 = arith.addf %175, %275 : vector<8x32xf32>
    %277 = vector.extract_strided_slice %177 {offsets = [0, 0], sizes = [1, 32], strides = [1, 1]} : vector<4x32xf32> to vector<1x32xf32>
    %278 = vector.extract_strided_slice %177 {offsets = [1, 0], sizes = [1, 32], strides = [1, 1]} : vector<4x32xf32> to vector<1x32xf32>
    %cst_95 = arith.constant dense<0.000000e+00> : vector<8xf32>
    %279 = vector.multi_reduction <add>, %276, %cst_95 [1] : vector<8x32xf32> to vector<8xf32>
    %280 = vector.shape_cast %279 : vector<8xf32> to vector<8x1xf32>
    %cst_96 = arith.constant 3.200000e+01 : f32
    %281 = vector.broadcast %cst_96 : f32 to vector<8x1xf32>
    %282 = arith.divf %280, %281 : vector<8x1xf32>
    %283 = vector.broadcast %282 : vector<8x1xf32> to vector<8x32xf32>
    %284 = arith.subf %276, %283 : vector<8x32xf32>
    %285 = arith.mulf %284, %284 : vector<8x32xf32>
    %cst_97 = arith.constant dense<0.000000e+00> : vector<8xf32>
    %286 = vector.multi_reduction <add>, %285, %cst_97 [1] : vector<8x32xf32> to vector<8xf32>
    %287 = vector.shape_cast %286 : vector<8xf32> to vector<8x1xf32>
    %cst_98 = arith.constant 3.200000e+01 : f32
    %288 = vector.broadcast %cst_98 : f32 to vector<8x1xf32>
    %289 = arith.divf %287, %288 : vector<8x1xf32>
    %290 = vector.broadcast %282 : vector<8x1xf32> to vector<8x32xf32>
    %291 = arith.subf %276, %290 : vector<8x32xf32>
    %cst_99 = arith.constant 9.99999974E-6 : f32
    %292 = vector.broadcast %cst_99 : f32 to vector<8x1xf32>
    %293 = arith.addf %289, %292 : vector<8x1xf32>
    %294 = math.rsqrt %293 : vector<8x1xf32>
    %295 = vector.broadcast %294 : vector<8x1xf32> to vector<8x32xf32>
    %296 = arith.mulf %291, %295 : vector<8x32xf32>
    %297 = vector.broadcast %277 : vector<1x32xf32> to vector<8x32xf32>
    %298 = arith.mulf %296, %297 : vector<8x32xf32>
    %299 = vector.broadcast %278 : vector<1x32xf32> to vector<8x32xf32>
    %300 = arith.addf %298, %299 : vector<8x32xf32>
    %301 = arith.truncf %300 : vector<8x32xf32> to vector<8x32xbf16>
    %c1_100 = arith.constant 1 : index
    %c0_101 = arith.constant 0 : index
    %c0_102 = arith.constant 0 : index
    %302 = vector.load %arg7[%c1_100, %c0_101, %c0_102] : memref<2x32x64xbf16, #tpu.memory_space<vmem>>, vector<1x32x64xbf16>
    %303 = vector.shape_cast %302 : vector<1x32x64xbf16> to vector<32x64xbf16>
    %cst_103 = arith.constant dense<0.000000e+00> : vector<8x64xf32>
    %304 = tpu.matmul %301, %303, %cst_103 {dimension_numbers = #tpu.dot_dimension_numbers<[1], [0], [0], [1], [0, 0, 1, 1], [], []>} : vector<8x32xbf16>, vector<32x64xbf16>, vector<8x64xf32> -> vector<8x64xf32>
    %c1_104 = arith.constant 1 : index
    %c0_105 = arith.constant 0 : index
    %c0_106 = arith.constant 0 : index
    %305 = vector.load %arg8[%c1_104, %c0_105, %c0_106] : memref<2x1x64xf32, #tpu.memory_space<vmem>>, vector<1x1x64xf32>
    %306 = vector.shape_cast %305 : vector<1x1x64xf32> to vector<1x64xf32>
    %307 = vector.broadcast %306 : vector<1x64xf32> to vector<8x64xf32>
    %308 = arith.addf %304, %307 : vector<8x64xf32>
    %cst_107 = arith.constant 0.000000e+00 : f32
    %309 = vector.broadcast %cst_107 : f32 to vector<8x64xf32>
    %310 = arith.maximumf %308, %309 : vector<8x64xf32>
    %311 = arith.truncf %310 : vector<8x64xf32> to vector<8x64xbf16>
    %c1_108 = arith.constant 1 : index
    %c0_109 = arith.constant 0 : index
    %c0_110 = arith.constant 0 : index
    %312 = vector.load %arg9[%c1_108, %c0_109, %c0_110] : memref<2x64x32xbf16, #tpu.memory_space<vmem>>, vector<1x64x32xbf16>
    %313 = vector.shape_cast %312 : vector<1x64x32xbf16> to vector<64x32xbf16>
    %cst_111 = arith.constant dense<0.000000e+00> : vector<8x32xf32>
    %314 = tpu.matmul %311, %313, %cst_111 {dimension_numbers = #tpu.dot_dimension_numbers<[1], [0], [0], [1], [0, 0, 1, 1], [], []>} : vector<8x64xbf16>, vector<64x32xbf16>, vector<8x32xf32> -> vector<8x32xf32>
    %c1_112 = arith.constant 1 : index
    %c0_113 = arith.constant 0 : index
    %c0_114 = arith.constant 0 : index
    %315 = vector.load %arg10[%c1_112, %c0_113, %c0_114] : memref<2x1x32xf32, #tpu.memory_space<vmem>>, vector<1x1x32xf32>
    %316 = vector.shape_cast %315 : vector<1x1x32xf32> to vector<1x32xf32>
    %317 = vector.broadcast %316 : vector<1x32xf32> to vector<8x32xf32>
    %318 = arith.addf %314, %317 : vector<8x32xf32>
    %319 = arith.addf %300, %318 : vector<8x32xf32>
    %320 = vector.extract_strided_slice %177 {offsets = [2, 0], sizes = [1, 32], strides = [1, 1]} : vector<4x32xf32> to vector<1x32xf32>
    %321 = vector.extract_strided_slice %177 {offsets = [3, 0], sizes = [1, 32], strides = [1, 1]} : vector<4x32xf32> to vector<1x32xf32>
    %cst_115 = arith.constant dense<0.000000e+00> : vector<8xf32>
    %322 = vector.multi_reduction <add>, %319, %cst_115 [1] : vector<8x32xf32> to vector<8xf32>
    %323 = vector.shape_cast %322 : vector<8xf32> to vector<8x1xf32>
    %cst_116 = arith.constant 3.200000e+01 : f32
    %324 = vector.broadcast %cst_116 : f32 to vector<8x1xf32>
    %325 = arith.divf %323, %324 : vector<8x1xf32>
    %326 = vector.broadcast %325 : vector<8x1xf32> to vector<8x32xf32>
    %327 = arith.subf %319, %326 : vector<8x32xf32>
    %328 = arith.mulf %327, %327 : vector<8x32xf32>
    %cst_117 = arith.constant dense<0.000000e+00> : vector<8xf32>
    %329 = vector.multi_reduction <add>, %328, %cst_117 [1] : vector<8x32xf32> to vector<8xf32>
    %330 = vector.shape_cast %329 : vector<8xf32> to vector<8x1xf32>
    %cst_118 = arith.constant 3.200000e+01 : f32
    %331 = vector.broadcast %cst_118 : f32 to vector<8x1xf32>
    %332 = arith.divf %330, %331 : vector<8x1xf32>
    %333 = vector.broadcast %325 : vector<8x1xf32> to vector<8x32xf32>
    %334 = arith.subf %319, %333 : vector<8x32xf32>
    %cst_119 = arith.constant 9.99999974E-6 : f32
    %335 = vector.broadcast %cst_119 : f32 to vector<8x1xf32>
    %336 = arith.addf %332, %335 : vector<8x1xf32>
    %337 = math.rsqrt %336 : vector<8x1xf32>
    %338 = vector.broadcast %337 : vector<8x1xf32> to vector<8x32xf32>
    %339 = arith.mulf %334, %338 : vector<8x32xf32>
    %340 = vector.broadcast %320 : vector<1x32xf32> to vector<8x32xf32>
    %341 = arith.mulf %339, %340 : vector<8x32xf32>
    %342 = vector.broadcast %321 : vector<1x32xf32> to vector<8x32xf32>
    %343 = arith.addf %341, %342 : vector<8x32xf32>
    %c0_120 = arith.constant 0 : index
    %c0_121 = arith.constant 0 : index
    %344 = vector.load %arg12[%c0_120, %c0_121] : memref<2x32xf32, #tpu.memory_space<vmem>>, vector<2x32xf32>
    %345 = vector.extract_strided_slice %344 {offsets = [0, 0], sizes = [1, 32], strides = [1, 1]} : vector<2x32xf32> to vector<1x32xf32>
    %346 = vector.extract_strided_slice %344 {offsets = [1, 0], sizes = [1, 32], strides = [1, 1]} : vector<2x32xf32> to vector<1x32xf32>
    %cst_122 = arith.constant dense<0.000000e+00> : vector<8xf32>
    %347 = vector.multi_reduction <add>, %343, %cst_122 [1] : vector<8x32xf32> to vector<8xf32>
    %348 = vector.shape_cast %347 : vector<8xf32> to vector<8x1xf32>
    %cst_123 = arith.constant 3.200000e+01 : f32
    %349 = vector.broadcast %cst_123 : f32 to vector<8x1xf32>
    %350 = arith.divf %348, %349 : vector<8x1xf32>
    %351 = vector.broadcast %350 : vector<8x1xf32> to vector<8x32xf32>
    %352 = arith.subf %343, %351 : vector<8x32xf32>
    %353 = arith.mulf %352, %352 : vector<8x32xf32>
    %cst_124 = arith.constant dense<0.000000e+00> : vector<8xf32>
    %354 = vector.multi_reduction <add>, %353, %cst_124 [1] : vector<8x32xf32> to vector<8xf32>
    %355 = vector.shape_cast %354 : vector<8xf32> to vector<8x1xf32>
    %cst_125 = arith.constant 3.200000e+01 : f32
    %356 = vector.broadcast %cst_125 : f32 to vector<8x1xf32>
    %357 = arith.divf %355, %356 : vector<8x1xf32>
    %358 = vector.broadcast %350 : vector<8x1xf32> to vector<8x32xf32>
    %359 = arith.subf %343, %358 : vector<8x32xf32>
    %cst_126 = arith.constant 9.99999974E-6 : f32
    %360 = vector.broadcast %cst_126 : f32 to vector<8x1xf32>
    %361 = arith.addf %357, %360 : vector<8x1xf32>
    %362 = math.rsqrt %361 : vector<8x1xf32>
    %363 = vector.broadcast %362 : vector<8x1xf32> to vector<8x32xf32>
    %364 = arith.mulf %359, %363 : vector<8x32xf32>
    %365 = vector.broadcast %345 : vector<1x32xf32> to vector<8x32xf32>
    %366 = arith.mulf %364, %365 : vector<8x32xf32>
    %367 = vector.broadcast %346 : vector<1x32xf32> to vector<8x32xf32>
    %368 = arith.addf %366, %367 : vector<8x32xf32>
    %369 = arith.truncf %368 : vector<8x32xf32> to vector<8x32xbf16>
    %c0_127 = arith.constant 0 : index
    %c0_128 = arith.constant 0 : index
    %c0_129 = arith.constant 0 : index
    %370 = vector.load %arg2[%c0_127, %c0_128, %c0_129] : memref<1x8x32xf32, #tpu.memory_space<vmem>>, vector<1x8x32xf32>
    %371 = vector.shape_cast %370 : vector<1x8x32xf32> to vector<8x32xf32>
    %c0_130 = arith.constant 0 : index
    %c0_131 = arith.constant 0 : index
    %c0_132 = arith.constant 0 : index
    %372 = vector.load %arg27[%c0_130, %c0_131, %c0_132] : memref<2x6x32xf32, #tpu.memory_space<vmem>>, vector<1x6x32xf32>
    %373 = vector.shape_cast %372 : vector<1x6x32xf32> to vector<6x32xf32>
    %374 = arith.truncf %371 : vector<8x32xf32> to vector<8x32xbf16>
    %c0_133 = arith.constant 0 : index
    %c0_134 = arith.constant 0 : index
    %c0_135 = arith.constant 0 : index
    %375 = vector.load %arg13[%c0_133, %c0_134, %c0_135] : memref<2x32x96xbf16, #tpu.memory_space<vmem>>, vector<1x32x96xbf16>
    %376 = vector.shape_cast %375 : vector<1x32x96xbf16> to vector<32x96xbf16>
    %cst_136 = arith.constant dense<0.000000e+00> : vector<8x96xf32>
    %377 = tpu.matmul %374, %376, %cst_136 {dimension_numbers = #tpu.dot_dimension_numbers<[1], [0], [0], [1], [0, 0, 1, 1], [], []>} : vector<8x32xbf16>, vector<32x96xbf16>, vector<8x96xf32> -> vector<8x96xf32>
    %c0_137 = arith.constant 0 : index
    %c0_138 = arith.constant 0 : index
    %c0_139 = arith.constant 0 : index
    %378 = vector.load %arg14[%c0_137, %c0_138, %c0_139] : memref<2x1x96xf32, #tpu.memory_space<vmem>>, vector<1x1x96xf32>
    %379 = vector.shape_cast %378 : vector<1x1x96xf32> to vector<1x96xf32>
    %380 = vector.broadcast %379 : vector<1x96xf32> to vector<8x96xf32>
    %381 = arith.addf %377, %380 : vector<8x96xf32>
    %382 = vector.extract_strided_slice %381 {offsets = [0, 0], sizes = [8, 32], strides = [1, 1]} : vector<8x96xf32> to vector<8x32xf32>
    %383 = vector.extract_strided_slice %381 {offsets = [0, 32], sizes = [8, 32], strides = [1, 1]} : vector<8x96xf32> to vector<8x32xf32>
    %384 = vector.extract_strided_slice %381 {offsets = [0, 64], sizes = [8, 32], strides = [1, 1]} : vector<8x96xf32> to vector<8x32xf32>
    %cst_140 = arith.constant 0.353553385 : f32
    %385 = vector.broadcast %cst_140 : f32 to vector<8x32xf32>
    %386 = arith.mulf %382, %385 : vector<8x32xf32>
    %387 = vector.extract_strided_slice %386 {offsets = [0, 0], sizes = [8, 8], strides = [1, 1]} : vector<8x32xf32> to vector<8x8xf32>
    %388 = arith.truncf %387 : vector<8x8xf32> to vector<8x8xbf16>
    %389 = vector.extract_strided_slice %383 {offsets = [0, 0], sizes = [8, 8], strides = [1, 1]} : vector<8x32xf32> to vector<8x8xf32>
    %390 = arith.truncf %389 : vector<8x8xf32> to vector<8x8xbf16>
    %391 = vector.extract_strided_slice %384 {offsets = [0, 0], sizes = [8, 8], strides = [1, 1]} : vector<8x32xf32> to vector<8x8xf32>
    %392 = arith.truncf %391 : vector<8x8xf32> to vector<8x8xbf16>
    %cst_141 = arith.constant dense<0.000000e+00> : vector<8x8xf32>
    %393 = tpu.matmul %388, %390, %cst_141 {dimension_numbers = #tpu.dot_dimension_numbers<[1], [1], [0], [0], [0, 0, 1, 0], [], []>} : vector<8x8xbf16>, vector<8x8xbf16>, vector<8x8xf32> -> vector<8x8xf32>
    %394 = arith.addf %393, %5 : vector<8x8xf32>
    %cst_142 = arith.constant dense<0xFF800000> : vector<8xf32>
    %395 = vector.multi_reduction <maximumf>, %394, %cst_142 [1] : vector<8x8xf32> to vector<8xf32>
    %396 = vector.shape_cast %395 : vector<8xf32> to vector<8x1xf32>
    %397 = vector.broadcast %396 : vector<8x1xf32> to vector<8x8xf32>
    %398 = arith.subf %394, %397 : vector<8x8xf32>
    %399 = math.exp %398 : vector<8x8xf32>
    %cst_143 = arith.constant dense<0.000000e+00> : vector<8xf32>
    %400 = vector.multi_reduction <add>, %399, %cst_143 [1] : vector<8x8xf32> to vector<8xf32>
    %401 = vector.shape_cast %400 : vector<8xf32> to vector<8x1xf32>
    %402 = tpu.reciprocal %401 {approx = true} : vector<8x1xf32> -> vector<8x1xf32>
    %403 = vector.broadcast %402 : vector<8x1xf32> to vector<8x8xf32>
    %404 = arith.mulf %399, %403 : vector<8x8xf32>
    %405 = arith.truncf %404 : vector<8x8xf32> to vector<8x8xbf16>
    %cst_144 = arith.constant dense<0.000000e+00> : vector<8x8xf32>
    %406 = tpu.matmul %405, %392, %cst_144 {dimension_numbers = #tpu.dot_dimension_numbers<[1], [0], [0], [1], [0, 0, 1, 1], [], []>} : vector<8x8xbf16>, vector<8x8xbf16>, vector<8x8xf32> -> vector<8x8xf32>
    %407 = vector.extract_strided_slice %386 {offsets = [0, 8], sizes = [8, 8], strides = [1, 1]} : vector<8x32xf32> to vector<8x8xf32>
    %408 = arith.truncf %407 : vector<8x8xf32> to vector<8x8xbf16>
    %409 = vector.extract_strided_slice %383 {offsets = [0, 8], sizes = [8, 8], strides = [1, 1]} : vector<8x32xf32> to vector<8x8xf32>
    %410 = arith.truncf %409 : vector<8x8xf32> to vector<8x8xbf16>
    %411 = vector.extract_strided_slice %384 {offsets = [0, 8], sizes = [8, 8], strides = [1, 1]} : vector<8x32xf32> to vector<8x8xf32>
    %412 = arith.truncf %411 : vector<8x8xf32> to vector<8x8xbf16>
    %cst_145 = arith.constant dense<0.000000e+00> : vector<8x8xf32>
    %413 = tpu.matmul %408, %410, %cst_145 {dimension_numbers = #tpu.dot_dimension_numbers<[1], [1], [0], [0], [0, 0, 1, 0], [], []>} : vector<8x8xbf16>, vector<8x8xbf16>, vector<8x8xf32> -> vector<8x8xf32>
    %414 = arith.addf %413, %5 : vector<8x8xf32>
    %cst_146 = arith.constant dense<0xFF800000> : vector<8xf32>
    %415 = vector.multi_reduction <maximumf>, %414, %cst_146 [1] : vector<8x8xf32> to vector<8xf32>
    %416 = vector.shape_cast %415 : vector<8xf32> to vector<8x1xf32>
    %417 = vector.broadcast %416 : vector<8x1xf32> to vector<8x8xf32>
    %418 = arith.subf %414, %417 : vector<8x8xf32>
    %419 = math.exp %418 : vector<8x8xf32>
    %cst_147 = arith.constant dense<0.000000e+00> : vector<8xf32>
    %420 = vector.multi_reduction <add>, %419, %cst_147 [1] : vector<8x8xf32> to vector<8xf32>
    %421 = vector.shape_cast %420 : vector<8xf32> to vector<8x1xf32>
    %422 = tpu.reciprocal %421 {approx = true} : vector<8x1xf32> -> vector<8x1xf32>
    %423 = vector.broadcast %422 : vector<8x1xf32> to vector<8x8xf32>
    %424 = arith.mulf %419, %423 : vector<8x8xf32>
    %425 = arith.truncf %424 : vector<8x8xf32> to vector<8x8xbf16>
    %cst_148 = arith.constant dense<0.000000e+00> : vector<8x8xf32>
    %426 = tpu.matmul %425, %412, %cst_148 {dimension_numbers = #tpu.dot_dimension_numbers<[1], [0], [0], [1], [0, 0, 1, 1], [], []>} : vector<8x8xbf16>, vector<8x8xbf16>, vector<8x8xf32> -> vector<8x8xf32>
    %427 = vector.extract_strided_slice %386 {offsets = [0, 16], sizes = [8, 8], strides = [1, 1]} : vector<8x32xf32> to vector<8x8xf32>
    %428 = arith.truncf %427 : vector<8x8xf32> to vector<8x8xbf16>
    %429 = vector.extract_strided_slice %383 {offsets = [0, 16], sizes = [8, 8], strides = [1, 1]} : vector<8x32xf32> to vector<8x8xf32>
    %430 = arith.truncf %429 : vector<8x8xf32> to vector<8x8xbf16>
    %431 = vector.extract_strided_slice %384 {offsets = [0, 16], sizes = [8, 8], strides = [1, 1]} : vector<8x32xf32> to vector<8x8xf32>
    %432 = arith.truncf %431 : vector<8x8xf32> to vector<8x8xbf16>
    %cst_149 = arith.constant dense<0.000000e+00> : vector<8x8xf32>
    %433 = tpu.matmul %428, %430, %cst_149 {dimension_numbers = #tpu.dot_dimension_numbers<[1], [1], [0], [0], [0, 0, 1, 0], [], []>} : vector<8x8xbf16>, vector<8x8xbf16>, vector<8x8xf32> -> vector<8x8xf32>
    %434 = arith.addf %433, %5 : vector<8x8xf32>
    %cst_150 = arith.constant dense<0xFF800000> : vector<8xf32>
    %435 = vector.multi_reduction <maximumf>, %434, %cst_150 [1] : vector<8x8xf32> to vector<8xf32>
    %436 = vector.shape_cast %435 : vector<8xf32> to vector<8x1xf32>
    %437 = vector.broadcast %436 : vector<8x1xf32> to vector<8x8xf32>
    %438 = arith.subf %434, %437 : vector<8x8xf32>
    %439 = math.exp %438 : vector<8x8xf32>
    %cst_151 = arith.constant dense<0.000000e+00> : vector<8xf32>
    %440 = vector.multi_reduction <add>, %439, %cst_151 [1] : vector<8x8xf32> to vector<8xf32>
    %441 = vector.shape_cast %440 : vector<8xf32> to vector<8x1xf32>
    %442 = tpu.reciprocal %441 {approx = true} : vector<8x1xf32> -> vector<8x1xf32>
    %443 = vector.broadcast %442 : vector<8x1xf32> to vector<8x8xf32>
    %444 = arith.mulf %439, %443 : vector<8x8xf32>
    %445 = arith.truncf %444 : vector<8x8xf32> to vector<8x8xbf16>
    %cst_152 = arith.constant dense<0.000000e+00> : vector<8x8xf32>
    %446 = tpu.matmul %445, %432, %cst_152 {dimension_numbers = #tpu.dot_dimension_numbers<[1], [0], [0], [1], [0, 0, 1, 1], [], []>} : vector<8x8xbf16>, vector<8x8xbf16>, vector<8x8xf32> -> vector<8x8xf32>
    %447 = vector.extract_strided_slice %386 {offsets = [0, 24], sizes = [8, 8], strides = [1, 1]} : vector<8x32xf32> to vector<8x8xf32>
    %448 = arith.truncf %447 : vector<8x8xf32> to vector<8x8xbf16>
    %449 = vector.extract_strided_slice %383 {offsets = [0, 24], sizes = [8, 8], strides = [1, 1]} : vector<8x32xf32> to vector<8x8xf32>
    %450 = arith.truncf %449 : vector<8x8xf32> to vector<8x8xbf16>
    %451 = vector.extract_strided_slice %384 {offsets = [0, 24], sizes = [8, 8], strides = [1, 1]} : vector<8x32xf32> to vector<8x8xf32>
    %452 = arith.truncf %451 : vector<8x8xf32> to vector<8x8xbf16>
    %cst_153 = arith.constant dense<0.000000e+00> : vector<8x8xf32>
    %453 = tpu.matmul %448, %450, %cst_153 {dimension_numbers = #tpu.dot_dimension_numbers<[1], [1], [0], [0], [0, 0, 1, 0], [], []>} : vector<8x8xbf16>, vector<8x8xbf16>, vector<8x8xf32> -> vector<8x8xf32>
    %454 = arith.addf %453, %5 : vector<8x8xf32>
    %cst_154 = arith.constant dense<0xFF800000> : vector<8xf32>
    %455 = vector.multi_reduction <maximumf>, %454, %cst_154 [1] : vector<8x8xf32> to vector<8xf32>
    %456 = vector.shape_cast %455 : vector<8xf32> to vector<8x1xf32>
    %457 = vector.broadcast %456 : vector<8x1xf32> to vector<8x8xf32>
    %458 = arith.subf %454, %457 : vector<8x8xf32>
    %459 = math.exp %458 : vector<8x8xf32>
    %cst_155 = arith.constant dense<0.000000e+00> : vector<8xf32>
    %460 = vector.multi_reduction <add>, %459, %cst_155 [1] : vector<8x8xf32> to vector<8xf32>
    %461 = vector.shape_cast %460 : vector<8xf32> to vector<8x1xf32>
    %462 = tpu.reciprocal %461 {approx = true} : vector<8x1xf32> -> vector<8x1xf32>
    %463 = vector.broadcast %462 : vector<8x1xf32> to vector<8x8xf32>
    %464 = arith.mulf %459, %463 : vector<8x8xf32>
    %465 = arith.truncf %464 : vector<8x8xf32> to vector<8x8xbf16>
    %cst_156 = arith.constant dense<0.000000e+00> : vector<8x8xf32>
    %466 = tpu.matmul %465, %452, %cst_156 {dimension_numbers = #tpu.dot_dimension_numbers<[1], [0], [0], [1], [0, 0, 1, 1], [], []>} : vector<8x8xbf16>, vector<8x8xbf16>, vector<8x8xf32> -> vector<8x8xf32>
    %467 = tpu.concatenate %406, %426, %446, %466 in 1 : vector<8x8xf32>, vector<8x8xf32>, vector<8x8xf32>, vector<8x8xf32> -> vector<8x32xf32>
    %468 = arith.truncf %467 : vector<8x32xf32> to vector<8x32xbf16>
    %c0_157 = arith.constant 0 : index
    %c0_158 = arith.constant 0 : index
    %c0_159 = arith.constant 0 : index
    %469 = vector.load %arg15[%c0_157, %c0_158, %c0_159] : memref<2x32x32xbf16, #tpu.memory_space<vmem>>, vector<1x32x32xbf16>
    %470 = vector.shape_cast %469 : vector<1x32x32xbf16> to vector<32x32xbf16>
    %cst_160 = arith.constant dense<0.000000e+00> : vector<8x32xf32>
    %471 = tpu.matmul %468, %470, %cst_160 {dimension_numbers = #tpu.dot_dimension_numbers<[1], [0], [0], [1], [0, 0, 1, 1], [], []>} : vector<8x32xbf16>, vector<32x32xbf16>, vector<8x32xf32> -> vector<8x32xf32>
    %c0_161 = arith.constant 0 : index
    %c0_162 = arith.constant 0 : index
    %c0_163 = arith.constant 0 : index
    %472 = vector.load %arg16[%c0_161, %c0_162, %c0_163] : memref<2x1x32xf32, #tpu.memory_space<vmem>>, vector<1x1x32xf32>
    %473 = vector.shape_cast %472 : vector<1x1x32xf32> to vector<1x32xf32>
    %474 = vector.broadcast %473 : vector<1x32xf32> to vector<8x32xf32>
    %475 = arith.addf %471, %474 : vector<8x32xf32>
    %476 = arith.addf %371, %475 : vector<8x32xf32>
    %477 = vector.extract_strided_slice %373 {offsets = [0, 0], sizes = [1, 32], strides = [1, 1]} : vector<6x32xf32> to vector<1x32xf32>
    %478 = vector.extract_strided_slice %373 {offsets = [1, 0], sizes = [1, 32], strides = [1, 1]} : vector<6x32xf32> to vector<1x32xf32>
    %cst_164 = arith.constant dense<0.000000e+00> : vector<8xf32>
    %479 = vector.multi_reduction <add>, %476, %cst_164 [1] : vector<8x32xf32> to vector<8xf32>
    %480 = vector.shape_cast %479 : vector<8xf32> to vector<8x1xf32>
    %cst_165 = arith.constant 3.200000e+01 : f32
    %481 = vector.broadcast %cst_165 : f32 to vector<8x1xf32>
    %482 = arith.divf %480, %481 : vector<8x1xf32>
    %483 = vector.broadcast %482 : vector<8x1xf32> to vector<8x32xf32>
    %484 = arith.subf %476, %483 : vector<8x32xf32>
    %485 = arith.mulf %484, %484 : vector<8x32xf32>
    %cst_166 = arith.constant dense<0.000000e+00> : vector<8xf32>
    %486 = vector.multi_reduction <add>, %485, %cst_166 [1] : vector<8x32xf32> to vector<8xf32>
    %487 = vector.shape_cast %486 : vector<8xf32> to vector<8x1xf32>
    %cst_167 = arith.constant 3.200000e+01 : f32
    %488 = vector.broadcast %cst_167 : f32 to vector<8x1xf32>
    %489 = arith.divf %487, %488 : vector<8x1xf32>
    %490 = vector.broadcast %482 : vector<8x1xf32> to vector<8x32xf32>
    %491 = arith.subf %476, %490 : vector<8x32xf32>
    %cst_168 = arith.constant 9.99999974E-6 : f32
    %492 = vector.broadcast %cst_168 : f32 to vector<8x1xf32>
    %493 = arith.addf %489, %492 : vector<8x1xf32>
    %494 = math.rsqrt %493 : vector<8x1xf32>
    %495 = vector.broadcast %494 : vector<8x1xf32> to vector<8x32xf32>
    %496 = arith.mulf %491, %495 : vector<8x32xf32>
    %497 = vector.broadcast %477 : vector<1x32xf32> to vector<8x32xf32>
    %498 = arith.mulf %496, %497 : vector<8x32xf32>
    %499 = vector.broadcast %478 : vector<1x32xf32> to vector<8x32xf32>
    %500 = arith.addf %498, %499 : vector<8x32xf32>
    %501 = arith.truncf %500 : vector<8x32xf32> to vector<8x32xbf16>
    %c0_169 = arith.constant 0 : index
    %c0_170 = arith.constant 0 : index
    %c0_171 = arith.constant 0 : index
    %502 = vector.load %arg17[%c0_169, %c0_170, %c0_171] : memref<2x32x32xbf16, #tpu.memory_space<vmem>>, vector<1x32x32xbf16>
    %503 = vector.shape_cast %502 : vector<1x32x32xbf16> to vector<32x32xbf16>
    %cst_172 = arith.constant dense<0.000000e+00> : vector<8x32xf32>
    %504 = tpu.matmul %501, %503, %cst_172 {dimension_numbers = #tpu.dot_dimension_numbers<[1], [0], [0], [1], [0, 0, 1, 1], [], []>} : vector<8x32xbf16>, vector<32x32xbf16>, vector<8x32xf32> -> vector<8x32xf32>
    %c0_173 = arith.constant 0 : index
    %c0_174 = arith.constant 0 : index
    %c0_175 = arith.constant 0 : index
    %505 = vector.load %arg18[%c0_173, %c0_174, %c0_175] : memref<2x1x32xf32, #tpu.memory_space<vmem>>, vector<1x1x32xf32>
    %506 = vector.shape_cast %505 : vector<1x1x32xf32> to vector<1x32xf32>
    %507 = vector.broadcast %506 : vector<1x32xf32> to vector<8x32xf32>
    %508 = arith.addf %504, %507 : vector<8x32xf32>
    %c0_176 = arith.constant 0 : index
    %c0_177 = arith.constant 0 : index
    %c0_178 = arith.constant 0 : index
    %509 = vector.load %arg19[%c0_176, %c0_177, %c0_178] : memref<2x32x64xbf16, #tpu.memory_space<vmem>>, vector<1x32x64xbf16>
    %510 = vector.shape_cast %509 : vector<1x32x64xbf16> to vector<32x64xbf16>
    %cst_179 = arith.constant dense<0.000000e+00> : vector<8x64xf32>
    %511 = tpu.matmul %369, %510, %cst_179 {dimension_numbers = #tpu.dot_dimension_numbers<[1], [0], [0], [1], [0, 0, 1, 1], [], []>} : vector<8x32xbf16>, vector<32x64xbf16>, vector<8x64xf32> -> vector<8x64xf32>
    %c0_180 = arith.constant 0 : index
    %c0_181 = arith.constant 0 : index
    %c0_182 = arith.constant 0 : index
    %512 = vector.load %arg20[%c0_180, %c0_181, %c0_182] : memref<2x1x64xf32, #tpu.memory_space<vmem>>, vector<1x1x64xf32>
    %513 = vector.shape_cast %512 : vector<1x1x64xf32> to vector<1x64xf32>
    %514 = vector.broadcast %513 : vector<1x64xf32> to vector<8x64xf32>
    %515 = arith.addf %511, %514 : vector<8x64xf32>
    %516 = vector.extract_strided_slice %515 {offsets = [0, 0], sizes = [8, 32], strides = [1, 1]} : vector<8x64xf32> to vector<8x32xf32>
    %517 = vector.extract_strided_slice %515 {offsets = [0, 32], sizes = [8, 32], strides = [1, 1]} : vector<8x64xf32> to vector<8x32xf32>
    %cst_183 = arith.constant 0.353553385 : f32
    %518 = vector.broadcast %cst_183 : f32 to vector<8x32xf32>
    %519 = arith.mulf %508, %518 : vector<8x32xf32>
    %520 = vector.extract_strided_slice %519 {offsets = [0, 0], sizes = [8, 8], strides = [1, 1]} : vector<8x32xf32> to vector<8x8xf32>
    %521 = arith.truncf %520 : vector<8x8xf32> to vector<8x8xbf16>
    %522 = vector.extract_strided_slice %516 {offsets = [0, 0], sizes = [8, 8], strides = [1, 1]} : vector<8x32xf32> to vector<8x8xf32>
    %523 = arith.truncf %522 : vector<8x8xf32> to vector<8x8xbf16>
    %524 = vector.extract_strided_slice %517 {offsets = [0, 0], sizes = [8, 8], strides = [1, 1]} : vector<8x32xf32> to vector<8x8xf32>
    %525 = arith.truncf %524 : vector<8x8xf32> to vector<8x8xbf16>
    %cst_184 = arith.constant dense<0.000000e+00> : vector<8x8xf32>
    %526 = tpu.matmul %521, %523, %cst_184 {dimension_numbers = #tpu.dot_dimension_numbers<[1], [1], [0], [0], [0, 0, 1, 0], [], []>} : vector<8x8xbf16>, vector<8x8xbf16>, vector<8x8xf32> -> vector<8x8xf32>
    %cst_185 = arith.constant dense<0xFF800000> : vector<8xf32>
    %527 = vector.multi_reduction <maximumf>, %526, %cst_185 [1] : vector<8x8xf32> to vector<8xf32>
    %528 = vector.shape_cast %527 : vector<8xf32> to vector<8x1xf32>
    %529 = vector.broadcast %528 : vector<8x1xf32> to vector<8x8xf32>
    %530 = arith.subf %526, %529 : vector<8x8xf32>
    %531 = math.exp %530 : vector<8x8xf32>
    %cst_186 = arith.constant dense<0.000000e+00> : vector<8xf32>
    %532 = vector.multi_reduction <add>, %531, %cst_186 [1] : vector<8x8xf32> to vector<8xf32>
    %533 = vector.shape_cast %532 : vector<8xf32> to vector<8x1xf32>
    %534 = tpu.reciprocal %533 {approx = true} : vector<8x1xf32> -> vector<8x1xf32>
    %535 = vector.broadcast %534 : vector<8x1xf32> to vector<8x8xf32>
    %536 = arith.mulf %531, %535 : vector<8x8xf32>
    %537 = arith.truncf %536 : vector<8x8xf32> to vector<8x8xbf16>
    %cst_187 = arith.constant dense<0.000000e+00> : vector<8x8xf32>
    %538 = tpu.matmul %537, %525, %cst_187 {dimension_numbers = #tpu.dot_dimension_numbers<[1], [0], [0], [1], [0, 0, 1, 1], [], []>} : vector<8x8xbf16>, vector<8x8xbf16>, vector<8x8xf32> -> vector<8x8xf32>
    %539 = vector.extract_strided_slice %519 {offsets = [0, 8], sizes = [8, 8], strides = [1, 1]} : vector<8x32xf32> to vector<8x8xf32>
    %540 = arith.truncf %539 : vector<8x8xf32> to vector<8x8xbf16>
    %541 = vector.extract_strided_slice %516 {offsets = [0, 8], sizes = [8, 8], strides = [1, 1]} : vector<8x32xf32> to vector<8x8xf32>
    %542 = arith.truncf %541 : vector<8x8xf32> to vector<8x8xbf16>
    %543 = vector.extract_strided_slice %517 {offsets = [0, 8], sizes = [8, 8], strides = [1, 1]} : vector<8x32xf32> to vector<8x8xf32>
    %544 = arith.truncf %543 : vector<8x8xf32> to vector<8x8xbf16>
    %cst_188 = arith.constant dense<0.000000e+00> : vector<8x8xf32>
    %545 = tpu.matmul %540, %542, %cst_188 {dimension_numbers = #tpu.dot_dimension_numbers<[1], [1], [0], [0], [0, 0, 1, 0], [], []>} : vector<8x8xbf16>, vector<8x8xbf16>, vector<8x8xf32> -> vector<8x8xf32>
    %cst_189 = arith.constant dense<0xFF800000> : vector<8xf32>
    %546 = vector.multi_reduction <maximumf>, %545, %cst_189 [1] : vector<8x8xf32> to vector<8xf32>
    %547 = vector.shape_cast %546 : vector<8xf32> to vector<8x1xf32>
    %548 = vector.broadcast %547 : vector<8x1xf32> to vector<8x8xf32>
    %549 = arith.subf %545, %548 : vector<8x8xf32>
    %550 = math.exp %549 : vector<8x8xf32>
    %cst_190 = arith.constant dense<0.000000e+00> : vector<8xf32>
    %551 = vector.multi_reduction <add>, %550, %cst_190 [1] : vector<8x8xf32> to vector<8xf32>
    %552 = vector.shape_cast %551 : vector<8xf32> to vector<8x1xf32>
    %553 = tpu.reciprocal %552 {approx = true} : vector<8x1xf32> -> vector<8x1xf32>
    %554 = vector.broadcast %553 : vector<8x1xf32> to vector<8x8xf32>
    %555 = arith.mulf %550, %554 : vector<8x8xf32>
    %556 = arith.truncf %555 : vector<8x8xf32> to vector<8x8xbf16>
    %cst_191 = arith.constant dense<0.000000e+00> : vector<8x8xf32>
    %557 = tpu.matmul %556, %544, %cst_191 {dimension_numbers = #tpu.dot_dimension_numbers<[1], [0], [0], [1], [0, 0, 1, 1], [], []>} : vector<8x8xbf16>, vector<8x8xbf16>, vector<8x8xf32> -> vector<8x8xf32>
    %558 = vector.extract_strided_slice %519 {offsets = [0, 16], sizes = [8, 8], strides = [1, 1]} : vector<8x32xf32> to vector<8x8xf32>
    %559 = arith.truncf %558 : vector<8x8xf32> to vector<8x8xbf16>
    %560 = vector.extract_strided_slice %516 {offsets = [0, 16], sizes = [8, 8], strides = [1, 1]} : vector<8x32xf32> to vector<8x8xf32>
    %561 = arith.truncf %560 : vector<8x8xf32> to vector<8x8xbf16>
    %562 = vector.extract_strided_slice %517 {offsets = [0, 16], sizes = [8, 8], strides = [1, 1]} : vector<8x32xf32> to vector<8x8xf32>
    %563 = arith.truncf %562 : vector<8x8xf32> to vector<8x8xbf16>
    %cst_192 = arith.constant dense<0.000000e+00> : vector<8x8xf32>
    %564 = tpu.matmul %559, %561, %cst_192 {dimension_numbers = #tpu.dot_dimension_numbers<[1], [1], [0], [0], [0, 0, 1, 0], [], []>} : vector<8x8xbf16>, vector<8x8xbf16>, vector<8x8xf32> -> vector<8x8xf32>
    %cst_193 = arith.constant dense<0xFF800000> : vector<8xf32>
    %565 = vector.multi_reduction <maximumf>, %564, %cst_193 [1] : vector<8x8xf32> to vector<8xf32>
    %566 = vector.shape_cast %565 : vector<8xf32> to vector<8x1xf32>
    %567 = vector.broadcast %566 : vector<8x1xf32> to vector<8x8xf32>
    %568 = arith.subf %564, %567 : vector<8x8xf32>
    %569 = math.exp %568 : vector<8x8xf32>
    %cst_194 = arith.constant dense<0.000000e+00> : vector<8xf32>
    %570 = vector.multi_reduction <add>, %569, %cst_194 [1] : vector<8x8xf32> to vector<8xf32>
    %571 = vector.shape_cast %570 : vector<8xf32> to vector<8x1xf32>
    %572 = tpu.reciprocal %571 {approx = true} : vector<8x1xf32> -> vector<8x1xf32>
    %573 = vector.broadcast %572 : vector<8x1xf32> to vector<8x8xf32>
    %574 = arith.mulf %569, %573 : vector<8x8xf32>
    %575 = arith.truncf %574 : vector<8x8xf32> to vector<8x8xbf16>
    %cst_195 = arith.constant dense<0.000000e+00> : vector<8x8xf32>
    %576 = tpu.matmul %575, %563, %cst_195 {dimension_numbers = #tpu.dot_dimension_numbers<[1], [0], [0], [1], [0, 0, 1, 1], [], []>} : vector<8x8xbf16>, vector<8x8xbf16>, vector<8x8xf32> -> vector<8x8xf32>
    %577 = vector.extract_strided_slice %519 {offsets = [0, 24], sizes = [8, 8], strides = [1, 1]} : vector<8x32xf32> to vector<8x8xf32>
    %578 = arith.truncf %577 : vector<8x8xf32> to vector<8x8xbf16>
    %579 = vector.extract_strided_slice %516 {offsets = [0, 24], sizes = [8, 8], strides = [1, 1]} : vector<8x32xf32> to vector<8x8xf32>
    %580 = arith.truncf %579 : vector<8x8xf32> to vector<8x8xbf16>
    %581 = vector.extract_strided_slice %517 {offsets = [0, 24], sizes = [8, 8], strides = [1, 1]} : vector<8x32xf32> to vector<8x8xf32>
    %582 = arith.truncf %581 : vector<8x8xf32> to vector<8x8xbf16>
    %cst_196 = arith.constant dense<0.000000e+00> : vector<8x8xf32>
    %583 = tpu.matmul %578, %580, %cst_196 {dimension_numbers = #tpu.dot_dimension_numbers<[1], [1], [0], [0], [0, 0, 1, 0], [], []>} : vector<8x8xbf16>, vector<8x8xbf16>, vector<8x8xf32> -> vector<8x8xf32>
    %cst_197 = arith.constant dense<0xFF800000> : vector<8xf32>
    %584 = vector.multi_reduction <maximumf>, %583, %cst_197 [1] : vector<8x8xf32> to vector<8xf32>
    %585 = vector.shape_cast %584 : vector<8xf32> to vector<8x1xf32>
    %586 = vector.broadcast %585 : vector<8x1xf32> to vector<8x8xf32>
    %587 = arith.subf %583, %586 : vector<8x8xf32>
    %588 = math.exp %587 : vector<8x8xf32>
    %cst_198 = arith.constant dense<0.000000e+00> : vector<8xf32>
    %589 = vector.multi_reduction <add>, %588, %cst_198 [1] : vector<8x8xf32> to vector<8xf32>
    %590 = vector.shape_cast %589 : vector<8xf32> to vector<8x1xf32>
    %591 = tpu.reciprocal %590 {approx = true} : vector<8x1xf32> -> vector<8x1xf32>
    %592 = vector.broadcast %591 : vector<8x1xf32> to vector<8x8xf32>
    %593 = arith.mulf %588, %592 : vector<8x8xf32>
    %594 = arith.truncf %593 : vector<8x8xf32> to vector<8x8xbf16>
    %cst_199 = arith.constant dense<0.000000e+00> : vector<8x8xf32>
    %595 = tpu.matmul %594, %582, %cst_199 {dimension_numbers = #tpu.dot_dimension_numbers<[1], [0], [0], [1], [0, 0, 1, 1], [], []>} : vector<8x8xbf16>, vector<8x8xbf16>, vector<8x8xf32> -> vector<8x8xf32>
    %596 = tpu.concatenate %538, %557, %576, %595 in 1 : vector<8x8xf32>, vector<8x8xf32>, vector<8x8xf32>, vector<8x8xf32> -> vector<8x32xf32>
    %597 = arith.truncf %596 : vector<8x32xf32> to vector<8x32xbf16>
    %c0_200 = arith.constant 0 : index
    %c0_201 = arith.constant 0 : index
    %c0_202 = arith.constant 0 : index
    %598 = vector.load %arg21[%c0_200, %c0_201, %c0_202] : memref<2x32x32xbf16, #tpu.memory_space<vmem>>, vector<1x32x32xbf16>
    %599 = vector.shape_cast %598 : vector<1x32x32xbf16> to vector<32x32xbf16>
    %cst_203 = arith.constant dense<0.000000e+00> : vector<8x32xf32>
    %600 = tpu.matmul %597, %599, %cst_203 {dimension_numbers = #tpu.dot_dimension_numbers<[1], [0], [0], [1], [0, 0, 1, 1], [], []>} : vector<8x32xbf16>, vector<32x32xbf16>, vector<8x32xf32> -> vector<8x32xf32>
    %c0_204 = arith.constant 0 : index
    %c0_205 = arith.constant 0 : index
    %c0_206 = arith.constant 0 : index
    %601 = vector.load %arg22[%c0_204, %c0_205, %c0_206] : memref<2x1x32xf32, #tpu.memory_space<vmem>>, vector<1x1x32xf32>
    %602 = vector.shape_cast %601 : vector<1x1x32xf32> to vector<1x32xf32>
    %603 = vector.broadcast %602 : vector<1x32xf32> to vector<8x32xf32>
    %604 = arith.addf %600, %603 : vector<8x32xf32>
    %605 = arith.addf %500, %604 : vector<8x32xf32>
    %606 = vector.extract_strided_slice %373 {offsets = [2, 0], sizes = [1, 32], strides = [1, 1]} : vector<6x32xf32> to vector<1x32xf32>
    %607 = vector.extract_strided_slice %373 {offsets = [3, 0], sizes = [1, 32], strides = [1, 1]} : vector<6x32xf32> to vector<1x32xf32>
    %cst_207 = arith.constant dense<0.000000e+00> : vector<8xf32>
    %608 = vector.multi_reduction <add>, %605, %cst_207 [1] : vector<8x32xf32> to vector<8xf32>
    %609 = vector.shape_cast %608 : vector<8xf32> to vector<8x1xf32>
    %cst_208 = arith.constant 3.200000e+01 : f32
    %610 = vector.broadcast %cst_208 : f32 to vector<8x1xf32>
    %611 = arith.divf %609, %610 : vector<8x1xf32>
    %612 = vector.broadcast %611 : vector<8x1xf32> to vector<8x32xf32>
    %613 = arith.subf %605, %612 : vector<8x32xf32>
    %614 = arith.mulf %613, %613 : vector<8x32xf32>
    %cst_209 = arith.constant dense<0.000000e+00> : vector<8xf32>
    %615 = vector.multi_reduction <add>, %614, %cst_209 [1] : vector<8x32xf32> to vector<8xf32>
    %616 = vector.shape_cast %615 : vector<8xf32> to vector<8x1xf32>
    %cst_210 = arith.constant 3.200000e+01 : f32
    %617 = vector.broadcast %cst_210 : f32 to vector<8x1xf32>
    %618 = arith.divf %616, %617 : vector<8x1xf32>
    %619 = vector.broadcast %611 : vector<8x1xf32> to vector<8x32xf32>
    %620 = arith.subf %605, %619 : vector<8x32xf32>
    %cst_211 = arith.constant 9.99999974E-6 : f32
    %621 = vector.broadcast %cst_211 : f32 to vector<8x1xf32>
    %622 = arith.addf %618, %621 : vector<8x1xf32>
    %623 = math.rsqrt %622 : vector<8x1xf32>
    %624 = vector.broadcast %623 : vector<8x1xf32> to vector<8x32xf32>
    %625 = arith.mulf %620, %624 : vector<8x32xf32>
    %626 = vector.broadcast %606 : vector<1x32xf32> to vector<8x32xf32>
    %627 = arith.mulf %625, %626 : vector<8x32xf32>
    %628 = vector.broadcast %607 : vector<1x32xf32> to vector<8x32xf32>
    %629 = arith.addf %627, %628 : vector<8x32xf32>
    %630 = arith.truncf %629 : vector<8x32xf32> to vector<8x32xbf16>
    %c0_212 = arith.constant 0 : index
    %c0_213 = arith.constant 0 : index
    %c0_214 = arith.constant 0 : index
    %631 = vector.load %arg23[%c0_212, %c0_213, %c0_214] : memref<2x32x64xbf16, #tpu.memory_space<vmem>>, vector<1x32x64xbf16>
    %632 = vector.shape_cast %631 : vector<1x32x64xbf16> to vector<32x64xbf16>
    %cst_215 = arith.constant dense<0.000000e+00> : vector<8x64xf32>
    %633 = tpu.matmul %630, %632, %cst_215 {dimension_numbers = #tpu.dot_dimension_numbers<[1], [0], [0], [1], [0, 0, 1, 1], [], []>} : vector<8x32xbf16>, vector<32x64xbf16>, vector<8x64xf32> -> vector<8x64xf32>
    %c0_216 = arith.constant 0 : index
    %c0_217 = arith.constant 0 : index
    %c0_218 = arith.constant 0 : index
    %634 = vector.load %arg24[%c0_216, %c0_217, %c0_218] : memref<2x1x64xf32, #tpu.memory_space<vmem>>, vector<1x1x64xf32>
    %635 = vector.shape_cast %634 : vector<1x1x64xf32> to vector<1x64xf32>
    %636 = vector.broadcast %635 : vector<1x64xf32> to vector<8x64xf32>
    %637 = arith.addf %633, %636 : vector<8x64xf32>
    %cst_219 = arith.constant 0.000000e+00 : f32
    %638 = vector.broadcast %cst_219 : f32 to vector<8x64xf32>
    %639 = arith.maximumf %637, %638 : vector<8x64xf32>
    %640 = arith.truncf %639 : vector<8x64xf32> to vector<8x64xbf16>
    %c0_220 = arith.constant 0 : index
    %c0_221 = arith.constant 0 : index
    %c0_222 = arith.constant 0 : index
    %641 = vector.load %arg25[%c0_220, %c0_221, %c0_222] : memref<2x64x32xbf16, #tpu.memory_space<vmem>>, vector<1x64x32xbf16>
    %642 = vector.shape_cast %641 : vector<1x64x32xbf16> to vector<64x32xbf16>
    %cst_223 = arith.constant dense<0.000000e+00> : vector<8x32xf32>
    %643 = tpu.matmul %640, %642, %cst_223 {dimension_numbers = #tpu.dot_dimension_numbers<[1], [0], [0], [1], [0, 0, 1, 1], [], []>} : vector<8x64xbf16>, vector<64x32xbf16>, vector<8x32xf32> -> vector<8x32xf32>
    %c0_224 = arith.constant 0 : index
    %c0_225 = arith.constant 0 : index
    %c0_226 = arith.constant 0 : index
    %644 = vector.load %arg26[%c0_224, %c0_225, %c0_226] : memref<2x1x32xf32, #tpu.memory_space<vmem>>, vector<1x1x32xf32>
    %645 = vector.shape_cast %644 : vector<1x1x32xf32> to vector<1x32xf32>
    %646 = vector.broadcast %645 : vector<1x32xf32> to vector<8x32xf32>
    %647 = arith.addf %643, %646 : vector<8x32xf32>
    %648 = arith.addf %629, %647 : vector<8x32xf32>
    %649 = vector.extract_strided_slice %373 {offsets = [4, 0], sizes = [1, 32], strides = [1, 1]} : vector<6x32xf32> to vector<1x32xf32>
    %650 = vector.extract_strided_slice %373 {offsets = [5, 0], sizes = [1, 32], strides = [1, 1]} : vector<6x32xf32> to vector<1x32xf32>
    %cst_227 = arith.constant dense<0.000000e+00> : vector<8xf32>
    %651 = vector.multi_reduction <add>, %648, %cst_227 [1] : vector<8x32xf32> to vector<8xf32>
    %652 = vector.shape_cast %651 : vector<8xf32> to vector<8x1xf32>
    %cst_228 = arith.constant 3.200000e+01 : f32
    %653 = vector.broadcast %cst_228 : f32 to vector<8x1xf32>
    %654 = arith.divf %652, %653 : vector<8x1xf32>
    %655 = vector.broadcast %654 : vector<8x1xf32> to vector<8x32xf32>
    %656 = arith.subf %648, %655 : vector<8x32xf32>
    %657 = arith.mulf %656, %656 : vector<8x32xf32>
    %cst_229 = arith.constant dense<0.000000e+00> : vector<8xf32>
    %658 = vector.multi_reduction <add>, %657, %cst_229 [1] : vector<8x32xf32> to vector<8xf32>
    %659 = vector.shape_cast %658 : vector<8xf32> to vector<8x1xf32>
    %cst_230 = arith.constant 3.200000e+01 : f32
    %660 = vector.broadcast %cst_230 : f32 to vector<8x1xf32>
    %661 = arith.divf %659, %660 : vector<8x1xf32>
    %662 = vector.broadcast %654 : vector<8x1xf32> to vector<8x32xf32>
    %663 = arith.subf %648, %662 : vector<8x32xf32>
    %cst_231 = arith.constant 9.99999974E-6 : f32
    %664 = vector.broadcast %cst_231 : f32 to vector<8x1xf32>
    %665 = arith.addf %661, %664 : vector<8x1xf32>
    %666 = math.rsqrt %665 : vector<8x1xf32>
    %667 = vector.broadcast %666 : vector<8x1xf32> to vector<8x32xf32>
    %668 = arith.mulf %663, %667 : vector<8x32xf32>
    %669 = vector.broadcast %649 : vector<1x32xf32> to vector<8x32xf32>
    %670 = arith.mulf %668, %669 : vector<8x32xf32>
    %671 = vector.broadcast %650 : vector<1x32xf32> to vector<8x32xf32>
    %672 = arith.addf %670, %671 : vector<8x32xf32>
    %c1_232 = arith.constant 1 : index
    %c0_233 = arith.constant 0 : index
    %c0_234 = arith.constant 0 : index
    %673 = vector.load %arg27[%c1_232, %c0_233, %c0_234] : memref<2x6x32xf32, #tpu.memory_space<vmem>>, vector<1x6x32xf32>
    %674 = vector.shape_cast %673 : vector<1x6x32xf32> to vector<6x32xf32>
    %675 = arith.truncf %672 : vector<8x32xf32> to vector<8x32xbf16>
    %c1_235 = arith.constant 1 : index
    %c0_236 = arith.constant 0 : index
    %c0_237 = arith.constant 0 : index
    %676 = vector.load %arg13[%c1_235, %c0_236, %c0_237] : memref<2x32x96xbf16, #tpu.memory_space<vmem>>, vector<1x32x96xbf16>
    %677 = vector.shape_cast %676 : vector<1x32x96xbf16> to vector<32x96xbf16>
    %cst_238 = arith.constant dense<0.000000e+00> : vector<8x96xf32>
    %678 = tpu.matmul %675, %677, %cst_238 {dimension_numbers = #tpu.dot_dimension_numbers<[1], [0], [0], [1], [0, 0, 1, 1], [], []>} : vector<8x32xbf16>, vector<32x96xbf16>, vector<8x96xf32> -> vector<8x96xf32>
    %c1_239 = arith.constant 1 : index
    %c0_240 = arith.constant 0 : index
    %c0_241 = arith.constant 0 : index
    %679 = vector.load %arg14[%c1_239, %c0_240, %c0_241] : memref<2x1x96xf32, #tpu.memory_space<vmem>>, vector<1x1x96xf32>
    %680 = vector.shape_cast %679 : vector<1x1x96xf32> to vector<1x96xf32>
    %681 = vector.broadcast %680 : vector<1x96xf32> to vector<8x96xf32>
    %682 = arith.addf %678, %681 : vector<8x96xf32>
    %683 = vector.extract_strided_slice %682 {offsets = [0, 0], sizes = [8, 32], strides = [1, 1]} : vector<8x96xf32> to vector<8x32xf32>
    %684 = vector.extract_strided_slice %682 {offsets = [0, 32], sizes = [8, 32], strides = [1, 1]} : vector<8x96xf32> to vector<8x32xf32>
    %685 = vector.extract_strided_slice %682 {offsets = [0, 64], sizes = [8, 32], strides = [1, 1]} : vector<8x96xf32> to vector<8x32xf32>
    %cst_242 = arith.constant 0.353553385 : f32
    %686 = vector.broadcast %cst_242 : f32 to vector<8x32xf32>
    %687 = arith.mulf %683, %686 : vector<8x32xf32>
    %688 = vector.extract_strided_slice %687 {offsets = [0, 0], sizes = [8, 8], strides = [1, 1]} : vector<8x32xf32> to vector<8x8xf32>
    %689 = arith.truncf %688 : vector<8x8xf32> to vector<8x8xbf16>
    %690 = vector.extract_strided_slice %684 {offsets = [0, 0], sizes = [8, 8], strides = [1, 1]} : vector<8x32xf32> to vector<8x8xf32>
    %691 = arith.truncf %690 : vector<8x8xf32> to vector<8x8xbf16>
    %692 = vector.extract_strided_slice %685 {offsets = [0, 0], sizes = [8, 8], strides = [1, 1]} : vector<8x32xf32> to vector<8x8xf32>
    %693 = arith.truncf %692 : vector<8x8xf32> to vector<8x8xbf16>
    %cst_243 = arith.constant dense<0.000000e+00> : vector<8x8xf32>
    %694 = tpu.matmul %689, %691, %cst_243 {dimension_numbers = #tpu.dot_dimension_numbers<[1], [1], [0], [0], [0, 0, 1, 0], [], []>} : vector<8x8xbf16>, vector<8x8xbf16>, vector<8x8xf32> -> vector<8x8xf32>
    %695 = arith.addf %694, %5 : vector<8x8xf32>
    %cst_244 = arith.constant dense<0xFF800000> : vector<8xf32>
    %696 = vector.multi_reduction <maximumf>, %695, %cst_244 [1] : vector<8x8xf32> to vector<8xf32>
    %697 = vector.shape_cast %696 : vector<8xf32> to vector<8x1xf32>
    %698 = vector.broadcast %697 : vector<8x1xf32> to vector<8x8xf32>
    %699 = arith.subf %695, %698 : vector<8x8xf32>
    %700 = math.exp %699 : vector<8x8xf32>
    %cst_245 = arith.constant dense<0.000000e+00> : vector<8xf32>
    %701 = vector.multi_reduction <add>, %700, %cst_245 [1] : vector<8x8xf32> to vector<8xf32>
    %702 = vector.shape_cast %701 : vector<8xf32> to vector<8x1xf32>
    %703 = tpu.reciprocal %702 {approx = true} : vector<8x1xf32> -> vector<8x1xf32>
    %704 = vector.broadcast %703 : vector<8x1xf32> to vector<8x8xf32>
    %705 = arith.mulf %700, %704 : vector<8x8xf32>
    %706 = arith.truncf %705 : vector<8x8xf32> to vector<8x8xbf16>
    %cst_246 = arith.constant dense<0.000000e+00> : vector<8x8xf32>
    %707 = tpu.matmul %706, %693, %cst_246 {dimension_numbers = #tpu.dot_dimension_numbers<[1], [0], [0], [1], [0, 0, 1, 1], [], []>} : vector<8x8xbf16>, vector<8x8xbf16>, vector<8x8xf32> -> vector<8x8xf32>
    %708 = vector.extract_strided_slice %687 {offsets = [0, 8], sizes = [8, 8], strides = [1, 1]} : vector<8x32xf32> to vector<8x8xf32>
    %709 = arith.truncf %708 : vector<8x8xf32> to vector<8x8xbf16>
    %710 = vector.extract_strided_slice %684 {offsets = [0, 8], sizes = [8, 8], strides = [1, 1]} : vector<8x32xf32> to vector<8x8xf32>
    %711 = arith.truncf %710 : vector<8x8xf32> to vector<8x8xbf16>
    %712 = vector.extract_strided_slice %685 {offsets = [0, 8], sizes = [8, 8], strides = [1, 1]} : vector<8x32xf32> to vector<8x8xf32>
    %713 = arith.truncf %712 : vector<8x8xf32> to vector<8x8xbf16>
    %cst_247 = arith.constant dense<0.000000e+00> : vector<8x8xf32>
    %714 = tpu.matmul %709, %711, %cst_247 {dimension_numbers = #tpu.dot_dimension_numbers<[1], [1], [0], [0], [0, 0, 1, 0], [], []>} : vector<8x8xbf16>, vector<8x8xbf16>, vector<8x8xf32> -> vector<8x8xf32>
    %715 = arith.addf %714, %5 : vector<8x8xf32>
    %cst_248 = arith.constant dense<0xFF800000> : vector<8xf32>
    %716 = vector.multi_reduction <maximumf>, %715, %cst_248 [1] : vector<8x8xf32> to vector<8xf32>
    %717 = vector.shape_cast %716 : vector<8xf32> to vector<8x1xf32>
    %718 = vector.broadcast %717 : vector<8x1xf32> to vector<8x8xf32>
    %719 = arith.subf %715, %718 : vector<8x8xf32>
    %720 = math.exp %719 : vector<8x8xf32>
    %cst_249 = arith.constant dense<0.000000e+00> : vector<8xf32>
    %721 = vector.multi_reduction <add>, %720, %cst_249 [1] : vector<8x8xf32> to vector<8xf32>
    %722 = vector.shape_cast %721 : vector<8xf32> to vector<8x1xf32>
    %723 = tpu.reciprocal %722 {approx = true} : vector<8x1xf32> -> vector<8x1xf32>
    %724 = vector.broadcast %723 : vector<8x1xf32> to vector<8x8xf32>
    %725 = arith.mulf %720, %724 : vector<8x8xf32>
    %726 = arith.truncf %725 : vector<8x8xf32> to vector<8x8xbf16>
    %cst_250 = arith.constant dense<0.000000e+00> : vector<8x8xf32>
    %727 = tpu.matmul %726, %713, %cst_250 {dimension_numbers = #tpu.dot_dimension_numbers<[1], [0], [0], [1], [0, 0, 1, 1], [], []>} : vector<8x8xbf16>, vector<8x8xbf16>, vector<8x8xf32> -> vector<8x8xf32>
    %728 = vector.extract_strided_slice %687 {offsets = [0, 16], sizes = [8, 8], strides = [1, 1]} : vector<8x32xf32> to vector<8x8xf32>
    %729 = arith.truncf %728 : vector<8x8xf32> to vector<8x8xbf16>
    %730 = vector.extract_strided_slice %684 {offsets = [0, 16], sizes = [8, 8], strides = [1, 1]} : vector<8x32xf32> to vector<8x8xf32>
    %731 = arith.truncf %730 : vector<8x8xf32> to vector<8x8xbf16>
    %732 = vector.extract_strided_slice %685 {offsets = [0, 16], sizes = [8, 8], strides = [1, 1]} : vector<8x32xf32> to vector<8x8xf32>
    %733 = arith.truncf %732 : vector<8x8xf32> to vector<8x8xbf16>
    %cst_251 = arith.constant dense<0.000000e+00> : vector<8x8xf32>
    %734 = tpu.matmul %729, %731, %cst_251 {dimension_numbers = #tpu.dot_dimension_numbers<[1], [1], [0], [0], [0, 0, 1, 0], [], []>} : vector<8x8xbf16>, vector<8x8xbf16>, vector<8x8xf32> -> vector<8x8xf32>
    %735 = arith.addf %734, %5 : vector<8x8xf32>
    %cst_252 = arith.constant dense<0xFF800000> : vector<8xf32>
    %736 = vector.multi_reduction <maximumf>, %735, %cst_252 [1] : vector<8x8xf32> to vector<8xf32>
    %737 = vector.shape_cast %736 : vector<8xf32> to vector<8x1xf32>
    %738 = vector.broadcast %737 : vector<8x1xf32> to vector<8x8xf32>
    %739 = arith.subf %735, %738 : vector<8x8xf32>
    %740 = math.exp %739 : vector<8x8xf32>
    %cst_253 = arith.constant dense<0.000000e+00> : vector<8xf32>
    %741 = vector.multi_reduction <add>, %740, %cst_253 [1] : vector<8x8xf32> to vector<8xf32>
    %742 = vector.shape_cast %741 : vector<8xf32> to vector<8x1xf32>
    %743 = tpu.reciprocal %742 {approx = true} : vector<8x1xf32> -> vector<8x1xf32>
    %744 = vector.broadcast %743 : vector<8x1xf32> to vector<8x8xf32>
    %745 = arith.mulf %740, %744 : vector<8x8xf32>
    %746 = arith.truncf %745 : vector<8x8xf32> to vector<8x8xbf16>
    %cst_254 = arith.constant dense<0.000000e+00> : vector<8x8xf32>
    %747 = tpu.matmul %746, %733, %cst_254 {dimension_numbers = #tpu.dot_dimension_numbers<[1], [0], [0], [1], [0, 0, 1, 1], [], []>} : vector<8x8xbf16>, vector<8x8xbf16>, vector<8x8xf32> -> vector<8x8xf32>
    %748 = vector.extract_strided_slice %687 {offsets = [0, 24], sizes = [8, 8], strides = [1, 1]} : vector<8x32xf32> to vector<8x8xf32>
    %749 = arith.truncf %748 : vector<8x8xf32> to vector<8x8xbf16>
    %750 = vector.extract_strided_slice %684 {offsets = [0, 24], sizes = [8, 8], strides = [1, 1]} : vector<8x32xf32> to vector<8x8xf32>
    %751 = arith.truncf %750 : vector<8x8xf32> to vector<8x8xbf16>
    %752 = vector.extract_strided_slice %685 {offsets = [0, 24], sizes = [8, 8], strides = [1, 1]} : vector<8x32xf32> to vector<8x8xf32>
    %753 = arith.truncf %752 : vector<8x8xf32> to vector<8x8xbf16>
    %cst_255 = arith.constant dense<0.000000e+00> : vector<8x8xf32>
    %754 = tpu.matmul %749, %751, %cst_255 {dimension_numbers = #tpu.dot_dimension_numbers<[1], [1], [0], [0], [0, 0, 1, 0], [], []>} : vector<8x8xbf16>, vector<8x8xbf16>, vector<8x8xf32> -> vector<8x8xf32>
    %755 = arith.addf %754, %5 : vector<8x8xf32>
    %cst_256 = arith.constant dense<0xFF800000> : vector<8xf32>
    %756 = vector.multi_reduction <maximumf>, %755, %cst_256 [1] : vector<8x8xf32> to vector<8xf32>
    %757 = vector.shape_cast %756 : vector<8xf32> to vector<8x1xf32>
    %758 = vector.broadcast %757 : vector<8x1xf32> to vector<8x8xf32>
    %759 = arith.subf %755, %758 : vector<8x8xf32>
    %760 = math.exp %759 : vector<8x8xf32>
    %cst_257 = arith.constant dense<0.000000e+00> : vector<8xf32>
    %761 = vector.multi_reduction <add>, %760, %cst_257 [1] : vector<8x8xf32> to vector<8xf32>
    %762 = vector.shape_cast %761 : vector<8xf32> to vector<8x1xf32>
    %763 = tpu.reciprocal %762 {approx = true} : vector<8x1xf32> -> vector<8x1xf32>
    %764 = vector.broadcast %763 : vector<8x1xf32> to vector<8x8xf32>
    %765 = arith.mulf %760, %764 : vector<8x8xf32>
    %766 = arith.truncf %765 : vector<8x8xf32> to vector<8x8xbf16>
    %cst_258 = arith.constant dense<0.000000e+00> : vector<8x8xf32>
    %767 = tpu.matmul %766, %753, %cst_258 {dimension_numbers = #tpu.dot_dimension_numbers<[1], [0], [0], [1], [0, 0, 1, 1], [], []>} : vector<8x8xbf16>, vector<8x8xbf16>, vector<8x8xf32> -> vector<8x8xf32>
    %768 = tpu.concatenate %707, %727, %747, %767 in 1 : vector<8x8xf32>, vector<8x8xf32>, vector<8x8xf32>, vector<8x8xf32> -> vector<8x32xf32>
    %769 = arith.truncf %768 : vector<8x32xf32> to vector<8x32xbf16>
    %c1_259 = arith.constant 1 : index
    %c0_260 = arith.constant 0 : index
    %c0_261 = arith.constant 0 : index
    %770 = vector.load %arg15[%c1_259, %c0_260, %c0_261] : memref<2x32x32xbf16, #tpu.memory_space<vmem>>, vector<1x32x32xbf16>
    %771 = vector.shape_cast %770 : vector<1x32x32xbf16> to vector<32x32xbf16>
    %cst_262 = arith.constant dense<0.000000e+00> : vector<8x32xf32>
    %772 = tpu.matmul %769, %771, %cst_262 {dimension_numbers = #tpu.dot_dimension_numbers<[1], [0], [0], [1], [0, 0, 1, 1], [], []>} : vector<8x32xbf16>, vector<32x32xbf16>, vector<8x32xf32> -> vector<8x32xf32>
    %c1_263 = arith.constant 1 : index
    %c0_264 = arith.constant 0 : index
    %c0_265 = arith.constant 0 : index
    %773 = vector.load %arg16[%c1_263, %c0_264, %c0_265] : memref<2x1x32xf32, #tpu.memory_space<vmem>>, vector<1x1x32xf32>
    %774 = vector.shape_cast %773 : vector<1x1x32xf32> to vector<1x32xf32>
    %775 = vector.broadcast %774 : vector<1x32xf32> to vector<8x32xf32>
    %776 = arith.addf %772, %775 : vector<8x32xf32>
    %777 = arith.addf %672, %776 : vector<8x32xf32>
    %778 = vector.extract_strided_slice %674 {offsets = [0, 0], sizes = [1, 32], strides = [1, 1]} : vector<6x32xf32> to vector<1x32xf32>
    %779 = vector.extract_strided_slice %674 {offsets = [1, 0], sizes = [1, 32], strides = [1, 1]} : vector<6x32xf32> to vector<1x32xf32>
    %cst_266 = arith.constant dense<0.000000e+00> : vector<8xf32>
    %780 = vector.multi_reduction <add>, %777, %cst_266 [1] : vector<8x32xf32> to vector<8xf32>
    %781 = vector.shape_cast %780 : vector<8xf32> to vector<8x1xf32>
    %cst_267 = arith.constant 3.200000e+01 : f32
    %782 = vector.broadcast %cst_267 : f32 to vector<8x1xf32>
    %783 = arith.divf %781, %782 : vector<8x1xf32>
    %784 = vector.broadcast %783 : vector<8x1xf32> to vector<8x32xf32>
    %785 = arith.subf %777, %784 : vector<8x32xf32>
    %786 = arith.mulf %785, %785 : vector<8x32xf32>
    %cst_268 = arith.constant dense<0.000000e+00> : vector<8xf32>
    %787 = vector.multi_reduction <add>, %786, %cst_268 [1] : vector<8x32xf32> to vector<8xf32>
    %788 = vector.shape_cast %787 : vector<8xf32> to vector<8x1xf32>
    %cst_269 = arith.constant 3.200000e+01 : f32
    %789 = vector.broadcast %cst_269 : f32 to vector<8x1xf32>
    %790 = arith.divf %788, %789 : vector<8x1xf32>
    %791 = vector.broadcast %783 : vector<8x1xf32> to vector<8x32xf32>
    %792 = arith.subf %777, %791 : vector<8x32xf32>
    %cst_270 = arith.constant 9.99999974E-6 : f32
    %793 = vector.broadcast %cst_270 : f32 to vector<8x1xf32>
    %794 = arith.addf %790, %793 : vector<8x1xf32>
    %795 = math.rsqrt %794 : vector<8x1xf32>
    %796 = vector.broadcast %795 : vector<8x1xf32> to vector<8x32xf32>
    %797 = arith.mulf %792, %796 : vector<8x32xf32>
    %798 = vector.broadcast %778 : vector<1x32xf32> to vector<8x32xf32>
    %799 = arith.mulf %797, %798 : vector<8x32xf32>
    %800 = vector.broadcast %779 : vector<1x32xf32> to vector<8x32xf32>
    %801 = arith.addf %799, %800 : vector<8x32xf32>
    %802 = arith.truncf %801 : vector<8x32xf32> to vector<8x32xbf16>
    %c1_271 = arith.constant 1 : index
    %c0_272 = arith.constant 0 : index
    %c0_273 = arith.constant 0 : index
    %803 = vector.load %arg17[%c1_271, %c0_272, %c0_273] : memref<2x32x32xbf16, #tpu.memory_space<vmem>>, vector<1x32x32xbf16>
    %804 = vector.shape_cast %803 : vector<1x32x32xbf16> to vector<32x32xbf16>
    %cst_274 = arith.constant dense<0.000000e+00> : vector<8x32xf32>
    %805 = tpu.matmul %802, %804, %cst_274 {dimension_numbers = #tpu.dot_dimension_numbers<[1], [0], [0], [1], [0, 0, 1, 1], [], []>} : vector<8x32xbf16>, vector<32x32xbf16>, vector<8x32xf32> -> vector<8x32xf32>
    %c1_275 = arith.constant 1 : index
    %c0_276 = arith.constant 0 : index
    %c0_277 = arith.constant 0 : index
    %806 = vector.load %arg18[%c1_275, %c0_276, %c0_277] : memref<2x1x32xf32, #tpu.memory_space<vmem>>, vector<1x1x32xf32>
    %807 = vector.shape_cast %806 : vector<1x1x32xf32> to vector<1x32xf32>
    %808 = vector.broadcast %807 : vector<1x32xf32> to vector<8x32xf32>
    %809 = arith.addf %805, %808 : vector<8x32xf32>
    %c1_278 = arith.constant 1 : index
    %c0_279 = arith.constant 0 : index
    %c0_280 = arith.constant 0 : index
    %810 = vector.load %arg19[%c1_278, %c0_279, %c0_280] : memref<2x32x64xbf16, #tpu.memory_space<vmem>>, vector<1x32x64xbf16>
    %811 = vector.shape_cast %810 : vector<1x32x64xbf16> to vector<32x64xbf16>
    %cst_281 = arith.constant dense<0.000000e+00> : vector<8x64xf32>
    %812 = tpu.matmul %369, %811, %cst_281 {dimension_numbers = #tpu.dot_dimension_numbers<[1], [0], [0], [1], [0, 0, 1, 1], [], []>} : vector<8x32xbf16>, vector<32x64xbf16>, vector<8x64xf32> -> vector<8x64xf32>
    %c1_282 = arith.constant 1 : index
    %c0_283 = arith.constant 0 : index
    %c0_284 = arith.constant 0 : index
    %813 = vector.load %arg20[%c1_282, %c0_283, %c0_284] : memref<2x1x64xf32, #tpu.memory_space<vmem>>, vector<1x1x64xf32>
    %814 = vector.shape_cast %813 : vector<1x1x64xf32> to vector<1x64xf32>
    %815 = vector.broadcast %814 : vector<1x64xf32> to vector<8x64xf32>
    %816 = arith.addf %812, %815 : vector<8x64xf32>
    %817 = vector.extract_strided_slice %816 {offsets = [0, 0], sizes = [8, 32], strides = [1, 1]} : vector<8x64xf32> to vector<8x32xf32>
    %818 = vector.extract_strided_slice %816 {offsets = [0, 32], sizes = [8, 32], strides = [1, 1]} : vector<8x64xf32> to vector<8x32xf32>
    %cst_285 = arith.constant 0.353553385 : f32
    %819 = vector.broadcast %cst_285 : f32 to vector<8x32xf32>
    %820 = arith.mulf %809, %819 : vector<8x32xf32>
    %821 = vector.extract_strided_slice %820 {offsets = [0, 0], sizes = [8, 8], strides = [1, 1]} : vector<8x32xf32> to vector<8x8xf32>
    %822 = arith.truncf %821 : vector<8x8xf32> to vector<8x8xbf16>
    %823 = vector.extract_strided_slice %817 {offsets = [0, 0], sizes = [8, 8], strides = [1, 1]} : vector<8x32xf32> to vector<8x8xf32>
    %824 = arith.truncf %823 : vector<8x8xf32> to vector<8x8xbf16>
    %825 = vector.extract_strided_slice %818 {offsets = [0, 0], sizes = [8, 8], strides = [1, 1]} : vector<8x32xf32> to vector<8x8xf32>
    %826 = arith.truncf %825 : vector<8x8xf32> to vector<8x8xbf16>
    %cst_286 = arith.constant dense<0.000000e+00> : vector<8x8xf32>
    %827 = tpu.matmul %822, %824, %cst_286 {dimension_numbers = #tpu.dot_dimension_numbers<[1], [1], [0], [0], [0, 0, 1, 0], [], []>} : vector<8x8xbf16>, vector<8x8xbf16>, vector<8x8xf32> -> vector<8x8xf32>
    %cst_287 = arith.constant dense<0xFF800000> : vector<8xf32>
    %828 = vector.multi_reduction <maximumf>, %827, %cst_287 [1] : vector<8x8xf32> to vector<8xf32>
    %829 = vector.shape_cast %828 : vector<8xf32> to vector<8x1xf32>
    %830 = vector.broadcast %829 : vector<8x1xf32> to vector<8x8xf32>
    %831 = arith.subf %827, %830 : vector<8x8xf32>
    %832 = math.exp %831 : vector<8x8xf32>
    %cst_288 = arith.constant dense<0.000000e+00> : vector<8xf32>
    %833 = vector.multi_reduction <add>, %832, %cst_288 [1] : vector<8x8xf32> to vector<8xf32>
    %834 = vector.shape_cast %833 : vector<8xf32> to vector<8x1xf32>
    %835 = tpu.reciprocal %834 {approx = true} : vector<8x1xf32> -> vector<8x1xf32>
    %836 = vector.broadcast %835 : vector<8x1xf32> to vector<8x8xf32>
    %837 = arith.mulf %832, %836 : vector<8x8xf32>
    %838 = arith.truncf %837 : vector<8x8xf32> to vector<8x8xbf16>
    %cst_289 = arith.constant dense<0.000000e+00> : vector<8x8xf32>
    %839 = tpu.matmul %838, %826, %cst_289 {dimension_numbers = #tpu.dot_dimension_numbers<[1], [0], [0], [1], [0, 0, 1, 1], [], []>} : vector<8x8xbf16>, vector<8x8xbf16>, vector<8x8xf32> -> vector<8x8xf32>
    %840 = vector.extract_strided_slice %820 {offsets = [0, 8], sizes = [8, 8], strides = [1, 1]} : vector<8x32xf32> to vector<8x8xf32>
    %841 = arith.truncf %840 : vector<8x8xf32> to vector<8x8xbf16>
    %842 = vector.extract_strided_slice %817 {offsets = [0, 8], sizes = [8, 8], strides = [1, 1]} : vector<8x32xf32> to vector<8x8xf32>
    %843 = arith.truncf %842 : vector<8x8xf32> to vector<8x8xbf16>
    %844 = vector.extract_strided_slice %818 {offsets = [0, 8], sizes = [8, 8], strides = [1, 1]} : vector<8x32xf32> to vector<8x8xf32>
    %845 = arith.truncf %844 : vector<8x8xf32> to vector<8x8xbf16>
    %cst_290 = arith.constant dense<0.000000e+00> : vector<8x8xf32>
    %846 = tpu.matmul %841, %843, %cst_290 {dimension_numbers = #tpu.dot_dimension_numbers<[1], [1], [0], [0], [0, 0, 1, 0], [], []>} : vector<8x8xbf16>, vector<8x8xbf16>, vector<8x8xf32> -> vector<8x8xf32>
    %cst_291 = arith.constant dense<0xFF800000> : vector<8xf32>
    %847 = vector.multi_reduction <maximumf>, %846, %cst_291 [1] : vector<8x8xf32> to vector<8xf32>
    %848 = vector.shape_cast %847 : vector<8xf32> to vector<8x1xf32>
    %849 = vector.broadcast %848 : vector<8x1xf32> to vector<8x8xf32>
    %850 = arith.subf %846, %849 : vector<8x8xf32>
    %851 = math.exp %850 : vector<8x8xf32>
    %cst_292 = arith.constant dense<0.000000e+00> : vector<8xf32>
    %852 = vector.multi_reduction <add>, %851, %cst_292 [1] : vector<8x8xf32> to vector<8xf32>
    %853 = vector.shape_cast %852 : vector<8xf32> to vector<8x1xf32>
    %854 = tpu.reciprocal %853 {approx = true} : vector<8x1xf32> -> vector<8x1xf32>
    %855 = vector.broadcast %854 : vector<8x1xf32> to vector<8x8xf32>
    %856 = arith.mulf %851, %855 : vector<8x8xf32>
    %857 = arith.truncf %856 : vector<8x8xf32> to vector<8x8xbf16>
    %cst_293 = arith.constant dense<0.000000e+00> : vector<8x8xf32>
    %858 = tpu.matmul %857, %845, %cst_293 {dimension_numbers = #tpu.dot_dimension_numbers<[1], [0], [0], [1], [0, 0, 1, 1], [], []>} : vector<8x8xbf16>, vector<8x8xbf16>, vector<8x8xf32> -> vector<8x8xf32>
    %859 = vector.extract_strided_slice %820 {offsets = [0, 16], sizes = [8, 8], strides = [1, 1]} : vector<8x32xf32> to vector<8x8xf32>
    %860 = arith.truncf %859 : vector<8x8xf32> to vector<8x8xbf16>
    %861 = vector.extract_strided_slice %817 {offsets = [0, 16], sizes = [8, 8], strides = [1, 1]} : vector<8x32xf32> to vector<8x8xf32>
    %862 = arith.truncf %861 : vector<8x8xf32> to vector<8x8xbf16>
    %863 = vector.extract_strided_slice %818 {offsets = [0, 16], sizes = [8, 8], strides = [1, 1]} : vector<8x32xf32> to vector<8x8xf32>
    %864 = arith.truncf %863 : vector<8x8xf32> to vector<8x8xbf16>
    %cst_294 = arith.constant dense<0.000000e+00> : vector<8x8xf32>
    %865 = tpu.matmul %860, %862, %cst_294 {dimension_numbers = #tpu.dot_dimension_numbers<[1], [1], [0], [0], [0, 0, 1, 0], [], []>} : vector<8x8xbf16>, vector<8x8xbf16>, vector<8x8xf32> -> vector<8x8xf32>
    %cst_295 = arith.constant dense<0xFF800000> : vector<8xf32>
    %866 = vector.multi_reduction <maximumf>, %865, %cst_295 [1] : vector<8x8xf32> to vector<8xf32>
    %867 = vector.shape_cast %866 : vector<8xf32> to vector<8x1xf32>
    %868 = vector.broadcast %867 : vector<8x1xf32> to vector<8x8xf32>
    %869 = arith.subf %865, %868 : vector<8x8xf32>
    %870 = math.exp %869 : vector<8x8xf32>
    %cst_296 = arith.constant dense<0.000000e+00> : vector<8xf32>
    %871 = vector.multi_reduction <add>, %870, %cst_296 [1] : vector<8x8xf32> to vector<8xf32>
    %872 = vector.shape_cast %871 : vector<8xf32> to vector<8x1xf32>
    %873 = tpu.reciprocal %872 {approx = true} : vector<8x1xf32> -> vector<8x1xf32>
    %874 = vector.broadcast %873 : vector<8x1xf32> to vector<8x8xf32>
    %875 = arith.mulf %870, %874 : vector<8x8xf32>
    %876 = arith.truncf %875 : vector<8x8xf32> to vector<8x8xbf16>
    %cst_297 = arith.constant dense<0.000000e+00> : vector<8x8xf32>
    %877 = tpu.matmul %876, %864, %cst_297 {dimension_numbers = #tpu.dot_dimension_numbers<[1], [0], [0], [1], [0, 0, 1, 1], [], []>} : vector<8x8xbf16>, vector<8x8xbf16>, vector<8x8xf32> -> vector<8x8xf32>
    %878 = vector.extract_strided_slice %820 {offsets = [0, 24], sizes = [8, 8], strides = [1, 1]} : vector<8x32xf32> to vector<8x8xf32>
    %879 = arith.truncf %878 : vector<8x8xf32> to vector<8x8xbf16>
    %880 = vector.extract_strided_slice %817 {offsets = [0, 24], sizes = [8, 8], strides = [1, 1]} : vector<8x32xf32> to vector<8x8xf32>
    %881 = arith.truncf %880 : vector<8x8xf32> to vector<8x8xbf16>
    %882 = vector.extract_strided_slice %818 {offsets = [0, 24], sizes = [8, 8], strides = [1, 1]} : vector<8x32xf32> to vector<8x8xf32>
    %883 = arith.truncf %882 : vector<8x8xf32> to vector<8x8xbf16>
    %cst_298 = arith.constant dense<0.000000e+00> : vector<8x8xf32>
    %884 = tpu.matmul %879, %881, %cst_298 {dimension_numbers = #tpu.dot_dimension_numbers<[1], [1], [0], [0], [0, 0, 1, 0], [], []>} : vector<8x8xbf16>, vector<8x8xbf16>, vector<8x8xf32> -> vector<8x8xf32>
    %cst_299 = arith.constant dense<0xFF800000> : vector<8xf32>
    %885 = vector.multi_reduction <maximumf>, %884, %cst_299 [1] : vector<8x8xf32> to vector<8xf32>
    %886 = vector.shape_cast %885 : vector<8xf32> to vector<8x1xf32>
    %887 = vector.broadcast %886 : vector<8x1xf32> to vector<8x8xf32>
    %888 = arith.subf %884, %887 : vector<8x8xf32>
    %889 = math.exp %888 : vector<8x8xf32>
    %cst_300 = arith.constant dense<0.000000e+00> : vector<8xf32>
    %890 = vector.multi_reduction <add>, %889, %cst_300 [1] : vector<8x8xf32> to vector<8xf32>
    %891 = vector.shape_cast %890 : vector<8xf32> to vector<8x1xf32>
    %892 = tpu.reciprocal %891 {approx = true} : vector<8x1xf32> -> vector<8x1xf32>
    %893 = vector.broadcast %892 : vector<8x1xf32> to vector<8x8xf32>
    %894 = arith.mulf %889, %893 : vector<8x8xf32>
    %895 = arith.truncf %894 : vector<8x8xf32> to vector<8x8xbf16>
    %cst_301 = arith.constant dense<0.000000e+00> : vector<8x8xf32>
    %896 = tpu.matmul %895, %883, %cst_301 {dimension_numbers = #tpu.dot_dimension_numbers<[1], [0], [0], [1], [0, 0, 1, 1], [], []>} : vector<8x8xbf16>, vector<8x8xbf16>, vector<8x8xf32> -> vector<8x8xf32>
    %897 = tpu.concatenate %839, %858, %877, %896 in 1 : vector<8x8xf32>, vector<8x8xf32>, vector<8x8xf32>, vector<8x8xf32> -> vector<8x32xf32>
    %898 = arith.truncf %897 : vector<8x32xf32> to vector<8x32xbf16>
    %c1_302 = arith.constant 1 : index
    %c0_303 = arith.constant 0 : index
    %c0_304 = arith.constant 0 : index
    %899 = vector.load %arg21[%c1_302, %c0_303, %c0_304] : memref<2x32x32xbf16, #tpu.memory_space<vmem>>, vector<1x32x32xbf16>
    %900 = vector.shape_cast %899 : vector<1x32x32xbf16> to vector<32x32xbf16>
    %cst_305 = arith.constant dense<0.000000e+00> : vector<8x32xf32>
    %901 = tpu.matmul %898, %900, %cst_305 {dimension_numbers = #tpu.dot_dimension_numbers<[1], [0], [0], [1], [0, 0, 1, 1], [], []>} : vector<8x32xbf16>, vector<32x32xbf16>, vector<8x32xf32> -> vector<8x32xf32>
    %c1_306 = arith.constant 1 : index
    %c0_307 = arith.constant 0 : index
    %c0_308 = arith.constant 0 : index
    %902 = vector.load %arg22[%c1_306, %c0_307, %c0_308] : memref<2x1x32xf32, #tpu.memory_space<vmem>>, vector<1x1x32xf32>
    %903 = vector.shape_cast %902 : vector<1x1x32xf32> to vector<1x32xf32>
    %904 = vector.broadcast %903 : vector<1x32xf32> to vector<8x32xf32>
    %905 = arith.addf %901, %904 : vector<8x32xf32>
    %906 = arith.addf %801, %905 : vector<8x32xf32>
    %907 = vector.extract_strided_slice %674 {offsets = [2, 0], sizes = [1, 32], strides = [1, 1]} : vector<6x32xf32> to vector<1x32xf32>
    %908 = vector.extract_strided_slice %674 {offsets = [3, 0], sizes = [1, 32], strides = [1, 1]} : vector<6x32xf32> to vector<1x32xf32>
    %cst_309 = arith.constant dense<0.000000e+00> : vector<8xf32>
    %909 = vector.multi_reduction <add>, %906, %cst_309 [1] : vector<8x32xf32> to vector<8xf32>
    %910 = vector.shape_cast %909 : vector<8xf32> to vector<8x1xf32>
    %cst_310 = arith.constant 3.200000e+01 : f32
    %911 = vector.broadcast %cst_310 : f32 to vector<8x1xf32>
    %912 = arith.divf %910, %911 : vector<8x1xf32>
    %913 = vector.broadcast %912 : vector<8x1xf32> to vector<8x32xf32>
    %914 = arith.subf %906, %913 : vector<8x32xf32>
    %915 = arith.mulf %914, %914 : vector<8x32xf32>
    %cst_311 = arith.constant dense<0.000000e+00> : vector<8xf32>
    %916 = vector.multi_reduction <add>, %915, %cst_311 [1] : vector<8x32xf32> to vector<8xf32>
    %917 = vector.shape_cast %916 : vector<8xf32> to vector<8x1xf32>
    %cst_312 = arith.constant 3.200000e+01 : f32
    %918 = vector.broadcast %cst_312 : f32 to vector<8x1xf32>
    %919 = arith.divf %917, %918 : vector<8x1xf32>
    %920 = vector.broadcast %912 : vector<8x1xf32> to vector<8x32xf32>
    %921 = arith.subf %906, %920 : vector<8x32xf32>
    %cst_313 = arith.constant 9.99999974E-6 : f32
    %922 = vector.broadcast %cst_313 : f32 to vector<8x1xf32>
    %923 = arith.addf %919, %922 : vector<8x1xf32>
    %924 = math.rsqrt %923 : vector<8x1xf32>
    %925 = vector.broadcast %924 : vector<8x1xf32> to vector<8x32xf32>
    %926 = arith.mulf %921, %925 : vector<8x32xf32>
    %927 = vector.broadcast %907 : vector<1x32xf32> to vector<8x32xf32>
    %928 = arith.mulf %926, %927 : vector<8x32xf32>
    %929 = vector.broadcast %908 : vector<1x32xf32> to vector<8x32xf32>
    %930 = arith.addf %928, %929 : vector<8x32xf32>
    %931 = arith.truncf %930 : vector<8x32xf32> to vector<8x32xbf16>
    %c1_314 = arith.constant 1 : index
    %c0_315 = arith.constant 0 : index
    %c0_316 = arith.constant 0 : index
    %932 = vector.load %arg23[%c1_314, %c0_315, %c0_316] : memref<2x32x64xbf16, #tpu.memory_space<vmem>>, vector<1x32x64xbf16>
    %933 = vector.shape_cast %932 : vector<1x32x64xbf16> to vector<32x64xbf16>
    %cst_317 = arith.constant dense<0.000000e+00> : vector<8x64xf32>
    %934 = tpu.matmul %931, %933, %cst_317 {dimension_numbers = #tpu.dot_dimension_numbers<[1], [0], [0], [1], [0, 0, 1, 1], [], []>} : vector<8x32xbf16>, vector<32x64xbf16>, vector<8x64xf32> -> vector<8x64xf32>
    %c1_318 = arith.constant 1 : index
    %c0_319 = arith.constant 0 : index
    %c0_320 = arith.constant 0 : index
    %935 = vector.load %arg24[%c1_318, %c0_319, %c0_320] : memref<2x1x64xf32, #tpu.memory_space<vmem>>, vector<1x1x64xf32>
    %936 = vector.shape_cast %935 : vector<1x1x64xf32> to vector<1x64xf32>
    %937 = vector.broadcast %936 : vector<1x64xf32> to vector<8x64xf32>
    %938 = arith.addf %934, %937 : vector<8x64xf32>
    %cst_321 = arith.constant 0.000000e+00 : f32
    %939 = vector.broadcast %cst_321 : f32 to vector<8x64xf32>
    %940 = arith.maximumf %938, %939 : vector<8x64xf32>
    %941 = arith.truncf %940 : vector<8x64xf32> to vector<8x64xbf16>
    %c1_322 = arith.constant 1 : index
    %c0_323 = arith.constant 0 : index
    %c0_324 = arith.constant 0 : index
    %942 = vector.load %arg25[%c1_322, %c0_323, %c0_324] : memref<2x64x32xbf16, #tpu.memory_space<vmem>>, vector<1x64x32xbf16>
    %943 = vector.shape_cast %942 : vector<1x64x32xbf16> to vector<64x32xbf16>
    %cst_325 = arith.constant dense<0.000000e+00> : vector<8x32xf32>
    %944 = tpu.matmul %941, %943, %cst_325 {dimension_numbers = #tpu.dot_dimension_numbers<[1], [0], [0], [1], [0, 0, 1, 1], [], []>} : vector<8x64xbf16>, vector<64x32xbf16>, vector<8x32xf32> -> vector<8x32xf32>
    %c1_326 = arith.constant 1 : index
    %c0_327 = arith.constant 0 : index
    %c0_328 = arith.constant 0 : index
    %945 = vector.load %arg26[%c1_326, %c0_327, %c0_328] : memref<2x1x32xf32, #tpu.memory_space<vmem>>, vector<1x1x32xf32>
    %946 = vector.shape_cast %945 : vector<1x1x32xf32> to vector<1x32xf32>
    %947 = vector.broadcast %946 : vector<1x32xf32> to vector<8x32xf32>
    %948 = arith.addf %944, %947 : vector<8x32xf32>
    %949 = arith.addf %930, %948 : vector<8x32xf32>
    %950 = vector.extract_strided_slice %674 {offsets = [4, 0], sizes = [1, 32], strides = [1, 1]} : vector<6x32xf32> to vector<1x32xf32>
    %951 = vector.extract_strided_slice %674 {offsets = [5, 0], sizes = [1, 32], strides = [1, 1]} : vector<6x32xf32> to vector<1x32xf32>
    %cst_329 = arith.constant dense<0.000000e+00> : vector<8xf32>
    %952 = vector.multi_reduction <add>, %949, %cst_329 [1] : vector<8x32xf32> to vector<8xf32>
    %953 = vector.shape_cast %952 : vector<8xf32> to vector<8x1xf32>
    %cst_330 = arith.constant 3.200000e+01 : f32
    %954 = vector.broadcast %cst_330 : f32 to vector<8x1xf32>
    %955 = arith.divf %953, %954 : vector<8x1xf32>
    %956 = vector.broadcast %955 : vector<8x1xf32> to vector<8x32xf32>
    %957 = arith.subf %949, %956 : vector<8x32xf32>
    %958 = arith.mulf %957, %957 : vector<8x32xf32>
    %cst_331 = arith.constant dense<0.000000e+00> : vector<8xf32>
    %959 = vector.multi_reduction <add>, %958, %cst_331 [1] : vector<8x32xf32> to vector<8xf32>
    %960 = vector.shape_cast %959 : vector<8xf32> to vector<8x1xf32>
    %cst_332 = arith.constant 3.200000e+01 : f32
    %961 = vector.broadcast %cst_332 : f32 to vector<8x1xf32>
    %962 = arith.divf %960, %961 : vector<8x1xf32>
    %963 = vector.broadcast %955 : vector<8x1xf32> to vector<8x32xf32>
    %964 = arith.subf %949, %963 : vector<8x32xf32>
    %cst_333 = arith.constant 9.99999974E-6 : f32
    %965 = vector.broadcast %cst_333 : f32 to vector<8x1xf32>
    %966 = arith.addf %962, %965 : vector<8x1xf32>
    %967 = math.rsqrt %966 : vector<8x1xf32>
    %968 = vector.broadcast %967 : vector<8x1xf32> to vector<8x32xf32>
    %969 = arith.mulf %964, %968 : vector<8x32xf32>
    %970 = vector.broadcast %950 : vector<1x32xf32> to vector<8x32xf32>
    %971 = arith.mulf %969, %970 : vector<8x32xf32>
    %972 = vector.broadcast %951 : vector<1x32xf32> to vector<8x32xf32>
    %973 = arith.addf %971, %972 : vector<8x32xf32>
    %c0_334 = arith.constant 0 : index
    %c0_335 = arith.constant 0 : index
    %974 = vector.load %arg28[%c0_334, %c0_335] : memref<2x32xf32, #tpu.memory_space<vmem>>, vector<2x32xf32>
    %975 = vector.extract_strided_slice %974 {offsets = [0, 0], sizes = [1, 32], strides = [1, 1]} : vector<2x32xf32> to vector<1x32xf32>
    %976 = vector.extract_strided_slice %974 {offsets = [1, 0], sizes = [1, 32], strides = [1, 1]} : vector<2x32xf32> to vector<1x32xf32>
    %cst_336 = arith.constant dense<0.000000e+00> : vector<8xf32>
    %977 = vector.multi_reduction <add>, %973, %cst_336 [1] : vector<8x32xf32> to vector<8xf32>
    %978 = vector.shape_cast %977 : vector<8xf32> to vector<8x1xf32>
    %cst_337 = arith.constant 3.200000e+01 : f32
    %979 = vector.broadcast %cst_337 : f32 to vector<8x1xf32>
    %980 = arith.divf %978, %979 : vector<8x1xf32>
    %981 = vector.broadcast %980 : vector<8x1xf32> to vector<8x32xf32>
    %982 = arith.subf %973, %981 : vector<8x32xf32>
    %983 = arith.mulf %982, %982 : vector<8x32xf32>
    %cst_338 = arith.constant dense<0.000000e+00> : vector<8xf32>
    %984 = vector.multi_reduction <add>, %983, %cst_338 [1] : vector<8x32xf32> to vector<8xf32>
    %985 = vector.shape_cast %984 : vector<8xf32> to vector<8x1xf32>
    %cst_339 = arith.constant 3.200000e+01 : f32
    %986 = vector.broadcast %cst_339 : f32 to vector<8x1xf32>
    %987 = arith.divf %985, %986 : vector<8x1xf32>
    %988 = vector.broadcast %980 : vector<8x1xf32> to vector<8x32xf32>
    %989 = arith.subf %973, %988 : vector<8x32xf32>
    %cst_340 = arith.constant 9.99999974E-6 : f32
    %990 = vector.broadcast %cst_340 : f32 to vector<8x1xf32>
    %991 = arith.addf %987, %990 : vector<8x1xf32>
    %992 = math.rsqrt %991 : vector<8x1xf32>
    %993 = vector.broadcast %992 : vector<8x1xf32> to vector<8x32xf32>
    %994 = arith.mulf %989, %993 : vector<8x32xf32>
    %995 = vector.broadcast %975 : vector<1x32xf32> to vector<8x32xf32>
    %996 = arith.mulf %994, %995 : vector<8x32xf32>
    %997 = vector.broadcast %976 : vector<1x32xf32> to vector<8x32xf32>
    %998 = arith.addf %996, %997 : vector<8x32xf32>
    %999 = arith.truncf %998 : vector<8x32xf32> to vector<8x32xbf16>
    %c0_341 = arith.constant 0 : index
    %c0_342 = arith.constant 0 : index
    %1000 = vector.load %arg29[%c0_341, %c0_342] : memref<32x128xbf16, #tpu.memory_space<vmem>>, vector<32x128xbf16>
    %cst_343 = arith.constant dense<0.000000e+00> : vector<8x128xf32>
    %1001 = tpu.matmul %999, %1000, %cst_343 {dimension_numbers = #tpu.dot_dimension_numbers<[1], [0], [0], [1], [0, 0, 1, 1], [], []>} : vector<8x32xbf16>, vector<32x128xbf16>, vector<8x128xf32> -> vector<8x128xf32>
    %c0_344 = arith.constant 0 : index
    %c0_345 = arith.constant 0 : index
    %1002 = vector.load %arg30[%c0_344, %c0_345] : memref<1x128xf32, #tpu.memory_space<vmem>>, vector<1x128xf32>
    %1003 = vector.broadcast %1002 : vector<1x128xf32> to vector<8x128xf32>
    %1004 = arith.addf %1001, %1003 : vector<8x128xf32>
    %c0_346 = arith.constant 0 : index
    %c0_347 = arith.constant 0 : index
    %c0_348 = arith.constant 0 : index
    %1005 = vector.load %arg31[%c0_346, %c0_347, %c0_348] : memref<1x8x128xf32, #tpu.memory_space<vmem>>, vector<1x8x128xf32>
    %1006 = vector.shape_cast %1005 : vector<1x8x128xf32> to vector<8x128xf32>
    %1007 = vector.shape_cast %1004 : vector<8x128xf32> to vector<1x8x128xf32>
    tpu.vector_store %arg31[%c0_346, %c0_347, %c0_348], %1007 {strides = array<i32>} : memref<1x8x128xf32, #tpu.memory_space<vmem>>, vector<1x8x128xf32>,
    return
  }
  func.func @transform_0(%arg0: i32) -> (i32, i32, i32) {
    %c0_i32 = arith.constant 0 : i32
    %c0_i32_0 = arith.constant 0 : i32
    %c0_i32_1 = arith.constant 0 : i32
    return %arg0, %c0_i32, %c0_i32_0 : i32, i32, i32
  }
  func.func @transform_1(%arg0: i32) -> (i32, i32, i32) {
    %c0_i32 = arith.constant 0 : i32
    %c0_i32_0 = arith.constant 0 : i32
    %c0_i32_1 = arith.constant 0 : i32
    return %arg0, %c0_i32, %c0_i32_0 : i32, i32, i32
  }
  func.func @transform_2(%arg0: i32) -> (i32, i32, i32) {
    %c0_i32 = arith.constant 0 : i32
    %c0_i32_0 = arith.constant 0 : i32
    %c0_i32_1 = arith.constant 0 : i32
    %c0_i32_2 = arith.constant 0 : i32
    return %c0_i32, %c0_i32_0, %c0_i32_1 : i32, i32, i32
  }
  func.func @transform_3(%arg0: i32) -> (i32, i32, i32) {
    %c0_i32 = arith.constant 0 : i32
    %c0_i32_0 = arith.constant 0 : i32
    %c0_i32_1 = arith.constant 0 : i32
    %c0_i32_2 = arith.constant 0 : i32
    return %c0_i32, %c0_i32_0, %c0_i32_1 : i32, i32, i32
  }
  func.func @transform_4(%arg0: i32) -> (i32, i32, i32) {
    %c0_i32 = arith.constant 0 : i32
    %c0_i32_0 = arith.constant 0 : i32
    %c0_i32_1 = arith.constant 0 : i32
    %c0_i32_2 = arith.constant 0 : i32
    return %c0_i32, %c0_i32_0, %c0_i32_1 : i32, i32, i32
  }
  func.func @transform_5(%arg0: i32) -> (i32, i32, i32) {
    %c0_i32 = arith.constant 0 : i32
    %c0_i32_0 = arith.constant 0 : i32
    %c0_i32_1 = arith.constant 0 : i32
    %c0_i32_2 = arith.constant 0 : i32
    return %c0_i32, %c0_i32_0, %c0_i32_1 : i32, i32, i32
  }
  func.func @transform_6(%arg0: i32) -> (i32, i32, i32) {
    %c0_i32 = arith.constant 0 : i32
    %c0_i32_0 = arith.constant 0 : i32
    %c0_i32_1 = arith.constant 0 : i32
    %c0_i32_2 = arith.constant 0 : i32
    return %c0_i32, %c0_i32_0, %c0_i32_1 : i32, i32, i32
  }
  func.func @transform_7(%arg0: i32) -> (i32, i32, i32) {
    %c0_i32 = arith.constant 0 : i32
    %c0_i32_0 = arith.constant 0 : i32
    %c0_i32_1 = arith.constant 0 : i32
    %c0_i32_2 = arith.constant 0 : i32
    return %c0_i32, %c0_i32_0, %c0_i32_1 : i32, i32, i32
  }
  func.func @transform_8(%arg0: i32) -> (i32, i32, i32) {
    %c0_i32 = arith.constant 0 : i32
    %c0_i32_0 = arith.constant 0 : i32
    %c0_i32_1 = arith.constant 0 : i32
    %c0_i32_2 = arith.constant 0 : i32
    return %c0_i32, %c0_i32_0, %c0_i32_1 : i32, i32, i32
  }
  func.func @transform_9(%arg0: i32) -> (i32, i32, i32) {
    %c0_i32 = arith.constant 0 : i32
    %c0_i32_0 = arith.constant 0 : i32
    %c0_i32_1 = arith.constant 0 : i32
    %c0_i32_2 = arith.constant 0 : i32
    return %c0_i32, %c0_i32_0, %c0_i32_1 : i32, i32, i32
  }
  func.func @transform_10(%arg0: i32) -> (i32, i32, i32) {
    %c0_i32 = arith.constant 0 : i32
    %c0_i32_0 = arith.constant 0 : i32
    %c0_i32_1 = arith.constant 0 : i32
    %c0_i32_2 = arith.constant 0 : i32
    return %c0_i32, %c0_i32_0, %c0_i32_1 : i32, i32, i32
  }
  func.func @transform_11(%arg0: i32) -> (i32, i32) {
    %c0_i32 = arith.constant 0 : i32
    %c0_i32_0 = arith.constant 0 : i32
    %c0_i32_1 = arith.constant 0 : i32
    return %c0_i32, %c0_i32_0 : i32, i32
  }
  func.func @transform_12(%arg0: i32) -> (i32, i32, i32) {
    %c0_i32 = arith.constant 0 : i32
    %c0_i32_0 = arith.constant 0 : i32
    %c0_i32_1 = arith.constant 0 : i32
    %c0_i32_2 = arith.constant 0 : i32
    return %c0_i32, %c0_i32_0, %c0_i32_1 : i32, i32, i32
  }
  func.func @transform_13(%arg0: i32) -> (i32, i32, i32) {
    %c0_i32 = arith.constant 0 : i32
    %c0_i32_0 = arith.constant 0 : i32
    %c0_i32_1 = arith.constant 0 : i32
    %c0_i32_2 = arith.constant 0 : i32
    return %c0_i32, %c0_i32_0, %c0_i32_1 : i32, i32, i32
  }
  func.func @transform_14(%arg0: i32) -> (i32, i32, i32) {
    %c0_i32 = arith.constant 0 : i32
    %c0_i32_0 = arith.constant 0 : i32
    %c0_i32_1 = arith.constant 0 : i32
    %c0_i32_2 = arith.constant 0 : i32
    return %c0_i32, %c0_i32_0, %c0_i32_1 : i32, i32, i32
  }
  func.func @transform_15(%arg0: i32) -> (i32, i32, i32) {
    %c0_i32 = arith.constant 0 : i32
    %c0_i32_0 = arith.constant 0 : i32
    %c0_i32_1 = arith.constant 0 : i32
    %c0_i32_2 = arith.constant 0 : i32
    return %c0_i32, %c0_i32_0, %c0_i32_1 : i32, i32, i32
  }
  func.func @transform_16(%arg0: i32) -> (i32, i32, i32) {
    %c0_i32 = arith.constant 0 : i32
    %c0_i32_0 = arith.constant 0 : i32
    %c0_i32_1 = arith.constant 0 : i32
    %c0_i32_2 = arith.constant 0 : i32
    return %c0_i32, %c0_i32_0, %c0_i32_1 : i32, i32, i32
  }
  func.func @transform_17(%arg0: i32) -> (i32, i32, i32) {
    %c0_i32 = arith.constant 0 : i32
    %c0_i32_0 = arith.constant 0 : i32
    %c0_i32_1 = arith.constant 0 : i32
    %c0_i32_2 = arith.constant 0 : i32
    return %c0_i32, %c0_i32_0, %c0_i32_1 : i32, i32, i32
  }
  func.func @transform_18(%arg0: i32) -> (i32, i32, i32) {
    %c0_i32 = arith.constant 0 : i32
    %c0_i32_0 = arith.constant 0 : i32
    %c0_i32_1 = arith.constant 0 : i32
    %c0_i32_2 = arith.constant 0 : i32
    return %c0_i32, %c0_i32_0, %c0_i32_1 : i32, i32, i32
  }
  func.func @transform_19(%arg0: i32) -> (i32, i32, i32) {
    %c0_i32 = arith.constant 0 : i32
    %c0_i32_0 = arith.constant 0 : i32
    %c0_i32_1 = arith.constant 0 : i32
    %c0_i32_2 = arith.constant 0 : i32
    return %c0_i32, %c0_i32_0, %c0_i32_1 : i32, i32, i32
  }
  func.func @transform_20(%arg0: i32) -> (i32, i32, i32) {
    %c0_i32 = arith.constant 0 : i32
    %c0_i32_0 = arith.constant 0 : i32
    %c0_i32_1 = arith.constant 0 : i32
    %c0_i32_2 = arith.constant 0 : i32
    return %c0_i32, %c0_i32_0, %c0_i32_1 : i32, i32, i32
  }
  func.func @transform_21(%arg0: i32) -> (i32, i32, i32) {
    %c0_i32 = arith.constant 0 : i32
    %c0_i32_0 = arith.constant 0 : i32
    %c0_i32_1 = arith.constant 0 : i32
    %c0_i32_2 = arith.constant 0 : i32
    return %c0_i32, %c0_i32_0, %c0_i32_1 : i32, i32, i32
  }
  func.func @transform_22(%arg0: i32) -> (i32, i32, i32) {
    %c0_i32 = arith.constant 0 : i32
    %c0_i32_0 = arith.constant 0 : i32
    %c0_i32_1 = arith.constant 0 : i32
    %c0_i32_2 = arith.constant 0 : i32
    return %c0_i32, %c0_i32_0, %c0_i32_1 : i32, i32, i32
  }
  func.func @transform_23(%arg0: i32) -> (i32, i32, i32) {
    %c0_i32 = arith.constant 0 : i32
    %c0_i32_0 = arith.constant 0 : i32
    %c0_i32_1 = arith.constant 0 : i32
    %c0_i32_2 = arith.constant 0 : i32
    return %c0_i32, %c0_i32_0, %c0_i32_1 : i32, i32, i32
  }
  func.func @transform_24(%arg0: i32) -> (i32, i32, i32) {
    %c0_i32 = arith.constant 0 : i32
    %c0_i32_0 = arith.constant 0 : i32
    %c0_i32_1 = arith.constant 0 : i32
    %c0_i32_2 = arith.constant 0 : i32
    return %c0_i32, %c0_i32_0, %c0_i32_1 : i32, i32, i32
  }
  func.func @transform_25(%arg0: i32) -> (i32, i32, i32) {
    %c0_i32 = arith.constant 0 : i32
    %c0_i32_0 = arith.constant 0 : i32
    %c0_i32_1 = arith.constant 0 : i32
    %c0_i32_2 = arith.constant 0 : i32
    return %c0_i32, %c0_i32_0, %c0_i32_1 : i32, i32, i32
  }
  func.func @transform_26(%arg0: i32) -> (i32, i32, i32) {
    %c0_i32 = arith.constant 0 : i32
    %c0_i32_0 = arith.constant 0 : i32
    %c0_i32_1 = arith.constant 0 : i32
    %c0_i32_2 = arith.constant 0 : i32
    return %c0_i32, %c0_i32_0, %c0_i32_1 : i32, i32, i32
  }
  func.func @transform_27(%arg0: i32) -> (i32, i32) {
    %c0_i32 = arith.constant 0 : i32
    %c0_i32_0 = arith.constant 0 : i32
    %c0_i32_1 = arith.constant 0 : i32
    return %c0_i32, %c0_i32_0 : i32, i32
  }
  func.func @transform_28(%arg0: i32) -> (i32, i32) {
    %c0_i32 = arith.constant 0 : i32
    %c0_i32_0 = arith.constant 0 : i32
    %c0_i32_1 = arith.constant 0 : i32
    return %c0_i32, %c0_i32_0 : i32, i32
  }
  func.func @transform_29(%arg0: i32) -> (i32, i32) {
    %c0_i32 = arith.constant 0 : i32
    %c0_i32_0 = arith.constant 0 : i32
    %c0_i32_1 = arith.constant 0 : i32
    return %c0_i32, %c0_i32_0 : i32, i32
  }
  func.func @transform_30(%arg0: i32) -> (i32, i32, i32) {
    %c0_i32 = arith.constant 0 : i32
    %c0_i32_0 = arith.constant 0 : i32
    %c0_i32_1 = arith.constant 0 : i32
    return %arg0, %c0_i32, %c0_i32_0 : i32, i32, i32
  }
}

</mosaic_0001>

<llo_original>
// kernel: transformer_model_forward.1
$region0: #{transformer_model_forward.1}
  #allocation0 [shape = 'u32[]', space=smem, size = 0x4, offset = 0x4, fixed_abs, tag = 'smem constant byte address 0x4 - core index']
  #allocation1 [shape = 'u32[144,128]{1,0:T(1,128)}', space=vmem, size = 0x12000, scoped, tag = 'internal scratch']
  %s0 = inlined_call_operand.smem [shape: u32[31], index: -1, kind: input, shape index: {}]
  %s1 = sld [smem:[%s0]]
  %s2 = scalar_lea.smem %s0, 1
  %s3 = sld [smem:[%s2]]
  %s4 = scalar_lea.smem %s0, 2
  %s5 = sld [smem:[%s4]]
  %s6 = scalar_lea.smem %s0, 3
  %s7 = sld [smem:[%s6]]
  %s8 = scalar_lea.smem %s0, 4
  %s9 = sld [smem:[%s8]]
  %s10 = scalar_lea.smem %s0, 5
  %s11 = sld [smem:[%s10]]
  %s12 = scalar_lea.smem %s0, 6
  %s13 = sld [smem:[%s12]]
  %s14 = scalar_lea.smem %s0, 7
  %s15 = sld [smem:[%s14]]
  %s16 = scalar_lea.smem %s0, 8
  %s17 = sld [smem:[%s16]]
  %s18 = scalar_lea.smem %s0, 9
  %s19 = sld [smem:[%s18]]
  %s20 = scalar_lea.smem %s0, 10
  %s21 = sld [smem:[%s20]]
  %s22 = scalar_lea.smem %s0, 11
  %s23 = sld [smem:[%s22]]
  %s24 = scalar_lea.smem %s0, 12
  %s25 = sld [smem:[%s24]]
  %s26 = scalar_lea.smem %s0, 13
  %s27 = sld [smem:[%s26]]
  %s28 = scalar_lea.smem %s0, 14
  %s29 = sld [smem:[%s28]]
  %s30 = scalar_lea.smem %s0, 15
  %s31 = sld [smem:[%s30]]
  %s32 = scalar_lea.smem %s0, 16
  %s33 = sld [smem:[%s32]]
  %s34 = scalar_lea.smem %s0, 17
  %s35 = sld [smem:[%s34]]
  %s36 = scalar_lea.smem %s0, 18
  %s37 = sld [smem:[%s36]]
  %s38 = scalar_lea.smem %s0, 19
  %s39 = sld [smem:[%s38]]
  %s40 = scalar_lea.smem %s0, 20
  %s41 = sld [smem:[%s40]]
  %s42 = scalar_lea.smem %s0, 21
  %s43 = sld [smem:[%s42]]
  %s44 = scalar_lea.smem %s0, 22
  %s45 = sld [smem:[%s44]]
  %s46 = scalar_lea.smem %s0, 23
  %s47 = sld [smem:[%s46]]
  %s48 = scalar_lea.smem %s0, 24
  %s49 = sld [smem:[%s48]]
  %s50 = scalar_lea.smem %s0, 25
  %s51 = sld [smem:[%s50]]
  %s52 = scalar_lea.smem %s0, 26
  %s53 = sld [smem:[%s52]]
  %s54 = scalar_lea.smem %s0, 27
  %s55 = sld [smem:[%s54]]
  %s56 = scalar_lea.smem %s0, 28
  %s57 = sld [smem:[%s56]]
  %s58 = scalar_lea.smem %s0, 29
  %s59 = sld [smem:[%s58]]
  %s60 = scalar_lea.smem %s0, 30
  %s61 = sld [smem:[%s60]]
  %s62 = sld [smem:[#allocation0]]
  $region153: #{transformer_model_forward.1} parent=0
    _
  %s64 = ssub.s32 1, %s62
  %s65 = scalar_select 0, %s64, %s62
  $region1: #{transformer_model_forward.1} parent=0
    #allocation2 [shape = 'u8[8192]{0}', space=vmem, size = 0x2000, scoped, tag = 'output window, operand 0']
    #allocation3 [shape = 's32[2]{0}', space=sflag, size = 0x8, scoped, tag = 'scoped memory for transformer_model_forward.1']
    %66 = vsyncpa [#allocation3], 0
    %s67 = scalar_lea.sflag [#allocation3], 1
    %68 = vsyncpa %s67, 0
    loop: start=0, step=1, limit=4
    $region2: #{transformer_model_forward.1} parent=1 // loop_pre_header
      _
    $region3: #{transformer_model_forward.1} parent=1 // loop_header
      %s70 = sphi 0, %s74
      %p71 = scmp.ge.s32.totalorder %s70, 4
      %s80 = sphi 0, %s82
      %s83 = sphi 0, %s80
      %s84 = sphi 0, %s83
      %s100 = sphi 0, %s84
      %s106 = sphi 0, %s108
      %s109 = sphi 0, %s106
      %s110 = sphi 0, %s109
      %s126 = sphi 0, %s110
      %s130 = sphi 0, %s130
      %s132 = sphi 0, %s130
      %s133 = sphi 0, %s132
      %s147 = sphi 0, %s133
      %s151 = sphi 0, %s151
      %s153 = sphi 0, %s151
      %s154 = sphi 0, %s153
      %s168 = sphi 0, %s154
      %s172 = sphi 0, %s172
      %s174 = sphi 0, %s172
      %s175 = sphi 0, %s174
      %s189 = sphi 0, %s175
      %s193 = sphi 0, %s193
      %s195 = sphi 0, %s193
      %s196 = sphi 0, %s195
      %s210 = sphi 0, %s196
      %s214 = sphi 0, %s214
      %s216 = sphi 0, %s214
      %s217 = sphi 0, %s216
      %s231 = sphi 0, %s217
      %s235 = sphi 0, %s235
      %s237 = sphi 0, %s235
      %s238 = sphi 0, %s237
      %s252 = sphi 0, %s238
      %s256 = sphi 0, %s256
      %s258 = sphi 0, %s256
      %s259 = sphi 0, %s258
      %s273 = sphi 0, %s259
      %s277 = sphi 0, %s277
      %s279 = sphi 0, %s277
      %s280 = sphi 0, %s279
      %s294 = sphi 0, %s280
      %s298 = sphi 0, %s298
      %s300 = sphi 0, %s298
      %s301 = sphi 0, %s300
      %s315 = sphi 0, %s301
      %s319 = sphi 0, %s319
      %s321 = sphi 0, %s319
      %s322 = sphi 0, %s321
      %s336 = sphi 0, %s322
      %s340 = sphi 0, %s340
      %s342 = sphi 0, %s340
      %s343 = sphi 0, %s342
      %s357 = sphi 0, %s343
      %s361 = sphi 0, %s361
      %s363 = sphi 0, %s361
      %s364 = sphi 0, %s363
      %s378 = sphi 0, %s364
      %s382 = sphi 0, %s382
      %s384 = sphi 0, %s382
      %s385 = sphi 0, %s384
      %s399 = sphi 0, %s385
      %s403 = sphi 0, %s403
      %s405 = sphi 0, %s403
      %s406 = sphi 0, %s405
      %s420 = sphi 0, %s406
      %s424 = sphi 0, %s424
      %s426 = sphi 0, %s424
      %s427 = sphi 0, %s426
      %s441 = sphi 0, %s427
      %s445 = sphi 0, %s445
      %s447 = sphi 0, %s445
      %s448 = sphi 0, %s447
      %s462 = sphi 0, %s448
      %s466 = sphi 0, %s466
      %s468 = sphi 0, %s466
      %s469 = sphi 0, %s468
      %s483 = sphi 0, %s469
      %s487 = sphi 0, %s487
      %s489 = sphi 0, %s487
      %s490 = sphi 0, %s489
      %s504 = sphi 0, %s490
      %s508 = sphi 0, %s508
      %s510 = sphi 0, %s508
      %s511 = sphi 0, %s510
      %s525 = sphi 0, %s511
      %s529 = sphi 0, %s529
      %s531 = sphi 0, %s529
      %s532 = sphi 0, %s531
      %s546 = sphi 0, %s532
      %s550 = sphi 0, %s550
      %s552 = sphi 0, %s550
      %s553 = sphi 0, %s552
      %s567 = sphi 0, %s553
      %s571 = sphi 0, %s571
      %s573 = sphi 0, %s571
      %s574 = sphi 0, %s573
      %s588 = sphi 0, %s574
      %s592 = sphi 0, %s592
      %s594 = sphi 0, %s592
      %s595 = sphi 0, %s594
      %s609 = sphi 0, %s595
      %s613 = sphi 0, %s613
      %s615 = sphi 0, %s613
      %s616 = sphi 0, %s615
      %s630 = sphi 0, %s616
      %s634 = sphi 0, %s634
      %s636 = sphi 0, %s634
      %s637 = sphi 0, %s636
      %s651 = sphi 0, %s637
      %s655 = sphi 0, %s655
      %s657 = sphi 0, %s655
      %s658 = sphi 0, %s657
      %s672 = sphi 0, %s658
      %s676 = sphi 0, %s676
      %s678 = sphi 0, %s676
      %s679 = sphi 0, %s678
      %s693 = sphi 0, %s679
      %s697 = sphi 0, %s697
      %s699 = sphi 0, %s697
      %s700 = sphi 0, %s699
      %s714 = sphi 0, %s700
      %s720 = sphi 0, %s722
      %s723 = sphi 0, %s720
      %s724 = sphi 0, %s723
      %s740 = sphi 0, %s724
    $region4: #{transformer_model_forward.1} parent=1 // loop_header_branch
      %73 = sbr.rel (%p71) target = $region8
    $region5: #{transformer_model_forward.1} parent=1 // loop_body
      %s75 = ssub.s32 %s70, 1
      %s76 = ssub.s32 %s70, 2
      %s77 = sadd.s32 %s70, 1
      %s78 = ssub.s32 %s70, %s77
      %p79 = scmp.eq.s32.totalorder %s78, 0
      %s81 = sadd.s32 %s80, 1
      %s82 = scalar_select %p79, %s80, %s81
      %p85 = pneg %p79
      %p86 = scmp.eq.s32.totalorder %s70, 1
      %p87 = por %p85, %p86
      %p88 = scmp.ne.s32.totalorder %s80, %s83
      %p89 = scmp.eq.s32.totalorder %s70, 0
      %p90 = por %p88, %p89
      %p91 = scmp.ne.s32.totalorder %s80, %s83
      %p92 = scmp.eq.s32.totalorder %s75, 1
      %p93 = por %p91, %p92
      %p94 = scmp.ne.s32.totalorder %s83, %s84
      %p95 = scmp.eq.s32.totalorder %s75, 0
      %p96 = por %p94, %p95
      %p97 = scmp.ne.s32.totalorder %s83, %s84
      %p98 = scmp.eq.s32.totalorder %s76, 1
      %p99 = por %p97, %p98
      %p101 = scmp.ne.s32.totalorder %s84, %s100
      %p102 = scmp.eq.s32.totalorder %s76, 0
      %p103 = por %p101, %p102
      %s104 = ssub.s32 %s70, %s77
      %p105 = scmp.eq.s32.totalorder %s104, 0
      %s107 = sadd.s32 %s106, 1
      %s108 = scalar_select %p105, %s106, %s107
      %p111 = pneg %p105
      %p112 = scmp.eq.s32.totalorder %s70, 1
      %p113 = por %p111, %p112
      %p114 = scmp.ne.s32.totalorder %s106, %s109
      %p115 = scmp.eq.s32.totalorder %s70, 0
      %p116 = por %p114, %p115
      %p117 = scmp.ne.s32.totalorder %s106, %s109
      %p118 = scmp.eq.s32.totalorder %s75, 1
      %p119 = por %p117, %p118
      %p120 = scmp.ne.s32.totalorder %s109, %s110
      %p121 = scmp.eq.s32.totalorder %s75, 0
      %p122 = por %p120, %p121
      %p123 = scmp.ne.s32.totalorder %s109, %s110
      %p124 = scmp.eq.s32.totalorder %s76, 1
      %p125 = por %p123, %p124
      %p127 = scmp.ne.s32.totalorder %s110, %s126
      %p128 = scmp.eq.s32.totalorder %s76, 0
      %p129 = por %p127, %p128
      %s131 = sadd.s32 %s130, 1
      %p134 = scmp.eq.s32.totalorder %s70, 1
      %p135 = scmp.ne.s32.totalorder %s130, %s132
      %p136 = scmp.eq.s32.totalorder %s70, 0
      %p137 = por %p135, %p136
      %p138 = scmp.ne.s32.totalorder %s130, %s132
      %p139 = scmp.eq.s32.totalorder %s75, 1
      %p140 = por %p138, %p139
      %p141 = scmp.ne.s32.totalorder %s132, %s133
      %p142 = scmp.eq.s32.totalorder %s75, 0
      %p143 = por %p141, %p142
      %p144 = scmp.ne.s32.totalorder %s132, %s133
      %p145 = scmp.eq.s32.totalorder %s76, 1
      %p146 = por %p144, %p145
      %p148 = scmp.ne.s32.totalorder %s133, %s147
      %p149 = scmp.eq.s32.totalorder %s76, 0
      %p150 = por %p148, %p149
      %s152 = sadd.s32 %s151, 1
      %p155 = scmp.eq.s32.totalorder %s70, 1
      %p156 = scmp.ne.s32.totalorder %s151, %s153
      %p157 = scmp.eq.s32.totalorder %s70, 0
      %p158 = por %p156, %p157
      %p159 = scmp.ne.s32.totalorder %s151, %s153
      %p160 = scmp.eq.s32.totalorder %s75, 1
      %p161 = por %p159, %p160
      %p162 = scmp.ne.s32.totalorder %s153, %s154
      %p163 = scmp.eq.s32.totalorder %s75, 0
      %p164 = por %p162, %p163
      %p165 = scmp.ne.s32.totalorder %s153, %s154
      %p166 = scmp.eq.s32.totalorder %s76, 1
      %p167 = por %p165, %p166
      %p169 = scmp.ne.s32.totalorder %s154, %s168
      %p170 = scmp.eq.s32.totalorder %s76, 0
      %p171 = por %p169, %p170
      %s173 = sadd.s32 %s172, 1
      %p176 = scmp.eq.s32.totalorder %s70, 1
      %p177 = scmp.ne.s32.totalorder %s172, %s174
      %p178 = scmp.eq.s32.totalorder %s70, 0
      %p179 = por %p177, %p178
      %p180 = scmp.ne.s32.totalorder %s172, %s174
      %p181 = scmp.eq.s32.totalorder %s75, 1
      %p182 = por %p180, %p181
      %p183 = scmp.ne.s32.totalorder %s174, %s175
      %p184 = scmp.eq.s32.totalorder %s75, 0
      %p185 = por %p183, %p184
      %p186 = scmp.ne.s32.totalorder %s174, %s175
      %p187 = scmp.eq.s32.totalorder %s76, 1
      %p188 = por %p186, %p187
      %p190 = scmp.ne.s32.totalorder %s175, %s189
      %p191 = scmp.eq.s32.totalorder %s76, 0
      %p192 = por %p190, %p191
      %s194 = sadd.s32 %s193, 1
      %p197 = scmp.eq.s32.totalorder %s70, 1
      %p198 = scmp.ne.s32.totalorder %s193, %s195
      %p199 = scmp.eq.s32.totalorder %s70, 0
      %p200 = por %p198, %p199
      %p201 = scmp.ne.s32.totalorder %s193, %s195
      %p202 = scmp.eq.s32.totalorder %s75, 1
      %p203 = por %p201, %p202
      %p204 = scmp.ne.s32.totalorder %s195, %s196
      %p205 = scmp.eq.s32.totalorder %s75, 0
      %p206 = por %p204, %p205
      %p207 = scmp.ne.s32.totalorder %s195, %s196
      %p208 = scmp.eq.s32.totalorder %s76, 1
      %p209 = por %p207, %p208
      %p211 = scmp.ne.s32.totalorder %s196, %s210
      %p212 = scmp.eq.s32.totalorder %s76, 0
      %p213 = por %p211, %p212
      %s215 = sadd.s32 %s214, 1
      %p218 = scmp.eq.s32.totalorder %s70, 1
      %p219 = scmp.ne.s32.totalorder %s214, %s216
      %p220 = scmp.eq.s32.totalorder %s70, 0
      %p221 = por %p219, %p220
      %p222 = scmp.ne.s32.totalorder %s214, %s216
      %p223 = scmp.eq.s32.totalorder %s75, 1
      %p224 = por %p222, %p223
      %p225 = scmp.ne.s32.totalorder %s216, %s217
      %p226 = scmp.eq.s32.totalorder %s75, 0
      %p227 = por %p225, %p226
      %p228 = scmp.ne.s32.totalorder %s216, %s217
      %p229 = scmp.eq.s32.totalorder %s76, 1
      %p230 = por %p228, %p229
      %p232 = scmp.ne.s32.totalorder %s217, %s231
      %p233 = scmp.eq.s32.totalorder %s76, 0
      %p234 = por %p232, %p233
      %s236 = sadd.s32 %s235, 1
      %p239 = scmp.eq.s32.totalorder %s70, 1
      %p240 = scmp.ne.s32.totalorder %s235, %s237
      %p241 = scmp.eq.s32.totalorder %s70, 0
      %p242 = por %p240, %p241
      %p243 = scmp.ne.s32.totalorder %s235, %s237
      %p244 = scmp.eq.s32.totalorder %s75, 1
      %p245 = por %p243, %p244
      %p246 = scmp.ne.s32.totalorder %s237, %s238
      %p247 = scmp.eq.s32.totalorder %s75, 0
      %p248 = por %p246, %p247
      %p249 = scmp.ne.s32.totalorder %s237, %s238
      %p250 = scmp.eq.s32.totalorder %s76, 1
      %p251 = por %p249, %p250
      %p253 = scmp.ne.s32.totalorder %s238, %s252
      %p254 = scmp.eq.s32.totalorder %s76, 0
      %p255 = por %p253, %p254
      %s257 = sadd.s32 %s256, 1
      %p260 = scmp.eq.s32.totalorder %s70, 1
      %p261 = scmp.ne.s32.totalorder %s256, %s258
      %p262 = scmp.eq.s32.totalorder %s70, 0
      %p263 = por %p261, %p262
      %p264 = scmp.ne.s32.totalorder %s256, %s258
      %p265 = scmp.eq.s32.totalorder %s75, 1
      %p266 = por %p264, %p265
      %p267 = scmp.ne.s32.totalorder %s258, %s259
      %p268 = scmp.eq.s32.totalorder %s75, 0
      %p269 = por %p267, %p268
      %p270 = scmp.ne.s32.totalorder %s258, %s259
      %p271 = scmp.eq.s32.totalorder %s76, 1
      %p272 = por %p270, %p271
      %p274 = scmp.ne.s32.totalorder %s259, %s273
      %p275 = scmp.eq.s32.totalorder %s76, 0
      %p276 = por %p274, %p275
      %s278 = sadd.s32 %s277, 1
      %p281 = scmp.eq.s32.totalorder %s70, 1
      %p282 = scmp.ne.s32.totalorder %s277, %s279
      %p283 = scmp.eq.s32.totalorder %s70, 0
      %p284 = por %p282, %p283
      %p285 = scmp.ne.s32.totalorder %s277, %s279
      %p286 = scmp.eq.s32.totalorder %s75, 1
      %p287 = por %p285, %p286
      %p288 = scmp.ne.s32.totalorder %s279, %s280
      %p289 = scmp.eq.s32.totalorder %s75, 0
      %p290 = por %p288, %p289
      %p291 = scmp.ne.s32.totalorder %s279, %s280
      %p292 = scmp.eq.s32.totalorder %s76, 1
      %p293 = por %p291, %p292
      %p295 = scmp.ne.s32.totalorder %s280, %s294
      %p296 = scmp.eq.s32.totalorder %s76, 0
      %p297 = por %p295, %p296
      %s299 = sadd.s32 %s298, 1
      %p302 = scmp.eq.s32.totalorder %s70, 1
      %p303 = scmp.ne.s32.totalorder %s298, %s300
      %p304 = scmp.eq.s32.totalorder %s70, 0
      %p305 = por %p303, %p304
      %p306 = scmp.ne.s32.totalorder %s298, %s300
      %p307 = scmp.eq.s32.totalorder %s75, 1
      %p308 = por %p306, %p307
      %p309 = scmp.ne.s32.totalorder %s300, %s301
      %p310 = scmp.eq.s32.totalorder %s75, 0
      %p311 = por %p309, %p310
      %p312 = scmp.ne.s32.totalorder %s300, %s301
      %p313 = scmp.eq.s32.totalorder %s76, 1
      %p314 = por %p312, %p313
      %p316 = scmp.ne.s32.totalorder %s301, %s315
      %p317 = scmp.eq.s32.totalorder %s76, 0
      %p318 = por %p316, %p317
      %s320 = sadd.s32 %s319, 1
      %p323 = scmp.eq.s32.totalorder %s70, 1
      %p324 = scmp.ne.s32.totalorder %s319, %s321
      %p325 = scmp.eq.s32.totalorder %s70, 0
      %p326 = por %p324, %p325
      %p327 = scmp.ne.s32.totalorder %s319, %s321
      %p328 = scmp.eq.s32.totalorder %s75, 1
      %p329 = por %p327, %p328
      %p330 = scmp.ne.s32.totalorder %s321, %s322
      %p331 = scmp.eq.s32.totalorder %s75, 0
      %p332 = por %p330, %p331
      %p333 = scmp.ne.s32.totalorder %s321, %s322
      %p334 = scmp.eq.s32.totalorder %s76, 1
      %p335 = por %p333, %p334
      %p337 = scmp.ne.s32.totalorder %s322, %s336
      %p338 = scmp.eq.s32.totalorder %s76, 0
      %p339 = por %p337, %p338
      %s341 = sadd.s32 %s340, 1
      %p344 = scmp.eq.s32.totalorder %s70, 1
      %p345 = scmp.ne.s32.totalorder %s340, %s342
      %p346 = scmp.eq.s32.totalorder %s70, 0
      %p347 = por %p345, %p346
      %p348 = scmp.ne.s32.totalorder %s340, %s342
      %p349 = scmp.eq.s32.totalorder %s75, 1
      %p350 = por %p348, %p349
      %p351 = scmp.ne.s32.totalorder %s342, %s343
      %p352 = scmp.eq.s32.totalorder %s75, 0
      %p353 = por %p351, %p352
      %p354 = scmp.ne.s32.totalorder %s342, %s343
      %p355 = scmp.eq.s32.totalorder %s76, 1
      %p356 = por %p354, %p355
      %p358 = scmp.ne.s32.totalorder %s343, %s357
      %p359 = scmp.eq.s32.totalorder %s76, 0
      %p360 = por %p358, %p359
      %s362 = sadd.s32 %s361, 1
      %p365 = scmp.eq.s32.totalorder %s70, 1
      %p366 = scmp.ne.s32.totalorder %s361, %s363
      %p367 = scmp.eq.s32.totalorder %s70, 0
      %p368 = por %p366, %p367
      %p369 = scmp.ne.s32.totalorder %s361, %s363
      %p370 = scmp.eq.s32.totalorder %s75, 1
      %p371 = por %p369, %p370
      %p372 = scmp.ne.s32.totalorder %s363, %s364
      %p373 = scmp.eq.s32.totalorder %s75, 0
      %p374 = por %p372, %p373
      %p375 = scmp.ne.s32.totalorder %s363, %s364
      %p376 = scmp.eq.s32.totalorder %s76, 1
      %p377 = por %p375, %p376
      %p379 = scmp.ne.s32.totalorder %s364, %s378
      %p380 = scmp.eq.s32.totalorder %s76, 0
      %p381 = por %p379, %p380
      %s383 = sadd.s32 %s382, 1
      %p386 = scmp.eq.s32.totalorder %s70, 1
      %p387 = scmp.ne.s32.totalorder %s382, %s384
      %p388 = scmp.eq.s32.totalorder %s70, 0
      %p389 = por %p387, %p388
      %p390 = scmp.ne.s32.totalorder %s382, %s384
      %p391 = scmp.eq.s32.totalorder %s75, 1
      %p392 = por %p390, %p391
      %p393 = scmp.ne.s32.totalorder %s384, %s385
      %p394 = scmp.eq.s32.totalorder %s75, 0
      %p395 = por %p393, %p394
      %p396 = scmp.ne.s32.totalorder %s384, %s385
      %p397 = scmp.eq.s32.totalorder %s76, 1
      %p398 = por %p396, %p397
      %p400 = scmp.ne.s32.totalorder %s385, %s399
      %p401 = scmp.eq.s32.totalorder %s76, 0
      %p402 = por %p400, %p401
      %s404 = sadd.s32 %s403, 1
      %p407 = scmp.eq.s32.totalorder %s70, 1
      %p408 = scmp.ne.s32.totalorder %s403, %s405
      %p409 = scmp.eq.s32.totalorder %s70, 0
      %p410 = por %p408, %p409
      %p411 = scmp.ne.s32.totalorder %s403, %s405
      %p412 = scmp.eq.s32.totalorder %s75, 1
      %p413 = por %p411, %p412
      %p414 = scmp.ne.s32.totalorder %s405, %s406
      %p415 = scmp.eq.s32.totalorder %s75, 0
      %p416 = por %p414, %p415
      %p417 = scmp.ne.s32.totalorder %s405, %s406
      %p418 = scmp.eq.s32.totalorder %s76, 1
      %p419 = por %p417, %p418
      %p421 = scmp.ne.s32.totalorder %s406, %s420
      %p422 = scmp.eq.s32.totalorder %s76, 0
      %p423 = por %p421, %p422
      %s425 = sadd.s32 %s424, 1
      %p428 = scmp.eq.s32.totalorder %s70, 1
      %p429 = scmp.ne.s32.totalorder %s424, %s426
      %p430 = scmp.eq.s32.totalorder %s70, 0
      %p431 = por %p429, %p430
      %p432 = scmp.ne.s32.totalorder %s424, %s426
      %p433 = scmp.eq.s32.totalorder %s75, 1
      %p434 = por %p432, %p433
      %p435 = scmp.ne.s32.totalorder %s426, %s427
      %p436 = scmp.eq.s32.totalorder %s75, 0
      %p437 = por %p435, %p436
      %p438 = scmp.ne.s32.totalorder %s426, %s427
      %p439 = scmp.eq.s32.totalorder %s76, 1
      %p440 = por %p438, %p439
      %p442 = scmp.ne.s32.totalorder %s427, %s441
      %p443 = scmp.eq.s32.totalorder %s76, 0
      %p444 = por %p442, %p443
      %s446 = sadd.s32 %s445, 1
      %p449 = scmp.eq.s32.totalorder %s70, 1
      %p450 = scmp.ne.s32.totalorder %s445, %s447
      %p451 = scmp.eq.s32.totalorder %s70, 0
      %p452 = por %p450, %p451
      %p453 = scmp.ne.s32.totalorder %s445, %s447
      %p454 = scmp.eq.s32.totalorder %s75, 1
      %p455 = por %p453, %p454
      %p456 = scmp.ne.s32.totalorder %s447, %s448
      %p457 = scmp.eq.s32.totalorder %s75, 0
      %p458 = por %p456, %p457
      %p459 = scmp.ne.s32.totalorder %s447, %s448
      %p460 = scmp.eq.s32.totalorder %s76, 1
      %p461 = por %p459, %p460
      %p463 = scmp.ne.s32.totalorder %s448, %s462
      %p464 = scmp.eq.s32.totalorder %s76, 0
      %p465 = por %p463, %p464
      %s467 = sadd.s32 %s466, 1
      %p470 = scmp.eq.s32.totalorder %s70, 1
      %p471 = scmp.ne.s32.totalorder %s466, %s468
      %p472 = scmp.eq.s32.totalorder %s70, 0
      %p473 = por %p471, %p472
      %p474 = scmp.ne.s32.totalorder %s466, %s468
      %p475 = scmp.eq.s32.totalorder %s75, 1
      %p476 = por %p474, %p475
      %p477 = scmp.ne.s32.totalorder %s468, %s469
      %p478 = scmp.eq.s32.totalorder %s75, 0
      %p479 = por %p477, %p478
      %p480 = scmp.ne.s32.totalorder %s468, %s469
      %p481 = scmp.eq.s32.totalorder %s76, 1
      %p482 = por %p480, %p481
      %p484 = scmp.ne.s32.totalorder %s469, %s483
      %p485 = scmp.eq.s32.totalorder %s76, 0
      %p486 = por %p484, %p485
      %s488 = sadd.s32 %s487, 1
      %p491 = scmp.eq.s32.totalorder %s70, 1
      %p492 = scmp.ne.s32.totalorder %s487, %s489
      %p493 = scmp.eq.s32.totalorder %s70, 0
      %p494 = por %p492, %p493
      %p495 = scmp.ne.s32.totalorder %s487, %s489
      %p496 = scmp.eq.s32.totalorder %s75, 1
      %p497 = por %p495, %p496
      %p498 = scmp.ne.s32.totalorder %s489, %s490
      %p499 = scmp.eq.s32.totalorder %s75, 0
      %p500 = por %p498, %p499
      %p501 = scmp.ne.s32.totalorder %s489, %s490
      %p502 = scmp.eq.s32.totalorder %s76, 1
      %p503 = por %p501, %p502
      %p505 = scmp.ne.s32.totalorder %s490, %s504
      %p506 = scmp.eq.s32.totalorder %s76, 0
      %p507 = por %p505, %p506
      %s509 = sadd.s32 %s508, 1
      %p512 = scmp.eq.s32.totalorder %s70, 1
      %p513 = scmp.ne.s32.totalorder %s508, %s510
      %p514 = scmp.eq.s32.totalorder %s70, 0
      %p515 = por %p513, %p514
      %p516 = scmp.ne.s32.totalorder %s508, %s510
      %p517 = scmp.eq.s32.totalorder %s75, 1
      %p518 = por %p516, %p517
      %p519 = scmp.ne.s32.totalorder %s510, %s511
      %p520 = scmp.eq.s32.totalorder %s75, 0
      %p521 = por %p519, %p520
      %p522 = scmp.ne.s32.totalorder %s510, %s511
      %p523 = scmp.eq.s32.totalorder %s76, 1
      %p524 = por %p522, %p523
      %p526 = scmp.ne.s32.totalorder %s511, %s525
      %p527 = scmp.eq.s32.totalorder %s76, 0
      %p528 = por %p526, %p527
      %s530 = sadd.s32 %s529, 1
      %p533 = scmp.eq.s32.totalorder %s70, 1
      %p534 = scmp.ne.s32.totalorder %s529, %s531
      %p535 = scmp.eq.s32.totalorder %s70, 0
      %p536 = por %p534, %p535
      %p537 = scmp.ne.s32.totalorder %s529, %s531
      %p538 = scmp.eq.s32.totalorder %s75, 1
      %p539 = por %p537, %p538
      %p540 = scmp.ne.s32.totalorder %s531, %s532
      %p541 = scmp.eq.s32.totalorder %s75, 0
      %p542 = por %p540, %p541
      %p543 = scmp.ne.s32.totalorder %s531, %s532
      %p544 = scmp.eq.s32.totalorder %s76, 1
      %p545 = por %p543, %p544
      %p547 = scmp.ne.s32.totalorder %s532, %s546
      %p548 = scmp.eq.s32.totalorder %s76, 0
      %p549 = por %p547, %p548
      %s551 = sadd.s32 %s550, 1
      %p554 = scmp.eq.s32.totalorder %s70, 1
      %p555 = scmp.ne.s32.totalorder %s550, %s552
      %p556 = scmp.eq.s32.totalorder %s70, 0
      %p557 = por %p555, %p556
      %p558 = scmp.ne.s32.totalorder %s550, %s552
      %p559 = scmp.eq.s32.totalorder %s75, 1
      %p560 = por %p558, %p559
      %p561 = scmp.ne.s32.totalorder %s552, %s553
      %p562 = scmp.eq.s32.totalorder %s75, 0
      %p563 = por %p561, %p562
      %p564 = scmp.ne.s32.totalorder %s552, %s553
      %p565 = scmp.eq.s32.totalorder %s76, 1
      %p566 = por %p564, %p565
      %p568 = scmp.ne.s32.totalorder %s553, %s567
      %p569 = scmp.eq.s32.totalorder %s76, 0
      %p570 = por %p568, %p569
      %s572 = sadd.s32 %s571, 1
      %p575 = scmp.eq.s32.totalorder %s70, 1
      %p576 = scmp.ne.s32.totalorder %s571, %s573
      %p577 = scmp.eq.s32.totalorder %s70, 0
      %p578 = por %p576, %p577
      %p579 = scmp.ne.s32.totalorder %s571, %s573
      %p580 = scmp.eq.s32.totalorder %s75, 1
      %p581 = por %p579, %p580
      %p582 = scmp.ne.s32.totalorder %s573, %s574
      %p583 = scmp.eq.s32.totalorder %s75, 0
      %p584 = por %p582, %p583
      %p585 = scmp.ne.s32.totalorder %s573, %s574
      %p586 = scmp.eq.s32.totalorder %s76, 1
      %p587 = por %p585, %p586
      %p589 = scmp.ne.s32.totalorder %s574, %s588
      %p590 = scmp.eq.s32.totalorder %s76, 0
      %p591 = por %p589, %p590
      %s593 = sadd.s32 %s592, 1
      %p596 = scmp.eq.s32.totalorder %s70, 1
      %p597 = scmp.ne.s32.totalorder %s592, %s594
      %p598 = scmp.eq.s32.totalorder %s70, 0
      %p599 = por %p597, %p598
      %p600 = scmp.ne.s32.totalorder %s592, %s594
      %p601 = scmp.eq.s32.totalorder %s75, 1
      %p602 = por %p600, %p601
      %p603 = scmp.ne.s32.totalorder %s594, %s595
      %p604 = scmp.eq.s32.totalorder %s75, 0
      %p605 = por %p603, %p604
      %p606 = scmp.ne.s32.totalorder %s594, %s595
      %p607 = scmp.eq.s32.totalorder %s76, 1
      %p608 = por %p606, %p607
      %p610 = scmp.ne.s32.totalorder %s595, %s609
      %p611 = scmp.eq.s32.totalorder %s76, 0
      %p612 = por %p610, %p611
      %s614 = sadd.s32 %s613, 1
      %p617 = scmp.eq.s32.totalorder %s70, 1
      %p618 = scmp.ne.s32.totalorder %s613, %s615
      %p619 = scmp.eq.s32.totalorder %s70, 0
      %p620 = por %p618, %p619
      %p621 = scmp.ne.s32.totalorder %s613, %s615
      %p622 = scmp.eq.s32.totalorder %s75, 1
      %p623 = por %p621, %p622
      %p624 = scmp.ne.s32.totalorder %s615, %s616
      %p625 = scmp.eq.s32.totalorder %s75, 0
      %p626 = por %p624, %p625
      %p627 = scmp.ne.s32.totalorder %s615, %s616
      %p628 = scmp.eq.s32.totalorder %s76, 1
      %p629 = por %p627, %p628
      %p631 = scmp.ne.s32.totalorder %s616, %s630
      %p632 = scmp.eq.s32.totalorder %s76, 0
      %p633 = por %p631, %p632
      %s635 = sadd.s32 %s634, 1
      %p638 = scmp.eq.s32.totalorder %s70, 1
      %p639 = scmp.ne.s32.totalorder %s634, %s636
      %p640 = scmp.eq.s32.totalorder %s70, 0
      %p641 = por %p639, %p640
      %p642 = scmp.ne.s32.totalorder %s634, %s636
      %p643 = scmp.eq.s32.totalorder %s75, 1
      %p644 = por %p642, %p643
      %p645 = scmp.ne.s32.totalorder %s636, %s637
      %p646 = scmp.eq.s32.totalorder %s75, 0
      %p647 = por %p645, %p646
      %p648 = scmp.ne.s32.totalorder %s636, %s637
      %p649 = scmp.eq.s32.totalorder %s76, 1
      %p650 = por %p648, %p649
      %p652 = scmp.ne.s32.totalorder %s637, %s651
      %p653 = scmp.eq.s32.totalorder %s76, 0
      %p654 = por %p652, %p653
      %s656 = sadd.s32 %s655, 1
      %p659 = scmp.eq.s32.totalorder %s70, 1
      %p660 = scmp.ne.s32.totalorder %s655, %s657
      %p661 = scmp.eq.s32.totalorder %s70, 0
      %p662 = por %p660, %p661
      %p663 = scmp.ne.s32.totalorder %s655, %s657
      %p664 = scmp.eq.s32.totalorder %s75, 1
      %p665 = por %p663, %p664
      %p666 = scmp.ne.s32.totalorder %s657, %s658
      %p667 = scmp.eq.s32.totalorder %s75, 0
      %p668 = por %p666, %p667
      %p669 = scmp.ne.s32.totalorder %s657, %s658
      %p670 = scmp.eq.s32.totalorder %s76, 1
      %p671 = por %p669, %p670
      %p673 = scmp.ne.s32.totalorder %s658, %s672
      %p674 = scmp.eq.s32.totalorder %s76, 0
      %p675 = por %p673, %p674
      %s677 = sadd.s32 %s676, 1
      %p680 = scmp.eq.s32.totalorder %s70, 1
      %p681 = scmp.ne.s32.totalorder %s676, %s678
      %p682 = scmp.eq.s32.totalorder %s70, 0
      %p683 = por %p681, %p682
      %p684 = scmp.ne.s32.totalorder %s676, %s678
      %p685 = scmp.eq.s32.totalorder %s75, 1
      %p686 = por %p684, %p685
      %p687 = scmp.ne.s32.totalorder %s678, %s679
      %p688 = scmp.eq.s32.totalorder %s75, 0
      %p689 = por %p687, %p688
      %p690 = scmp.ne.s32.totalorder %s678, %s679
      %p691 = scmp.eq.s32.totalorder %s76, 1
      %p692 = por %p690, %p691
      %p694 = scmp.ne.s32.totalorder %s679, %s693
      %p695 = scmp.eq.s32.totalorder %s76, 0
      %p696 = por %p694, %p695
      %s698 = sadd.s32 %s697, 1
      %p701 = scmp.eq.s32.totalorder %s70, 1
      %p702 = scmp.ne.s32.totalorder %s697, %s699
      %p703 = scmp.eq.s32.totalorder %s70, 0
      %p704 = por %p702, %p703
      %p705 = scmp.ne.s32.totalorder %s697, %s699
      %p706 = scmp.eq.s32.totalorder %s75, 1
      %p707 = por %p705, %p706
      %p708 = scmp.ne.s32.totalorder %s699, %s700
      %p709 = scmp.eq.s32.totalorder %s75, 0
      %p710 = por %p708, %p709
      %p711 = scmp.ne.s32.totalorder %s699, %s700
      %p712 = scmp.eq.s32.totalorder %s76, 1
      %p713 = por %p711, %p712
      %p715 = scmp.ne.s32.totalorder %s700, %s714
      %p716 = scmp.eq.s32.totalorder %s76, 0
      %p717 = por %p715, %p716
      %s718 = ssub.s32 %s70, %s77
      %p719 = scmp.eq.s32.totalorder %s718, 0
      %s721 = sadd.s32 %s720, 1
      %s722 = scalar_select %p719, %s720, %s721
      %p725 = pneg %p719
      %p726 = scmp.eq.s32.totalorder %s70, 1
      %p727 = por %p725, %p726
      %p728 = scmp.ne.s32.totalorder %s720, %s723
      %p729 = scmp.eq.s32.totalorder %s70, 0
      %p730 = por %p728, %p729
      %p731 = scmp.ne.s32.totalorder %s720, %s723
      %p732 = scmp.eq.s32.totalorder %s75, 1
      %p733 = por %p731, %p732
      %p734 = scmp.ne.s32.totalorder %s723, %s724
      %p735 = scmp.eq.s32.totalorder %s75, 0
      %p736 = por %p734, %p735
      %p737 = scmp.ne.s32.totalorder %s723, %s724
      %p738 = scmp.eq.s32.totalorder %s76, 1
      %p739 = por %p737, %p738
      %p741 = scmp.ne.s32.totalorder %s724, %s740
      %p742 = scmp.eq.s32.totalorder %s76, 0
      %p743 = por %p741, %p742
      %p744 = scmp.le.s32.totalorder 1, %s70
      %p745 = scmp.lt.s32.totalorder %s70, 3
      %p746 = pnand %p744, %p745
      %p747 = pneg %p746
      // Predicated region
      $region9: #{transformer_model_forward.1} parent=5 // pred_check
        _
      $region10: #{transformer_model_forward.1} parent=5 // pred_check_branch
        %749 = sbr.rel (%p746) target = $region12
      $region11: #{transformer_model_forward.1} parent=5 // pred_region
        %s750 = ssub.s32 %s70, 1
        // Predicated region
        $region13: #{transformer_model_forward.1} parent=11 // pred_check
          %p751 = pneg %p143
        $region14: #{transformer_model_forward.1} parent=11 // pred_check_branch
          %753 = sbr.rel (%p751) target = $region16
        $region15: #{transformer_model_forward.1} parent=11 // pred_region
          _
        $region16: #{transformer_model_forward.1} parent=11 // pred_fallthru
          _
        // Predicated region
        $region17: #{transformer_model_forward.1} parent=11 // pred_check
          %p754 = pneg %p164
        $region18: #{transformer_model_forward.1} parent=11 // pred_check_branch
          %756 = sbr.rel (%p754) target = $region20
        $region19: #{transformer_model_forward.1} parent=11 // pred_region
          _
        $region20: #{transformer_model_forward.1} parent=11 // pred_fallthru
          _
        // Predicated region
        $region21: #{transformer_model_forward.1} parent=11 // pred_check
          %p757 = pneg %p185
        $region22: #{transformer_model_forward.1} parent=11 // pred_check_branch
          %759 = sbr.rel (%p757) target = $region24
        $region23: #{transformer_model_forward.1} parent=11 // pred_region
          _
        $region24: #{transformer_model_forward.1} parent=11 // pred_fallthru
          _
        // Predicated region
        $region25: #{transformer_model_forward.1} parent=11 // pred_check
          %p760 = pneg %p206
        $region26: #{transformer_model_forward.1} parent=11 // pred_check_branch
          %762 = sbr.rel (%p760) target = $region28
        $region27: #{transformer_model_forward.1} parent=11 // pred_region
          _
        $region28: #{transformer_model_forward.1} parent=11 // pred_fallthru
          _
        // Predicated region
        $region29: #{transformer_model_forward.1} parent=11 // pred_check
          %p763 = pneg %p227
        $region30: #{transformer_model_forward.1} parent=11 // pred_check_branch
          %765 = sbr.rel (%p763) target = $region32
        $region31: #{transformer_model_forward.1} parent=11 // pred_region
          _
        $region32: #{transformer_model_forward.1} parent=11 // pred_fallthru
          _
        // Predicated region
        $region33: #{transformer_model_forward.1} parent=11 // pred_check
          %p766 = pneg %p248
        $region34: #{transformer_model_forward.1} parent=11 // pred_check_branch
          %768 = sbr.rel (%p766) target = $region36
        $region35: #{transformer_model_forward.1} parent=11 // pred_region
          _
        $region36: #{transformer_model_forward.1} parent=11 // pred_fallthru
          _
        // Predicated region
        $region37: #{transformer_model_forward.1} parent=11 // pred_check
          %p769 = pneg %p269
        $region38: #{transformer_model_forward.1} parent=11 // pred_check_branch
          %771 = sbr.rel (%p769) target = $region40
        $region39: #{transformer_model_forward.1} parent=11 // pred_region
          _
        $region40: #{transformer_model_forward.1} parent=11 // pred_fallthru
          _
        // Predicated region
        $region41: #{transformer_model_forward.1} parent=11 // pred_check
          %p772 = pneg %p290
        $region42: #{transformer_model_forward.1} parent=11 // pred_check_branch
          %774 = sbr.rel (%p772) target = $region44
        $region43: #{transformer_model_forward.1} parent=11 // pred_region
          _
        $region44: #{transformer_model_forward.1} parent=11 // pred_fallthru
          _
        // Predicated region
        $region45: #{transformer_model_forward.1} parent=11 // pred_check
          %p775 = pneg %p311
        $region46: #{transformer_model_forward.1} parent=11 // pred_check_branch
          %777 = sbr.rel (%p775) target = $region48
        $region47: #{transformer_model_forward.1} parent=11 // pred_region
          _
        $region48: #{transformer_model_forward.1} parent=11 // pred_fallthru
          _
        // Predicated region
        $region49: #{transformer_model_forward.1} parent=11 // pred_check
          %p778 = pneg %p332
        $region50: #{transformer_model_forward.1} parent=11 // pred_check_branch
          %780 = sbr.rel (%p778) target = $region52
        $region51: #{transformer_model_forward.1} parent=11 // pred_region
          _
        $region52: #{transformer_model_forward.1} parent=11 // pred_fallthru
          _
        // Predicated region
        $region53: #{transformer_model_forward.1} parent=11 // pred_check
          %p781 = pneg %p353
        $region54: #{transformer_model_forward.1} parent=11 // pred_check_branch
          %783 = sbr.rel (%p781) target = $region56
        $region55: #{transformer_model_forward.1} parent=11 // pred_region
          _
        $region56: #{transformer_model_forward.1} parent=11 // pred_fallthru
          _
        // Predicated region
        $region57: #{transformer_model_forward.1} parent=11 // pred_check
          %p784 = pneg %p374
        $region58: #{transformer_model_forward.1} parent=11 // pred_check_branch
          %786 = sbr.rel (%p784) target = $region60
        $region59: #{transformer_model_forward.1} parent=11 // pred_region
          _
        $region60: #{transformer_model_forward.1} parent=11 // pred_fallthru
          _
        // Predicated region
        $region61: #{transformer_model_forward.1} parent=11 // pred_check
          %p787 = pneg %p395
        $region62: #{transformer_model_forward.1} parent=11 // pred_check_branch
          %789 = sbr.rel (%p787) target = $region64
        $region63: #{transformer_model_forward.1} parent=11 // pred_region
          _
        $region64: #{transformer_model_forward.1} parent=11 // pred_fallthru
          _
        // Predicated region
        $region65: #{transformer_model_forward.1} parent=11 // pred_check
          %p790 = pneg %p416
        $region66: #{transformer_model_forward.1} parent=11 // pred_check_branch
          %792 = sbr.rel (%p790) target = $region68
        $region67: #{transformer_model_forward.1} parent=11 // pred_region
          _
        $region68: #{transformer_model_forward.1} parent=11 // pred_fallthru
          _
        // Predicated region
        $region69: #{transformer_model_forward.1} parent=11 // pred_check
          %p793 = pneg %p437
        $region70: #{transformer_model_forward.1} parent=11 // pred_check_branch
          %795 = sbr.rel (%p793) target = $region72
        $region71: #{transformer_model_forward.1} parent=11 // pred_region
          _
        $region72: #{transformer_model_forward.1} parent=11 // pred_fallthru
          _
        // Predicated region
        $region73: #{transformer_model_forward.1} parent=11 // pred_check
          %p796 = pneg %p458
        $region74: #{transformer_model_forward.1} parent=11 // pred_check_branch
          %798 = sbr.rel (%p796) target = $region76
        $region75: #{transformer_model_forward.1} parent=11 // pred_region
          _
        $region76: #{transformer_model_forward.1} parent=11 // pred_fallthru
          _
        // Predicated region
        $region77: #{transformer_model_forward.1} parent=11 // pred_check
          %p799 = pneg %p479
        $region78: #{transformer_model_forward.1} parent=11 // pred_check_branch
          %801 = sbr.rel (%p799) target = $region80
        $region79: #{transformer_model_forward.1} parent=11 // pred_region
          _
        $region80: #{transformer_model_forward.1} parent=11 // pred_fallthru
          _
        // Predicated region
        $region81: #{transformer_model_forward.1} parent=11 // pred_check
          %p802 = pneg %p500
        $region82: #{transformer_model_forward.1} parent=11 // pred_check_branch
          %804 = sbr.rel (%p802) target = $region84
        $region83: #{transformer_model_forward.1} parent=11 // pred_region
          _
        $region84: #{transformer_model_forward.1} parent=11 // pred_fallthru
          _
        // Predicated region
        $region85: #{transformer_model_forward.1} parent=11 // pred_check
          %p805 = pneg %p521
        $region86: #{transformer_model_forward.1} parent=11 // pred_check_branch
          %807 = sbr.rel (%p805) target = $region88
        $region87: #{transformer_model_forward.1} parent=11 // pred_region
          _
        $region88: #{transformer_model_forward.1} parent=11 // pred_fallthru
          _
        // Predicated region
        $region89: #{transformer_model_forward.1} parent=11 // pred_check
          %p808 = pneg %p542
        $region90: #{transformer_model_forward.1} parent=11 // pred_check_branch
          %810 = sbr.rel (%p808) target = $region92
        $region91: #{transformer_model_forward.1} parent=11 // pred_region
          _
        $region92: #{transformer_model_forward.1} parent=11 // pred_fallthru
          _
        // Predicated region
        $region93: #{transformer_model_forward.1} parent=11 // pred_check
          %p811 = pneg %p563
        $region94: #{transformer_model_forward.1} parent=11 // pred_check_branch
          %813 = sbr.rel (%p811) target = $region96
        $region95: #{transformer_model_forward.1} parent=11 // pred_region
          _
        $region96: #{transformer_model_forward.1} parent=11 // pred_fallthru
          _
        // Predicated region
        $region97: #{transformer_model_forward.1} parent=11 // pred_check
          %p814 = pneg %p584
        $region98: #{transformer_model_forward.1} parent=11 // pred_check_branch
          %816 = sbr.rel (%p814) target = $region100
        $region99: #{transformer_model_forward.1} parent=11 // pred_region
          _
        $region100: #{transformer_model_forward.1} parent=11 // pred_fallthru
          _
        // Predicated region
        $region101: #{transformer_model_forward.1} parent=11 // pred_check
          %p817 = pneg %p605
        $region102: #{transformer_model_forward.1} parent=11 // pred_check_branch
          %819 = sbr.rel (%p817) target = $region104
        $region103: #{transformer_model_forward.1} parent=11 // pred_region
          _
        $region104: #{transformer_model_forward.1} parent=11 // pred_fallthru
          _
        // Predicated region
        $region105: #{transformer_model_forward.1} parent=11 // pred_check
          %p820 = pneg %p626
        $region106: #{transformer_model_forward.1} parent=11 // pred_check_branch
          %822 = sbr.rel (%p820) target = $region108
        $region107: #{transformer_model_forward.1} parent=11 // pred_region
          _
        $region108: #{transformer_model_forward.1} parent=11 // pred_fallthru
          _
        // Predicated region
        $region109: #{transformer_model_forward.1} parent=11 // pred_check
          %p823 = pneg %p647
        $region110: #{transformer_model_forward.1} parent=11 // pred_check_branch
          %825 = sbr.rel (%p823) target = $region112
        $region111: #{transformer_model_forward.1} parent=11 // pred_region
          _
        $region112: #{transformer_model_forward.1} parent=11 // pred_fallthru
          _
        // Predicated region
        $region113: #{transformer_model_forward.1} parent=11 // pred_check
          %p826 = pneg %p668
        $region114: #{transformer_model_forward.1} parent=11 // pred_check_branch
          %828 = sbr.rel (%p826) target = $region116
        $region115: #{transformer_model_forward.1} parent=11 // pred_region
          _
        $region116: #{transformer_model_forward.1} parent=11 // pred_fallthru
          _
        // Predicated region
        $region117: #{transformer_model_forward.1} parent=11 // pred_check
          %p829 = pneg %p689
        $region118: #{transformer_model_forward.1} parent=11 // pred_check_branch
          %831 = sbr.rel (%p829) target = $region120
        $region119: #{transformer_model_forward.1} parent=11 // pred_region
          _
        $region120: #{transformer_model_forward.1} parent=11 // pred_fallthru
          _
        // Predicated region
        $region121: #{transformer_model_forward.1} parent=11 // pred_check
          %p832 = pneg %p710
        $region122: #{transformer_model_forward.1} parent=11 // pred_check_branch
          %834 = sbr.rel (%p832) target = $region124
        $region123: #{transformer_model_forward.1} parent=11 // pred_region
          _
        $region124: #{transformer_model_forward.1} parent=11 // pred_fallthru
          _
      $region12: #{transformer_model_forward.1} parent=5 // pred_fallthru
        _
      %p835 = scmp.lt.s32.totalorder %s70, 2
      // Predicated region
      $region125: #{transformer_model_forward.1} parent=5 // pred_check
        %p836 = pneg %p835
      $region126: #{transformer_model_forward.1} parent=5 // pred_check_branch
        %838 = sbr.rel (%p836) target = $region128
      $region127: #{transformer_model_forward.1} parent=5 // pred_region
        // Predicated region
        $region129: #{transformer_model_forward.1} parent=127 // pred_check
          %p839 = pneg %p90
        $region130: #{transformer_model_forward.1} parent=127 // pred_check_branch
          %841 = sbr.rel (%p839) target = $region132
        $region131: #{transformer_model_forward.1} parent=127 // pred_region
          %p842 = scmp.lt.s32.totalorder %s70, 1
          %s843 = scalar_select %p842, %s70, 1
          %s844 = smul.addr %s843, 8
          %s845 = scalar_lea.vmem %s1, %s844
        $region132: #{transformer_model_forward.1} parent=127 // pred_fallthru
          _
        // Predicated region
        $region133: #{transformer_model_forward.1} parent=127 // pred_check
          %p846 = pneg %p116
        $region134: #{transformer_model_forward.1} parent=127 // pred_check_branch
          %848 = sbr.rel (%p846) target = $region136
        $region135: #{transformer_model_forward.1} parent=127 // pred_region
          %p849 = scmp.lt.s32.totalorder %s70, 1
          %s850 = scalar_select %p849, %s70, 1
          %s851 = smul.addr %s850, 8
          %s852 = scalar_lea.vmem %s3, %s851
        $region136: #{transformer_model_forward.1} parent=127 // pred_fallthru
          _
      $region128: #{transformer_model_forward.1} parent=5 // pred_fallthru
        _
      %p853 = scmp.le.s32.totalorder 1, %s70
      %p854 = scmp.lt.s32.totalorder %s70, 3
      %p855 = pnand %p853, %p854
      %p856 = pneg %p855
      // Predicated region
      $region137: #{transformer_model_forward.1} parent=5 // pred_check
        _
      $region138: #{transformer_model_forward.1} parent=5 // pred_check_branch
        %858 = sbr.rel (%p855) target = $region140
      $region139: #{transformer_model_forward.1} parent=5 // pred_region
        %s859 = ssub.s32 %s70, 1
        %p860 = scmp.lt.s32.totalorder %s75, 1
        %s861 = scalar_select %p860, %s75, 1
        %s862 = smul.addr %s861, 8
        %s863 = scalar_lea.vmem %s1, %s862
        %p864 = pneg %p96
        %p865 = pneg %p93
        %p866 = scmp.lt.s32.totalorder %s75, 1
        %s867 = scalar_select %p866, %s75, 1
        %s868 = smul.addr %s867, 8
        %s869 = scalar_lea.vmem %s3, %s868
        %p870 = pneg %p122
        %p871 = pneg %p119
        %p872 = pneg %p143
        %p873 = pneg %p140
        %p874 = pneg %p164
        %p875 = pneg %p161
        %p876 = pneg %p185
        %p877 = pneg %p182
        %p878 = pneg %p206
        %p879 = pneg %p203
        %p880 = pneg %p227
        %p881 = pneg %p224
        %p882 = pneg %p248
        %p883 = pneg %p245
        %p884 = pneg %p269
        %p885 = pneg %p266
        %p886 = pneg %p290
        %p887 = pneg %p287
        %p888 = pneg %p311
        %p889 = pneg %p308
        %p890 = pneg %p332
        %p891 = pneg %p329
        %p892 = pneg %p353
        %p893 = pneg %p350
        %p894 = pneg %p374
        %p895 = pneg %p371
        %p896 = pneg %p395
        %p897 = pneg %p392
        %p898 = pneg %p416
        %p899 = pneg %p413
        %p900 = pneg %p437
        %p901 = pneg %p434
        %p902 = pneg %p458
        %p903 = pneg %p455
        %p904 = pneg %p479
        %p905 = pneg %p476
        %p906 = pneg %p500
        %p907 = pneg %p497
        %p908 = pneg %p521
        %p909 = pneg %p518
        %p910 = pneg %p542
        %p911 = pneg %p539
        %p912 = pneg %p563
        %p913 = pneg %p560
        %p914 = pneg %p584
        %p915 = pneg %p581
        %p916 = pneg %p605
        %p917 = pneg %p602
        %p918 = pneg %p626
        %p919 = pneg %p623
        %p920 = pneg %p647
        %p921 = pneg %p644
        %p922 = pneg %p668
        %p923 = pneg %p665
        %p924 = pneg %p689
        %p925 = pneg %p686
        %p926 = pneg %p710
        %p927 = pneg %p707
        %p928 = pneg %p736
        %p929 = pneg %p733
        %s930 = sand.u32 %s723, 1
        %s931 = scalar_lea.sflag [#allocation3], %s930
        %s932 = sand.u32 %s723, 1
        %s933 = smul.addr %s932, 8
        %s934 = scalar_lea.vmem [#allocation2], %s933
        %p935 = scmp.lt.s32.totalorder %s75, 1
        %s936 = scalar_select %p935, %s75, 1
        %s937 = smul.addr %s936, 8
        %s938 = scalar_lea.vmem %s1, %s937
        %p939 = scmp.lt.s32.totalorder %s75, 1
        %s940 = scalar_select %p939, %s75, 1
        %s941 = smul.addr %s940, 8
        %s942 = scalar_lea.vmem %s3, %s941
        %v944 = vlaneseq
        %v945 = vshrl.u32 %v944, 7
        %v946 = vlaneseq
        %v947 = vand.u32 %v946, 127
        %vm948 = vcmp.gt.s32.totalorder %v947, %v945
        %v949 = vsel %vm948, -1e+09, 0.0
        %v950 = vld [vmem:[%s938] sm:$0xff]
        %v951 = vld [vmem:[%s21] sm:$0xf]
        %v952 = vpack.c.bf16 %v950, %v950
        %v953 = vld [vmem:[%s5] sm:$0xf]
        %v954 = vld [vmem:[%s5 + $0x4] sm:$0xf]
        %v955 = vld [vmem:[%s5 + $0x8] sm:$0xf]
        %v956 = vld [vmem:[%s5 + $0xc] sm:$0xf]
        %v957 = vld [vmem:[%s7] sm:$0x1]
        %v959 = vlaneseq
        %v960 = vshrl.u32 %v959, 7
        %v961 = vsub.s32 0, %v960
        %v962 = vrot.slane %v957, %v961
        %v968 = vunpack.c.l.b16 %v953
        %v969 = vunpack.c.l.b16 %v954
        %v970 = vunpack.c.l.b16 %v955
        %v971 = vunpack.c.l.b16 %v956
        %v972 = vpack.c.b16 %v969, %v968
        %v973 = vpack.c.b16 %v971, %v970
        %vm976 = vcmask 261120
        %v978 = vsel %vm976, %v952, 0
        %980 = vmatprep.subr.bf16.mxu0 0
        %981 = vmatpush1.bf16.msra.mxu0 %v972
        %982 = vmatprep.subr.bf16.mxu0 0
        %983 = vmatpush1.bf16.msra.mxu0 %v973
        %984 = vmatprep.subr.bf16.mxu0 0
        %985 = vmatpush1.bf16.msra.mxu0 0
        %986 = vmatprep.subr.bf16.mxu0 0
        %987 = vmatpush1.bf16.msra.mxu0 0
        %988 = vmatprep.subr.bf16.mxu0 0
        %989 = vmatpush1.bf16.msra.mxu0 0
        %990 = vmatprep.subr.bf16.mxu0 0
        %991 = vmatpush1.bf16.msra.mxu0 0
        %992 = vmatprep.subr.bf16.mxu0 0
        %993 = vmatpush1.bf16.msra.mxu0 0
        %994 = vmatprep.subr.bf16.mxu0 0
        %995 = vmatpush1.bf16.msra.mxu0 0
        %996 = vmatprep.subr.bf16.mxu0 0
        %997 = vmatpush1.bf16.msra.mxu0 0
        %998 = vmatprep.subr.bf16.mxu0 0
        %999 = vmatpush1.bf16.msra.mxu0 0
        %1000 = vmatprep.subr.bf16.mxu0 0
        %1001 = vmatpush1.bf16.msra.mxu0 0
        %1002 = vmatprep.subr.bf16.mxu0 0
        %1003 = vmatpush1.bf16.msra.mxu0 0
        %1004 = vmatprep.subr.bf16.mxu0 0
        %1005 = vmatpush1.bf16.msra.mxu0 0
        %1006 = vmatprep.subr.bf16.mxu0 0
        %1007 = vmatpush1.bf16.msra.mxu0 0
        %1008 = vmatprep.subr.bf16.mxu0 0
        %1009 = vmatpush1.bf16.msra.mxu0 0
        %1010 = vmatprep.subr.bf16.mxu0 0
        %1011 = vmatpush1.bf16.msra.mxu0 0
        %1012 = vmatprep.mubr.bf16.mxu0 0
        %1013 = vmatmul.mubr.bf16.gmra.mrb[0].mxu0 %v978
        %v1014 = vpop.f32.mrb[0].mxu0
        %v1015 = vadd.f32 %v962, %v1014
        %v1016 = vpop.f32.mrb[0].mxu0
        %v1017 = vpop.f32.mrb[0].mxu0
        %v1018 = vpop.f32.mrb[0].mxu0
        %1019 = vdwg.mxu0
        %v1020 = vmul.f32 %v1015, 0.35355338
        %v1021 = vpack.c.bf16 %v1020, %v1020
        %v1022 = vpack.c.bf16 %v1015, %v1015
        %1024 = vrot.lane.b32.xlu0 %v1022, 96
        %v1025 = vpop.permute.xlu0 %1024
        %vm1026 = vcmask 64512
        %v1028 = vsel %vm1026, %v1021, 0
        %v1031 = vsel %vm1026, %v1025, 0
        %1033 = vmatprep.subr.bf16.mxu0 0
        %1034 = vmatpush1.bf16.xpose.msra.mxu0 %v1031
        %1035 = vmatprep.subr.bf16.mxu0 0
        %1036 = vmatpush1.bf16.xpose.msra.mxu0 0
        %1037 = vmatprep.subr.bf16.mxu0 0
        %1038 = vmatpush1.bf16.xpose.msra.mxu0 0
        %1039 = vmatprep.subr.bf16.mxu0 0
        %1040 = vmatpush1.bf16.xpose.msra.mxu0 0
        %1041 = vmatprep.subr.bf16.mxu0 0
        %1042 = vmatpush1.bf16.xpose.msra.mxu0 0
        %1043 = vmatprep.subr.bf16.mxu0 0
        %1044 = vmatpush1.bf16.xpose.msra.mxu0 0
        %1045 = vmatprep.subr.bf16.mxu0 0
        %1046 = vmatpush1.bf16.xpose.msra.mxu0 0
        %1047 = vmatprep.subr.bf16.mxu0 0
        %1048 = vmatpush1.bf16.xpose.msra.mxu0 0
        %1049 = vmatprep.subr.bf16.mxu0 0
        %1050 = vmatpush1.bf16.xpose.msra.mxu0 0
        %1051 = vmatprep.subr.bf16.mxu0 0
        %1052 = vmatpush1.bf16.xpose.msra.mxu0 0
        %1053 = vmatprep.subr.bf16.mxu0 0
        %1054 = vmatpush1.bf16.xpose.msra.mxu0 0
        %1055 = vmatprep.subr.bf16.mxu0 0
        %1056 = vmatpush1.bf16.xpose.msra.mxu0 0
        %1057 = vmatprep.subr.bf16.mxu0 0
        %1058 = vmatpush1.bf16.xpose.msra.mxu0 0
        %1059 = vmatprep.subr.bf16.mxu0 0
        %1060 = vmatpush1.bf16.xpose.msra.mxu0 0
        %1061 = vmatprep.subr.bf16.mxu0 0
        %1062 = vmatpush1.bf16.xpose.msra.mxu0 0
        %1063 = vmatprep.subr.bf16.mxu0 0
        %1064 = vmatpush1.bf16.xpose.msra.mxu0 0
        %1065 = vmatprep.mubr.bf16.mxu0 0
        %1066 = vmatmul.mubr.bf16.gmra.mrb[0].mxu0 %v1028
        %v1067 = vpop.f32.mrb[0].mxu0
        %v1068 = vadd.f32 0.0, %v1067
        %v1069 = vpop.f32.mrb[0].mxu0
        %v1070 = vpop.f32.mrb[0].mxu0
        %v1071 = vpop.f32.mrb[0].mxu0
        %1072 = vdwg.mxu0
        %v1073 = vsel %vm1026, %v1068, -inf
        %1074 = vmax.xlane.f32.xlu0 %v1073
        %v1075 = vpop.xlane.xlu0 %1074
        %v1076 = vsub.f32 %v1068, %v1075
        %v1077 = vmul.f32 %v1076, 1.442695
        %v1078 = vpow.pop %v1077
        %v1079 = vsel %vm1026, %v1078, 0.0
        %1080 = vadd.xlane.f32.xlu0 %v1079
        %v1081 = vpop.xlane.xlu0 %1080
        %v1082 = vrcp.pop %v1081
        %v1083 = vmul.f32 %v1078, %v1082
        %v1084 = vpack.c.bf16 %v1083, %v1083
        %1085 = vrot.lane.b32.xlu0 %v1022, 64
        %v1086 = vpop.permute.xlu0 %1085
        %v1088 = vsel %vm1026, %v1084, 0
        %vm1090 = vcmask 1043456
        %v1092 = vsel %vm1090, %v1086, 0
        %1094 = vmatprep.subr.bf16.mxu0 0
        %1095 = vmatpush1.bf16.msra.mxu0 %v1092
        %1096 = vmatprep.subr.bf16.mxu0 0
        %1097 = vmatpush1.bf16.msra.mxu0 0
        %1098 = vmatprep.subr.bf16.mxu0 0
        %1099 = vmatpush1.bf16.msra.mxu0 0
        %1100 = vmatprep.subr.bf16.mxu0 0
        %1101 = vmatpush1.bf16.msra.mxu0 0
        %1102 = vmatprep.subr.bf16.mxu0 0
        %1103 = vmatpush1.bf16.msra.mxu0 0
        %1104 = vmatprep.subr.bf16.mxu0 0
        %1105 = vmatpush1.bf16.msra.mxu0 0
        %1106 = vmatprep.subr.bf16.mxu0 0
        %1107 = vmatpush1.bf16.msra.mxu0 0
        %1108 = vmatprep.subr.bf16.mxu0 0
        %1109 = vmatpush1.bf16.msra.mxu0 0
        %1110 = vmatprep.subr.bf16.mxu0 0
        %1111 = vmatpush1.bf16.msra.mxu0 0
        %1112 = vmatprep.subr.bf16.mxu0 0
        %1113 = vmatpush1.bf16.msra.mxu0 0
        %1114 = vmatprep.subr.bf16.mxu0 0
        %1115 = vmatpush1.bf16.msra.mxu0 0
        %1116 = vmatprep.subr.bf16.mxu0 0
        %1117 = vmatpush1.bf16.msra.mxu0 0
        %1118 = vmatprep.subr.bf16.mxu0 0
        %1119 = vmatpush1.bf16.msra.mxu0 0
        %1120 = vmatprep.subr.bf16.mxu0 0
        %1121 = vmatpush1.bf16.msra.mxu0 0
        %1122 = vmatprep.subr.bf16.mxu0 0
        %1123 = vmatpush1.bf16.msra.mxu0 0
        %1124 = vmatprep.subr.bf16.mxu0 0
        %1125 = vmatpush1.bf16.msra.mxu0 0
        %1126 = vmatprep.mubr.bf16.mxu0 0
        %1127 = vmatmul.mubr.bf16.gmra.mrb[0].mxu0 %v1088
        %v1128 = vpop.f32.mrb[0].mxu0
        %v1129 = vadd.f32 0.0, %v1128
        %v1130 = vpop.f32.mrb[0].mxu0
        %v1131 = vpop.f32.mrb[0].mxu0
        %v1132 = vpop.f32.mrb[0].mxu0
        %1133 = vdwg.mxu0
        %1135 = vrot.lane.b32.xlu0 %v1021, 120
        %v1136 = vpop.permute.xlu0 %1135
        %1137 = vrot.lane.b32.xlu0 %v1022, 88
        %v1138 = vpop.permute.xlu0 %1137
        %v1140 = vsel %vm1026, %v1136, 0
        %v1143 = vsel %vm1026, %v1138, 0
        %1145 = vmatprep.subr.bf16.mxu0 0
        %1146 = vmatpush1.bf16.xpose.msra.mxu0 %v1143
        %1147 = vmatprep.subr.bf16.mxu0 0
        %1148 = vmatpush1.bf16.xpose.msra.mxu0 0
        %1149 = vmatprep.subr.bf16.mxu0 0
        %1150 = vmatpush1.bf16.xpose.msra.mxu0 0
        %1151 = vmatprep.subr.bf16.mxu0 0
        %1152 = vmatpush1.bf16.xpose.msra.mxu0 0
        %1153 = vmatprep.subr.bf16.mxu0 0
        %1154 = vmatpush1.bf16.xpose.msra.mxu0 0
        %1155 = vmatprep.subr.bf16.mxu0 0
        %1156 = vmatpush1.bf16.xpose.msra.mxu0 0
        %1157 = vmatprep.subr.bf16.mxu0 0
        %1158 = vmatpush1.bf16.xpose.msra.mxu0 0
        %1159 = vmatprep.subr.bf16.mxu0 0
        %1160 = vmatpush1.bf16.xpose.msra.mxu0 0
        %1161 = vmatprep.subr.bf16.mxu0 0
        %1162 = vmatpush1.bf16.xpose.msra.mxu0 0
        %1163 = vmatprep.subr.bf16.mxu0 0
        %1164 = vmatpush1.bf16.xpose.msra.mxu0 0
        %1165 = vmatprep.subr.bf16.mxu0 0
        %1166 = vmatpush1.bf16.xpose.msra.mxu0 0
        %1167 = vmatprep.subr.bf16.mxu0 0
        %1168 = vmatpush1.bf16.xpose.msra.mxu0 0
        %1169 = vmatprep.subr.bf16.mxu0 0
        %1170 = vmatpush1.bf16.xpose.msra.mxu0 0
        %1171 = vmatprep.subr.bf16.mxu0 0
        %1172 = vmatpush1.bf16.xpose.msra.mxu0 0
        %1173 = vmatprep.subr.bf16.mxu0 0
        %1174 = vmatpush1.bf16.xpose.msra.mxu0 0
        %1175 = vmatprep.subr.bf16.mxu0 0
        %1176 = vmatpush1.bf16.xpose.msra.mxu0 0
        %1177 = vmatprep.mubr.bf16.mxu0 0
        %1178 = vmatmul.mubr.bf16.gmra.mrb[0].mxu0 %v1140
        %v1179 = vpop.f32.mrb[0].mxu0
        %v1180 = vadd.f32 0.0, %v1179
        %v1181 = vpop.f32.mrb[0].mxu0
        %v1182 = vpop.f32.mrb[0].mxu0
        %v1183 = vpop.f32.mrb[0].mxu0
        %1184 = vdwg.mxu0
        %v1185 = vsel %vm1026, %v1180, -inf
        %1186 = vmax.xlane.f32.xlu0 %v1185
        %v1187 = vpop.xlane.xlu0 %1186
        %v1188 = vsub.f32 %v1180, %v1187
        %v1189 = vmul.f32 %v1188, 1.442695
        %v1190 = vpow.pop %v1189
        %v1191 = vsel %vm1026, %v1190, 0.0
        %1192 = vadd.xlane.f32.xlu0 %v1191
        %v1193 = vpop.xlane.xlu0 %1192
        %v1194 = vrcp.pop %v1193
        %v1195 = vmul.f32 %v1190, %v1194
        %v1196 = vpack.c.bf16 %v1195, %v1195
        %1197 = vrot.lane.b32.xlu0 %v1022, 56
        %v1198 = vpop.permute.xlu0 %1197
        %v1200 = vsel %vm1026, %v1196, 0
        %v1203 = vsel %vm1090, %v1198, 0
        %1205 = vmatprep.subr.bf16.mxu0 0
        %1206 = vmatpush1.bf16.msra.mxu0 %v1203
        %1207 = vmatprep.subr.bf16.mxu0 0
        %1208 = vmatpush1.bf16.msra.mxu0 0
        %1209 = vmatprep.subr.bf16.mxu0 0
        %1210 = vmatpush1.bf16.msra.mxu0 0
        %1211 = vmatprep.subr.bf16.mxu0 0
        %1212 = vmatpush1.bf16.msra.mxu0 0
        %1213 = vmatprep.subr.bf16.mxu0 0
        %1214 = vmatpush1.bf16.msra.mxu0 0
        %1215 = vmatprep.subr.bf16.mxu0 0
        %1216 = vmatpush1.bf16.msra.mxu0 0
        %1217 = vmatprep.subr.bf16.mxu0 0
        %1218 = vmatpush1.bf16.msra.mxu0 0
        %1219 = vmatprep.subr.bf16.mxu0 0
        %1220 = vmatpush1.bf16.msra.mxu0 0
        %1221 = vmatprep.subr.bf16.mxu0 0
        %1222 = vmatpush1.bf16.msra.mxu0 0
        %1223 = vmatprep.subr.bf16.mxu0 0
        %1224 = vmatpush1.bf16.msra.mxu0 0
        %1225 = vmatprep.subr.bf16.mxu0 0
        %1226 = vmatpush1.bf16.msra.mxu0 0
        %1227 = vmatprep.subr.bf16.mxu0 0
        %1228 = vmatpush1.bf16.msra.mxu0 0
        %1229 = vmatprep.subr.bf16.mxu0 0
        %1230 = vmatpush1.bf16.msra.mxu0 0
        %1231 = vmatprep.subr.bf16.mxu0 0
        %1232 = vmatpush1.bf16.msra.mxu0 0
        %1233 = vmatprep.subr.bf16.mxu0 0
        %1234 = vmatpush1.bf16.msra.mxu0 0
        %1235 = vmatprep.subr.bf16.mxu0 0
        %1236 = vmatpush1.bf16.msra.mxu0 0
        %1237 = vmatprep.mubr.bf16.mxu0 0
        %1238 = vmatmul.mubr.bf16.gmra.mrb[0].mxu0 %v1200
        %v1239 = vpop.f32.mrb[0].mxu0
        %v1240 = vadd.f32 0.0, %v1239
        %v1241 = vpop.f32.mrb[0].mxu0
        %v1242 = vpop.f32.mrb[0].mxu0
        %v1243 = vpop.f32.mrb[0].mxu0
        %1244 = vdwg.mxu0
        %1245 = vrot.lane.b32.xlu0 %v1021, 112
        %v1246 = vpop.permute.xlu0 %1245
        %1247 = vrot.lane.b32.xlu0 %v1022, 80
        %v1248 = vpop.permute.xlu0 %1247
        %v1250 = vsel %vm1026, %v1246, 0
        %v1253 = vsel %vm1026, %v1248, 0
        %1255 = vmatprep.subr.bf16.mxu0 0
        %1256 = vmatpush1.bf16.xpose.msra.mxu0 %v1253
        %1257 = vmatprep.subr.bf16.mxu0 0
        %1258 = vmatpush1.bf16.xpose.msra.mxu0 0
        %1259 = vmatprep.subr.bf16.mxu0 0
        %1260 = vmatpush1.bf16.xpose.msra.mxu0 0
        %1261 = vmatprep.subr.bf16.mxu0 0
        %1262 = vmatpush1.bf16.xpose.msra.mxu0 0
        %1263 = vmatprep.subr.bf16.mxu0 0
        %1264 = vmatpush1.bf16.xpose.msra.mxu0 0
        %1265 = vmatprep.subr.bf16.mxu0 0
        %1266 = vmatpush1.bf16.xpose.msra.mxu0 0
        %1267 = vmatprep.subr.bf16.mxu0 0
        %1268 = vmatpush1.bf16.xpose.msra.mxu0 0
        %1269 = vmatprep.subr.bf16.mxu0 0
        %1270 = vmatpush1.bf16.xpose.msra.mxu0 0
        %1271 = vmatprep.subr.bf16.mxu0 0
        %1272 = vmatpush1.bf16.xpose.msra.mxu0 0
        %1273 = vmatprep.subr.bf16.mxu0 0
        %1274 = vmatpush1.bf16.xpose.msra.mxu0 0
        %1275 = vmatprep.subr.bf16.mxu0 0
        %1276 = vmatpush1.bf16.xpose.msra.mxu0 0
        %1277 = vmatprep.subr.bf16.mxu0 0
        %1278 = vmatpush1.bf16.xpose.msra.mxu0 0
        %1279 = vmatprep.subr.bf16.mxu0 0
        %1280 = vmatpush1.bf16.xpose.msra.mxu0 0
        %1281 = vmatprep.subr.bf16.mxu0 0
        %1282 = vmatpush1.bf16.xpose.msra.mxu0 0
        %1283 = vmatprep.subr.bf16.mxu0 0
        %1284 = vmatpush1.bf16.xpose.msra.mxu0 0
        %1285 = vmatprep.subr.bf16.mxu0 0
        %1286 = vmatpush1.bf16.xpose.msra.mxu0 0
        %1287 = vmatprep.mubr.bf16.mxu0 0
        %1288 = vmatmul.mubr.bf16.gmra.mrb[0].mxu0 %v1250
        %v1289 = vpop.f32.mrb[0].mxu0
        %v1290 = vadd.f32 0.0, %v1289
        %v1291 = vpop.f32.mrb[0].mxu0
        %v1292 = vpop.f32.mrb[0].mxu0
        %v1293 = vpop.f32.mrb[0].mxu0
        %1294 = vdwg.mxu0
        %v1295 = vsel %vm1026, %v1290, -inf
        %1296 = vmax.xlane.f32.xlu0 %v1295
        %v1297 = vpop.xlane.xlu0 %1296
        %v1298 = vsub.f32 %v1290, %v1297
        %v1299 = vmul.f32 %v1298, 1.442695
        %v1300 = vpow.pop %v1299
        %v1301 = vsel %vm1026, %v1300, 0.0
        %1302 = vadd.xlane.f32.xlu0 %v1301
        %v1303 = vpop.xlane.xlu0 %1302
        %v1304 = vrcp.pop %v1303
        %v1305 = vmul.f32 %v1300, %v1304
        %v1306 = vpack.c.bf16 %v1305, %v1305
        %1307 = vrot.lane.b32.xlu0 %v1022, 48
        %v1308 = vpop.permute.xlu0 %1307
        %v1310 = vsel %vm1026, %v1306, 0
        %v1313 = vsel %vm1090, %v1308, 0
        %1315 = vmatprep.subr.bf16.mxu0 0
        %1316 = vmatpush1.bf16.msra.mxu0 %v1313
        %1317 = vmatprep.subr.bf16.mxu0 0
        %1318 = vmatpush1.bf16.msra.mxu0 0
        %1319 = vmatprep.subr.bf16.mxu0 0
        %1320 = vmatpush1.bf16.msra.mxu0 0
        %1321 = vmatprep.subr.bf16.mxu0 0
        %1322 = vmatpush1.bf16.msra.mxu0 0
        %1323 = vmatprep.subr.bf16.mxu0 0
        %1324 = vmatpush1.bf16.msra.mxu0 0
        %1325 = vmatprep.subr.bf16.mxu0 0
        %1326 = vmatpush1.bf16.msra.mxu0 0
        %1327 = vmatprep.subr.bf16.mxu0 0
        %1328 = vmatpush1.bf16.msra.mxu0 0
        %1329 = vmatprep.subr.bf16.mxu0 0
        %1330 = vmatpush1.bf16.msra.mxu0 0
        %1331 = vmatprep.subr.bf16.mxu0 0
        %1332 = vmatpush1.bf16.msra.mxu0 0
        %1333 = vmatprep.subr.bf16.mxu0 0
        %1334 = vmatpush1.bf16.msra.mxu0 0
        %1335 = vmatprep.subr.bf16.mxu0 0
        %1336 = vmatpush1.bf16.msra.mxu0 0
        %1337 = vmatprep.subr.bf16.mxu0 0
        %1338 = vmatpush1.bf16.msra.mxu0 0
        %1339 = vmatprep.subr.bf16.mxu0 0
        %1340 = vmatpush1.bf16.msra.mxu0 0
        %1341 = vmatprep.subr.bf16.mxu0 0
        %1342 = vmatpush1.bf16.msra.mxu0 0
        %1343 = vmatprep.subr.bf16.mxu0 0
        %1344 = vmatpush1.bf16.msra.mxu0 0
        %1345 = vmatprep.subr.bf16.mxu0 0
        %1346 = vmatpush1.bf16.msra.mxu0 0
        %1347 = vmatprep.mubr.bf16.mxu0 0
        %1348 = vmatmul.mubr.bf16.gmra.mrb[0].mxu0 %v1310
        %v1349 = vpop.f32.mrb[0].mxu0
        %v1350 = vadd.f32 0.0, %v1349
        %v1351 = vpop.f32.mrb[0].mxu0
        %v1352 = vpop.f32.mrb[0].mxu0
        %v1353 = vpop.f32.mrb[0].mxu0
        %1354 = vdwg.mxu0
        %1355 = vrot.lane.b32.xlu0 %v1021, 104
        %v1356 = vpop.permute.xlu0 %1355
        %1357 = vrot.lane.b32.xlu0 %v1022, 72
        %v1358 = vpop.permute.xlu0 %1357
        %v1360 = vsel %vm1026, %v1356, 0
        %v1363 = vsel %vm1026, %v1358, 0
        %1365 = vmatprep.subr.bf16.mxu0 0
        %1366 = vmatpush1.bf16.xpose.msra.mxu0 %v1363
        %1367 = vmatprep.subr.bf16.mxu0 0
        %1368 = vmatpush1.bf16.xpose.msra.mxu0 0
        %1369 = vmatprep.subr.bf16.mxu0 0
        %1370 = vmatpush1.bf16.xpose.msra.mxu0 0
        %1371 = vmatprep.subr.bf16.mxu0 0
        %1372 = vmatpush1.bf16.xpose.msra.mxu0 0
        %1373 = vmatprep.subr.bf16.mxu0 0
        %1374 = vmatpush1.bf16.xpose.msra.mxu0 0
        %1375 = vmatprep.subr.bf16.mxu0 0
        %1376 = vmatpush1.bf16.xpose.msra.mxu0 0
        %1377 = vmatprep.subr.bf16.mxu0 0
        %1378 = vmatpush1.bf16.xpose.msra.mxu0 0
        %1379 = vmatprep.subr.bf16.mxu0 0
        %1380 = vmatpush1.bf16.xpose.msra.mxu0 0
        %1381 = vmatprep.subr.bf16.mxu0 0
        %1382 = vmatpush1.bf16.xpose.msra.mxu0 0
        %1383 = vmatprep.subr.bf16.mxu0 0
        %1384 = vmatpush1.bf16.xpose.msra.mxu0 0
        %1385 = vmatprep.subr.bf16.mxu0 0
        %1386 = vmatpush1.bf16.xpose.msra.mxu0 0
        %1387 = vmatprep.subr.bf16.mxu0 0
        %1388 = vmatpush1.bf16.xpose.msra.mxu0 0
        %1389 = vmatprep.subr.bf16.mxu0 0
        %1390 = vmatpush1.bf16.xpose.msra.mxu0 0
        %1391 = vmatprep.subr.bf16.mxu0 0
        %1392 = vmatpush1.bf16.xpose.msra.mxu0 0
        %1393 = vmatprep.subr.bf16.mxu0 0
        %1394 = vmatpush1.bf16.xpose.msra.mxu0 0
        %1395 = vmatprep.subr.bf16.mxu0 0
        %1396 = vmatpush1.bf16.xpose.msra.mxu0 0
        %1397 = vmatprep.mubr.bf16.mxu0 0
        %1398 = vmatmul.mubr.bf16.gmra.mrb[0].mxu0 %v1360
        %v1399 = vpop.f32.mrb[0].mxu0
        %v1400 = vadd.f32 0.0, %v1399
        %v1401 = vpop.f32.mrb[0].mxu0
        %v1402 = vpop.f32.mrb[0].mxu0
        %v1403 = vpop.f32.mrb[0].mxu0
        %1404 = vdwg.mxu0
        %v1405 = vsel %vm1026, %v1400, -inf
        %1406 = vmax.xlane.f32.xlu0 %v1405
        %v1407 = vpop.xlane.xlu0 %1406
        %v1408 = vsub.f32 %v1400, %v1407
        %v1409 = vmul.f32 %v1408, 1.442695
        %v1410 = vpow.pop %v1409
        %v1411 = vsel %vm1026, %v1410, 0.0
        %1412 = vadd.xlane.f32.xlu0 %v1411
        %v1413 = vpop.xlane.xlu0 %1412
        %v1414 = vrcp.pop %v1413
        %v1415 = vmul.f32 %v1410, %v1414
        %v1416 = vpack.c.bf16 %v1415, %v1415
        %1417 = vrot.lane.b32.xlu0 %v1022, 40
        %v1418 = vpop.permute.xlu0 %1417
        %v1420 = vsel %vm1026, %v1416, 0
        %v1423 = vsel %vm1090, %v1418, 0
        %1425 = vmatprep.subr.bf16.mxu0 0
        %1426 = vmatpush1.bf16.msra.mxu0 %v1423
        %1427 = vmatprep.subr.bf16.mxu0 0
        %1428 = vmatpush1.bf16.msra.mxu0 0
        %1429 = vmatprep.subr.bf16.mxu0 0
        %1430 = vmatpush1.bf16.msra.mxu0 0
        %1431 = vmatprep.subr.bf16.mxu0 0
        %1432 = vmatpush1.bf16.msra.mxu0 0
        %1433 = vmatprep.subr.bf16.mxu0 0
        %1434 = vmatpush1.bf16.msra.mxu0 0
        %1435 = vmatprep.subr.bf16.mxu0 0
        %1436 = vmatpush1.bf16.msra.mxu0 0
        %1437 = vmatprep.subr.bf16.mxu0 0
        %1438 = vmatpush1.bf16.msra.mxu0 0
        %1439 = vmatprep.subr.bf16.mxu0 0
        %1440 = vmatpush1.bf16.msra.mxu0 0
        %1441 = vmatprep.subr.bf16.mxu0 0
        %1442 = vmatpush1.bf16.msra.mxu0 0
        %1443 = vmatprep.subr.bf16.mxu0 0
        %1444 = vmatpush1.bf16.msra.mxu0 0
        %1445 = vmatprep.subr.bf16.mxu0 0
        %1446 = vmatpush1.bf16.msra.mxu0 0
        %1447 = vmatprep.subr.bf16.mxu0 0
        %1448 = vmatpush1.bf16.msra.mxu0 0
        %1449 = vmatprep.subr.bf16.mxu0 0
        %1450 = vmatpush1.bf16.msra.mxu0 0
        %1451 = vmatprep.subr.bf16.mxu0 0
        %1452 = vmatpush1.bf16.msra.mxu0 0
        %1453 = vmatprep.subr.bf16.mxu0 0
        %1454 = vmatpush1.bf16.msra.mxu0 0
        %1455 = vmatprep.subr.bf16.mxu0 0
        %1456 = vmatpush1.bf16.msra.mxu0 0
        %1457 = vmatprep.mubr.bf16.mxu0 0
        %1458 = vmatmul.mubr.bf16.gmra.mrb[0].mxu0 %v1420
        %v1459 = vpop.f32.mrb[0].mxu0
        %v1460 = vadd.f32 0.0, %v1459
        %v1461 = vpop.f32.mrb[0].mxu0
        %v1462 = vpop.f32.mrb[0].mxu0
        %v1463 = vpop.f32.mrb[0].mxu0
        %1464 = vdwg.mxu0
        %1466 = vrot.lane.b32.xlu0 %v1240, 8
        %v1467 = vpop.permute.xlu0 %1466
        %1470 = vrot.lane.b32.xlu0 %v1350, 16
        %v1471 = vpop.permute.xlu0 %1470
        %1474 = vrot.lane.b32.xlu0 %v1460, 24
        %v1475 = vpop.permute.xlu0 %1474
        %v1477 = vsel %vm1026, %v1129, %v1467
        %vm1478 = vcmask 130048
        %v1479 = vsel %vm1478, %v1477, %v1471
        %vm1480 = vcmask 195584
        %v1481 = vsel %vm1480, %v1479, %v1475
        %v1482 = vpack.c.bf16 %v1481, %v1481
        %v1483 = vld [vmem:[%s9] sm:$0xf]
        %v1484 = vld [vmem:[%s9 + $0x4] sm:$0xf]
        %v1485 = vld [vmem:[%s9 + $0x8] sm:$0xf]
        %v1486 = vld [vmem:[%s9 + $0xc] sm:$0xf]
        %v1487 = vld [vmem:[%s11] sm:$0x1]
        %v1489 = vlaneseq
        %v1490 = vshrl.u32 %v1489, 7
        %v1491 = vsub.s32 0, %v1490
        %v1492 = vrot.slane %v1487, %v1491
        %v1498 = vunpack.c.l.b16 %v1483
        %v1499 = vunpack.c.l.b16 %v1484
        %v1500 = vunpack.c.l.b16 %v1485
        %v1501 = vunpack.c.l.b16 %v1486
        %v1502 = vpack.c.b16 %v1499, %v1498
        %v1503 = vpack.c.b16 %v1501, %v1500
        %v1507 = vsel %vm976, %v1482, 0
        %1509 = vmatprep.subr.bf16.mxu0 0
        %1510 = vmatpush1.bf16.msra.mxu0 %v1502
        %1511 = vmatprep.subr.bf16.mxu0 0
        %1512 = vmatpush1.bf16.msra.mxu0 %v1503
        %1513 = vmatprep.subr.bf16.mxu0 0
        %1514 = vmatpush1.bf16.msra.mxu0 0
        %1515 = vmatprep.subr.bf16.mxu0 0
        %1516 = vmatpush1.bf16.msra.mxu0 0
        %1517 = vmatprep.subr.bf16.mxu0 0
        %1518 = vmatpush1.bf16.msra.mxu0 0
        %1519 = vmatprep.subr.bf16.mxu0 0
        %1520 = vmatpush1.bf16.msra.mxu0 0
        %1521 = vmatprep.subr.bf16.mxu0 0
        %1522 = vmatpush1.bf16.msra.mxu0 0
        %1523 = vmatprep.subr.bf16.mxu0 0
        %1524 = vmatpush1.bf16.msra.mxu0 0
        %1525 = vmatprep.subr.bf16.mxu0 0
        %1526 = vmatpush1.bf16.msra.mxu0 0
        %1527 = vmatprep.subr.bf16.mxu0 0
        %1528 = vmatpush1.bf16.msra.mxu0 0
        %1529 = vmatprep.subr.bf16.mxu0 0
        %1530 = vmatpush1.bf16.msra.mxu0 0
        %1531 = vmatprep.subr.bf16.mxu0 0
        %1532 = vmatpush1.bf16.msra.mxu0 0
        %1533 = vmatprep.subr.bf16.mxu0 0
        %1534 = vmatpush1.bf16.msra.mxu0 0
        %1535 = vmatprep.subr.bf16.mxu0 0
        %1536 = vmatpush1.bf16.msra.mxu0 0
        %1537 = vmatprep.subr.bf16.mxu0 0
        %1538 = vmatpush1.bf16.msra.mxu0 0
        %1539 = vmatprep.subr.bf16.mxu0 0
        %1540 = vmatpush1.bf16.msra.mxu0 0
        %1541 = vmatprep.mubr.bf16.mxu0 0
        %1542 = vmatmul.mubr.bf16.gmra.mrb[0].mxu0 %v1507
        %v1543 = vpop.f32.mrb[0].mxu0
        %v1544 = vadd.f32 %v1492, %v1543
        %v1545 = vpop.f32.mrb[0].mxu0
        %v1546 = vpop.f32.mrb[0].mxu0
        %v1547 = vpop.f32.mrb[0].mxu0
        %1548 = vdwg.mxu0
        %v1549 = vadd.f32 %v950, %v1544
        %v1550 = vsel %vm976, %v1549, 0.0
        %1551 = vadd.xlane.f32.xlu0 %v1550
        %v1552 = vpop.xlane.xlu0 %1551
        %v1553 = vrcp.pop 32.0
        %v1554 = vmul.f32 %v1552, %v1553
        %v1555 = vsub.f32 %v1549, %v1554
        %v1556 = vmul.f32 %v1555, %v1555
        %v1557 = vsel %vm976, %v1556, 0.0
        %1558 = vadd.xlane.f32.xlu0 %v1557
        %v1559 = vpop.xlane.xlu0 %1558
        %v1560 = vmul.f32 %v1559, %v1553
        %v1561 = vadd.f32 %v1560, 1e-05
        %v1562 = vrsqrt.pop %v1561
        %v1563 = vmul.f32 %v1555, %v1562
        %v1564 = vlaneseq
        %v1565 = vshrl.u32 %v1564, 7
        %v1566 = vsub.s32 0, %v1565
        %v1567 = vrot.slane %v951, %v1566
        %v1568 = vmul.f32 %v1563, %v1567
        %v1569 = vlaneseq
        %v1570 = vshrl.u32 %v1569, 7
        %v1571 = vsub.s32 1, %v1570
        %v1572 = vrot.slane %v951, %v1571
        %v1573 = vadd.f32 %v1568, %v1572
        %v1574 = vpack.c.bf16 %v1573, %v1573
        %v1575 = vld [vmem:[%s13] sm:$0xf]
        %v1576 = vld [vmem:[%s13 + $0x4] sm:$0xf]
        %v1577 = vld [vmem:[%s13 + $0x8] sm:$0xf]
        %v1578 = vld [vmem:[%s13 + $0xc] sm:$0xf]
        %v1579 = vld [vmem:[%s15] sm:$0x1]
        %v1581 = vlaneseq
        %v1582 = vshrl.u32 %v1581, 7
        %v1583 = vsub.s32 0, %v1582
        %v1584 = vrot.slane %v1579, %v1583
        %v1590 = vunpack.c.l.b16 %v1575
        %v1591 = vunpack.c.l.b16 %v1576
        %v1592 = vunpack.c.l.b16 %v1577
        %v1593 = vunpack.c.l.b16 %v1578
        %v1594 = vpack.c.b16 %v1591, %v1590
        %v1595 = vpack.c.b16 %v1593, %v1592
        %v1599 = vsel %vm976, %v1574, 0
        %1601 = vmatprep.subr.bf16.mxu0 0
        %1602 = vmatpush1.bf16.msra.mxu0 %v1594
        %1603 = vmatprep.subr.bf16.mxu0 0
        %1604 = vmatpush1.bf16.msra.mxu0 %v1595
        %1605 = vmatprep.subr.bf16.mxu0 0
        %1606 = vmatpush1.bf16.msra.mxu0 0
        %1607 = vmatprep.subr.bf16.mxu0 0
        %1608 = vmatpush1.bf16.msra.mxu0 0
        %1609 = vmatprep.subr.bf16.mxu0 0
        %1610 = vmatpush1.bf16.msra.mxu0 0
        %1611 = vmatprep.subr.bf16.mxu0 0
        %1612 = vmatpush1.bf16.msra.mxu0 0
        %1613 = vmatprep.subr.bf16.mxu0 0
        %1614 = vmatpush1.bf16.msra.mxu0 0
        %1615 = vmatprep.subr.bf16.mxu0 0
        %1616 = vmatpush1.bf16.msra.mxu0 0
        %1617 = vmatprep.subr.bf16.mxu0 0
        %1618 = vmatpush1.bf16.msra.mxu0 0
        %1619 = vmatprep.subr.bf16.mxu0 0
        %1620 = vmatpush1.bf16.msra.mxu0 0
        %1621 = vmatprep.subr.bf16.mxu0 0
        %1622 = vmatpush1.bf16.msra.mxu0 0
        %1623 = vmatprep.subr.bf16.mxu0 0
        %1624 = vmatpush1.bf16.msra.mxu0 0
        %1625 = vmatprep.subr.bf16.mxu0 0
        %1626 = vmatpush1.bf16.msra.mxu0 0
        %1627 = vmatprep.subr.bf16.mxu0 0
        %1628 = vmatpush1.bf16.msra.mxu0 0
        %1629 = vmatprep.subr.bf16.mxu0 0
        %1630 = vmatpush1.bf16.msra.mxu0 0
        %1631 = vmatprep.subr.bf16.mxu0 0
        %1632 = vmatpush1.bf16.msra.mxu0 0
        %1633 = vmatprep.mubr.bf16.mxu0 0
        %1634 = vmatmul.mubr.bf16.gmra.mrb[0].mxu0 %v1599
        %v1635 = vpop.f32.mrb[0].mxu0
        %v1636 = vadd.f32 %v1584, %v1635
        %v1637 = vpop.f32.mrb[0].mxu0
        %v1638 = vpop.f32.mrb[0].mxu0
        %v1639 = vpop.f32.mrb[0].mxu0
        %1640 = vdwg.mxu0
        %v1641 = vmax.f32 %v1636, 0.0
        %v1642 = vpack.c.bf16 %v1641, %v1641
        %v1643 = vld [vmem:[%s17] sm:$0xf]
        %v1644 = vld [vmem:[%s17 + $0x4] sm:$0xf]
        %v1645 = vld [vmem:[%s17 + $0x8] sm:$0xf]
        %v1646 = vld [vmem:[%s17 + $0xc] sm:$0xf]
        %v1647 = vld [vmem:[%s17 + $0x10] sm:$0xf]
        %v1648 = vld [vmem:[%s17 + $0x14] sm:$0xf]
        %v1649 = vld [vmem:[%s17 + $0x18] sm:$0xf]
        %v1650 = vld [vmem:[%s17 + $0x1c] sm:$0xf]
        %v1651 = vld [vmem:[%s19] sm:$0x1]
        %v1653 = vlaneseq
        %v1654 = vshrl.u32 %v1653, 7
        %v1655 = vsub.s32 0, %v1654
        %v1656 = vrot.slane %v1651, %v1655
        %v1666 = vunpack.c.l.b16 %v1643
        %v1667 = vunpack.c.l.b16 %v1644
        %v1668 = vunpack.c.l.b16 %v1645
        %v1669 = vunpack.c.l.b16 %v1646
        %v1670 = vunpack.c.l.b16 %v1647
        %v1671 = vunpack.c.l.b16 %v1648
        %v1672 = vunpack.c.l.b16 %v1649
        %v1673 = vunpack.c.l.b16 %v1650
        %v1674 = vpack.c.b16 %v1667, %v1666
        %v1675 = vpack.c.b16 %v1669, %v1668
        %v1676 = vpack.c.b16 %v1671, %v1670
        %v1677 = vpack.c.b16 %v1673, %v1672
        %vm1682 = vcmask 523264
        %v1684 = vsel %vm1682, %v1642, 0
        %1686 = vmatprep.subr.bf16.mxu0 0
        %1687 = vmatpush1.bf16.msra.mxu0 %v1674
        %1688 = vmatprep.subr.bf16.mxu0 0
        %1689 = vmatpush1.bf16.msra.mxu0 %v1675
        %1690 = vmatprep.subr.bf16.mxu0 0
        %1691 = vmatpush1.bf16.msra.mxu0 %v1676
        %1692 = vmatprep.subr.bf16.mxu0 0
        %1693 = vmatpush1.bf16.msra.mxu0 %v1677
        %1694 = vmatprep.subr.bf16.mxu0 0
        %1695 = vmatpush1.bf16.msra.mxu0 0
        %1696 = vmatprep.subr.bf16.mxu0 0
        %1697 = vmatpush1.bf16.msra.mxu0 0
        %1698 = vmatprep.subr.bf16.mxu0 0
        %1699 = vmatpush1.bf16.msra.mxu0 0
        %1700 = vmatprep.subr.bf16.mxu0 0
        %1701 = vmatpush1.bf16.msra.mxu0 0
        %1702 = vmatprep.subr.bf16.mxu0 0
        %1703 = vmatpush1.bf16.msra.mxu0 0
        %1704 = vmatprep.subr.bf16.mxu0 0
        %1705 = vmatpush1.bf16.msra.mxu0 0
        %1706 = vmatprep.subr.bf16.mxu0 0
        %1707 = vmatpush1.bf16.msra.mxu0 0
        %1708 = vmatprep.subr.bf16.mxu0 0
        %1709 = vmatpush1.bf16.msra.mxu0 0
        %1710 = vmatprep.subr.bf16.mxu0 0
        %1711 = vmatpush1.bf16.msra.mxu0 0
        %1712 = vmatprep.subr.bf16.mxu0 0
        %1713 = vmatpush1.bf16.msra.mxu0 0
        %1714 = vmatprep.subr.bf16.mxu0 0
        %1715 = vmatpush1.bf16.msra.mxu0 0
        %1716 = vmatprep.subr.bf16.mxu0 0
        %1717 = vmatpush1.bf16.msra.mxu0 0
        %1718 = vmatprep.mubr.bf16.mxu0 0
        %1719 = vmatmul.mubr.bf16.gmra.mrb[0].mxu0 %v1684
        %v1720 = vpop.f32.mrb[0].mxu0
        %v1721 = vadd.f32 %v1656, %v1720
        %v1722 = vpop.f32.mrb[0].mxu0
        %v1723 = vpop.f32.mrb[0].mxu0
        %v1724 = vpop.f32.mrb[0].mxu0
        %1725 = vdwg.mxu0
        %v1726 = vadd.f32 %v1573, %v1721
        %v1727 = vsel %vm976, %v1726, 0.0
        %1728 = vadd.xlane.f32.xlu0 %v1727
        %v1729 = vpop.xlane.xlu0 %1728
        %v1730 = vmul.f32 %v1729, %v1553
        %v1731 = vsub.f32 %v1726, %v1730
        %v1732 = vmul.f32 %v1731, %v1731
        %v1733 = vsel %vm976, %v1732, 0.0
        %1734 = vadd.xlane.f32.xlu0 %v1733
        %v1735 = vpop.xlane.xlu0 %1734
        %v1736 = vmul.f32 %v1735, %v1553
        %v1737 = vadd.f32 %v1736, 1e-05
        %v1738 = vrsqrt.pop %v1737
        %v1739 = vmul.f32 %v1731, %v1738
        %v1740 = vlaneseq
        %v1741 = vshrl.u32 %v1740, 7
        %v1742 = vsub.s32 2, %v1741
        %v1743 = vrot.slane %v951, %v1742
        %v1744 = vmul.f32 %v1739, %v1743
        %v1745 = vlaneseq
        %v1746 = vshrl.u32 %v1745, 7
        %v1747 = vsub.s32 3, %v1746
        %v1748 = vrot.slane %v951, %v1747
        %v1749 = vadd.f32 %v1744, %v1748
        %s1750 = scalar_lea.vmem %s21, 4
        %v1751 = vld [vmem:[%s1750] sm:$0xf]
        %v1752 = vpack.c.bf16 %v1749, %v1749
        %s1753 = scalar_lea.vmem %s5, 16
        %v1754 = vld [vmem:[%s1753] sm:$0xf]
        %v1755 = vld [vmem:[%s1753 + $0x4] sm:$0xf]
        %v1756 = vld [vmem:[%s1753 + $0x8] sm:$0xf]
        %v1757 = vld [vmem:[%s1753 + $0xc] sm:$0xf]
        %s1758 = scalar_lea.vmem %s7, 1
        %v1759 = vld [vmem:[%s1758] sm:$0x1]
        %v1761 = vlaneseq
        %v1762 = vshrl.u32 %v1761, 7
        %v1763 = vsub.s32 0, %v1762
        %v1764 = vrot.slane %v1759, %v1763
        %v1770 = vunpack.c.l.b16 %v1754
        %v1771 = vunpack.c.l.b16 %v1755
        %v1772 = vunpack.c.l.b16 %v1756
        %v1773 = vunpack.c.l.b16 %v1757
        %v1774 = vpack.c.b16 %v1771, %v1770
        %v1775 = vpack.c.b16 %v1773, %v1772
        %v1779 = vsel %vm976, %v1752, 0
        %1781 = vmatprep.subr.bf16.mxu0 0
        %1782 = vmatpush1.bf16.msra.mxu0 %v1774
        %1783 = vmatprep.subr.bf16.mxu0 0
        %1784 = vmatpush1.bf16.msra.mxu0 %v1775
        %1785 = vmatprep.subr.bf16.mxu0 0
        %1786 = vmatpush1.bf16.msra.mxu0 0
        %1787 = vmatprep.subr.bf16.mxu0 0
        %1788 = vmatpush1.bf16.msra.mxu0 0
        %1789 = vmatprep.subr.bf16.mxu0 0
        %1790 = vmatpush1.bf16.msra.mxu0 0
        %1791 = vmatprep.subr.bf16.mxu0 0
        %1792 = vmatpush1.bf16.msra.mxu0 0
        %1793 = vmatprep.subr.bf16.mxu0 0
        %1794 = vmatpush1.bf16.msra.mxu0 0
        %1795 = vmatprep.subr.bf16.mxu0 0
        %1796 = vmatpush1.bf16.msra.mxu0 0
        %1797 = vmatprep.subr.bf16.mxu0 0
        %1798 = vmatpush1.bf16.msra.mxu0 0
        %1799 = vmatprep.subr.bf16.mxu0 0
        %1800 = vmatpush1.bf16.msra.mxu0 0
        %1801 = vmatprep.subr.bf16.mxu0 0
        %1802 = vmatpush1.bf16.msra.mxu0 0
        %1803 = vmatprep.subr.bf16.mxu0 0
        %1804 = vmatpush1.bf16.msra.mxu0 0
        %1805 = vmatprep.subr.bf16.mxu0 0
        %1806 = vmatpush1.bf16.msra.mxu0 0
        %1807 = vmatprep.subr.bf16.mxu0 0
        %1808 = vmatpush1.bf16.msra.mxu0 0
        %1809 = vmatprep.subr.bf16.mxu0 0
        %1810 = vmatpush1.bf16.msra.mxu0 0
        %1811 = vmatprep.subr.bf16.mxu0 0
        %1812 = vmatpush1.bf16.msra.mxu0 0
        %1813 = vmatprep.mubr.bf16.mxu0 0
        %1814 = vmatmul.mubr.bf16.gmra.mrb[0].mxu0 %v1779
        %v1815 = vpop.f32.mrb[0].mxu0
        %v1816 = vadd.f32 %v1764, %v1815
        %v1817 = vpop.f32.mrb[0].mxu0
        %v1818 = vpop.f32.mrb[0].mxu0
        %v1819 = vpop.f32.mrb[0].mxu0
        %1820 = vdwg.mxu0
        %v1821 = vmul.f32 %v1816, 0.35355338
        %v1822 = vpack.c.bf16 %v1821, %v1821
        %v1823 = vpack.c.bf16 %v1816, %v1816
        %1825 = vrot.lane.b32.xlu0 %v1823, 96
        %v1826 = vpop.permute.xlu0 %1825
        %v1828 = vsel %vm1026, %v1822, 0
        %v1831 = vsel %vm1026, %v1826, 0
        %1833 = vmatprep.subr.bf16.mxu0 0
        %1834 = vmatpush1.bf16.xpose.msra.mxu0 %v1831
        %1835 = vmatprep.subr.bf16.mxu0 0
        %1836 = vmatpush1.bf16.xpose.msra.mxu0 0
        %1837 = vmatprep.subr.bf16.mxu0 0
        %1838 = vmatpush1.bf16.xpose.msra.mxu0 0
        %1839 = vmatprep.subr.bf16.mxu0 0
        %1840 = vmatpush1.bf16.xpose.msra.mxu0 0
        %1841 = vmatprep.subr.bf16.mxu0 0
        %1842 = vmatpush1.bf16.xpose.msra.mxu0 0
        %1843 = vmatprep.subr.bf16.mxu0 0
        %1844 = vmatpush1.bf16.xpose.msra.mxu0 0
        %1845 = vmatprep.subr.bf16.mxu0 0
        %1846 = vmatpush1.bf16.xpose.msra.mxu0 0
        %1847 = vmatprep.subr.bf16.mxu0 0
        %1848 = vmatpush1.bf16.xpose.msra.mxu0 0
        %1849 = vmatprep.subr.bf16.mxu0 0
        %1850 = vmatpush1.bf16.xpose.msra.mxu0 0
        %1851 = vmatprep.subr.bf16.mxu0 0
        %1852 = vmatpush1.bf16.xpose.msra.mxu0 0
        %1853 = vmatprep.subr.bf16.mxu0 0
        %1854 = vmatpush1.bf16.xpose.msra.mxu0 0
        %1855 = vmatprep.subr.bf16.mxu0 0
        %1856 = vmatpush1.bf16.xpose.msra.mxu0 0
        %1857 = vmatprep.subr.bf16.mxu0 0
        %1858 = vmatpush1.bf16.xpose.msra.mxu0 0
        %1859 = vmatprep.subr.bf16.mxu0 0
        %1860 = vmatpush1.bf16.xpose.msra.mxu0 0
        %1861 = vmatprep.subr.bf16.mxu0 0
        %1862 = vmatpush1.bf16.xpose.msra.mxu0 0
        %1863 = vmatprep.subr.bf16.mxu0 0
        %1864 = vmatpush1.bf16.xpose.msra.mxu0 0
        %1865 = vmatprep.mubr.bf16.mxu0 0
        %1866 = vmatmul.mubr.bf16.gmra.mrb[0].mxu0 %v1828
        %v1867 = vpop.f32.mrb[0].mxu0
        %v1868 = vadd.f32 0.0, %v1867
        %v1869 = vpop.f32.mrb[0].mxu0
        %v1870 = vpop.f32.mrb[0].mxu0
        %v1871 = vpop.f32.mrb[0].mxu0
        %1872 = vdwg.mxu0
        %v1873 = vsel %vm1026, %v1868, -inf
        %1874 = vmax.xlane.f32.xlu0 %v1873
        %v1875 = vpop.xlane.xlu0 %1874
        %v1876 = vsub.f32 %v1868, %v1875
        %v1877 = vmul.f32 %v1876, 1.442695
        %v1878 = vpow.pop %v1877
        %v1879 = vsel %vm1026, %v1878, 0.0
        %1880 = vadd.xlane.f32.xlu0 %v1879
        %v1881 = vpop.xlane.xlu0 %1880
        %v1882 = vrcp.pop %v1881
        %v1883 = vmul.f32 %v1878, %v1882
        %v1884 = vpack.c.bf16 %v1883, %v1883
        %1885 = vrot.lane.b32.xlu0 %v1823, 64
        %v1886 = vpop.permute.xlu0 %1885
        %v1888 = vsel %vm1026, %v1884, 0
        %v1891 = vsel %vm1090, %v1886, 0
        %1893 = vmatprep.subr.bf16.mxu0 0
        %1894 = vmatpush1.bf16.msra.mxu0 %v1891
        %1895 = vmatprep.subr.bf16.mxu0 0
        %1896 = vmatpush1.bf16.msra.mxu0 0
        %1897 = vmatprep.subr.bf16.mxu0 0
        %1898 = vmatpush1.bf16.msra.mxu0 0
        %1899 = vmatprep.subr.bf16.mxu0 0
        %1900 = vmatpush1.bf16.msra.mxu0 0
        %1901 = vmatprep.subr.bf16.mxu0 0
        %1902 = vmatpush1.bf16.msra.mxu0 0
        %1903 = vmatprep.subr.bf16.mxu0 0
        %1904 = vmatpush1.bf16.msra.mxu0 0
        %1905 = vmatprep.subr.bf16.mxu0 0
        %1906 = vmatpush1.bf16.msra.mxu0 0
        %1907 = vmatprep.subr.bf16.mxu0 0
        %1908 = vmatpush1.bf16.msra.mxu0 0
        %1909 = vmatprep.subr.bf16.mxu0 0
        %1910 = vmatpush1.bf16.msra.mxu0 0
        %1911 = vmatprep.subr.bf16.mxu0 0
        %1912 = vmatpush1.bf16.msra.mxu0 0
        %1913 = vmatprep.subr.bf16.mxu0 0
        %1914 = vmatpush1.bf16.msra.mxu0 0
        %1915 = vmatprep.subr.bf16.mxu0 0
        %1916 = vmatpush1.bf16.msra.mxu0 0
        %1917 = vmatprep.subr.bf16.mxu0 0
        %1918 = vmatpush1.bf16.msra.mxu0 0
        %1919 = vmatprep.subr.bf16.mxu0 0
        %1920 = vmatpush1.bf16.msra.mxu0 0
        %1921 = vmatprep.subr.bf16.mxu0 0
        %1922 = vmatpush1.bf16.msra.mxu0 0
        %1923 = vmatprep.subr.bf16.mxu0 0
        %1924 = vmatpush1.bf16.msra.mxu0 0
        %1925 = vmatprep.mubr.bf16.mxu0 0
        %1926 = vmatmul.mubr.bf16.gmra.mrb[0].mxu0 %v1888
        %v1927 = vpop.f32.mrb[0].mxu0
        %v1928 = vadd.f32 0.0, %v1927
        %v1929 = vpop.f32.mrb[0].mxu0
        %v1930 = vpop.f32.mrb[0].mxu0
        %v1931 = vpop.f32.mrb[0].mxu0
        %1932 = vdwg.mxu0
        %1934 = vrot.lane.b32.xlu0 %v1822, 120
        %v1935 = vpop.permute.xlu0 %1934
        %1936 = vrot.lane.b32.xlu0 %v1823, 88
        %v1937 = vpop.permute.xlu0 %1936
        %v1939 = vsel %vm1026, %v1935, 0
        %v1942 = vsel %vm1026, %v1937, 0
        %1944 = vmatprep.subr.bf16.mxu0 0
        %1945 = vmatpush1.bf16.xpose.msra.mxu0 %v1942
        %1946 = vmatprep.subr.bf16.mxu0 0
        %1947 = vmatpush1.bf16.xpose.msra.mxu0 0
        %1948 = vmatprep.subr.bf16.mxu0 0
        %1949 = vmatpush1.bf16.xpose.msra.mxu0 0
        %1950 = vmatprep.subr.bf16.mxu0 0
        %1951 = vmatpush1.bf16.xpose.msra.mxu0 0
        %1952 = vmatprep.subr.bf16.mxu0 0
        %1953 = vmatpush1.bf16.xpose.msra.mxu0 0
        %1954 = vmatprep.subr.bf16.mxu0 0
        %1955 = vmatpush1.bf16.xpose.msra.mxu0 0
        %1956 = vmatprep.subr.bf16.mxu0 0
        %1957 = vmatpush1.bf16.xpose.msra.mxu0 0
        %1958 = vmatprep.subr.bf16.mxu0 0
        %1959 = vmatpush1.bf16.xpose.msra.mxu0 0
        %1960 = vmatprep.subr.bf16.mxu0 0
        %1961 = vmatpush1.bf16.xpose.msra.mxu0 0
        %1962 = vmatprep.subr.bf16.mxu0 0
        %1963 = vmatpush1.bf16.xpose.msra.mxu0 0
        %1964 = vmatprep.subr.bf16.mxu0 0
        %1965 = vmatpush1.bf16.xpose.msra.mxu0 0
        %1966 = vmatprep.subr.bf16.mxu0 0
        %1967 = vmatpush1.bf16.xpose.msra.mxu0 0
        %1968 = vmatprep.subr.bf16.mxu0 0
        %1969 = vmatpush1.bf16.xpose.msra.mxu0 0
        %1970 = vmatprep.subr.bf16.mxu0 0
        %1971 = vmatpush1.bf16.xpose.msra.mxu0 0
        %1972 = vmatprep.subr.bf16.mxu0 0
        %1973 = vmatpush1.bf16.xpose.msra.mxu0 0
        %1974 = vmatprep.subr.bf16.mxu0 0
        %1975 = vmatpush1.bf16.xpose.msra.mxu0 0
        %1976 = vmatprep.mubr.bf16.mxu0 0
        %1977 = vmatmul.mubr.bf16.gmra.mrb[0].mxu0 %v1939
        %v1978 = vpop.f32.mrb[0].mxu0
        %v1979 = vadd.f32 0.0, %v1978
        %v1980 = vpop.f32.mrb[0].mxu0
        %v1981 = vpop.f32.mrb[0].mxu0
        %v1982 = vpop.f32.mrb[0].mxu0
        %1983 = vdwg.mxu0
        %v1984 = vsel %vm1026, %v1979, -inf
        %1985 = vmax.xlane.f32.xlu0 %v1984
        %v1986 = vpop.xlane.xlu0 %1985
        %v1987 = vsub.f32 %v1979, %v1986
        %v1988 = vmul.f32 %v1987, 1.442695
        %v1989 = vpow.pop %v1988
        %v1990 = vsel %vm1026, %v1989, 0.0
        %1991 = vadd.xlane.f32.xlu0 %v1990
        %v1992 = vpop.xlane.xlu0 %1991
        %v1993 = vrcp.pop %v1992
        %v1994 = vmul.f32 %v1989, %v1993
        %v1995 = vpack.c.bf16 %v1994, %v1994
        %1996 = vrot.lane.b32.xlu0 %v1823, 56
        %v1997 = vpop.permute.xlu0 %1996
        %v1999 = vsel %vm1026, %v1995, 0
        %v2002 = vsel %vm1090, %v1997, 0
        %2004 = vmatprep.subr.bf16.mxu0 0
        %2005 = vmatpush1.bf16.msra.mxu0 %v2002
        %2006 = vmatprep.subr.bf16.mxu0 0
        %2007 = vmatpush1.bf16.msra.mxu0 0
        %2008 = vmatprep.subr.bf16.mxu0 0
        %2009 = vmatpush1.bf16.msra.mxu0 0
        %2010 = vmatprep.subr.bf16.mxu0 0
        %2011 = vmatpush1.bf16.msra.mxu0 0
        %2012 = vmatprep.subr.bf16.mxu0 0
        %2013 = vmatpush1.bf16.msra.mxu0 0
        %2014 = vmatprep.subr.bf16.mxu0 0
        %2015 = vmatpush1.bf16.msra.mxu0 0
        %2016 = vmatprep.subr.bf16.mxu0 0
        %2017 = vmatpush1.bf16.msra.mxu0 0
        %2018 = vmatprep.subr.bf16.mxu0 0
        %2019 = vmatpush1.bf16.msra.mxu0 0
        %2020 = vmatprep.subr.bf16.mxu0 0
        %2021 = vmatpush1.bf16.msra.mxu0 0
        %2022 = vmatprep.subr.bf16.mxu0 0
        %2023 = vmatpush1.bf16.msra.mxu0 0
        %2024 = vmatprep.subr.bf16.mxu0 0
        %2025 = vmatpush1.bf16.msra.mxu0 0
        %2026 = vmatprep.subr.bf16.mxu0 0
        %2027 = vmatpush1.bf16.msra.mxu0 0
        %2028 = vmatprep.subr.bf16.mxu0 0
        %2029 = vmatpush1.bf16.msra.mxu0 0
        %2030 = vmatprep.subr.bf16.mxu0 0
        %2031 = vmatpush1.bf16.msra.mxu0 0
        %2032 = vmatprep.subr.bf16.mxu0 0
        %2033 = vmatpush1.bf16.msra.mxu0 0
        %2034 = vmatprep.subr.bf16.mxu0 0
        %2035 = vmatpush1.bf16.msra.mxu0 0
        %2036 = vmatprep.mubr.bf16.mxu0 0
        %2037 = vmatmul.mubr.bf16.gmra.mrb[0].mxu0 %v1999
        %v2038 = vpop.f32.mrb[0].mxu0
        %v2039 = vadd.f32 0.0, %v2038
        %v2040 = vpop.f32.mrb[0].mxu0
        %v2041 = vpop.f32.mrb[0].mxu0
        %v2042 = vpop.f32.mrb[0].mxu0
        %2043 = vdwg.mxu0
        %2044 = vrot.lane.b32.xlu0 %v1822, 112
        %v2045 = vpop.permute.xlu0 %2044
        %2046 = vrot.lane.b32.xlu0 %v1823, 80
        %v2047 = vpop.permute.xlu0 %2046
        %v2049 = vsel %vm1026, %v2045, 0
        %v2052 = vsel %vm1026, %v2047, 0
        %2054 = vmatprep.subr.bf16.mxu0 0
        %2055 = vmatpush1.bf16.xpose.msra.mxu0 %v2052
        %2056 = vmatprep.subr.bf16.mxu0 0
        %2057 = vmatpush1.bf16.xpose.msra.mxu0 0
        %2058 = vmatprep.subr.bf16.mxu0 0
        %2059 = vmatpush1.bf16.xpose.msra.mxu0 0
        %2060 = vmatprep.subr.bf16.mxu0 0
        %2061 = vmatpush1.bf16.xpose.msra.mxu0 0
        %2062 = vmatprep.subr.bf16.mxu0 0
        %2063 = vmatpush1.bf16.xpose.msra.mxu0 0
        %2064 = vmatprep.subr.bf16.mxu0 0
        %2065 = vmatpush1.bf16.xpose.msra.mxu0 0
        %2066 = vmatprep.subr.bf16.mxu0 0
        %2067 = vmatpush1.bf16.xpose.msra.mxu0 0
        %2068 = vmatprep.subr.bf16.mxu0 0
        %2069 = vmatpush1.bf16.xpose.msra.mxu0 0
        %2070 = vmatprep.subr.bf16.mxu0 0
        %2071 = vmatpush1.bf16.xpose.msra.mxu0 0
        %2072 = vmatprep.subr.bf16.mxu0 0
        %2073 = vmatpush1.bf16.xpose.msra.mxu0 0
        %2074 = vmatprep.subr.bf16.mxu0 0
        %2075 = vmatpush1.bf16.xpose.msra.mxu0 0
        %2076 = vmatprep.subr.bf16.mxu0 0
        %2077 = vmatpush1.bf16.xpose.msra.mxu0 0
        %2078 = vmatprep.subr.bf16.mxu0 0
        %2079 = vmatpush1.bf16.xpose.msra.mxu0 0
        %2080 = vmatprep.subr.bf16.mxu0 0
        %2081 = vmatpush1.bf16.xpose.msra.mxu0 0
        %2082 = vmatprep.subr.bf16.mxu0 0
        %2083 = vmatpush1.bf16.xpose.msra.mxu0 0
        %2084 = vmatprep.subr.bf16.mxu0 0
        %2085 = vmatpush1.bf16.xpose.msra.mxu0 0
        %2086 = vmatprep.mubr.bf16.mxu0 0
        %2087 = vmatmul.mubr.bf16.gmra.mrb[0].mxu0 %v2049
        %v2088 = vpop.f32.mrb[0].mxu0
        %v2089 = vadd.f32 0.0, %v2088
        %v2090 = vpop.f32.mrb[0].mxu0
        %v2091 = vpop.f32.mrb[0].mxu0
        %v2092 = vpop.f32.mrb[0].mxu0
        %2093 = vdwg.mxu0
        %v2094 = vsel %vm1026, %v2089, -inf
        %2095 = vmax.xlane.f32.xlu0 %v2094
        %v2096 = vpop.xlane.xlu0 %2095
        %v2097 = vsub.f32 %v2089, %v2096
        %v2098 = vmul.f32 %v2097, 1.442695
        %v2099 = vpow.pop %v2098
        %v2100 = vsel %vm1026, %v2099, 0.0
        %2101 = vadd.xlane.f32.xlu0 %v2100
        %v2102 = vpop.xlane.xlu0 %2101
        %v2103 = vrcp.pop %v2102
        %v2104 = vmul.f32 %v2099, %v2103
        %v2105 = vpack.c.bf16 %v2104, %v2104
        %2106 = vrot.lane.b32.xlu0 %v1823, 48
        %v2107 = vpop.permute.xlu0 %2106
        %v2109 = vsel %vm1026, %v2105, 0
        %v2112 = vsel %vm1090, %v2107, 0
        %2114 = vmatprep.subr.bf16.mxu0 0
        %2115 = vmatpush1.bf16.msra.mxu0 %v2112
        %2116 = vmatprep.subr.bf16.mxu0 0
        %2117 = vmatpush1.bf16.msra.mxu0 0
        %2118 = vmatprep.subr.bf16.mxu0 0
        %2119 = vmatpush1.bf16.msra.mxu0 0
        %2120 = vmatprep.subr.bf16.mxu0 0
        %2121 = vmatpush1.bf16.msra.mxu0 0
        %2122 = vmatprep.subr.bf16.mxu0 0
        %2123 = vmatpush1.bf16.msra.mxu0 0
        %2124 = vmatprep.subr.bf16.mxu0 0
        %2125 = vmatpush1.bf16.msra.mxu0 0
        %2126 = vmatprep.subr.bf16.mxu0 0
        %2127 = vmatpush1.bf16.msra.mxu0 0
        %2128 = vmatprep.subr.bf16.mxu0 0
        %2129 = vmatpush1.bf16.msra.mxu0 0
        %2130 = vmatprep.subr.bf16.mxu0 0
        %2131 = vmatpush1.bf16.msra.mxu0 0
        %2132 = vmatprep.subr.bf16.mxu0 0
        %2133 = vmatpush1.bf16.msra.mxu0 0
        %2134 = vmatprep.subr.bf16.mxu0 0
        %2135 = vmatpush1.bf16.msra.mxu0 0
        %2136 = vmatprep.subr.bf16.mxu0 0
        %2137 = vmatpush1.bf16.msra.mxu0 0
        %2138 = vmatprep.subr.bf16.mxu0 0
        %2139 = vmatpush1.bf16.msra.mxu0 0
        %2140 = vmatprep.subr.bf16.mxu0 0
        %2141 = vmatpush1.bf16.msra.mxu0 0
        %2142 = vmatprep.subr.bf16.mxu0 0
        %2143 = vmatpush1.bf16.msra.mxu0 0
        %2144 = vmatprep.subr.bf16.mxu0 0
        %2145 = vmatpush1.bf16.msra.mxu0 0
        %2146 = vmatprep.mubr.bf16.mxu0 0
        %2147 = vmatmul.mubr.bf16.gmra.mrb[0].mxu0 %v2109
        %v2148 = vpop.f32.mrb[0].mxu0
        %v2149 = vadd.f32 0.0, %v2148
        %v2150 = vpop.f32.mrb[0].mxu0
        %v2151 = vpop.f32.mrb[0].mxu0
        %v2152 = vpop.f32.mrb[0].mxu0
        %2153 = vdwg.mxu0
        %2154 = vrot.lane.b32.xlu0 %v1822, 104
        %v2155 = vpop.permute.xlu0 %2154
        %2156 = vrot.lane.b32.xlu0 %v1823, 72
        %v2157 = vpop.permute.xlu0 %2156
        %v2159 = vsel %vm1026, %v2155, 0
        %v2162 = vsel %vm1026, %v2157, 0
        %2164 = vmatprep.subr.bf16.mxu0 0
        %2165 = vmatpush1.bf16.xpose.msra.mxu0 %v2162
        %2166 = vmatprep.subr.bf16.mxu0 0
        %2167 = vmatpush1.bf16.xpose.msra.mxu0 0
        %2168 = vmatprep.subr.bf16.mxu0 0
        %2169 = vmatpush1.bf16.xpose.msra.mxu0 0
        %2170 = vmatprep.subr.bf16.mxu0 0
        %2171 = vmatpush1.bf16.xpose.msra.mxu0 0
        %2172 = vmatprep.subr.bf16.mxu0 0
        %2173 = vmatpush1.bf16.xpose.msra.mxu0 0
        %2174 = vmatprep.subr.bf16.mxu0 0
        %2175 = vmatpush1.bf16.xpose.msra.mxu0 0
        %2176 = vmatprep.subr.bf16.mxu0 0
        %2177 = vmatpush1.bf16.xpose.msra.mxu0 0
        %2178 = vmatprep.subr.bf16.mxu0 0
        %2179 = vmatpush1.bf16.xpose.msra.mxu0 0
        %2180 = vmatprep.subr.bf16.mxu0 0
        %2181 = vmatpush1.bf16.xpose.msra.mxu0 0
        %2182 = vmatprep.subr.bf16.mxu0 0
        %2183 = vmatpush1.bf16.xpose.msra.mxu0 0
        %2184 = vmatprep.subr.bf16.mxu0 0
        %2185 = vmatpush1.bf16.xpose.msra.mxu0 0
        %2186 = vmatprep.subr.bf16.mxu0 0
        %2187 = vmatpush1.bf16.xpose.msra.mxu0 0
        %2188 = vmatprep.subr.bf16.mxu0 0
        %2189 = vmatpush1.bf16.xpose.msra.mxu0 0
        %2190 = vmatprep.subr.bf16.mxu0 0
        %2191 = vmatpush1.bf16.xpose.msra.mxu0 0
        %2192 = vmatprep.subr.bf16.mxu0 0
        %2193 = vmatpush1.bf16.xpose.msra.mxu0 0
        %2194 = vmatprep.subr.bf16.mxu0 0
        %2195 = vmatpush1.bf16.xpose.msra.mxu0 0
        %2196 = vmatprep.mubr.bf16.mxu0 0
        %2197 = vmatmul.mubr.bf16.gmra.mrb[0].mxu0 %v2159
        %v2198 = vpop.f32.mrb[0].mxu0
        %v2199 = vadd.f32 0.0, %v2198
        %v2200 = vpop.f32.mrb[0].mxu0
        %v2201 = vpop.f32.mrb[0].mxu0
        %v2202 = vpop.f32.mrb[0].mxu0
        %2203 = vdwg.mxu0
        %v2204 = vsel %vm1026, %v2199, -inf
        %2205 = vmax.xlane.f32.xlu0 %v2204
        %v2206 = vpop.xlane.xlu0 %2205
        %v2207 = vsub.f32 %v2199, %v2206
        %v2208 = vmul.f32 %v2207, 1.442695
        %v2209 = vpow.pop %v2208
        %v2210 = vsel %vm1026, %v2209, 0.0
        %2211 = vadd.xlane.f32.xlu0 %v2210
        %v2212 = vpop.xlane.xlu0 %2211
        %v2213 = vrcp.pop %v2212
        %v2214 = vmul.f32 %v2209, %v2213
        %v2215 = vpack.c.bf16 %v2214, %v2214
        %2216 = vrot.lane.b32.xlu0 %v1823, 40
        %v2217 = vpop.permute.xlu0 %2216
        %v2219 = vsel %vm1026, %v2215, 0
        %v2222 = vsel %vm1090, %v2217, 0
        %2224 = vmatprep.subr.bf16.mxu0 0
        %2225 = vmatpush1.bf16.msra.mxu0 %v2222
        %2226 = vmatprep.subr.bf16.mxu0 0
        %2227 = vmatpush1.bf16.msra.mxu0 0
        %2228 = vmatprep.subr.bf16.mxu0 0
        %2229 = vmatpush1.bf16.msra.mxu0 0
        %2230 = vmatprep.subr.bf16.mxu0 0
        %2231 = vmatpush1.bf16.msra.mxu0 0
        %2232 = vmatprep.subr.bf16.mxu0 0
        %2233 = vmatpush1.bf16.msra.mxu0 0
        %2234 = vmatprep.subr.bf16.mxu0 0
        %2235 = vmatpush1.bf16.msra.mxu0 0
        %2236 = vmatprep.subr.bf16.mxu0 0
        %2237 = vmatpush1.bf16.msra.mxu0 0
        %2238 = vmatprep.subr.bf16.mxu0 0
        %2239 = vmatpush1.bf16.msra.mxu0 0
        %2240 = vmatprep.subr.bf16.mxu0 0
        %2241 = vmatpush1.bf16.msra.mxu0 0
        %2242 = vmatprep.subr.bf16.mxu0 0
        %2243 = vmatpush1.bf16.msra.mxu0 0
        %2244 = vmatprep.subr.bf16.mxu0 0
        %2245 = vmatpush1.bf16.msra.mxu0 0
        %2246 = vmatprep.subr.bf16.mxu0 0
        %2247 = vmatpush1.bf16.msra.mxu0 0
        %2248 = vmatprep.subr.bf16.mxu0 0
        %2249 = vmatpush1.bf16.msra.mxu0 0
        %2250 = vmatprep.subr.bf16.mxu0 0
        %2251 = vmatpush1.bf16.msra.mxu0 0
        %2252 = vmatprep.subr.bf16.mxu0 0
        %2253 = vmatpush1.bf16.msra.mxu0 0
        %2254 = vmatprep.subr.bf16.mxu0 0
        %2255 = vmatpush1.bf16.msra.mxu0 0
        %2256 = vmatprep.mubr.bf16.mxu0 0
        %2257 = vmatmul.mubr.bf16.gmra.mrb[0].mxu0 %v2219
        %v2258 = vpop.f32.mrb[0].mxu0
        %v2259 = vadd.f32 0.0, %v2258
        %v2260 = vpop.f32.mrb[0].mxu0
        %v2261 = vpop.f32.mrb[0].mxu0
        %v2262 = vpop.f32.mrb[0].mxu0
        %2263 = vdwg.mxu0
        %2265 = vrot.lane.b32.xlu0 %v2039, 8
        %v2266 = vpop.permute.xlu0 %2265
        %2269 = vrot.lane.b32.xlu0 %v2149, 16
        %v2270 = vpop.permute.xlu0 %2269
        %2273 = vrot.lane.b32.xlu0 %v2259, 24
        %v2274 = vpop.permute.xlu0 %2273
        %v2276 = vsel %vm1026, %v1928, %v2266
        %v2277 = vsel %vm1478, %v2276, %v2270
        %v2278 = vsel %vm1480, %v2277, %v2274
        %v2279 = vpack.c.bf16 %v2278, %v2278
        %s2280 = scalar_lea.vmem %s9, 16
        %v2281 = vld [vmem:[%s2280] sm:$0xf]
        %v2282 = vld [vmem:[%s2280 + $0x4] sm:$0xf]
        %v2283 = vld [vmem:[%s2280 + $0x8] sm:$0xf]
        %v2284 = vld [vmem:[%s2280 + $0xc] sm:$0xf]
        %s2285 = scalar_lea.vmem %s11, 1
        %v2286 = vld [vmem:[%s2285] sm:$0x1]
        %v2288 = vlaneseq
        %v2289 = vshrl.u32 %v2288, 7
        %v2290 = vsub.s32 0, %v2289
        %v2291 = vrot.slane %v2286, %v2290
        %v2297 = vunpack.c.l.b16 %v2281
        %v2298 = vunpack.c.l.b16 %v2282
        %v2299 = vunpack.c.l.b16 %v2283
        %v2300 = vunpack.c.l.b16 %v2284
        %v2301 = vpack.c.b16 %v2298, %v2297
        %v2302 = vpack.c.b16 %v2300, %v2299
        %v2306 = vsel %vm976, %v2279, 0
        %2308 = vmatprep.subr.bf16.mxu0 0
        %2309 = vmatpush1.bf16.msra.mxu0 %v2301
        %2310 = vmatprep.subr.bf16.mxu0 0
        %2311 = vmatpush1.bf16.msra.mxu0 %v2302
        %2312 = vmatprep.subr.bf16.mxu0 0
        %2313 = vmatpush1.bf16.msra.mxu0 0
        %2314 = vmatprep.subr.bf16.mxu0 0
        %2315 = vmatpush1.bf16.msra.mxu0 0
        %2316 = vmatprep.subr.bf16.mxu0 0
        %2317 = vmatpush1.bf16.msra.mxu0 0
        %2318 = vmatprep.subr.bf16.mxu0 0
        %2319 = vmatpush1.bf16.msra.mxu0 0
        %2320 = vmatprep.subr.bf16.mxu0 0
        %2321 = vmatpush1.bf16.msra.mxu0 0
        %2322 = vmatprep.subr.bf16.mxu0 0
        %2323 = vmatpush1.bf16.msra.mxu0 0
        %2324 = vmatprep.subr.bf16.mxu0 0
        %2325 = vmatpush1.bf16.msra.mxu0 0
        %2326 = vmatprep.subr.bf16.mxu0 0
        %2327 = vmatpush1.bf16.msra.mxu0 0
        %2328 = vmatprep.subr.bf16.mxu0 0
        %2329 = vmatpush1.bf16.msra.mxu0 0
        %2330 = vmatprep.subr.bf16.mxu0 0
        %2331 = vmatpush1.bf16.msra.mxu0 0
        %2332 = vmatprep.subr.bf16.mxu0 0
        %2333 = vmatpush1.bf16.msra.mxu0 0
        %2334 = vmatprep.subr.bf16.mxu0 0
        %2335 = vmatpush1.bf16.msra.mxu0 0
        %2336 = vmatprep.subr.bf16.mxu0 0
        %2337 = vmatpush1.bf16.msra.mxu0 0
        %2338 = vmatprep.subr.bf16.mxu0 0
        %2339 = vmatpush1.bf16.msra.mxu0 0
        %2340 = vmatprep.mubr.bf16.mxu0 0
        %2341 = vmatmul.mubr.bf16.gmra.mrb[0].mxu0 %v2306
        %v2342 = vpop.f32.mrb[0].mxu0
        %v2343 = vadd.f32 %v2291, %v2342
        %v2344 = vpop.f32.mrb[0].mxu0
        %v2345 = vpop.f32.mrb[0].mxu0
        %v2346 = vpop.f32.mrb[0].mxu0
        %2347 = vdwg.mxu0
        %v2348 = vadd.f32 %v1749, %v2343
        %v2349 = vsel %vm976, %v2348, 0.0
        %2350 = vadd.xlane.f32.xlu0 %v2349
        %v2351 = vpop.xlane.xlu0 %2350
        %v2352 = vmul.f32 %v2351, %v1553
        %v2353 = vsub.f32 %v2348, %v2352
        %v2354 = vmul.f32 %v2353, %v2353
        %v2355 = vsel %vm976, %v2354, 0.0
        %2356 = vadd.xlane.f32.xlu0 %v2355
        %v2357 = vpop.xlane.xlu0 %2356
        %v2358 = vmul.f32 %v2357, %v1553
        %v2359 = vadd.f32 %v2358, 1e-05
        %v2360 = vrsqrt.pop %v2359
        %v2361 = vmul.f32 %v2353, %v2360
        %v2362 = vlaneseq
        %v2363 = vshrl.u32 %v2362, 7
        %v2364 = vsub.s32 0, %v2363
        %v2365 = vrot.slane %v1751, %v2364
        %v2366 = vmul.f32 %v2361, %v2365
        %v2367 = vlaneseq
        %v2368 = vshrl.u32 %v2367, 7
        %v2369 = vsub.s32 1, %v2368
        %v2370 = vrot.slane %v1751, %v2369
        %v2371 = vadd.f32 %v2366, %v2370
        %v2372 = vpack.c.bf16 %v2371, %v2371
        %s2373 = scalar_lea.vmem %s13, 16
        %v2374 = vld [vmem:[%s2373] sm:$0xf]
        %v2375 = vld [vmem:[%s2373 + $0x4] sm:$0xf]
        %v2376 = vld [vmem:[%s2373 + $0x8] sm:$0xf]
        %v2377 = vld [vmem:[%s2373 + $0xc] sm:$0xf]
        %s2378 = scalar_lea.vmem %s15, 1
        %v2379 = vld [vmem:[%s2378] sm:$0x1]
        %v2381 = vlaneseq
        %v2382 = vshrl.u32 %v2381, 7
        %v2383 = vsub.s32 0, %v2382
        %v2384 = vrot.slane %v2379, %v2383
        %v2390 = vunpack.c.l.b16 %v2374
        %v2391 = vunpack.c.l.b16 %v2375
        %v2392 = vunpack.c.l.b16 %v2376
        %v2393 = vunpack.c.l.b16 %v2377
        %v2394 = vpack.c.b16 %v2391, %v2390
        %v2395 = vpack.c.b16 %v2393, %v2392
        %v2399 = vsel %vm976, %v2372, 0
        %2401 = vmatprep.subr.bf16.mxu0 0
        %2402 = vmatpush1.bf16.msra.mxu0 %v2394
        %2403 = vmatprep.subr.bf16.mxu0 0
        %2404 = vmatpush1.bf16.msra.mxu0 %v2395
        %2405 = vmatprep.subr.bf16.mxu0 0
        %2406 = vmatpush1.bf16.msra.mxu0 0
        %2407 = vmatprep.subr.bf16.mxu0 0
        %2408 = vmatpush1.bf16.msra.mxu0 0
        %2409 = vmatprep.subr.bf16.mxu0 0
        %2410 = vmatpush1.bf16.msra.mxu0 0
        %2411 = vmatprep.subr.bf16.mxu0 0
        %2412 = vmatpush1.bf16.msra.mxu0 0
        %2413 = vmatprep.subr.bf16.mxu0 0
        %2414 = vmatpush1.bf16.msra.mxu0 0
        %2415 = vmatprep.subr.bf16.mxu0 0
        %2416 = vmatpush1.bf16.msra.mxu0 0
        %2417 = vmatprep.subr.bf16.mxu0 0
        %2418 = vmatpush1.bf16.msra.mxu0 0
        %2419 = vmatprep.subr.bf16.mxu0 0
        %2420 = vmatpush1.bf16.msra.mxu0 0
        %2421 = vmatprep.subr.bf16.mxu0 0
        %2422 = vmatpush1.bf16.msra.mxu0 0
        %2423 = vmatprep.subr.bf16.mxu0 0
        %2424 = vmatpush1.bf16.msra.mxu0 0
        %2425 = vmatprep.subr.bf16.mxu0 0
        %2426 = vmatpush1.bf16.msra.mxu0 0
        %2427 = vmatprep.subr.bf16.mxu0 0
        %2428 = vmatpush1.bf16.msra.mxu0 0
        %2429 = vmatprep.subr.bf16.mxu0 0
        %2430 = vmatpush1.bf16.msra.mxu0 0
        %2431 = vmatprep.subr.bf16.mxu0 0
        %2432 = vmatpush1.bf16.msra.mxu0 0
        %2433 = vmatprep.mubr.bf16.mxu0 0
        %2434 = vmatmul.mubr.bf16.gmra.mrb[0].mxu0 %v2399
        %v2435 = vpop.f32.mrb[0].mxu0
        %v2436 = vadd.f32 %v2384, %v2435
        %v2437 = vpop.f32.mrb[0].mxu0
        %v2438 = vpop.f32.mrb[0].mxu0
        %v2439 = vpop.f32.mrb[0].mxu0
        %2440 = vdwg.mxu0
        %v2441 = vmax.f32 %v2436, 0.0
        %v2442 = vpack.c.bf16 %v2441, %v2441
        %s2443 = scalar_lea.vmem %s17, 32
        %v2444 = vld [vmem:[%s2443] sm:$0xf]
        %v2445 = vld [vmem:[%s2443 + $0x4] sm:$0xf]
        %v2446 = vld [vmem:[%s2443 + $0x8] sm:$0xf]
        %v2447 = vld [vmem:[%s2443 + $0xc] sm:$0xf]
        %v2448 = vld [vmem:[%s2443 + $0x10] sm:$0xf]
        %v2449 = vld [vmem:[%s2443 + $0x14] sm:$0xf]
        %v2450 = vld [vmem:[%s2443 + $0x18] sm:$0xf]
        %v2451 = vld [vmem:[%s2443 + $0x1c] sm:$0xf]
        %s2452 = scalar_lea.vmem %s19, 1
        %v2453 = vld [vmem:[%s2452] sm:$0x1]
        %v2455 = vlaneseq
        %v2456 = vshrl.u32 %v2455, 7
        %v2457 = vsub.s32 0, %v2456
        %v2458 = vrot.slane %v2453, %v2457
        %v2468 = vunpack.c.l.b16 %v2444
        %v2469 = vunpack.c.l.b16 %v2445
        %v2470 = vunpack.c.l.b16 %v2446
        %v2471 = vunpack.c.l.b16 %v2447
        %v2472 = vunpack.c.l.b16 %v2448
        %v2473 = vunpack.c.l.b16 %v2449
        %v2474 = vunpack.c.l.b16 %v2450
        %v2475 = vunpack.c.l.b16 %v2451
        %v2476 = vpack.c.b16 %v2469, %v2468
        %v2477 = vpack.c.b16 %v2471, %v2470
        %v2478 = vpack.c.b16 %v2473, %v2472
        %v2479 = vpack.c.b16 %v2475, %v2474
        %v2485 = vsel %vm1682, %v2442, 0
        %2487 = vmatprep.subr.bf16.mxu0 0
        %2488 = vmatpush1.bf16.msra.mxu0 %v2476
        %2489 = vmatprep.subr.bf16.mxu0 0
        %2490 = vmatpush1.bf16.msra.mxu0 %v2477
        %2491 = vmatprep.subr.bf16.mxu0 0
        %2492 = vmatpush1.bf16.msra.mxu0 %v2478
        %2493 = vmatprep.subr.bf16.mxu0 0
        %2494 = vmatpush1.bf16.msra.mxu0 %v2479
        %2495 = vmatprep.subr.bf16.mxu0 0
        %2496 = vmatpush1.bf16.msra.mxu0 0
        %2497 = vmatprep.subr.bf16.mxu0 0
        %2498 = vmatpush1.bf16.msra.mxu0 0
        %2499 = vmatprep.subr.bf16.mxu0 0
        %2500 = vmatpush1.bf16.msra.mxu0 0
        %2501 = vmatprep.subr.bf16.mxu0 0
        %2502 = vmatpush1.bf16.msra.mxu0 0
        %2503 = vmatprep.subr.bf16.mxu0 0
        %2504 = vmatpush1.bf16.msra.mxu0 0
        %2505 = vmatprep.subr.bf16.mxu0 0
        %2506 = vmatpush1.bf16.msra.mxu0 0
        %2507 = vmatprep.subr.bf16.mxu0 0
        %2508 = vmatpush1.bf16.msra.mxu0 0
        %2509 = vmatprep.subr.bf16.mxu0 0
        %2510 = vmatpush1.bf16.msra.mxu0 0
        %2511 = vmatprep.subr.bf16.mxu0 0
        %2512 = vmatpush1.bf16.msra.mxu0 0
        %2513 = vmatprep.subr.bf16.mxu0 0
        %2514 = vmatpush1.bf16.msra.mxu0 0
        %2515 = vmatprep.subr.bf16.mxu0 0
        %2516 = vmatpush1.bf16.msra.mxu0 0
        %2517 = vmatprep.subr.bf16.mxu0 0
        %2518 = vmatpush1.bf16.msra.mxu0 0
        %2519 = vmatprep.mubr.bf16.mxu0 0
        %2520 = vmatmul.mubr.bf16.gmra.mrb[0].mxu0 %v2485
        %v2521 = vpop.f32.mrb[0].mxu0
        %v2522 = vadd.f32 %v2458, %v2521
        %v2523 = vpop.f32.mrb[0].mxu0
        %v2524 = vpop.f32.mrb[0].mxu0
        %v2525 = vpop.f32.mrb[0].mxu0
        %2526 = vdwg.mxu0
        %v2527 = vadd.f32 %v2371, %v2522
        %v2528 = vsel %vm976, %v2527, 0.0
        %2529 = vadd.xlane.f32.xlu0 %v2528
        %v2530 = vpop.xlane.xlu0 %2529
        %v2531 = vmul.f32 %v2530, %v1553
        %v2532 = vsub.f32 %v2527, %v2531
        %v2533 = vmul.f32 %v2532, %v2532
        %v2534 = vsel %vm976, %v2533, 0.0
        %2535 = vadd.xlane.f32.xlu0 %v2534
        %v2536 = vpop.xlane.xlu0 %2535
        %v2537 = vmul.f32 %v2536, %v1553
        %v2538 = vadd.f32 %v2537, 1e-05
        %v2539 = vrsqrt.pop %v2538
        %v2540 = vmul.f32 %v2532, %v2539
        %v2541 = vlaneseq
        %v2542 = vshrl.u32 %v2541, 7
        %v2543 = vsub.s32 2, %v2542
        %v2544 = vrot.slane %v1751, %v2543
        %v2545 = vmul.f32 %v2540, %v2544
        %v2546 = vlaneseq
        %v2547 = vshrl.u32 %v2546, 7
        %v2548 = vsub.s32 3, %v2547
        %v2549 = vrot.slane %v1751, %v2548
        %v2550 = vadd.f32 %v2545, %v2549
        %v2551 = vld [vmem:[%s23] sm:$0x3]
        %v2552 = vsel %vm976, %v2550, 0.0
        %2553 = vadd.xlane.f32.xlu0 %v2552
        %v2554 = vpop.xlane.xlu0 %2553
        %v2555 = vmul.f32 %v2554, %v1553
        %v2556 = vsub.f32 %v2550, %v2555
        %v2557 = vmul.f32 %v2556, %v2556
        %v2558 = vsel %vm976, %v2557, 0.0
        %2559 = vadd.xlane.f32.xlu0 %v2558
        %v2560 = vpop.xlane.xlu0 %2559
        %v2561 = vmul.f32 %v2560, %v1553
        %v2562 = vadd.f32 %v2561, 1e-05
        %v2563 = vrsqrt.pop %v2562
        %v2564 = vmul.f32 %v2556, %v2563
        %v2565 = vlaneseq
        %v2566 = vshrl.u32 %v2565, 7
        %v2567 = vsub.s32 0, %v2566
        %v2568 = vrot.slane %v2551, %v2567
        %v2569 = vmul.f32 %v2564, %v2568
        %v2570 = vlaneseq
        %v2571 = vshrl.u32 %v2570, 7
        %v2572 = vsub.s32 1, %v2571
        %v2573 = vrot.slane %v2551, %v2572
        %v2574 = vadd.f32 %v2569, %v2573
        %v2575 = vpack.c.bf16 %v2574, %v2574
        %v2576 = vld [vmem:[%s942] sm:$0xff]
        %v2577 = vld [vmem:[%s53] sm:$0x3f]
        %v2578 = vpack.c.bf16 %v2576, %v2576
        %v2579 = vld [vmem:[%s25] sm:$0xf]
        %v2580 = vld [vmem:[%s25 + $0x4] sm:$0xf]
        %v2581 = vld [vmem:[%s25 + $0x8] sm:$0xf]
        %v2582 = vld [vmem:[%s25 + $0xc] sm:$0xf]
        %v2583 = vld [vmem:[%s27] sm:$0x1]
        %v2585 = vlaneseq
        %v2586 = vshrl.u32 %v2585, 7
        %v2587 = vsub.s32 0, %v2586
        %v2588 = vrot.slane %v2583, %v2587
        %v2594 = vunpack.c.l.b16 %v2579
        %v2595 = vunpack.c.l.b16 %v2580
        %v2596 = vunpack.c.l.b16 %v2581
        %v2597 = vunpack.c.l.b16 %v2582
        %v2598 = vpack.c.b16 %v2595, %v2594
        %v2599 = vpack.c.b16 %v2597, %v2596
        %v2603 = vsel %vm976, %v2578, 0
        %2605 = vmatprep.subr.bf16.mxu0 0
        %2606 = vmatpush1.bf16.msra.mxu0 %v2598
        %2607 = vmatprep.subr.bf16.mxu0 0
        %2608 = vmatpush1.bf16.msra.mxu0 %v2599
        %2609 = vmatprep.subr.bf16.mxu0 0
        %2610 = vmatpush1.bf16.msra.mxu0 0
        %2611 = vmatprep.subr.bf16.mxu0 0
        %2612 = vmatpush1.bf16.msra.mxu0 0
        %2613 = vmatprep.subr.bf16.mxu0 0
        %2614 = vmatpush1.bf16.msra.mxu0 0
        %2615 = vmatprep.subr.bf16.mxu0 0
        %2616 = vmatpush1.bf16.msra.mxu0 0
        %2617 = vmatprep.subr.bf16.mxu0 0
        %2618 = vmatpush1.bf16.msra.mxu0 0
        %2619 = vmatprep.subr.bf16.mxu0 0
        %2620 = vmatpush1.bf16.msra.mxu0 0
        %2621 = vmatprep.subr.bf16.mxu0 0
        %2622 = vmatpush1.bf16.msra.mxu0 0
        %2623 = vmatprep.subr.bf16.mxu0 0
        %2624 = vmatpush1.bf16.msra.mxu0 0
        %2625 = vmatprep.subr.bf16.mxu0 0
        %2626 = vmatpush1.bf16.msra.mxu0 0
        %2627 = vmatprep.subr.bf16.mxu0 0
        %2628 = vmatpush1.bf16.msra.mxu0 0
        %2629 = vmatprep.subr.bf16.mxu0 0
        %2630 = vmatpush1.bf16.msra.mxu0 0
        %2631 = vmatprep.subr.bf16.mxu0 0
        %2632 = vmatpush1.bf16.msra.mxu0 0
        %2633 = vmatprep.subr.bf16.mxu0 0
        %2634 = vmatpush1.bf16.msra.mxu0 0
        %2635 = vmatprep.subr.bf16.mxu0 0
        %2636 = vmatpush1.bf16.msra.mxu0 0
        %2637 = vmatprep.mubr.bf16.mxu0 0
        %2638 = vmatmul.mubr.bf16.gmra.mrb[0].mxu0 %v2603
        %v2639 = vpop.f32.mrb[0].mxu0
        %v2640 = vadd.f32 %v2588, %v2639
        %v2641 = vpop.f32.mrb[0].mxu0
        %v2642 = vpop.f32.mrb[0].mxu0
        %v2643 = vpop.f32.mrb[0].mxu0
        %2644 = vdwg.mxu0
        %v2645 = vmul.f32 %v2640, 0.35355338
        %v2646 = vpack.c.bf16 %v2645, %v2645
        %v2647 = vpack.c.bf16 %v2640, %v2640
        %2649 = vrot.lane.b32.xlu0 %v2647, 96
        %v2650 = vpop.permute.xlu0 %2649
        %v2652 = vsel %vm1026, %v2646, 0
        %v2655 = vsel %vm1026, %v2650, 0
        %2657 = vmatprep.subr.bf16.mxu0 0
        %2658 = vmatpush1.bf16.xpose.msra.mxu0 %v2655
        %2659 = vmatprep.subr.bf16.mxu0 0
        %2660 = vmatpush1.bf16.xpose.msra.mxu0 0
        %2661 = vmatprep.subr.bf16.mxu0 0
        %2662 = vmatpush1.bf16.xpose.msra.mxu0 0
        %2663 = vmatprep.subr.bf16.mxu0 0
        %2664 = vmatpush1.bf16.xpose.msra.mxu0 0
        %2665 = vmatprep.subr.bf16.mxu0 0
        %2666 = vmatpush1.bf16.xpose.msra.mxu0 0
        %2667 = vmatprep.subr.bf16.mxu0 0
        %2668 = vmatpush1.bf16.xpose.msra.mxu0 0
        %2669 = vmatprep.subr.bf16.mxu0 0
        %2670 = vmatpush1.bf16.xpose.msra.mxu0 0
        %2671 = vmatprep.subr.bf16.mxu0 0
        %2672 = vmatpush1.bf16.xpose.msra.mxu0 0
        %2673 = vmatprep.subr.bf16.mxu0 0
        %2674 = vmatpush1.bf16.xpose.msra.mxu0 0
        %2675 = vmatprep.subr.bf16.mxu0 0
        %2676 = vmatpush1.bf16.xpose.msra.mxu0 0
        %2677 = vmatprep.subr.bf16.mxu0 0
        %2678 = vmatpush1.bf16.xpose.msra.mxu0 0
        %2679 = vmatprep.subr.bf16.mxu0 0
        %2680 = vmatpush1.bf16.xpose.msra.mxu0 0
        %2681 = vmatprep.subr.bf16.mxu0 0
        %2682 = vmatpush1.bf16.xpose.msra.mxu0 0
        %2683 = vmatprep.subr.bf16.mxu0 0
        %2684 = vmatpush1.bf16.xpose.msra.mxu0 0
        %2685 = vmatprep.subr.bf16.mxu0 0
        %2686 = vmatpush1.bf16.xpose.msra.mxu0 0
        %2687 = vmatprep.subr.bf16.mxu0 0
        %2688 = vmatpush1.bf16.xpose.msra.mxu0 0
        %2689 = vmatprep.mubr.bf16.mxu0 0
        %2690 = vmatmul.mubr.bf16.gmra.mrb[0].mxu0 %v2652
        %v2691 = vpop.f32.mrb[0].mxu0
        %v2692 = vadd.f32 %v949, %v2691
        %v2693 = vpop.f32.mrb[0].mxu0
        %v2694 = vpop.f32.mrb[0].mxu0
        %v2695 = vpop.f32.mrb[0].mxu0
        %2696 = vdwg.mxu0
        %v2697 = vsel %vm1026, %v2692, -inf
        %2698 = vmax.xlane.f32.xlu0 %v2697
        %v2699 = vpop.xlane.xlu0 %2698
        %v2700 = vsub.f32 %v2692, %v2699
        %v2701 = vmul.f32 %v2700, 1.442695
        %v2702 = vpow.pop %v2701
        %v2703 = vsel %vm1026, %v2702, 0.0
        %2704 = vadd.xlane.f32.xlu0 %v2703
        %v2705 = vpop.xlane.xlu0 %2704
        %v2706 = vrcp.pop %v2705
        %v2707 = vmul.f32 %v2702, %v2706
        %v2708 = vpack.c.bf16 %v2707, %v2707
        %2709 = vrot.lane.b32.xlu0 %v2647, 64
        %v2710 = vpop.permute.xlu0 %2709
        %v2712 = vsel %vm1026, %v2708, 0
        %v2715 = vsel %vm1090, %v2710, 0
        %2717 = vmatprep.subr.bf16.mxu0 0
        %2718 = vmatpush1.bf16.msra.mxu0 %v2715
        %2719 = vmatprep.subr.bf16.mxu0 0
        %2720 = vmatpush1.bf16.msra.mxu0 0
        %2721 = vmatprep.subr.bf16.mxu0 0
        %2722 = vmatpush1.bf16.msra.mxu0 0
        %2723 = vmatprep.subr.bf16.mxu0 0
        %2724 = vmatpush1.bf16.msra.mxu0 0
        %2725 = vmatprep.subr.bf16.mxu0 0
        %2726 = vmatpush1.bf16.msra.mxu0 0
        %2727 = vmatprep.subr.bf16.mxu0 0
        %2728 = vmatpush1.bf16.msra.mxu0 0
        %2729 = vmatprep.subr.bf16.mxu0 0
        %2730 = vmatpush1.bf16.msra.mxu0 0
        %2731 = vmatprep.subr.bf16.mxu0 0
        %2732 = vmatpush1.bf16.msra.mxu0 0
        %2733 = vmatprep.subr.bf16.mxu0 0
        %2734 = vmatpush1.bf16.msra.mxu0 0
        %2735 = vmatprep.subr.bf16.mxu0 0
        %2736 = vmatpush1.bf16.msra.mxu0 0
        %2737 = vmatprep.subr.bf16.mxu0 0
        %2738 = vmatpush1.bf16.msra.mxu0 0
        %2739 = vmatprep.subr.bf16.mxu0 0
        %2740 = vmatpush1.bf16.msra.mxu0 0
        %2741 = vmatprep.subr.bf16.mxu0 0
        %2742 = vmatpush1.bf16.msra.mxu0 0
        %2743 = vmatprep.subr.bf16.mxu0 0
        %2744 = vmatpush1.bf16.msra.mxu0 0
        %2745 = vmatprep.subr.bf16.mxu0 0
        %2746 = vmatpush1.bf16.msra.mxu0 0
        %2747 = vmatprep.subr.bf16.mxu0 0
        %2748 = vmatpush1.bf16.msra.mxu0 0
        %2749 = vmatprep.mubr.bf16.mxu0 0
        %2750 = vmatmul.mubr.bf16.gmra.mrb[0].mxu0 %v2712
        %v2751 = vpop.f32.mrb[0].mxu0
        %v2752 = vadd.f32 0.0, %v2751
        %v2753 = vpop.f32.mrb[0].mxu0
        %v2754 = vpop.f32.mrb[0].mxu0
        %v2755 = vpop.f32.mrb[0].mxu0
        %2756 = vdwg.mxu0
        %2758 = vrot.lane.b32.xlu0 %v2646, 120
        %v2759 = vpop.permute.xlu0 %2758
        %2760 = vrot.lane.b32.xlu0 %v2647, 88
        %v2761 = vpop.permute.xlu0 %2760
        %v2763 = vsel %vm1026, %v2759, 0
        %v2766 = vsel %vm1026, %v2761, 0
        %2768 = vmatprep.subr.bf16.mxu0 0
        %2769 = vmatpush1.bf16.xpose.msra.mxu0 %v2766
        %2770 = vmatprep.subr.bf16.mxu0 0
        %2771 = vmatpush1.bf16.xpose.msra.mxu0 0
        %2772 = vmatprep.subr.bf16.mxu0 0
        %2773 = vmatpush1.bf16.xpose.msra.mxu0 0
        %2774 = vmatprep.subr.bf16.mxu0 0
        %2775 = vmatpush1.bf16.xpose.msra.mxu0 0
        %2776 = vmatprep.subr.bf16.mxu0 0
        %2777 = vmatpush1.bf16.xpose.msra.mxu0 0
        %2778 = vmatprep.subr.bf16.mxu0 0
        %2779 = vmatpush1.bf16.xpose.msra.mxu0 0
        %2780 = vmatprep.subr.bf16.mxu0 0
        %2781 = vmatpush1.bf16.xpose.msra.mxu0 0
        %2782 = vmatprep.subr.bf16.mxu0 0
        %2783 = vmatpush1.bf16.xpose.msra.mxu0 0
        %2784 = vmatprep.subr.bf16.mxu0 0
        %2785 = vmatpush1.bf16.xpose.msra.mxu0 0
        %2786 = vmatprep.subr.bf16.mxu0 0
        %2787 = vmatpush1.bf16.xpose.msra.mxu0 0
        %2788 = vmatprep.subr.bf16.mxu0 0
        %2789 = vmatpush1.bf16.xpose.msra.mxu0 0
        %2790 = vmatprep.subr.bf16.mxu0 0
        %2791 = vmatpush1.bf16.xpose.msra.mxu0 0
        %2792 = vmatprep.subr.bf16.mxu0 0
        %2793 = vmatpush1.bf16.xpose.msra.mxu0 0
        %2794 = vmatprep.subr.bf16.mxu0 0
        %2795 = vmatpush1.bf16.xpose.msra.mxu0 0
        %2796 = vmatprep.subr.bf16.mxu0 0
        %2797 = vmatpush1.bf16.xpose.msra.mxu0 0
        %2798 = vmatprep.subr.bf16.mxu0 0
        %2799 = vmatpush1.bf16.xpose.msra.mxu0 0
        %2800 = vmatprep.mubr.bf16.mxu0 0
        %2801 = vmatmul.mubr.bf16.gmra.mrb[0].mxu0 %v2763
        %v2802 = vpop.f32.mrb[0].mxu0
        %v2803 = vadd.f32 %v949, %v2802
        %v2804 = vpop.f32.mrb[0].mxu0
        %v2805 = vpop.f32.mrb[0].mxu0
        %v2806 = vpop.f32.mrb[0].mxu0
        %2807 = vdwg.mxu0
        %v2808 = vsel %vm1026, %v2803, -inf
        %2809 = vmax.xlane.f32.xlu0 %v2808
        %v2810 = vpop.xlane.xlu0 %2809
        %v2811 = vsub.f32 %v2803, %v2810
        %v2812 = vmul.f32 %v2811, 1.442695
        %v2813 = vpow.pop %v2812
        %v2814 = vsel %vm1026, %v2813, 0.0
        %2815 = vadd.xlane.f32.xlu0 %v2814
        %v2816 = vpop.xlane.xlu0 %2815
        %v2817 = vrcp.pop %v2816
        %v2818 = vmul.f32 %v2813, %v2817
        %v2819 = vpack.c.bf16 %v2818, %v2818
        %2820 = vrot.lane.b32.xlu0 %v2647, 56
        %v2821 = vpop.permute.xlu0 %2820
        %v2823 = vsel %vm1026, %v2819, 0
        %v2826 = vsel %vm1090, %v2821, 0
        %2828 = vmatprep.subr.bf16.mxu0 0
        %2829 = vmatpush1.bf16.msra.mxu0 %v2826
        %2830 = vmatprep.subr.bf16.mxu0 0
        %2831 = vmatpush1.bf16.msra.mxu0 0
        %2832 = vmatprep.subr.bf16.mxu0 0
        %2833 = vmatpush1.bf16.msra.mxu0 0
        %2834 = vmatprep.subr.bf16.mxu0 0
        %2835 = vmatpush1.bf16.msra.mxu0 0
        %2836 = vmatprep.subr.bf16.mxu0 0
        %2837 = vmatpush1.bf16.msra.mxu0 0
        %2838 = vmatprep.subr.bf16.mxu0 0
        %2839 = vmatpush1.bf16.msra.mxu0 0
        %2840 = vmatprep.subr.bf16.mxu0 0
        %2841 = vmatpush1.bf16.msra.mxu0 0
        %2842 = vmatprep.subr.bf16.mxu0 0
        %2843 = vmatpush1.bf16.msra.mxu0 0
        %2844 = vmatprep.subr.bf16.mxu0 0
        %2845 = vmatpush1.bf16.msra.mxu0 0
        %2846 = vmatprep.subr.bf16.mxu0 0
        %2847 = vmatpush1.bf16.msra.mxu0 0
        %2848 = vmatprep.subr.bf16.mxu0 0
        %2849 = vmatpush1.bf16.msra.mxu0 0
        %2850 = vmatprep.subr.bf16.mxu0 0
        %2851 = vmatpush1.bf16.msra.mxu0 0
        %2852 = vmatprep.subr.bf16.mxu0 0
        %2853 = vmatpush1.bf16.msra.mxu0 0
        %2854 = vmatprep.subr.bf16.mxu0 0
        %2855 = vmatpush1.bf16.msra.mxu0 0
        %2856 = vmatprep.subr.bf16.mxu0 0
        %2857 = vmatpush1.bf16.msra.mxu0 0
        %2858 = vmatprep.subr.bf16.mxu0 0
        %2859 = vmatpush1.bf16.msra.mxu0 0
        %2860 = vmatprep.mubr.bf16.mxu0 0
        %2861 = vmatmul.mubr.bf16.gmra.mrb[0].mxu0 %v2823
        %v2862 = vpop.f32.mrb[0].mxu0
        %v2863 = vadd.f32 0.0, %v2862
        %v2864 = vpop.f32.mrb[0].mxu0
        %v2865 = vpop.f32.mrb[0].mxu0
        %v2866 = vpop.f32.mrb[0].mxu0
        %2867 = vdwg.mxu0
        %2868 = vrot.lane.b32.xlu0 %v2646, 112
        %v2869 = vpop.permute.xlu0 %2868
        %2870 = vrot.lane.b32.xlu0 %v2647, 80
        %v2871 = vpop.permute.xlu0 %2870
        %v2873 = vsel %vm1026, %v2869, 0
        %v2876 = vsel %vm1026, %v2871, 0
        %2878 = vmatprep.subr.bf16.mxu0 0
        %2879 = vmatpush1.bf16.xpose.msra.mxu0 %v2876
        %2880 = vmatprep.subr.bf16.mxu0 0
        %2881 = vmatpush1.bf16.xpose.msra.mxu0 0
        %2882 = vmatprep.subr.bf16.mxu0 0
        %2883 = vmatpush1.bf16.xpose.msra.mxu0 0
        %2884 = vmatprep.subr.bf16.mxu0 0
        %2885 = vmatpush1.bf16.xpose.msra.mxu0 0
        %2886 = vmatprep.subr.bf16.mxu0 0
        %2887 = vmatpush1.bf16.xpose.msra.mxu0 0
        %2888 = vmatprep.subr.bf16.mxu0 0
        %2889 = vmatpush1.bf16.xpose.msra.mxu0 0
        %2890 = vmatprep.subr.bf16.mxu0 0
        %2891 = vmatpush1.bf16.xpose.msra.mxu0 0
        %2892 = vmatprep.subr.bf16.mxu0 0
        %2893 = vmatpush1.bf16.xpose.msra.mxu0 0
        %2894 = vmatprep.subr.bf16.mxu0 0
        %2895 = vmatpush1.bf16.xpose.msra.mxu0 0
        %2896 = vmatprep.subr.bf16.mxu0 0
        %2897 = vmatpush1.bf16.xpose.msra.mxu0 0
        %2898 = vmatprep.subr.bf16.mxu0 0
        %2899 = vmatpush1.bf16.xpose.msra.mxu0 0
        %2900 = vmatprep.subr.bf16.mxu0 0
        %2901 = vmatpush1.bf16.xpose.msra.mxu0 0
        %2902 = vmatprep.subr.bf16.mxu0 0
        %2903 = vmatpush1.bf16.xpose.msra.mxu0 0
        %2904 = vmatprep.subr.bf16.mxu0 0
        %2905 = vmatpush1.bf16.xpose.msra.mxu0 0
        %2906 = vmatprep.subr.bf16.mxu0 0
        %2907 = vmatpush1.bf16.xpose.msra.mxu0 0
        %2908 = vmatprep.subr.bf16.mxu0 0
        %2909 = vmatpush1.bf16.xpose.msra.mxu0 0
        %2910 = vmatprep.mubr.bf16.mxu0 0
        %2911 = vmatmul.mubr.bf16.gmra.mrb[0].mxu0 %v2873
        %v2912 = vpop.f32.mrb[0].mxu0
        %v2913 = vadd.f32 %v949, %v2912
        %v2914 = vpop.f32.mrb[0].mxu0
        %v2915 = vpop.f32.mrb[0].mxu0
        %v2916 = vpop.f32.mrb[0].mxu0
        %2917 = vdwg.mxu0
        %v2918 = vsel %vm1026, %v2913, -inf
        %2919 = vmax.xlane.f32.xlu0 %v2918
        %v2920 = vpop.xlane.xlu0 %2919
        %v2921 = vsub.f32 %v2913, %v2920
        %v2922 = vmul.f32 %v2921, 1.442695
        %v2923 = vpow.pop %v2922
        %v2924 = vsel %vm1026, %v2923, 0.0
        %2925 = vadd.xlane.f32.xlu0 %v2924
        %v2926 = vpop.xlane.xlu0 %2925
        %v2927 = vrcp.pop %v2926
        %v2928 = vmul.f32 %v2923, %v2927
        %v2929 = vpack.c.bf16 %v2928, %v2928
        %2930 = vrot.lane.b32.xlu0 %v2647, 48
        %v2931 = vpop.permute.xlu0 %2930
        %v2933 = vsel %vm1026, %v2929, 0
        %v2936 = vsel %vm1090, %v2931, 0
        %2938 = vmatprep.subr.bf16.mxu0 0
        %2939 = vmatpush1.bf16.msra.mxu0 %v2936
        %2940 = vmatprep.subr.bf16.mxu0 0
        %2941 = vmatpush1.bf16.msra.mxu0 0
        %2942 = vmatprep.subr.bf16.mxu0 0
        %2943 = vmatpush1.bf16.msra.mxu0 0
        %2944 = vmatprep.subr.bf16.mxu0 0
        %2945 = vmatpush1.bf16.msra.mxu0 0
        %2946 = vmatprep.subr.bf16.mxu0 0
        %2947 = vmatpush1.bf16.msra.mxu0 0
        %2948 = vmatprep.subr.bf16.mxu0 0
        %2949 = vmatpush1.bf16.msra.mxu0 0
        %2950 = vmatprep.subr.bf16.mxu0 0
        %2951 = vmatpush1.bf16.msra.mxu0 0
        %2952 = vmatprep.subr.bf16.mxu0 0
        %2953 = vmatpush1.bf16.msra.mxu0 0
        %2954 = vmatprep.subr.bf16.mxu0 0
        %2955 = vmatpush1.bf16.msra.mxu0 0
        %2956 = vmatprep.subr.bf16.mxu0 0
        %2957 = vmatpush1.bf16.msra.mxu0 0
        %2958 = vmatprep.subr.bf16.mxu0 0
        %2959 = vmatpush1.bf16.msra.mxu0 0
        %2960 = vmatprep.subr.bf16.mxu0 0
        %2961 = vmatpush1.bf16.msra.mxu0 0
        %2962 = vmatprep.subr.bf16.mxu0 0
        %2963 = vmatpush1.bf16.msra.mxu0 0
        %2964 = vmatprep.subr.bf16.mxu0 0
        %2965 = vmatpush1.bf16.msra.mxu0 0
        %2966 = vmatprep.subr.bf16.mxu0 0
        %2967 = vmatpush1.bf16.msra.mxu0 0
        %2968 = vmatprep.subr.bf16.mxu0 0
        %2969 = vmatpush1.bf16.msra.mxu0 0
        %2970 = vmatprep.mubr.bf16.mxu0 0
        %2971 = vmatmul.mubr.bf16.gmra.mrb[0].mxu0 %v2933
        %v2972 = vpop.f32.mrb[0].mxu0
        %v2973 = vadd.f32 0.0, %v2972
        %v2974 = vpop.f32.mrb[0].mxu0
        %v2975 = vpop.f32.mrb[0].mxu0
        %v2976 = vpop.f32.mrb[0].mxu0
        %2977 = vdwg.mxu0
        %2978 = vrot.lane.b32.xlu0 %v2646, 104
        %v2979 = vpop.permute.xlu0 %2978
        %2980 = vrot.lane.b32.xlu0 %v2647, 72
        %v2981 = vpop.permute.xlu0 %2980
        %v2983 = vsel %vm1026, %v2979, 0
        %v2986 = vsel %vm1026, %v2981, 0
        %2988 = vmatprep.subr.bf16.mxu0 0
        %2989 = vmatpush1.bf16.xpose.msra.mxu0 %v2986
        %2990 = vmatprep.subr.bf16.mxu0 0
        %2991 = vmatpush1.bf16.xpose.msra.mxu0 0
        %2992 = vmatprep.subr.bf16.mxu0 0
        %2993 = vmatpush1.bf16.xpose.msra.mxu0 0
        %2994 = vmatprep.subr.bf16.mxu0 0
        %2995 = vmatpush1.bf16.xpose.msra.mxu0 0
        %2996 = vmatprep.subr.bf16.mxu0 0
        %2997 = vmatpush1.bf16.xpose.msra.mxu0 0
        %2998 = vmatprep.subr.bf16.mxu0 0
        %2999 = vmatpush1.bf16.xpose.msra.mxu0 0
        %3000 = vmatprep.subr.bf16.mxu0 0
        %3001 = vmatpush1.bf16.xpose.msra.mxu0 0
        %3002 = vmatprep.subr.bf16.mxu0 0
        %3003 = vmatpush1.bf16.xpose.msra.mxu0 0
        %3004 = vmatprep.subr.bf16.mxu0 0
        %3005 = vmatpush1.bf16.xpose.msra.mxu0 0
        %3006 = vmatprep.subr.bf16.mxu0 0
        %3007 = vmatpush1.bf16.xpose.msra.mxu0 0
        %3008 = vmatprep.subr.bf16.mxu0 0
        %3009 = vmatpush1.bf16.xpose.msra.mxu0 0
        %3010 = vmatprep.subr.bf16.mxu0 0
        %3011 = vmatpush1.bf16.xpose.msra.mxu0 0
        %3012 = vmatprep.subr.bf16.mxu0 0
        %3013 = vmatpush1.bf16.xpose.msra.mxu0 0
        %3014 = vmatprep.subr.bf16.mxu0 0
        %3015 = vmatpush1.bf16.xpose.msra.mxu0 0
        %3016 = vmatprep.subr.bf16.mxu0 0
        %3017 = vmatpush1.bf16.xpose.msra.mxu0 0
        %3018 = vmatprep.subr.bf16.mxu0 0
        %3019 = vmatpush1.bf16.xpose.msra.mxu0 0
        %3020 = vmatprep.mubr.bf16.mxu0 0
        %3021 = vmatmul.mubr.bf16.gmra.mrb[0].mxu0 %v2983
        %v3022 = vpop.f32.mrb[0].mxu0
        %v3023 = vadd.f32 %v949, %v3022
        %v3024 = vpop.f32.mrb[0].mxu0
        %v3025 = vpop.f32.mrb[0].mxu0
        %v3026 = vpop.f32.mrb[0].mxu0
        %3027 = vdwg.mxu0
        %v3028 = vsel %vm1026, %v3023, -inf
        %3029 = vmax.xlane.f32.xlu0 %v3028
        %v3030 = vpop.xlane.xlu0 %3029
        %v3031 = vsub.f32 %v3023, %v3030
        %v3032 = vmul.f32 %v3031, 1.442695
        %v3033 = vpow.pop %v3032
        %v3034 = vsel %vm1026, %v3033, 0.0
        %3035 = vadd.xlane.f32.xlu0 %v3034
        %v3036 = vpop.xlane.xlu0 %3035
        %v3037 = vrcp.pop %v3036
        %v3038 = vmul.f32 %v3033, %v3037
        %v3039 = vpack.c.bf16 %v3038, %v3038
        %3040 = vrot.lane.b32.xlu0 %v2647, 40
        %v3041 = vpop.permute.xlu0 %3040
        %v3043 = vsel %vm1026, %v3039, 0
        %v3046 = vsel %vm1090, %v3041, 0
        %3048 = vmatprep.subr.bf16.mxu0 0
        %3049 = vmatpush1.bf16.msra.mxu0 %v3046
        %3050 = vmatprep.subr.bf16.mxu0 0
        %3051 = vmatpush1.bf16.msra.mxu0 0
        %3052 = vmatprep.subr.bf16.mxu0 0
        %3053 = vmatpush1.bf16.msra.mxu0 0
        %3054 = vmatprep.subr.bf16.mxu0 0
        %3055 = vmatpush1.bf16.msra.mxu0 0
        %3056 = vmatprep.subr.bf16.mxu0 0
        %3057 = vmatpush1.bf16.msra.mxu0 0
        %3058 = vmatprep.subr.bf16.mxu0 0
        %3059 = vmatpush1.bf16.msra.mxu0 0
        %3060 = vmatprep.subr.bf16.mxu0 0
        %3061 = vmatpush1.bf16.msra.mxu0 0
        %3062 = vmatprep.subr.bf16.mxu0 0
        %3063 = vmatpush1.bf16.msra.mxu0 0
        %3064 = vmatprep.subr.bf16.mxu0 0
        %3065 = vmatpush1.bf16.msra.mxu0 0
        %3066 = vmatprep.subr.bf16.mxu0 0
        %3067 = vmatpush1.bf16.msra.mxu0 0
        %3068 = vmatprep.subr.bf16.mxu0 0
        %3069 = vmatpush1.bf16.msra.mxu0 0
        %3070 = vmatprep.subr.bf16.mxu0 0
        %3071 = vmatpush1.bf16.msra.mxu0 0
        %3072 = vmatprep.subr.bf16.mxu0 0
        %3073 = vmatpush1.bf16.msra.mxu0 0
        %3074 = vmatprep.subr.bf16.mxu0 0
        %3075 = vmatpush1.bf16.msra.mxu0 0
        %3076 = vmatprep.subr.bf16.mxu0 0
        %3077 = vmatpush1.bf16.msra.mxu0 0
        %3078 = vmatprep.subr.bf16.mxu0 0
        %3079 = vmatpush1.bf16.msra.mxu0 0
        %3080 = vmatprep.mubr.bf16.mxu0 0
        %3081 = vmatmul.mubr.bf16.gmra.mrb[0].mxu0 %v3043
        %v3082 = vpop.f32.mrb[0].mxu0
        %v3083 = vadd.f32 0.0, %v3082
        %v3084 = vpop.f32.mrb[0].mxu0
        %v3085 = vpop.f32.mrb[0].mxu0
        %v3086 = vpop.f32.mrb[0].mxu0
        %3087 = vdwg.mxu0
        %3089 = vrot.lane.b32.xlu0 %v2863, 8
        %v3090 = vpop.permute.xlu0 %3089
        %3093 = vrot.lane.b32.xlu0 %v2973, 16
        %v3094 = vpop.permute.xlu0 %3093
        %3097 = vrot.lane.b32.xlu0 %v3083, 24
        %v3098 = vpop.permute.xlu0 %3097
        %v3100 = vsel %vm1026, %v2752, %v3090
        %v3101 = vsel %vm1478, %v3100, %v3094
        %v3102 = vsel %vm1480, %v3101, %v3098
        %v3103 = vpack.c.bf16 %v3102, %v3102
        %v3104 = vld [vmem:[%s29] sm:$0xf]
        %v3105 = vld [vmem:[%s29 + $0x4] sm:$0xf]
        %v3106 = vld [vmem:[%s29 + $0x8] sm:$0xf]
        %v3107 = vld [vmem:[%s29 + $0xc] sm:$0xf]
        %v3108 = vld [vmem:[%s31] sm:$0x1]
        %v3110 = vlaneseq
        %v3111 = vshrl.u32 %v3110, 7
        %v3112 = vsub.s32 0, %v3111
        %v3113 = vrot.slane %v3108, %v3112
        %v3119 = vunpack.c.l.b16 %v3104
        %v3120 = vunpack.c.l.b16 %v3105
        %v3121 = vunpack.c.l.b16 %v3106
        %v3122 = vunpack.c.l.b16 %v3107
        %v3123 = vpack.c.b16 %v3120, %v3119
        %v3124 = vpack.c.b16 %v3122, %v3121
        %v3128 = vsel %vm976, %v3103, 0
        %3130 = vmatprep.subr.bf16.mxu0 0
        %3131 = vmatpush1.bf16.msra.mxu0 %v3123
        %3132 = vmatprep.subr.bf16.mxu0 0
        %3133 = vmatpush1.bf16.msra.mxu0 %v3124
        %3134 = vmatprep.subr.bf16.mxu0 0
        %3135 = vmatpush1.bf16.msra.mxu0 0
        %3136 = vmatprep.subr.bf16.mxu0 0
        %3137 = vmatpush1.bf16.msra.mxu0 0
        %3138 = vmatprep.subr.bf16.mxu0 0
        %3139 = vmatpush1.bf16.msra.mxu0 0
        %3140 = vmatprep.subr.bf16.mxu0 0
        %3141 = vmatpush1.bf16.msra.mxu0 0
        %3142 = vmatprep.subr.bf16.mxu0 0
        %3143 = vmatpush1.bf16.msra.mxu0 0
        %3144 = vmatprep.subr.bf16.mxu0 0
        %3145 = vmatpush1.bf16.msra.mxu0 0
        %3146 = vmatprep.subr.bf16.mxu0 0
        %3147 = vmatpush1.bf16.msra.mxu0 0
        %3148 = vmatprep.subr.bf16.mxu0 0
        %3149 = vmatpush1.bf16.msra.mxu0 0
        %3150 = vmatprep.subr.bf16.mxu0 0
        %3151 = vmatpush1.bf16.msra.mxu0 0
        %3152 = vmatprep.subr.bf16.mxu0 0
        %3153 = vmatpush1.bf16.msra.mxu0 0
        %3154 = vmatprep.subr.bf16.mxu0 0
        %3155 = vmatpush1.bf16.msra.mxu0 0
        %3156 = vmatprep.subr.bf16.mxu0 0
        %3157 = vmatpush1.bf16.msra.mxu0 0
        %3158 = vmatprep.subr.bf16.mxu0 0
        %3159 = vmatpush1.bf16.msra.mxu0 0
        %3160 = vmatprep.subr.bf16.mxu0 0
        %3161 = vmatpush1.bf16.msra.mxu0 0
        %3162 = vmatprep.mubr.bf16.mxu0 0
        %3163 = vmatmul.mubr.bf16.gmra.mrb[0].mxu0 %v3128
        %v3164 = vpop.f32.mrb[0].mxu0
        %v3165 = vadd.f32 %v3113, %v3164
        %v3166 = vpop.f32.mrb[0].mxu0
        %v3167 = vpop.f32.mrb[0].mxu0
        %v3168 = vpop.f32.mrb[0].mxu0
        %3169 = vdwg.mxu0
        %v3170 = vadd.f32 %v2576, %v3165
        %v3171 = vsel %vm976, %v3170, 0.0
        %3172 = vadd.xlane.f32.xlu0 %v3171
        %v3173 = vpop.xlane.xlu0 %3172
        %v3174 = vmul.f32 %v3173, %v1553
        %v3175 = vsub.f32 %v3170, %v3174
        %v3176 = vmul.f32 %v3175, %v3175
        %v3177 = vsel %vm976, %v3176, 0.0
        %3178 = vadd.xlane.f32.xlu0 %v3177
        %v3179 = vpop.xlane.xlu0 %3178
        %v3180 = vmul.f32 %v3179, %v1553
        %v3181 = vadd.f32 %v3180, 1e-05
        %v3182 = vrsqrt.pop %v3181
        %v3183 = vmul.f32 %v3175, %v3182
        %v3184 = vlaneseq
        %v3185 = vshrl.u32 %v3184, 7
        %v3186 = vsub.s32 0, %v3185
        %v3187 = vrot.slane %v2577, %v3186
        %v3188 = vmul.f32 %v3183, %v3187
        %v3189 = vlaneseq
        %v3190 = vshrl.u32 %v3189, 7
        %v3191 = vsub.s32 1, %v3190
        %v3192 = vrot.slane %v2577, %v3191
        %v3193 = vadd.f32 %v3188, %v3192
        %v3194 = vpack.c.bf16 %v3193, %v3193
        %v3195 = vld [vmem:[%s33] sm:$0xf]
        %v3196 = vld [vmem:[%s33 + $0x4] sm:$0xf]
        %v3197 = vld [vmem:[%s33 + $0x8] sm:$0xf]
        %v3198 = vld [vmem:[%s33 + $0xc] sm:$0xf]
        %v3199 = vld [vmem:[%s35] sm:$0x1]
        %v3201 = vlaneseq
        %v3202 = vshrl.u32 %v3201, 7
        %v3203 = vsub.s32 0, %v3202
        %v3204 = vrot.slane %v3199, %v3203
        %v3210 = vunpack.c.l.b16 %v3195
        %v3211 = vunpack.c.l.b16 %v3196
        %v3212 = vunpack.c.l.b16 %v3197
        %v3213 = vunpack.c.l.b16 %v3198
        %v3214 = vpack.c.b16 %v3211, %v3210
        %v3215 = vpack.c.b16 %v3213, %v3212
        %v3219 = vsel %vm976, %v3194, 0
        %3221 = vmatprep.subr.bf16.mxu0 0
        %3222 = vmatpush1.bf16.msra.mxu0 %v3214
        %3223 = vmatprep.subr.bf16.mxu0 0
        %3224 = vmatpush1.bf16.msra.mxu0 %v3215
        %3225 = vmatprep.subr.bf16.mxu0 0
        %3226 = vmatpush1.bf16.msra.mxu0 0
        %3227 = vmatprep.subr.bf16.mxu0 0
        %3228 = vmatpush1.bf16.msra.mxu0 0
        %3229 = vmatprep.subr.bf16.mxu0 0
        %3230 = vmatpush1.bf16.msra.mxu0 0
        %3231 = vmatprep.subr.bf16.mxu0 0
        %3232 = vmatpush1.bf16.msra.mxu0 0
        %3233 = vmatprep.subr.bf16.mxu0 0
        %3234 = vmatpush1.bf16.msra.mxu0 0
        %3235 = vmatprep.subr.bf16.mxu0 0
        %3236 = vmatpush1.bf16.msra.mxu0 0
        %3237 = vmatprep.subr.bf16.mxu0 0
        %3238 = vmatpush1.bf16.msra.mxu0 0
        %3239 = vmatprep.subr.bf16.mxu0 0
        %3240 = vmatpush1.bf16.msra.mxu0 0
        %3241 = vmatprep.subr.bf16.mxu0 0
        %3242 = vmatpush1.bf16.msra.mxu0 0
        %3243 = vmatprep.subr.bf16.mxu0 0
        %3244 = vmatpush1.bf16.msra.mxu0 0
        %3245 = vmatprep.subr.bf16.mxu0 0
        %3246 = vmatpush1.bf16.msra.mxu0 0
        %3247 = vmatprep.subr.bf16.mxu0 0
        %3248 = vmatpush1.bf16.msra.mxu0 0
        %3249 = vmatprep.subr.bf16.mxu0 0
        %3250 = vmatpush1.bf16.msra.mxu0 0
        %3251 = vmatprep.subr.bf16.mxu0 0
        %3252 = vmatpush1.bf16.msra.mxu0 0
        %3253 = vmatprep.mubr.bf16.mxu0 0
        %3254 = vmatmul.mubr.bf16.gmra.mrb[0].mxu0 %v3219
        %v3255 = vpop.f32.mrb[0].mxu0
        %v3256 = vadd.f32 %v3204, %v3255
        %v3257 = vpop.f32.mrb[0].mxu0
        %v3258 = vpop.f32.mrb[0].mxu0
        %v3259 = vpop.f32.mrb[0].mxu0
        %3260 = vdwg.mxu0
        %v3261 = vld [vmem:[%s37] sm:$0xf]
        %v3262 = vld [vmem:[%s37 + $0x4] sm:$0xf]
        %v3263 = vld [vmem:[%s37 + $0x8] sm:$0xf]
        %v3264 = vld [vmem:[%s37 + $0xc] sm:$0xf]
        %v3265 = vld [vmem:[%s39] sm:$0x1]
        %v3267 = vlaneseq
        %v3268 = vshrl.u32 %v3267, 7
        %v3269 = vsub.s32 0, %v3268
        %v3270 = vrot.slane %v3265, %v3269
        %v3276 = vunpack.c.l.b16 %v3261
        %v3277 = vunpack.c.l.b16 %v3262
        %v3278 = vunpack.c.l.b16 %v3263
        %v3279 = vunpack.c.l.b16 %v3264
        %v3280 = vpack.c.b16 %v3277, %v3276
        %v3281 = vpack.c.b16 %v3279, %v3278
        %v3285 = vsel %vm976, %v2575, 0
        %3287 = vmatprep.subr.bf16.mxu0 0
        %3288 = vmatpush1.bf16.msra.mxu0 %v3280
        %3289 = vmatprep.subr.bf16.mxu0 0
        %3290 = vmatpush1.bf16.msra.mxu0 %v3281
        %3291 = vmatprep.subr.bf16.mxu0 0
        %3292 = vmatpush1.bf16.msra.mxu0 0
        %3293 = vmatprep.subr.bf16.mxu0 0
        %3294 = vmatpush1.bf16.msra.mxu0 0
        %3295 = vmatprep.subr.bf16.mxu0 0
        %3296 = vmatpush1.bf16.msra.mxu0 0
        %3297 = vmatprep.subr.bf16.mxu0 0
        %3298 = vmatpush1.bf16.msra.mxu0 0
        %3299 = vmatprep.subr.bf16.mxu0 0
        %3300 = vmatpush1.bf16.msra.mxu0 0
        %3301 = vmatprep.subr.bf16.mxu0 0
        %3302 = vmatpush1.bf16.msra.mxu0 0
        %3303 = vmatprep.subr.bf16.mxu0 0
        %3304 = vmatpush1.bf16.msra.mxu0 0
        %3305 = vmatprep.subr.bf16.mxu0 0
        %3306 = vmatpush1.bf16.msra.mxu0 0
        %3307 = vmatprep.subr.bf16.mxu0 0
        %3308 = vmatpush1.bf16.msra.mxu0 0
        %3309 = vmatprep.subr.bf16.mxu0 0
        %3310 = vmatpush1.bf16.msra.mxu0 0
        %3311 = vmatprep.subr.bf16.mxu0 0
        %3312 = vmatpush1.bf16.msra.mxu0 0
        %3313 = vmatprep.subr.bf16.mxu0 0
        %3314 = vmatpush1.bf16.msra.mxu0 0
        %3315 = vmatprep.subr.bf16.mxu0 0
        %3316 = vmatpush1.bf16.msra.mxu0 0
        %3317 = vmatprep.subr.bf16.mxu0 0
        %3318 = vmatpush1.bf16.msra.mxu0 0
        %3319 = vmatprep.mubr.bf16.mxu0 0
        %3320 = vmatmul.mubr.bf16.gmra.mrb[0].mxu0 %v3285
        %v3321 = vpop.f32.mrb[0].mxu0
        %v3322 = vadd.f32 %v3270, %v3321
        %v3323 = vpop.f32.mrb[0].mxu0
        %v3324 = vpop.f32.mrb[0].mxu0
        %v3325 = vpop.f32.mrb[0].mxu0
        %3326 = vdwg.mxu0
        %v3327 = vmul.f32 %v3256, 0.35355338
        %v3328 = vpack.c.bf16 %v3327, %v3327
        %v3329 = vpack.c.bf16 %v3322, %v3322
        %v3331 = vsel %vm1026, %v3328, 0
        %v3334 = vsel %vm1026, %v3329, 0
        %3336 = vmatprep.subr.bf16.mxu0 0
        %3337 = vmatpush1.bf16.xpose.msra.mxu0 %v3334
        %3338 = vmatprep.subr.bf16.mxu0 0
        %3339 = vmatpush1.bf16.xpose.msra.mxu0 0
        %3340 = vmatprep.subr.bf16.mxu0 0
        %3341 = vmatpush1.bf16.xpose.msra.mxu0 0
        %3342 = vmatprep.subr.bf16.mxu0 0
        %3343 = vmatpush1.bf16.xpose.msra.mxu0 0
        %3344 = vmatprep.subr.bf16.mxu0 0
        %3345 = vmatpush1.bf16.xpose.msra.mxu0 0
        %3346 = vmatprep.subr.bf16.mxu0 0
        %3347 = vmatpush1.bf16.xpose.msra.mxu0 0
        %3348 = vmatprep.subr.bf16.mxu0 0
        %3349 = vmatpush1.bf16.xpose.msra.mxu0 0
        %3350 = vmatprep.subr.bf16.mxu0 0
        %3351 = vmatpush1.bf16.xpose.msra.mxu0 0
        %3352 = vmatprep.subr.bf16.mxu0 0
        %3353 = vmatpush1.bf16.xpose.msra.mxu0 0
        %3354 = vmatprep.subr.bf16.mxu0 0
        %3355 = vmatpush1.bf16.xpose.msra.mxu0 0
        %3356 = vmatprep.subr.bf16.mxu0 0
        %3357 = vmatpush1.bf16.xpose.msra.mxu0 0
        %3358 = vmatprep.subr.bf16.mxu0 0
        %3359 = vmatpush1.bf16.xpose.msra.mxu0 0
        %3360 = vmatprep.subr.bf16.mxu0 0
        %3361 = vmatpush1.bf16.xpose.msra.mxu0 0
        %3362 = vmatprep.subr.bf16.mxu0 0
        %3363 = vmatpush1.bf16.xpose.msra.mxu0 0
        %3364 = vmatprep.subr.bf16.mxu0 0
        %3365 = vmatpush1.bf16.xpose.msra.mxu0 0
        %3366 = vmatprep.subr.bf16.mxu0 0
        %3367 = vmatpush1.bf16.xpose.msra.mxu0 0
        %3368 = vmatprep.mubr.bf16.mxu0 0
        %3369 = vmatmul.mubr.bf16.gmra.mrb[0].mxu0 %v3331
        %v3370 = vpop.f32.mrb[0].mxu0
        %v3371 = vadd.f32 0.0, %v3370
        %v3372 = vpop.f32.mrb[0].mxu0
        %v3373 = vpop.f32.mrb[0].mxu0
        %v3374 = vpop.f32.mrb[0].mxu0
        %3375 = vdwg.mxu0
        %v3376 = vsel %vm1026, %v3371, -inf
        %3377 = vmax.xlane.f32.xlu0 %v3376
        %v3378 = vpop.xlane.xlu0 %3377
        %v3379 = vsub.f32 %v3371, %v3378
        %v3380 = vmul.f32 %v3379, 1.442695
        %v3381 = vpow.pop %v3380
        %v3382 = vsel %vm1026, %v3381, 0.0
        %3383 = vadd.xlane.f32.xlu0 %v3382
        %v3384 = vpop.xlane.xlu0 %3383
        %v3385 = vrcp.pop %v3384
        %v3386 = vmul.f32 %v3381, %v3385
        %v3387 = vpack.c.bf16 %v3386, %v3386
        %3389 = vrot.lane.b32.xlu0 %v3329, 96
        %v3390 = vpop.permute.xlu0 %3389
        %v3392 = vsel %vm1026, %v3387, 0
        %v3395 = vsel %vm1090, %v3390, 0
        %3397 = vmatprep.subr.bf16.mxu0 0
        %3398 = vmatpush1.bf16.msra.mxu0 %v3395
        %3399 = vmatprep.subr.bf16.mxu0 0
        %3400 = vmatpush1.bf16.msra.mxu0 0
        %3401 = vmatprep.subr.bf16.mxu0 0
        %3402 = vmatpush1.bf16.msra.mxu0 0
        %3403 = vmatprep.subr.bf16.mxu0 0
        %3404 = vmatpush1.bf16.msra.mxu0 0
        %3405 = vmatprep.subr.bf16.mxu0 0
        %3406 = vmatpush1.bf16.msra.mxu0 0
        %3407 = vmatprep.subr.bf16.mxu0 0
        %3408 = vmatpush1.bf16.msra.mxu0 0
        %3409 = vmatprep.subr.bf16.mxu0 0
        %3410 = vmatpush1.bf16.msra.mxu0 0
        %3411 = vmatprep.subr.bf16.mxu0 0
        %3412 = vmatpush1.bf16.msra.mxu0 0
        %3413 = vmatprep.subr.bf16.mxu0 0
        %3414 = vmatpush1.bf16.msra.mxu0 0
        %3415 = vmatprep.subr.bf16.mxu0 0
        %3416 = vmatpush1.bf16.msra.mxu0 0
        %3417 = vmatprep.subr.bf16.mxu0 0
        %3418 = vmatpush1.bf16.msra.mxu0 0
        %3419 = vmatprep.subr.bf16.mxu0 0
        %3420 = vmatpush1.bf16.msra.mxu0 0
        %3421 = vmatprep.subr.bf16.mxu0 0
        %3422 = vmatpush1.bf16.msra.mxu0 0
        %3423 = vmatprep.subr.bf16.mxu0 0
        %3424 = vmatpush1.bf16.msra.mxu0 0
        %3425 = vmatprep.subr.bf16.mxu0 0
        %3426 = vmatpush1.bf16.msra.mxu0 0
        %3427 = vmatprep.subr.bf16.mxu0 0
        %3428 = vmatpush1.bf16.msra.mxu0 0
        %3429 = vmatprep.mubr.bf16.mxu0 0
        %3430 = vmatmul.mubr.bf16.gmra.mrb[0].mxu0 %v3392
        %v3431 = vpop.f32.mrb[0].mxu0
        %v3432 = vadd.f32 0.0, %v3431
        %v3433 = vpop.f32.mrb[0].mxu0
        %v3434 = vpop.f32.mrb[0].mxu0
        %v3435 = vpop.f32.mrb[0].mxu0
        %3436 = vdwg.mxu0
        %3438 = vrot.lane.b32.xlu0 %v3328, 120
        %v3439 = vpop.permute.xlu0 %3438
        %3440 = vrot.lane.b32.xlu0 %v3329, 120
        %v3441 = vpop.permute.xlu0 %3440
        %v3443 = vsel %vm1026, %v3439, 0
        %v3446 = vsel %vm1026, %v3441, 0
        %3448 = vmatprep.subr.bf16.mxu0 0
        %3449 = vmatpush1.bf16.xpose.msra.mxu0 %v3446
        %3450 = vmatprep.subr.bf16.mxu0 0
        %3451 = vmatpush1.bf16.xpose.msra.mxu0 0
        %3452 = vmatprep.subr.bf16.mxu0 0
        %3453 = vmatpush1.bf16.xpose.msra.mxu0 0
        %3454 = vmatprep.subr.bf16.mxu0 0
        %3455 = vmatpush1.bf16.xpose.msra.mxu0 0
        %3456 = vmatprep.subr.bf16.mxu0 0
        %3457 = vmatpush1.bf16.xpose.msra.mxu0 0
        %3458 = vmatprep.subr.bf16.mxu0 0
        %3459 = vmatpush1.bf16.xpose.msra.mxu0 0
        %3460 = vmatprep.subr.bf16.mxu0 0
        %3461 = vmatpush1.bf16.xpose.msra.mxu0 0
        %3462 = vmatprep.subr.bf16.mxu0 0
        %3463 = vmatpush1.bf16.xpose.msra.mxu0 0
        %3464 = vmatprep.subr.bf16.mxu0 0
        %3465 = vmatpush1.bf16.xpose.msra.mxu0 0
        %3466 = vmatprep.subr.bf16.mxu0 0
        %3467 = vmatpush1.bf16.xpose.msra.mxu0 0
        %3468 = vmatprep.subr.bf16.mxu0 0
        %3469 = vmatpush1.bf16.xpose.msra.mxu0 0
        %3470 = vmatprep.subr.bf16.mxu0 0
        %3471 = vmatpush1.bf16.xpose.msra.mxu0 0
        %3472 = vmatprep.subr.bf16.mxu0 0
        %3473 = vmatpush1.bf16.xpose.msra.mxu0 0
        %3474 = vmatprep.subr.bf16.mxu0 0
        %3475 = vmatpush1.bf16.xpose.msra.mxu0 0
        %3476 = vmatprep.subr.bf16.mxu0 0
        %3477 = vmatpush1.bf16.xpose.msra.mxu0 0
        %3478 = vmatprep.subr.bf16.mxu0 0
        %3479 = vmatpush1.bf16.xpose.msra.mxu0 0
        %3480 = vmatprep.mubr.bf16.mxu0 0
        %3481 = vmatmul.mubr.bf16.gmra.mrb[0].mxu0 %v3443
        %v3482 = vpop.f32.mrb[0].mxu0
        %v3483 = vadd.f32 0.0, %v3482
        %v3484 = vpop.f32.mrb[0].mxu0
        %v3485 = vpop.f32.mrb[0].mxu0
        %v3486 = vpop.f32.mrb[0].mxu0
        %3487 = vdwg.mxu0
        %v3488 = vsel %vm1026, %v3483, -inf
        %3489 = vmax.xlane.f32.xlu0 %v3488
        %v3490 = vpop.xlane.xlu0 %3489
        %v3491 = vsub.f32 %v3483, %v3490
        %v3492 = vmul.f32 %v3491, 1.442695
        %v3493 = vpow.pop %v3492
        %v3494 = vsel %vm1026, %v3493, 0.0
        %3495 = vadd.xlane.f32.xlu0 %v3494
        %v3496 = vpop.xlane.xlu0 %3495
        %v3497 = vrcp.pop %v3496
        %v3498 = vmul.f32 %v3493, %v3497
        %v3499 = vpack.c.bf16 %v3498, %v3498
        %3500 = vrot.lane.b32.xlu0 %v3329, 88
        %v3501 = vpop.permute.xlu0 %3500
        %v3503 = vsel %vm1026, %v3499, 0
        %v3506 = vsel %vm1090, %v3501, 0
        %3508 = vmatprep.subr.bf16.mxu0 0
        %3509 = vmatpush1.bf16.msra.mxu0 %v3506
        %3510 = vmatprep.subr.bf16.mxu0 0
        %3511 = vmatpush1.bf16.msra.mxu0 0
        %3512 = vmatprep.subr.bf16.mxu0 0
        %3513 = vmatpush1.bf16.msra.mxu0 0
        %3514 = vmatprep.subr.bf16.mxu0 0
        %3515 = vmatpush1.bf16.msra.mxu0 0
        %3516 = vmatprep.subr.bf16.mxu0 0
        %3517 = vmatpush1.bf16.msra.mxu0 0
        %3518 = vmatprep.subr.bf16.mxu0 0
        %3519 = vmatpush1.bf16.msra.mxu0 0
        %3520 = vmatprep.subr.bf16.mxu0 0
        %3521 = vmatpush1.bf16.msra.mxu0 0
        %3522 = vmatprep.subr.bf16.mxu0 0
        %3523 = vmatpush1.bf16.msra.mxu0 0
        %3524 = vmatprep.subr.bf16.mxu0 0
        %3525 = vmatpush1.bf16.msra.mxu0 0
        %3526 = vmatprep.subr.bf16.mxu0 0
        %3527 = vmatpush1.bf16.msra.mxu0 0
        %3528 = vmatprep.subr.bf16.mxu0 0
        %3529 = vmatpush1.bf16.msra.mxu0 0
        %3530 = vmatprep.subr.bf16.mxu0 0
        %3531 = vmatpush1.bf16.msra.mxu0 0
        %3532 = vmatprep.subr.bf16.mxu0 0
        %3533 = vmatpush1.bf16.msra.mxu0 0
        %3534 = vmatprep.subr.bf16.mxu0 0
        %3535 = vmatpush1.bf16.msra.mxu0 0
        %3536 = vmatprep.subr.bf16.mxu0 0
        %3537 = vmatpush1.bf16.msra.mxu0 0
        %3538 = vmatprep.subr.bf16.mxu0 0
        %3539 = vmatpush1.bf16.msra.mxu0 0
        %3540 = vmatprep.mubr.bf16.mxu0 0
        %3541 = vmatmul.mubr.bf16.gmra.mrb[0].mxu0 %v3503
        %v3542 = vpop.f32.mrb[0].mxu0
        %v3543 = vadd.f32 0.0, %v3542
        %v3544 = vpop.f32.mrb[0].mxu0
        %v3545 = vpop.f32.mrb[0].mxu0
        %v3546 = vpop.f32.mrb[0].mxu0
        %3547 = vdwg.mxu0
        %3548 = vrot.lane.b32.xlu0 %v3328, 112
        %v3549 = vpop.permute.xlu0 %3548
        %3550 = vrot.lane.b32.xlu0 %v3329, 112
        %v3551 = vpop.permute.xlu0 %3550
        %v3553 = vsel %vm1026, %v3549, 0
        %v3556 = vsel %vm1026, %v3551, 0
        %3558 = vmatprep.subr.bf16.mxu0 0
        %3559 = vmatpush1.bf16.xpose.msra.mxu0 %v3556
        %3560 = vmatprep.subr.bf16.mxu0 0
        %3561 = vmatpush1.bf16.xpose.msra.mxu0 0
        %3562 = vmatprep.subr.bf16.mxu0 0
        %3563 = vmatpush1.bf16.xpose.msra.mxu0 0
        %3564 = vmatprep.subr.bf16.mxu0 0
        %3565 = vmatpush1.bf16.xpose.msra.mxu0 0
        %3566 = vmatprep.subr.bf16.mxu0 0
        %3567 = vmatpush1.bf16.xpose.msra.mxu0 0
        %3568 = vmatprep.subr.bf16.mxu0 0
        %3569 = vmatpush1.bf16.xpose.msra.mxu0 0
        %3570 = vmatprep.subr.bf16.mxu0 0
        %3571 = vmatpush1.bf16.xpose.msra.mxu0 0
        %3572 = vmatprep.subr.bf16.mxu0 0
        %3573 = vmatpush1.bf16.xpose.msra.mxu0 0
        %3574 = vmatprep.subr.bf16.mxu0 0
        %3575 = vmatpush1.bf16.xpose.msra.mxu0 0
        %3576 = vmatprep.subr.bf16.mxu0 0
        %3577 = vmatpush1.bf16.xpose.msra.mxu0 0
        %3578 = vmatprep.subr.bf16.mxu0 0
        %3579 = vmatpush1.bf16.xpose.msra.mxu0 0
        %3580 = vmatprep.subr.bf16.mxu0 0
        %3581 = vmatpush1.bf16.xpose.msra.mxu0 0
        %3582 = vmatprep.subr.bf16.mxu0 0
        %3583 = vmatpush1.bf16.xpose.msra.mxu0 0
        %3584 = vmatprep.subr.bf16.mxu0 0
        %3585 = vmatpush1.bf16.xpose.msra.mxu0 0
        %3586 = vmatprep.subr.bf16.mxu0 0
        %3587 = vmatpush1.bf16.xpose.msra.mxu0 0
        %3588 = vmatprep.subr.bf16.mxu0 0
        %3589 = vmatpush1.bf16.xpose.msra.mxu0 0
        %3590 = vmatprep.mubr.bf16.mxu0 0
        %3591 = vmatmul.mubr.bf16.gmra.mrb[0].mxu0 %v3553
        %v3592 = vpop.f32.mrb[0].mxu0
        %v3593 = vadd.f32 0.0, %v3592
        %v3594 = vpop.f32.mrb[0].mxu0
        %v3595 = vpop.f32.mrb[0].mxu0
        %v3596 = vpop.f32.mrb[0].mxu0
        %3597 = vdwg.mxu0
        %v3598 = vsel %vm1026, %v3593, -inf
        %3599 = vmax.xlane.f32.xlu0 %v3598
        %v3600 = vpop.xlane.xlu0 %3599
        %v3601 = vsub.f32 %v3593, %v3600
        %v3602 = vmul.f32 %v3601, 1.442695
        %v3603 = vpow.pop %v3602
        %v3604 = vsel %vm1026, %v3603, 0.0
        %3605 = vadd.xlane.f32.xlu0 %v3604
        %v3606 = vpop.xlane.xlu0 %3605
        %v3607 = vrcp.pop %v3606
        %v3608 = vmul.f32 %v3603, %v3607
        %v3609 = vpack.c.bf16 %v3608, %v3608
        %3610 = vrot.lane.b32.xlu0 %v3329, 80
        %v3611 = vpop.permute.xlu0 %3610
        %v3613 = vsel %vm1026, %v3609, 0
        %v3616 = vsel %vm1090, %v3611, 0
        %3618 = vmatprep.subr.bf16.mxu0 0
        %3619 = vmatpush1.bf16.msra.mxu0 %v3616
        %3620 = vmatprep.subr.bf16.mxu0 0
        %3621 = vmatpush1.bf16.msra.mxu0 0
        %3622 = vmatprep.subr.bf16.mxu0 0
        %3623 = vmatpush1.bf16.msra.mxu0 0
        %3624 = vmatprep.subr.bf16.mxu0 0
        %3625 = vmatpush1.bf16.msra.mxu0 0
        %3626 = vmatprep.subr.bf16.mxu0 0
        %3627 = vmatpush1.bf16.msra.mxu0 0
        %3628 = vmatprep.subr.bf16.mxu0 0
        %3629 = vmatpush1.bf16.msra.mxu0 0
        %3630 = vmatprep.subr.bf16.mxu0 0
        %3631 = vmatpush1.bf16.msra.mxu0 0
        %3632 = vmatprep.subr.bf16.mxu0 0
        %3633 = vmatpush1.bf16.msra.mxu0 0
        %3634 = vmatprep.subr.bf16.mxu0 0
        %3635 = vmatpush1.bf16.msra.mxu0 0
        %3636 = vmatprep.subr.bf16.mxu0 0
        %3637 = vmatpush1.bf16.msra.mxu0 0
        %3638 = vmatprep.subr.bf16.mxu0 0
        %3639 = vmatpush1.bf16.msra.mxu0 0
        %3640 = vmatprep.subr.bf16.mxu0 0
        %3641 = vmatpush1.bf16.msra.mxu0 0
        %3642 = vmatprep.subr.bf16.mxu0 0
        %3643 = vmatpush1.bf16.msra.mxu0 0
        %3644 = vmatprep.subr.bf16.mxu0 0
        %3645 = vmatpush1.bf16.msra.mxu0 0
        %3646 = vmatprep.subr.bf16.mxu0 0
        %3647 = vmatpush1.bf16.msra.mxu0 0
        %3648 = vmatprep.subr.bf16.mxu0 0
        %3649 = vmatpush1.bf16.msra.mxu0 0
        %3650 = vmatprep.mubr.bf16.mxu0 0
        %3651 = vmatmul.mubr.bf16.gmra.mrb[0].mxu0 %v3613
        %v3652 = vpop.f32.mrb[0].mxu0
        %v3653 = vadd.f32 0.0, %v3652
        %v3654 = vpop.f32.mrb[0].mxu0
        %v3655 = vpop.f32.mrb[0].mxu0
        %v3656 = vpop.f32.mrb[0].mxu0
        %3657 = vdwg.mxu0
        %3658 = vrot.lane.b32.xlu0 %v3328, 104
        %v3659 = vpop.permute.xlu0 %3658
        %3660 = vrot.lane.b32.xlu0 %v3329, 104
        %v3661 = vpop.permute.xlu0 %3660
        %v3663 = vsel %vm1026, %v3659, 0
        %v3666 = vsel %vm1026, %v3661, 0
        %3668 = vmatprep.subr.bf16.mxu0 0
        %3669 = vmatpush1.bf16.xpose.msra.mxu0 %v3666
        %3670 = vmatprep.subr.bf16.mxu0 0
        %3671 = vmatpush1.bf16.xpose.msra.mxu0 0
        %3672 = vmatprep.subr.bf16.mxu0 0
        %3673 = vmatpush1.bf16.xpose.msra.mxu0 0
        %3674 = vmatprep.subr.bf16.mxu0 0
        %3675 = vmatpush1.bf16.xpose.msra.mxu0 0
        %3676 = vmatprep.subr.bf16.mxu0 0
        %3677 = vmatpush1.bf16.xpose.msra.mxu0 0
        %3678 = vmatprep.subr.bf16.mxu0 0
        %3679 = vmatpush1.bf16.xpose.msra.mxu0 0
        %3680 = vmatprep.subr.bf16.mxu0 0
        %3681 = vmatpush1.bf16.xpose.msra.mxu0 0
        %3682 = vmatprep.subr.bf16.mxu0 0
        %3683 = vmatpush1.bf16.xpose.msra.mxu0 0
        %3684 = vmatprep.subr.bf16.mxu0 0
        %3685 = vmatpush1.bf16.xpose.msra.mxu0 0
        %3686 = vmatprep.subr.bf16.mxu0 0
        %3687 = vmatpush1.bf16.xpose.msra.mxu0 0
        %3688 = vmatprep.subr.bf16.mxu0 0
        %3689 = vmatpush1.bf16.xpose.msra.mxu0 0
        %3690 = vmatprep.subr.bf16.mxu0 0
        %3691 = vmatpush1.bf16.xpose.msra.mxu0 0
        %3692 = vmatprep.subr.bf16.mxu0 0
        %3693 = vmatpush1.bf16.xpose.msra.mxu0 0
        %3694 = vmatprep.subr.bf16.mxu0 0
        %3695 = vmatpush1.bf16.xpose.msra.mxu0 0
        %3696 = vmatprep.subr.bf16.mxu0 0
        %3697 = vmatpush1.bf16.xpose.msra.mxu0 0
        %3698 = vmatprep.subr.bf16.mxu0 0
        %3699 = vmatpush1.bf16.xpose.msra.mxu0 0
        %3700 = vmatprep.mubr.bf16.mxu0 0
        %3701 = vmatmul.mubr.bf16.gmra.mrb[0].mxu0 %v3663
        %v3702 = vpop.f32.mrb[0].mxu0
        %v3703 = vadd.f32 0.0, %v3702
        %v3704 = vpop.f32.mrb[0].mxu0
        %v3705 = vpop.f32.mrb[0].mxu0
        %v3706 = vpop.f32.mrb[0].mxu0
        %3707 = vdwg.mxu0
        %v3708 = vsel %vm1026, %v3703, -inf
        %3709 = vmax.xlane.f32.xlu0 %v3708
        %v3710 = vpop.xlane.xlu0 %3709
        %v3711 = vsub.f32 %v3703, %v3710
        %v3712 = vmul.f32 %v3711, 1.442695
        %v3713 = vpow.pop %v3712
        %v3714 = vsel %vm1026, %v3713, 0.0
        %3715 = vadd.xlane.f32.xlu0 %v3714
        %v3716 = vpop.xlane.xlu0 %3715
        %v3717 = vrcp.pop %v3716
        %v3718 = vmul.f32 %v3713, %v3717
        %v3719 = vpack.c.bf16 %v3718, %v3718
        %3720 = vrot.lane.b32.xlu0 %v3329, 72
        %v3721 = vpop.permute.xlu0 %3720
        %v3723 = vsel %vm1026, %v3719, 0
        %v3726 = vsel %vm1090, %v3721, 0
        %3728 = vmatprep.subr.bf16.mxu0 0
        %3729 = vmatpush1.bf16.msra.mxu0 %v3726
        %3730 = vmatprep.subr.bf16.mxu0 0
        %3731 = vmatpush1.bf16.msra.mxu0 0
        %3732 = vmatprep.subr.bf16.mxu0 0
        %3733 = vmatpush1.bf16.msra.mxu0 0
        %3734 = vmatprep.subr.bf16.mxu0 0
        %3735 = vmatpush1.bf16.msra.mxu0 0
        %3736 = vmatprep.subr.bf16.mxu0 0
        %3737 = vmatpush1.bf16.msra.mxu0 0
        %3738 = vmatprep.subr.bf16.mxu0 0
        %3739 = vmatpush1.bf16.msra.mxu0 0
        %3740 = vmatprep.subr.bf16.mxu0 0
        %3741 = vmatpush1.bf16.msra.mxu0 0
        %3742 = vmatprep.subr.bf16.mxu0 0
        %3743 = vmatpush1.bf16.msra.mxu0 0
        %3744 = vmatprep.subr.bf16.mxu0 0
        %3745 = vmatpush1.bf16.msra.mxu0 0
        %3746 = vmatprep.subr.bf16.mxu0 0
        %3747 = vmatpush1.bf16.msra.mxu0 0
        %3748 = vmatprep.subr.bf16.mxu0 0
        %3749 = vmatpush1.bf16.msra.mxu0 0
        %3750 = vmatprep.subr.bf16.mxu0 0
        %3751 = vmatpush1.bf16.msra.mxu0 0
        %3752 = vmatprep.subr.bf16.mxu0 0
        %3753 = vmatpush1.bf16.msra.mxu0 0
        %3754 = vmatprep.subr.bf16.mxu0 0
        %3755 = vmatpush1.bf16.msra.mxu0 0
        %3756 = vmatprep.subr.bf16.mxu0 0
        %3757 = vmatpush1.bf16.msra.mxu0 0
        %3758 = vmatprep.subr.bf16.mxu0 0
        %3759 = vmatpush1.bf16.msra.mxu0 0
        %3760 = vmatprep.mubr.bf16.mxu0 0
        %3761 = vmatmul.mubr.bf16.gmra.mrb[0].mxu0 %v3723
        %v3762 = vpop.f32.mrb[0].mxu0
        %v3763 = vadd.f32 0.0, %v3762
        %v3764 = vpop.f32.mrb[0].mxu0
        %v3765 = vpop.f32.mrb[0].mxu0
        %v3766 = vpop.f32.mrb[0].mxu0
        %3767 = vdwg.mxu0
        %3769 = vrot.lane.b32.xlu0 %v3543, 8
        %v3770 = vpop.permute.xlu0 %3769
        %3773 = vrot.lane.b32.xlu0 %v3653, 16
        %v3774 = vpop.permute.xlu0 %3773
        %3777 = vrot.lane.b32.xlu0 %v3763, 24
        %v3778 = vpop.permute.xlu0 %3777
        %v3780 = vsel %vm1026, %v3432, %v3770
        %v3781 = vsel %vm1478, %v3780, %v3774
        %v3782 = vsel %vm1480, %v3781, %v3778
        %v3783 = vpack.c.bf16 %v3782, %v3782
        %v3784 = vld [vmem:[%s41] sm:$0xf]
        %v3785 = vld [vmem:[%s41 + $0x4] sm:$0xf]
        %v3786 = vld [vmem:[%s41 + $0x8] sm:$0xf]
        %v3787 = vld [vmem:[%s41 + $0xc] sm:$0xf]
        %v3788 = vld [vmem:[%s43] sm:$0x1]
        %v3790 = vlaneseq
        %v3791 = vshrl.u32 %v3790, 7
        %v3792 = vsub.s32 0, %v3791
        %v3793 = vrot.slane %v3788, %v3792
        %v3799 = vunpack.c.l.b16 %v3784
        %v3800 = vunpack.c.l.b16 %v3785
        %v3801 = vunpack.c.l.b16 %v3786
        %v3802 = vunpack.c.l.b16 %v3787
        %v3803 = vpack.c.b16 %v3800, %v3799
        %v3804 = vpack.c.b16 %v3802, %v3801
        %v3808 = vsel %vm976, %v3783, 0
        %3810 = vmatprep.subr.bf16.mxu0 0
        %3811 = vmatpush1.bf16.msra.mxu0 %v3803
        %3812 = vmatprep.subr.bf16.mxu0 0
        %3813 = vmatpush1.bf16.msra.mxu0 %v3804
        %3814 = vmatprep.subr.bf16.mxu0 0
        %3815 = vmatpush1.bf16.msra.mxu0 0
        %3816 = vmatprep.subr.bf16.mxu0 0
        %3817 = vmatpush1.bf16.msra.mxu0 0
        %3818 = vmatprep.subr.bf16.mxu0 0
        %3819 = vmatpush1.bf16.msra.mxu0 0
        %3820 = vmatprep.subr.bf16.mxu0 0
        %3821 = vmatpush1.bf16.msra.mxu0 0
        %3822 = vmatprep.subr.bf16.mxu0 0
        %3823 = vmatpush1.bf16.msra.mxu0 0
        %3824 = vmatprep.subr.bf16.mxu0 0
        %3825 = vmatpush1.bf16.msra.mxu0 0
        %3826 = vmatprep.subr.bf16.mxu0 0
        %3827 = vmatpush1.bf16.msra.mxu0 0
        %3828 = vmatprep.subr.bf16.mxu0 0
        %3829 = vmatpush1.bf16.msra.mxu0 0
        %3830 = vmatprep.subr.bf16.mxu0 0
        %3831 = vmatpush1.bf16.msra.mxu0 0
        %3832 = vmatprep.subr.bf16.mxu0 0
        %3833 = vmatpush1.bf16.msra.mxu0 0
        %3834 = vmatprep.subr.bf16.mxu0 0
        %3835 = vmatpush1.bf16.msra.mxu0 0
        %3836 = vmatprep.subr.bf16.mxu0 0
        %3837 = vmatpush1.bf16.msra.mxu0 0
        %3838 = vmatprep.subr.bf16.mxu0 0
        %3839 = vmatpush1.bf16.msra.mxu0 0
        %3840 = vmatprep.subr.bf16.mxu0 0
        %3841 = vmatpush1.bf16.msra.mxu0 0
        %3842 = vmatprep.mubr.bf16.mxu0 0
        %3843 = vmatmul.mubr.bf16.gmra.mrb[0].mxu0 %v3808
        %v3844 = vpop.f32.mrb[0].mxu0
        %v3845 = vadd.f32 %v3793, %v3844
        %v3846 = vpop.f32.mrb[0].mxu0
        %v3847 = vpop.f32.mrb[0].mxu0
        %v3848 = vpop.f32.mrb[0].mxu0
        %3849 = vdwg.mxu0
        %v3850 = vadd.f32 %v3193, %v3845
        %v3851 = vsel %vm976, %v3850, 0.0
        %3852 = vadd.xlane.f32.xlu0 %v3851
        %v3853 = vpop.xlane.xlu0 %3852
        %v3854 = vmul.f32 %v3853, %v1553
        %v3855 = vsub.f32 %v3850, %v3854
        %v3856 = vmul.f32 %v3855, %v3855
        %v3857 = vsel %vm976, %v3856, 0.0
        %3858 = vadd.xlane.f32.xlu0 %v3857
        %v3859 = vpop.xlane.xlu0 %3858
        %v3860 = vmul.f32 %v3859, %v1553
        %v3861 = vadd.f32 %v3860, 1e-05
        %v3862 = vrsqrt.pop %v3861
        %v3863 = vmul.f32 %v3855, %v3862
        %v3864 = vlaneseq
        %v3865 = vshrl.u32 %v3864, 7
        %v3866 = vsub.s32 2, %v3865
        %v3867 = vrot.slane %v2577, %v3866
        %v3868 = vmul.f32 %v3863, %v3867
        %v3869 = vlaneseq
        %v3870 = vshrl.u32 %v3869, 7
        %v3871 = vsub.s32 3, %v3870
        %v3872 = vrot.slane %v2577, %v3871
        %v3873 = vadd.f32 %v3868, %v3872
        %v3874 = vpack.c.bf16 %v3873, %v3873
        %v3875 = vld [vmem:[%s45] sm:$0xf]
        %v3876 = vld [vmem:[%s45 + $0x4] sm:$0xf]
        %v3877 = vld [vmem:[%s45 + $0x8] sm:$0xf]
        %v3878 = vld [vmem:[%s45 + $0xc] sm:$0xf]
        %v3879 = vld [vmem:[%s47] sm:$0x1]
        %v3881 = vlaneseq
        %v3882 = vshrl.u32 %v3881, 7
        %v3883 = vsub.s32 0, %v3882
        %v3884 = vrot.slane %v3879, %v3883
        %v3890 = vunpack.c.l.b16 %v3875
        %v3891 = vunpack.c.l.b16 %v3876
        %v3892 = vunpack.c.l.b16 %v3877
        %v3893 = vunpack.c.l.b16 %v3878
        %v3894 = vpack.c.b16 %v3891, %v3890
        %v3895 = vpack.c.b16 %v3893, %v3892
        %v3899 = vsel %vm976, %v3874, 0
        %3901 = vmatprep.subr.bf16.mxu0 0
        %3902 = vmatpush1.bf16.msra.mxu0 %v3894
        %3903 = vmatprep.subr.bf16.mxu0 0
        %3904 = vmatpush1.bf16.msra.mxu0 %v3895
        %3905 = vmatprep.subr.bf16.mxu0 0
        %3906 = vmatpush1.bf16.msra.mxu0 0
        %3907 = vmatprep.subr.bf16.mxu0 0
        %3908 = vmatpush1.bf16.msra.mxu0 0
        %3909 = vmatprep.subr.bf16.mxu0 0
        %3910 = vmatpush1.bf16.msra.mxu0 0
        %3911 = vmatprep.subr.bf16.mxu0 0
        %3912 = vmatpush1.bf16.msra.mxu0 0
        %3913 = vmatprep.subr.bf16.mxu0 0
        %3914 = vmatpush1.bf16.msra.mxu0 0
        %3915 = vmatprep.subr.bf16.mxu0 0
        %3916 = vmatpush1.bf16.msra.mxu0 0
        %3917 = vmatprep.subr.bf16.mxu0 0
        %3918 = vmatpush1.bf16.msra.mxu0 0
        %3919 = vmatprep.subr.bf16.mxu0 0
        %3920 = vmatpush1.bf16.msra.mxu0 0
        %3921 = vmatprep.subr.bf16.mxu0 0
        %3922 = vmatpush1.bf16.msra.mxu0 0
        %3923 = vmatprep.subr.bf16.mxu0 0
        %3924 = vmatpush1.bf16.msra.mxu0 0
        %3925 = vmatprep.subr.bf16.mxu0 0
        %3926 = vmatpush1.bf16.msra.mxu0 0
        %3927 = vmatprep.subr.bf16.mxu0 0
        %3928 = vmatpush1.bf16.msra.mxu0 0
        %3929 = vmatprep.subr.bf16.mxu0 0
        %3930 = vmatpush1.bf16.msra.mxu0 0
        %3931 = vmatprep.subr.bf16.mxu0 0
        %3932 = vmatpush1.bf16.msra.mxu0 0
        %3933 = vmatprep.mubr.bf16.mxu0 0
        %3934 = vmatmul.mubr.bf16.gmra.mrb[0].mxu0 %v3899
        %v3935 = vpop.f32.mrb[0].mxu0
        %v3936 = vadd.f32 %v3884, %v3935
        %v3937 = vpop.f32.mrb[0].mxu0
        %v3938 = vpop.f32.mrb[0].mxu0
        %v3939 = vpop.f32.mrb[0].mxu0
        %3940 = vdwg.mxu0
        %v3941 = vmax.f32 %v3936, 0.0
        %v3942 = vpack.c.bf16 %v3941, %v3941
        %v3943 = vld [vmem:[%s49] sm:$0xf]
        %v3944 = vld [vmem:[%s49 + $0x4] sm:$0xf]
        %v3945 = vld [vmem:[%s49 + $0x8] sm:$0xf]
        %v3946 = vld [vmem:[%s49 + $0xc] sm:$0xf]
        %v3947 = vld [vmem:[%s49 + $0x10] sm:$0xf]
        %v3948 = vld [vmem:[%s49 + $0x14] sm:$0xf]
        %v3949 = vld [vmem:[%s49 + $0x18] sm:$0xf]
        %v3950 = vld [vmem:[%s49 + $0x1c] sm:$0xf]
        %v3951 = vld [vmem:[%s51] sm:$0x1]
        %v3953 = vlaneseq
        %v3954 = vshrl.u32 %v3953, 7
        %v3955 = vsub.s32 0, %v3954
        %v3956 = vrot.slane %v3951, %v3955
        %v3966 = vunpack.c.l.b16 %v3943
        %v3967 = vunpack.c.l.b16 %v3944
        %v3968 = vunpack.c.l.b16 %v3945
        %v3969 = vunpack.c.l.b16 %v3946
        %v3970 = vunpack.c.l.b16 %v3947
        %v3971 = vunpack.c.l.b16 %v3948
        %v3972 = vunpack.c.l.b16 %v3949
        %v3973 = vunpack.c.l.b16 %v3950
        %v3974 = vpack.c.b16 %v3967, %v3966
        %v3975 = vpack.c.b16 %v3969, %v3968
        %v3976 = vpack.c.b16 %v3971, %v3970
        %v3977 = vpack.c.b16 %v3973, %v3972
        %v3983 = vsel %vm1682, %v3942, 0
        %3985 = vmatprep.subr.bf16.mxu0 0
        %3986 = vmatpush1.bf16.msra.mxu0 %v3974
        %3987 = vmatprep.subr.bf16.mxu0 0
        %3988 = vmatpush1.bf16.msra.mxu0 %v3975
        %3989 = vmatprep.subr.bf16.mxu0 0
        %3990 = vmatpush1.bf16.msra.mxu0 %v3976
        %3991 = vmatprep.subr.bf16.mxu0 0
        %3992 = vmatpush1.bf16.msra.mxu0 %v3977
        %3993 = vmatprep.subr.bf16.mxu0 0
        %3994 = vmatpush1.bf16.msra.mxu0 0
        %3995 = vmatprep.subr.bf16.mxu0 0
        %3996 = vmatpush1.bf16.msra.mxu0 0
        %3997 = vmatprep.subr.bf16.mxu0 0
        %3998 = vmatpush1.bf16.msra.mxu0 0
        %3999 = vmatprep.subr.bf16.mxu0 0
        %4000 = vmatpush1.bf16.msra.mxu0 0
        %4001 = vmatprep.subr.bf16.mxu0 0
        %4002 = vmatpush1.bf16.msra.mxu0 0
        %4003 = vmatprep.subr.bf16.mxu0 0
        %4004 = vmatpush1.bf16.msra.mxu0 0
        %4005 = vmatprep.subr.bf16.mxu0 0
        %4006 = vmatpush1.bf16.msra.mxu0 0
        %4007 = vmatprep.subr.bf16.mxu0 0
        %4008 = vmatpush1.bf16.msra.mxu0 0
        %4009 = vmatprep.subr.bf16.mxu0 0
        %4010 = vmatpush1.bf16.msra.mxu0 0
        %4011 = vmatprep.subr.bf16.mxu0 0
        %4012 = vmatpush1.bf16.msra.mxu0 0
        %4013 = vmatprep.subr.bf16.mxu0 0
        %4014 = vmatpush1.bf16.msra.mxu0 0
        %4015 = vmatprep.subr.bf16.mxu0 0
        %4016 = vmatpush1.bf16.msra.mxu0 0
        %4017 = vmatprep.mubr.bf16.mxu0 0
        %4018 = vmatmul.mubr.bf16.gmra.mrb[0].mxu0 %v3983
        %v4019 = vpop.f32.mrb[0].mxu0
        %v4020 = vadd.f32 %v3956, %v4019
        %v4021 = vpop.f32.mrb[0].mxu0
        %v4022 = vpop.f32.mrb[0].mxu0
        %v4023 = vpop.f32.mrb[0].mxu0
        %4024 = vdwg.mxu0
        %v4025 = vadd.f32 %v3873, %v4020
        %v4026 = vsel %vm976, %v4025, 0.0
        %4027 = vadd.xlane.f32.xlu0 %v4026
        %v4028 = vpop.xlane.xlu0 %4027
        %v4029 = vmul.f32 %v4028, %v1553
        %v4030 = vsub.f32 %v4025, %v4029
        %v4031 = vmul.f32 %v4030, %v4030
        %v4032 = vsel %vm976, %v4031, 0.0
        %4033 = vadd.xlane.f32.xlu0 %v4032
        %v4034 = vpop.xlane.xlu0 %4033
        %v4035 = vmul.f32 %v4034, %v1553
        %v4036 = vadd.f32 %v4035, 1e-05
        %v4037 = vrsqrt.pop %v4036
        %v4038 = vmul.f32 %v4030, %v4037
        %v4039 = vlaneseq
        %v4040 = vshrl.u32 %v4039, 7
        %v4041 = vsub.s32 4, %v4040
        %v4042 = vrot.slane %v2577, %v4041
        %v4043 = vmul.f32 %v4038, %v4042
        %v4044 = vlaneseq
        %v4045 = vshrl.u32 %v4044, 7
        %v4046 = vsub.s32 5, %v4045
        %v4047 = vrot.slane %v2577, %v4046
        %v4048 = vadd.f32 %v4043, %v4047
        %s4049 = scalar_lea.vmem %s53, 8
        %v4050 = vld [vmem:[%s4049] sm:$0x3f]
        %v4051 = vpack.c.bf16 %v4048, %v4048
        %s4052 = scalar_lea.vmem %s25, 16
        %v4053 = vld [vmem:[%s4052] sm:$0xf]
        %v4054 = vld [vmem:[%s4052 + $0x4] sm:$0xf]
        %v4055 = vld [vmem:[%s4052 + $0x8] sm:$0xf]
        %v4056 = vld [vmem:[%s4052 + $0xc] sm:$0xf]
        %s4057 = scalar_lea.vmem %s27, 1
        %v4058 = vld [vmem:[%s4057] sm:$0x1]
        %v4060 = vlaneseq
        %v4061 = vshrl.u32 %v4060, 7
        %v4062 = vsub.s32 0, %v4061
        %v4063 = vrot.slane %v4058, %v4062
        %v4069 = vunpack.c.l.b16 %v4053
        %v4070 = vunpack.c.l.b16 %v4054
        %v4071 = vunpack.c.l.b16 %v4055
        %v4072 = vunpack.c.l.b16 %v4056
        %v4073 = vpack.c.b16 %v4070, %v4069
        %v4074 = vpack.c.b16 %v4072, %v4071
        %v4078 = vsel %vm976, %v4051, 0
        %4080 = vmatprep.subr.bf16.mxu0 0
        %4081 = vmatpush1.bf16.msra.mxu0 %v4073
        %4082 = vmatprep.subr.bf16.mxu0 0
        %4083 = vmatpush1.bf16.msra.mxu0 %v4074
        %4084 = vmatprep.subr.bf16.mxu0 0
        %4085 = vmatpush1.bf16.msra.mxu0 0
        %4086 = vmatprep.subr.bf16.mxu0 0
        %4087 = vmatpush1.bf16.msra.mxu0 0
        %4088 = vmatprep.subr.bf16.mxu0 0
        %4089 = vmatpush1.bf16.msra.mxu0 0
        %4090 = vmatprep.subr.bf16.mxu0 0
        %4091 = vmatpush1.bf16.msra.mxu0 0
        %4092 = vmatprep.subr.bf16.mxu0 0
        %4093 = vmatpush1.bf16.msra.mxu0 0
        %4094 = vmatprep.subr.bf16.mxu0 0
        %4095 = vmatpush1.bf16.msra.mxu0 0
        %4096 = vmatprep.subr.bf16.mxu0 0
        %4097 = vmatpush1.bf16.msra.mxu0 0
        %4098 = vmatprep.subr.bf16.mxu0 0
        %4099 = vmatpush1.bf16.msra.mxu0 0
        %4100 = vmatprep.subr.bf16.mxu0 0
        %4101 = vmatpush1.bf16.msra.mxu0 0
        %4102 = vmatprep.subr.bf16.mxu0 0
        %4103 = vmatpush1.bf16.msra.mxu0 0
        %4104 = vmatprep.subr.bf16.mxu0 0
        %4105 = vmatpush1.bf16.msra.mxu0 0
        %4106 = vmatprep.subr.bf16.mxu0 0
        %4107 = vmatpush1.bf16.msra.mxu0 0
        %4108 = vmatprep.subr.bf16.mxu0 0
        %4109 = vmatpush1.bf16.msra.mxu0 0
        %4110 = vmatprep.subr.bf16.mxu0 0
        %4111 = vmatpush1.bf16.msra.mxu0 0
        %4112 = vmatprep.mubr.bf16.mxu0 0
        %4113 = vmatmul.mubr.bf16.gmra.mrb[0].mxu0 %v4078
        %v4114 = vpop.f32.mrb[0].mxu0
        %v4115 = vadd.f32 %v4063, %v4114
        %v4116 = vpop.f32.mrb[0].mxu0
        %v4117 = vpop.f32.mrb[0].mxu0
        %v4118 = vpop.f32.mrb[0].mxu0
        %4119 = vdwg.mxu0
        %v4120 = vmul.f32 %v4115, 0.35355338
        %v4121 = vpack.c.bf16 %v4120, %v4120
        %v4122 = vpack.c.bf16 %v4115, %v4115
        %4124 = vrot.lane.b32.xlu0 %v4122, 96
        %v4125 = vpop.permute.xlu0 %4124
        %v4127 = vsel %vm1026, %v4121, 0
        %v4130 = vsel %vm1026, %v4125, 0
        %4132 = vmatprep.subr.bf16.mxu0 0
        %4133 = vmatpush1.bf16.xpose.msra.mxu0 %v4130
        %4134 = vmatprep.subr.bf16.mxu0 0
        %4135 = vmatpush1.bf16.xpose.msra.mxu0 0
        %4136 = vmatprep.subr.bf16.mxu0 0
        %4137 = vmatpush1.bf16.xpose.msra.mxu0 0
        %4138 = vmatprep.subr.bf16.mxu0 0
        %4139 = vmatpush1.bf16.xpose.msra.mxu0 0
        %4140 = vmatprep.subr.bf16.mxu0 0
        %4141 = vmatpush1.bf16.xpose.msra.mxu0 0
        %4142 = vmatprep.subr.bf16.mxu0 0
        %4143 = vmatpush1.bf16.xpose.msra.mxu0 0
        %4144 = vmatprep.subr.bf16.mxu0 0
        %4145 = vmatpush1.bf16.xpose.msra.mxu0 0
        %4146 = vmatprep.subr.bf16.mxu0 0
        %4147 = vmatpush1.bf16.xpose.msra.mxu0 0
        %4148 = vmatprep.subr.bf16.mxu0 0
        %4149 = vmatpush1.bf16.xpose.msra.mxu0 0
        %4150 = vmatprep.subr.bf16.mxu0 0
        %4151 = vmatpush1.bf16.xpose.msra.mxu0 0
        %4152 = vmatprep.subr.bf16.mxu0 0
        %4153 = vmatpush1.bf16.xpose.msra.mxu0 0
        %4154 = vmatprep.subr.bf16.mxu0 0
        %4155 = vmatpush1.bf16.xpose.msra.mxu0 0
        %4156 = vmatprep.subr.bf16.mxu0 0
        %4157 = vmatpush1.bf16.xpose.msra.mxu0 0
        %4158 = vmatprep.subr.bf16.mxu0 0
        %4159 = vmatpush1.bf16.xpose.msra.mxu0 0
        %4160 = vmatprep.subr.bf16.mxu0 0
        %4161 = vmatpush1.bf16.xpose.msra.mxu0 0
        %4162 = vmatprep.subr.bf16.mxu0 0
        %4163 = vmatpush1.bf16.xpose.msra.mxu0 0
        %4164 = vmatprep.mubr.bf16.mxu0 0
        %4165 = vmatmul.mubr.bf16.gmra.mrb[0].mxu0 %v4127
        %v4166 = vpop.f32.mrb[0].mxu0
        %v4167 = vadd.f32 %v949, %v4166
        %v4168 = vpop.f32.mrb[0].mxu0
        %v4169 = vpop.f32.mrb[0].mxu0
        %v4170 = vpop.f32.mrb[0].mxu0
        %4171 = vdwg.mxu0
        %v4172 = vsel %vm1026, %v4167, -inf
        %4173 = vmax.xlane.f32.xlu0 %v4172
        %v4174 = vpop.xlane.xlu0 %4173
        %v4175 = vsub.f32 %v4167, %v4174
        %v4176 = vmul.f32 %v4175, 1.442695
        %v4177 = vpow.pop %v4176
        %v4178 = vsel %vm1026, %v4177, 0.0
        %4179 = vadd.xlane.f32.xlu0 %v4178
        %v4180 = vpop.xlane.xlu0 %4179
        %v4181 = vrcp.pop %v4180
        %v4182 = vmul.f32 %v4177, %v4181
        %v4183 = vpack.c.bf16 %v4182, %v4182
        %4184 = vrot.lane.b32.xlu0 %v4122, 64
        %v4185 = vpop.permute.xlu0 %4184
        %v4187 = vsel %vm1026, %v4183, 0
        %v4190 = vsel %vm1090, %v4185, 0
        %4192 = vmatprep.subr.bf16.mxu0 0
        %4193 = vmatpush1.bf16.msra.mxu0 %v4190
        %4194 = vmatprep.subr.bf16.mxu0 0
        %4195 = vmatpush1.bf16.msra.mxu0 0
        %4196 = vmatprep.subr.bf16.mxu0 0
        %4197 = vmatpush1.bf16.msra.mxu0 0
        %4198 = vmatprep.subr.bf16.mxu0 0
        %4199 = vmatpush1.bf16.msra.mxu0 0
        %4200 = vmatprep.subr.bf16.mxu0 0
        %4201 = vmatpush1.bf16.msra.mxu0 0
        %4202 = vmatprep.subr.bf16.mxu0 0
        %4203 = vmatpush1.bf16.msra.mxu0 0
        %4204 = vmatprep.subr.bf16.mxu0 0
        %4205 = vmatpush1.bf16.msra.mxu0 0
        %4206 = vmatprep.subr.bf16.mxu0 0
        %4207 = vmatpush1.bf16.msra.mxu0 0
        %4208 = vmatprep.subr.bf16.mxu0 0
        %4209 = vmatpush1.bf16.msra.mxu0 0
        %4210 = vmatprep.subr.bf16.mxu0 0
        %4211 = vmatpush1.bf16.msra.mxu0 0
        %4212 = vmatprep.subr.bf16.mxu0 0
        %4213 = vmatpush1.bf16.msra.mxu0 0
        %4214 = vmatprep.subr.bf16.mxu0 0
        %4215 = vmatpush1.bf16.msra.mxu0 0
        %4216 = vmatprep.subr.bf16.mxu0 0
        %4217 = vmatpush1.bf16.msra.mxu0 0
        %4218 = vmatprep.subr.bf16.mxu0 0
        %4219 = vmatpush1.bf16.msra.mxu0 0
        %4220 = vmatprep.subr.bf16.mxu0 0
        %4221 = vmatpush1.bf16.msra.mxu0 0
        %4222 = vmatprep.subr.bf16.mxu0 0
        %4223 = vmatpush1.bf16.msra.mxu0 0
        %4224 = vmatprep.mubr.bf16.mxu0 0
        %4225 = vmatmul.mubr.bf16.gmra.mrb[0].mxu0 %v4187
        %v4226 = vpop.f32.mrb[0].mxu0
        %v4227 = vadd.f32 0.0, %v4226
        %v4228 = vpop.f32.mrb[0].mxu0
        %v4229 = vpop.f32.mrb[0].mxu0
        %v4230 = vpop.f32.mrb[0].mxu0
        %4231 = vdwg.mxu0
        %4233 = vrot.lane.b32.xlu0 %v4121, 120
        %v4234 = vpop.permute.xlu0 %4233
        %4235 = vrot.lane.b32.xlu0 %v4122, 88
        %v4236 = vpop.permute.xlu0 %4235
        %v4238 = vsel %vm1026, %v4234, 0
        %v4241 = vsel %vm1026, %v4236, 0
        %4243 = vmatprep.subr.bf16.mxu0 0
        %4244 = vmatpush1.bf16.xpose.msra.mxu0 %v4241
        %4245 = vmatprep.subr.bf16.mxu0 0
        %4246 = vmatpush1.bf16.xpose.msra.mxu0 0
        %4247 = vmatprep.subr.bf16.mxu0 0
        %4248 = vmatpush1.bf16.xpose.msra.mxu0 0
        %4249 = vmatprep.subr.bf16.mxu0 0
        %4250 = vmatpush1.bf16.xpose.msra.mxu0 0
        %4251 = vmatprep.subr.bf16.mxu0 0
        %4252 = vmatpush1.bf16.xpose.msra.mxu0 0
        %4253 = vmatprep.subr.bf16.mxu0 0
        %4254 = vmatpush1.bf16.xpose.msra.mxu0 0
        %4255 = vmatprep.subr.bf16.mxu0 0
        %4256 = vmatpush1.bf16.xpose.msra.mxu0 0
        %4257 = vmatprep.subr.bf16.mxu0 0
        %4258 = vmatpush1.bf16.xpose.msra.mxu0 0
        %4259 = vmatprep.subr.bf16.mxu0 0
        %4260 = vmatpush1.bf16.xpose.msra.mxu0 0
        %4261 = vmatprep.subr.bf16.mxu0 0
        %4262 = vmatpush1.bf16.xpose.msra.mxu0 0
        %4263 = vmatprep.subr.bf16.mxu0 0
        %4264 = vmatpush1.bf16.xpose.msra.mxu0 0
        %4265 = vmatprep.subr.bf16.mxu0 0
        %4266 = vmatpush1.bf16.xpose.msra.mxu0 0
        %4267 = vmatprep.subr.bf16.mxu0 0
        %4268 = vmatpush1.bf16.xpose.msra.mxu0 0
        %4269 = vmatprep.subr.bf16.mxu0 0
        %4270 = vmatpush1.bf16.xpose.msra.mxu0 0
        %4271 = vmatprep.subr.bf16.mxu0 0
        %4272 = vmatpush1.bf16.xpose.msra.mxu0 0
        %4273 = vmatprep.subr.bf16.mxu0 0
        %4274 = vmatpush1.bf16.xpose.msra.mxu0 0
        %4275 = vmatprep.mubr.bf16.mxu0 0
        %4276 = vmatmul.mubr.bf16.gmra.mrb[0].mxu0 %v4238
        %v4277 = vpop.f32.mrb[0].mxu0
        %v4278 = vadd.f32 %v949, %v4277
        %v4279 = vpop.f32.mrb[0].mxu0
        %v4280 = vpop.f32.mrb[0].mxu0
        %v4281 = vpop.f32.mrb[0].mxu0
        %4282 = vdwg.mxu0
        %v4283 = vsel %vm1026, %v4278, -inf
        %4284 = vmax.xlane.f32.xlu0 %v4283
        %v4285 = vpop.xlane.xlu0 %4284
        %v4286 = vsub.f32 %v4278, %v4285
        %v4287 = vmul.f32 %v4286, 1.442695
        %v4288 = vpow.pop %v4287
        %v4289 = vsel %vm1026, %v4288, 0.0
        %4290 = vadd.xlane.f32.xlu0 %v4289
        %v4291 = vpop.xlane.xlu0 %4290
        %v4292 = vrcp.pop %v4291
        %v4293 = vmul.f32 %v4288, %v4292
        %v4294 = vpack.c.bf16 %v4293, %v4293
        %4295 = vrot.lane.b32.xlu0 %v4122, 56
        %v4296 = vpop.permute.xlu0 %4295
        %v4298 = vsel %vm1026, %v4294, 0
        %v4301 = vsel %vm1090, %v4296, 0
        %4303 = vmatprep.subr.bf16.mxu0 0
        %4304 = vmatpush1.bf16.msra.mxu0 %v4301
        %4305 = vmatprep.subr.bf16.mxu0 0
        %4306 = vmatpush1.bf16.msra.mxu0 0
        %4307 = vmatprep.subr.bf16.mxu0 0
        %4308 = vmatpush1.bf16.msra.mxu0 0
        %4309 = vmatprep.subr.bf16.mxu0 0
        %4310 = vmatpush1.bf16.msra.mxu0 0
        %4311 = vmatprep.subr.bf16.mxu0 0
        %4312 = vmatpush1.bf16.msra.mxu0 0
        %4313 = vmatprep.subr.bf16.mxu0 0
        %4314 = vmatpush1.bf16.msra.mxu0 0
        %4315 = vmatprep.subr.bf16.mxu0 0
        %4316 = vmatpush1.bf16.msra.mxu0 0
        %4317 = vmatprep.subr.bf16.mxu0 0
        %4318 = vmatpush1.bf16.msra.mxu0 0
        %4319 = vmatprep.subr.bf16.mxu0 0
        %4320 = vmatpush1.bf16.msra.mxu0 0
        %4321 = vmatprep.subr.bf16.mxu0 0
        %4322 = vmatpush1.bf16.msra.mxu0 0
        %4323 = vmatprep.subr.bf16.mxu0 0
        %4324 = vmatpush1.bf16.msra.mxu0 0
        %4325 = vmatprep.subr.bf16.mxu0 0
        %4326 = vmatpush1.bf16.msra.mxu0 0
        %4327 = vmatprep.subr.bf16.mxu0 0
        %4328 = vmatpush1.bf16.msra.mxu0 0
        %4329 = vmatprep.subr.bf16.mxu0 0
        %4330 = vmatpush1.bf16.msra.mxu0 0
        %4331 = vmatprep.subr.bf16.mxu0 0
        %4332 = vmatpush1.bf16.msra.mxu0 0
        %4333 = vmatprep.subr.bf16.mxu0 0
        %4334 = vmatpush1.bf16.msra.mxu0 0
        %4335 = vmatprep.mubr.bf16.mxu0 0
        %4336 = vmatmul.mubr.bf16.gmra.mrb[0].mxu0 %v4298
        %v4337 = vpop.f32.mrb[0].mxu0
        %v4338 = vadd.f32 0.0, %v4337
        %v4339 = vpop.f32.mrb[0].mxu0
        %v4340 = vpop.f32.mrb[0].mxu0
        %v4341 = vpop.f32.mrb[0].mxu0
        %4342 = vdwg.mxu0
        %4343 = vrot.lane.b32.xlu0 %v4121, 112
        %v4344 = vpop.permute.xlu0 %4343
        %4345 = vrot.lane.b32.xlu0 %v4122, 80
        %v4346 = vpop.permute.xlu0 %4345
        %v4348 = vsel %vm1026, %v4344, 0
        %v4351 = vsel %vm1026, %v4346, 0
        %4353 = vmatprep.subr.bf16.mxu0 0
        %4354 = vmatpush1.bf16.xpose.msra.mxu0 %v4351
        %4355 = vmatprep.subr.bf16.mxu0 0
        %4356 = vmatpush1.bf16.xpose.msra.mxu0 0
        %4357 = vmatprep.subr.bf16.mxu0 0
        %4358 = vmatpush1.bf16.xpose.msra.mxu0 0
        %4359 = vmatprep.subr.bf16.mxu0 0
        %4360 = vmatpush1.bf16.xpose.msra.mxu0 0
        %4361 = vmatprep.subr.bf16.mxu0 0
        %4362 = vmatpush1.bf16.xpose.msra.mxu0 0
        %4363 = vmatprep.subr.bf16.mxu0 0
        %4364 = vmatpush1.bf16.xpose.msra.mxu0 0
        %4365 = vmatprep.subr.bf16.mxu0 0
        %4366 = vmatpush1.bf16.xpose.msra.mxu0 0
        %4367 = vmatprep.subr.bf16.mxu0 0
        %4368 = vmatpush1.bf16.xpose.msra.mxu0 0
        %4369 = vmatprep.subr.bf16.mxu0 0
        %4370 = vmatpush1.bf16.xpose.msra.mxu0 0
        %4371 = vmatprep.subr.bf16.mxu0 0
        %4372 = vmatpush1.bf16.xpose.msra.mxu0 0
        %4373 = vmatprep.subr.bf16.mxu0 0
        %4374 = vmatpush1.bf16.xpose.msra.mxu0 0
        %4375 = vmatprep.subr.bf16.mxu0 0
        %4376 = vmatpush1.bf16.xpose.msra.mxu0 0
        %4377 = vmatprep.subr.bf16.mxu0 0
        %4378 = vmatpush1.bf16.xpose.msra.mxu0 0
        %4379 = vmatprep.subr.bf16.mxu0 0
        %4380 = vmatpush1.bf16.xpose.msra.mxu0 0
        %4381 = vmatprep.subr.bf16.mxu0 0
        %4382 = vmatpush1.bf16.xpose.msra.mxu0 0
        %4383 = vmatprep.subr.bf16.mxu0 0
        %4384 = vmatpush1.bf16.xpose.msra.mxu0 0
        %4385 = vmatprep.mubr.bf16.mxu0 0
        %4386 = vmatmul.mubr.bf16.gmra.mrb[0].mxu0 %v4348
        %v4387 = vpop.f32.mrb[0].mxu0
        %v4388 = vadd.f32 %v949, %v4387
        %v4389 = vpop.f32.mrb[0].mxu0
        %v4390 = vpop.f32.mrb[0].mxu0
        %v4391 = vpop.f32.mrb[0].mxu0
        %4392 = vdwg.mxu0
        %v4393 = vsel %vm1026, %v4388, -inf
        %4394 = vmax.xlane.f32.xlu0 %v4393
        %v4395 = vpop.xlane.xlu0 %4394
        %v4396 = vsub.f32 %v4388, %v4395
        %v4397 = vmul.f32 %v4396, 1.442695
        %v4398 = vpow.pop %v4397
        %v4399 = vsel %vm1026, %v4398, 0.0
        %4400 = vadd.xlane.f32.xlu0 %v4399
        %v4401 = vpop.xlane.xlu0 %4400
        %v4402 = vrcp.pop %v4401
        %v4403 = vmul.f32 %v4398, %v4402
        %v4404 = vpack.c.bf16 %v4403, %v4403
        %4405 = vrot.lane.b32.xlu0 %v4122, 48
        %v4406 = vpop.permute.xlu0 %4405
        %v4408 = vsel %vm1026, %v4404, 0
        %v4411 = vsel %vm1090, %v4406, 0
        %4413 = vmatprep.subr.bf16.mxu0 0
        %4414 = vmatpush1.bf16.msra.mxu0 %v4411
        %4415 = vmatprep.subr.bf16.mxu0 0
        %4416 = vmatpush1.bf16.msra.mxu0 0
        %4417 = vmatprep.subr.bf16.mxu0 0
        %4418 = vmatpush1.bf16.msra.mxu0 0
        %4419 = vmatprep.subr.bf16.mxu0 0
        %4420 = vmatpush1.bf16.msra.mxu0 0
        %4421 = vmatprep.subr.bf16.mxu0 0
        %4422 = vmatpush1.bf16.msra.mxu0 0
        %4423 = vmatprep.subr.bf16.mxu0 0
        %4424 = vmatpush1.bf16.msra.mxu0 0
        %4425 = vmatprep.subr.bf16.mxu0 0
        %4426 = vmatpush1.bf16.msra.mxu0 0
        %4427 = vmatprep.subr.bf16.mxu0 0
        %4428 = vmatpush1.bf16.msra.mxu0 0
        %4429 = vmatprep.subr.bf16.mxu0 0
        %4430 = vmatpush1.bf16.msra.mxu0 0
        %4431 = vmatprep.subr.bf16.mxu0 0
        %4432 = vmatpush1.bf16.msra.mxu0 0
        %4433 = vmatprep.subr.bf16.mxu0 0
        %4434 = vmatpush1.bf16.msra.mxu0 0
        %4435 = vmatprep.subr.bf16.mxu0 0
        %4436 = vmatpush1.bf16.msra.mxu0 0
        %4437 = vmatprep.subr.bf16.mxu0 0
        %4438 = vmatpush1.bf16.msra.mxu0 0
        %4439 = vmatprep.subr.bf16.mxu0 0
        %4440 = vmatpush1.bf16.msra.mxu0 0
        %4441 = vmatprep.subr.bf16.mxu0 0
        %4442 = vmatpush1.bf16.msra.mxu0 0
        %4443 = vmatprep.subr.bf16.mxu0 0
        %4444 = vmatpush1.bf16.msra.mxu0 0
        %4445 = vmatprep.mubr.bf16.mxu0 0
        %4446 = vmatmul.mubr.bf16.gmra.mrb[0].mxu0 %v4408
        %v4447 = vpop.f32.mrb[0].mxu0
        %v4448 = vadd.f32 0.0, %v4447
        %v4449 = vpop.f32.mrb[0].mxu0
        %v4450 = vpop.f32.mrb[0].mxu0
        %v4451 = vpop.f32.mrb[0].mxu0
        %4452 = vdwg.mxu0
        %4453 = vrot.lane.b32.xlu0 %v4121, 104
        %v4454 = vpop.permute.xlu0 %4453
        %4455 = vrot.lane.b32.xlu0 %v4122, 72
        %v4456 = vpop.permute.xlu0 %4455
        %v4458 = vsel %vm1026, %v4454, 0
        %v4461 = vsel %vm1026, %v4456, 0
        %4463 = vmatprep.subr.bf16.mxu0 0
        %4464 = vmatpush1.bf16.xpose.msra.mxu0 %v4461
        %4465 = vmatprep.subr.bf16.mxu0 0
        %4466 = vmatpush1.bf16.xpose.msra.mxu0 0
        %4467 = vmatprep.subr.bf16.mxu0 0
        %4468 = vmatpush1.bf16.xpose.msra.mxu0 0
        %4469 = vmatprep.subr.bf16.mxu0 0
        %4470 = vmatpush1.bf16.xpose.msra.mxu0 0
        %4471 = vmatprep.subr.bf16.mxu0 0
        %4472 = vmatpush1.bf16.xpose.msra.mxu0 0
        %4473 = vmatprep.subr.bf16.mxu0 0
        %4474 = vmatpush1.bf16.xpose.msra.mxu0 0
        %4475 = vmatprep.subr.bf16.mxu0 0
        %4476 = vmatpush1.bf16.xpose.msra.mxu0 0
        %4477 = vmatprep.subr.bf16.mxu0 0
        %4478 = vmatpush1.bf16.xpose.msra.mxu0 0
        %4479 = vmatprep.subr.bf16.mxu0 0
        %4480 = vmatpush1.bf16.xpose.msra.mxu0 0
        %4481 = vmatprep.subr.bf16.mxu0 0
        %4482 = vmatpush1.bf16.xpose.msra.mxu0 0
        %4483 = vmatprep.subr.bf16.mxu0 0
        %4484 = vmatpush1.bf16.xpose.msra.mxu0 0
        %4485 = vmatprep.subr.bf16.mxu0 0
        %4486 = vmatpush1.bf16.xpose.msra.mxu0 0
        %4487 = vmatprep.subr.bf16.mxu0 0
        %4488 = vmatpush1.bf16.xpose.msra.mxu0 0
        %4489 = vmatprep.subr.bf16.mxu0 0
        %4490 = vmatpush1.bf16.xpose.msra.mxu0 0
        %4491 = vmatprep.subr.bf16.mxu0 0
        %4492 = vmatpush1.bf16.xpose.msra.mxu0 0
        %4493 = vmatprep.subr.bf16.mxu0 0
        %4494 = vmatpush1.bf16.xpose.msra.mxu0 0
        %4495 = vmatprep.mubr.bf16.mxu0 0
        %4496 = vmatmul.mubr.bf16.gmra.mrb[0].mxu0 %v4458
        %v4497 = vpop.f32.mrb[0].mxu0
        %v4498 = vadd.f32 %v949, %v4497
        %v4499 = vpop.f32.mrb[0].mxu0
        %v4500 = vpop.f32.mrb[0].mxu0
        %v4501 = vpop.f32.mrb[0].mxu0
        %4502 = vdwg.mxu0
        %v4503 = vsel %vm1026, %v4498, -inf
        %4504 = vmax.xlane.f32.xlu0 %v4503
        %v4505 = vpop.xlane.xlu0 %4504
        %v4506 = vsub.f32 %v4498, %v4505
        %v4507 = vmul.f32 %v4506, 1.442695
        %v4508 = vpow.pop %v4507
        %v4509 = vsel %vm1026, %v4508, 0.0
        %4510 = vadd.xlane.f32.xlu0 %v4509
        %v4511 = vpop.xlane.xlu0 %4510
        %v4512 = vrcp.pop %v4511
        %v4513 = vmul.f32 %v4508, %v4512
        %v4514 = vpack.c.bf16 %v4513, %v4513
        %4515 = vrot.lane.b32.xlu0 %v4122, 40
        %v4516 = vpop.permute.xlu0 %4515
        %v4518 = vsel %vm1026, %v4514, 0
        %v4521 = vsel %vm1090, %v4516, 0
        %4523 = vmatprep.subr.bf16.mxu0 0
        %4524 = vmatpush1.bf16.msra.mxu0 %v4521
        %4525 = vmatprep.subr.bf16.mxu0 0
        %4526 = vmatpush1.bf16.msra.mxu0 0
        %4527 = vmatprep.subr.bf16.mxu0 0
        %4528 = vmatpush1.bf16.msra.mxu0 0
        %4529 = vmatprep.subr.bf16.mxu0 0
        %4530 = vmatpush1.bf16.msra.mxu0 0
        %4531 = vmatprep.subr.bf16.mxu0 0
        %4532 = vmatpush1.bf16.msra.mxu0 0
        %4533 = vmatprep.subr.bf16.mxu0 0
        %4534 = vmatpush1.bf16.msra.mxu0 0
        %4535 = vmatprep.subr.bf16.mxu0 0
        %4536 = vmatpush1.bf16.msra.mxu0 0
        %4537 = vmatprep.subr.bf16.mxu0 0
        %4538 = vmatpush1.bf16.msra.mxu0 0
        %4539 = vmatprep.subr.bf16.mxu0 0
        %4540 = vmatpush1.bf16.msra.mxu0 0
        %4541 = vmatprep.subr.bf16.mxu0 0
        %4542 = vmatpush1.bf16.msra.mxu0 0
        %4543 = vmatprep.subr.bf16.mxu0 0
        %4544 = vmatpush1.bf16.msra.mxu0 0
        %4545 = vmatprep.subr.bf16.mxu0 0
        %4546 = vmatpush1.bf16.msra.mxu0 0
        %4547 = vmatprep.subr.bf16.mxu0 0
        %4548 = vmatpush1.bf16.msra.mxu0 0
        %4549 = vmatprep.subr.bf16.mxu0 0
        %4550 = vmatpush1.bf16.msra.mxu0 0
        %4551 = vmatprep.subr.bf16.mxu0 0
        %4552 = vmatpush1.bf16.msra.mxu0 0
        %4553 = vmatprep.subr.bf16.mxu0 0
        %4554 = vmatpush1.bf16.msra.mxu0 0
        %4555 = vmatprep.mubr.bf16.mxu0 0
        %4556 = vmatmul.mubr.bf16.gmra.mrb[0].mxu0 %v4518
        %v4557 = vpop.f32.mrb[0].mxu0
        %v4558 = vadd.f32 0.0, %v4557
        %v4559 = vpop.f32.mrb[0].mxu0
        %v4560 = vpop.f32.mrb[0].mxu0
        %v4561 = vpop.f32.mrb[0].mxu0
        %4562 = vdwg.mxu0
        %4564 = vrot.lane.b32.xlu0 %v4338, 8
        %v4565 = vpop.permute.xlu0 %4564
        %4568 = vrot.lane.b32.xlu0 %v4448, 16
        %v4569 = vpop.permute.xlu0 %4568
        %4572 = vrot.lane.b32.xlu0 %v4558, 24
        %v4573 = vpop.permute.xlu0 %4572
        %v4575 = vsel %vm1026, %v4227, %v4565
        %v4576 = vsel %vm1478, %v4575, %v4569
        %v4577 = vsel %vm1480, %v4576, %v4573
        %v4578 = vpack.c.bf16 %v4577, %v4577
        %s4579 = scalar_lea.vmem %s29, 16
        %v4580 = vld [vmem:[%s4579] sm:$0xf]
        %v4581 = vld [vmem:[%s4579 + $0x4] sm:$0xf]
        %v4582 = vld [vmem:[%s4579 + $0x8] sm:$0xf]
        %v4583 = vld [vmem:[%s4579 + $0xc] sm:$0xf]
        %s4584 = scalar_lea.vmem %s31, 1
        %v4585 = vld [vmem:[%s4584] sm:$0x1]
        %v4587 = vlaneseq
        %v4588 = vshrl.u32 %v4587, 7
        %v4589 = vsub.s32 0, %v4588
        %v4590 = vrot.slane %v4585, %v4589
        %v4596 = vunpack.c.l.b16 %v4580
        %v4597 = vunpack.c.l.b16 %v4581
        %v4598 = vunpack.c.l.b16 %v4582
        %v4599 = vunpack.c.l.b16 %v4583
        %v4600 = vpack.c.b16 %v4597, %v4596
        %v4601 = vpack.c.b16 %v4599, %v4598
        %v4605 = vsel %vm976, %v4578, 0
        %4607 = vmatprep.subr.bf16.mxu0 0
        %4608 = vmatpush1.bf16.msra.mxu0 %v4600
        %4609 = vmatprep.subr.bf16.mxu0 0
        %4610 = vmatpush1.bf16.msra.mxu0 %v4601
        %4611 = vmatprep.subr.bf16.mxu0 0
        %4612 = vmatpush1.bf16.msra.mxu0 0
        %4613 = vmatprep.subr.bf16.mxu0 0
        %4614 = vmatpush1.bf16.msra.mxu0 0
        %4615 = vmatprep.subr.bf16.mxu0 0
        %4616 = vmatpush1.bf16.msra.mxu0 0
        %4617 = vmatprep.subr.bf16.mxu0 0
        %4618 = vmatpush1.bf16.msra.mxu0 0
        %4619 = vmatprep.subr.bf16.mxu0 0
        %4620 = vmatpush1.bf16.msra.mxu0 0
        %4621 = vmatprep.subr.bf16.mxu0 0
        %4622 = vmatpush1.bf16.msra.mxu0 0
        %4623 = vmatprep.subr.bf16.mxu0 0
        %4624 = vmatpush1.bf16.msra.mxu0 0
        %4625 = vmatprep.subr.bf16.mxu0 0
        %4626 = vmatpush1.bf16.msra.mxu0 0
        %4627 = vmatprep.subr.bf16.mxu0 0
        %4628 = vmatpush1.bf16.msra.mxu0 0
        %4629 = vmatprep.subr.bf16.mxu0 0
        %4630 = vmatpush1.bf16.msra.mxu0 0
        %4631 = vmatprep.subr.bf16.mxu0 0
        %4632 = vmatpush1.bf16.msra.mxu0 0
        %4633 = vmatprep.subr.bf16.mxu0 0
        %4634 = vmatpush1.bf16.msra.mxu0 0
        %4635 = vmatprep.subr.bf16.mxu0 0
        %4636 = vmatpush1.bf16.msra.mxu0 0
        %4637 = vmatprep.subr.bf16.mxu0 0
        %4638 = vmatpush1.bf16.msra.mxu0 0
        %4639 = vmatprep.mubr.bf16.mxu0 0
        %4640 = vmatmul.mubr.bf16.gmra.mrb[0].mxu0 %v4605
        %v4641 = vpop.f32.mrb[0].mxu0
        %v4642 = vadd.f32 %v4590, %v4641
        %v4643 = vpop.f32.mrb[0].mxu0
        %v4644 = vpop.f32.mrb[0].mxu0
        %v4645 = vpop.f32.mrb[0].mxu0
        %4646 = vdwg.mxu0
        %v4647 = vadd.f32 %v4048, %v4642
        %v4648 = vsel %vm976, %v4647, 0.0
        %4649 = vadd.xlane.f32.xlu0 %v4648
        %v4650 = vpop.xlane.xlu0 %4649
        %v4651 = vmul.f32 %v4650, %v1553
        %v4652 = vsub.f32 %v4647, %v4651
        %v4653 = vmul.f32 %v4652, %v4652
        %v4654 = vsel %vm976, %v4653, 0.0
        %4655 = vadd.xlane.f32.xlu0 %v4654
        %v4656 = vpop.xlane.xlu0 %4655
        %v4657 = vmul.f32 %v4656, %v1553
        %v4658 = vadd.f32 %v4657, 1e-05
        %v4659 = vrsqrt.pop %v4658
        %v4660 = vmul.f32 %v4652, %v4659
        %v4661 = vlaneseq
        %v4662 = vshrl.u32 %v4661, 7
        %v4663 = vsub.s32 0, %v4662
        %v4664 = vrot.slane %v4050, %v4663
        %v4665 = vmul.f32 %v4660, %v4664
        %v4666 = vlaneseq
        %v4667 = vshrl.u32 %v4666, 7
        %v4668 = vsub.s32 1, %v4667
        %v4669 = vrot.slane %v4050, %v4668
        %v4670 = vadd.f32 %v4665, %v4669
        %v4671 = vpack.c.bf16 %v4670, %v4670
        %s4672 = scalar_lea.vmem %s33, 16
        %v4673 = vld [vmem:[%s4672] sm:$0xf]
        %v4674 = vld [vmem:[%s4672 + $0x4] sm:$0xf]
        %v4675 = vld [vmem:[%s4672 + $0x8] sm:$0xf]
        %v4676 = vld [vmem:[%s4672 + $0xc] sm:$0xf]
        %s4677 = scalar_lea.vmem %s35, 1
        %v4678 = vld [vmem:[%s4677] sm:$0x1]
        %v4680 = vlaneseq
        %v4681 = vshrl.u32 %v4680, 7
        %v4682 = vsub.s32 0, %v4681
        %v4683 = vrot.slane %v4678, %v4682
        %v4689 = vunpack.c.l.b16 %v4673
        %v4690 = vunpack.c.l.b16 %v4674
        %v4691 = vunpack.c.l.b16 %v4675
        %v4692 = vunpack.c.l.b16 %v4676
        %v4693 = vpack.c.b16 %v4690, %v4689
        %v4694 = vpack.c.b16 %v4692, %v4691
        %v4698 = vsel %vm976, %v4671, 0
        %4700 = vmatprep.subr.bf16.mxu0 0
        %4701 = vmatpush1.bf16.msra.mxu0 %v4693
        %4702 = vmatprep.subr.bf16.mxu0 0
        %4703 = vmatpush1.bf16.msra.mxu0 %v4694
        %4704 = vmatprep.subr.bf16.mxu0 0
        %4705 = vmatpush1.bf16.msra.mxu0 0
        %4706 = vmatprep.subr.bf16.mxu0 0
        %4707 = vmatpush1.bf16.msra.mxu0 0
        %4708 = vmatprep.subr.bf16.mxu0 0
        %4709 = vmatpush1.bf16.msra.mxu0 0
        %4710 = vmatprep.subr.bf16.mxu0 0
        %4711 = vmatpush1.bf16.msra.mxu0 0
        %4712 = vmatprep.subr.bf16.mxu0 0
        %4713 = vmatpush1.bf16.msra.mxu0 0
        %4714 = vmatprep.subr.bf16.mxu0 0
        %4715 = vmatpush1.bf16.msra.mxu0 0
        %4716 = vmatprep.subr.bf16.mxu0 0
        %4717 = vmatpush1.bf16.msra.mxu0 0
        %4718 = vmatprep.subr.bf16.mxu0 0
        %4719 = vmatpush1.bf16.msra.mxu0 0
        %4720 = vmatprep.subr.bf16.mxu0 0
        %4721 = vmatpush1.bf16.msra.mxu0 0
        %4722 = vmatprep.subr.bf16.mxu0 0
        %4723 = vmatpush1.bf16.msra.mxu0 0
        %4724 = vmatprep.subr.bf16.mxu0 0
        %4725 = vmatpush1.bf16.msra.mxu0 0
        %4726 = vmatprep.subr.bf16.mxu0 0
        %4727 = vmatpush1.bf16.msra.mxu0 0
        %4728 = vmatprep.subr.bf16.mxu0 0
        %4729 = vmatpush1.bf16.msra.mxu0 0
        %4730 = vmatprep.subr.bf16.mxu0 0
        %4731 = vmatpush1.bf16.msra.mxu0 0
        %4732 = vmatprep.mubr.bf16.mxu0 0
        %4733 = vmatmul.mubr.bf16.gmra.mrb[0].mxu0 %v4698
        %v4734 = vpop.f32.mrb[0].mxu0
        %v4735 = vadd.f32 %v4683, %v4734
        %v4736 = vpop.f32.mrb[0].mxu0
        %v4737 = vpop.f32.mrb[0].mxu0
        %v4738 = vpop.f32.mrb[0].mxu0
        %4739 = vdwg.mxu0
        %s4740 = scalar_lea.vmem %s37, 16
        %v4741 = vld [vmem:[%s4740] sm:$0xf]
        %v4742 = vld [vmem:[%s4740 + $0x4] sm:$0xf]
        %v4743 = vld [vmem:[%s4740 + $0x8] sm:$0xf]
        %v4744 = vld [vmem:[%s4740 + $0xc] sm:$0xf]
        %s4745 = scalar_lea.vmem %s39, 1
        %v4746 = vld [vmem:[%s4745] sm:$0x1]
        %v4748 = vlaneseq
        %v4749 = vshrl.u32 %v4748, 7
        %v4750 = vsub.s32 0, %v4749
        %v4751 = vrot.slane %v4746, %v4750
        %v4757 = vunpack.c.l.b16 %v4741
        %v4758 = vunpack.c.l.b16 %v4742
        %v4759 = vunpack.c.l.b16 %v4743
        %v4760 = vunpack.c.l.b16 %v4744
        %v4761 = vpack.c.b16 %v4758, %v4757
        %v4762 = vpack.c.b16 %v4760, %v4759
        %4765 = vmatprep.subr.bf16.mxu0 0
        %4766 = vmatpush1.bf16.msra.mxu0 %v4761
        %4767 = vmatprep.subr.bf16.mxu0 0
        %4768 = vmatpush1.bf16.msra.mxu0 %v4762
        %4769 = vmatprep.subr.bf16.mxu0 0
        %4770 = vmatpush1.bf16.msra.mxu0 0
        %4771 = vmatprep.subr.bf16.mxu0 0
        %4772 = vmatpush1.bf16.msra.mxu0 0
        %4773 = vmatprep.subr.bf16.mxu0 0
        %4774 = vmatpush1.bf16.msra.mxu0 0
        %4775 = vmatprep.subr.bf16.mxu0 0
        %4776 = vmatpush1.bf16.msra.mxu0 0
        %4777 = vmatprep.subr.bf16.mxu0 0
        %4778 = vmatpush1.bf16.msra.mxu0 0
        %4779 = vmatprep.subr.bf16.mxu0 0
        %4780 = vmatpush1.bf16.msra.mxu0 0
        %4781 = vmatprep.subr.bf16.mxu0 0
        %4782 = vmatpush1.bf16.msra.mxu0 0
        %4783 = vmatprep.subr.bf16.mxu0 0
        %4784 = vmatpush1.bf16.msra.mxu0 0
        %4785 = vmatprep.subr.bf16.mxu0 0
        %4786 = vmatpush1.bf16.msra.mxu0 0
        %4787 = vmatprep.subr.bf16.mxu0 0
        %4788 = vmatpush1.bf16.msra.mxu0 0
        %4789 = vmatprep.subr.bf16.mxu0 0
        %4790 = vmatpush1.bf16.msra.mxu0 0
        %4791 = vmatprep.subr.bf16.mxu0 0
        %4792 = vmatpush1.bf16.msra.mxu0 0
        %4793 = vmatprep.subr.bf16.mxu0 0
        %4794 = vmatpush1.bf16.msra.mxu0 0
        %4795 = vmatprep.subr.bf16.mxu0 0
        %4796 = vmatpush1.bf16.msra.mxu0 0
        %4797 = vmatprep.mubr.bf16.mxu0 0
        %4798 = vmatmul.mubr.bf16.gmra.mrb[0].mxu0 %v3285
        %v4799 = vpop.f32.mrb[0].mxu0
        %v4800 = vadd.f32 %v4751, %v4799
        %v4801 = vpop.f32.mrb[0].mxu0
        %v4802 = vpop.f32.mrb[0].mxu0
        %v4803 = vpop.f32.mrb[0].mxu0
        %4804 = vdwg.mxu0
        %v4805 = vmul.f32 %v4735, 0.35355338
        %v4806 = vpack.c.bf16 %v4805, %v4805
        %v4807 = vpack.c.bf16 %v4800, %v4800
        %v4809 = vsel %vm1026, %v4806, 0
        %v4812 = vsel %vm1026, %v4807, 0
        %4814 = vmatprep.subr.bf16.mxu0 0
        %4815 = vmatpush1.bf16.xpose.msra.mxu0 %v4812
        %4816 = vmatprep.subr.bf16.mxu0 0
        %4817 = vmatpush1.bf16.xpose.msra.mxu0 0
        %4818 = vmatprep.subr.bf16.mxu0 0
        %4819 = vmatpush1.bf16.xpose.msra.mxu0 0
        %4820 = vmatprep.subr.bf16.mxu0 0
        %4821 = vmatpush1.bf16.xpose.msra.mxu0 0
        %4822 = vmatprep.subr.bf16.mxu0 0
        %4823 = vmatpush1.bf16.xpose.msra.mxu0 0
        %4824 = vmatprep.subr.bf16.mxu0 0
        %4825 = vmatpush1.bf16.xpose.msra.mxu0 0
        %4826 = vmatprep.subr.bf16.mxu0 0
        %4827 = vmatpush1.bf16.xpose.msra.mxu0 0
        %4828 = vmatprep.subr.bf16.mxu0 0
        %4829 = vmatpush1.bf16.xpose.msra.mxu0 0
        %4830 = vmatprep.subr.bf16.mxu0 0
        %4831 = vmatpush1.bf16.xpose.msra.mxu0 0
        %4832 = vmatprep.subr.bf16.mxu0 0
        %4833 = vmatpush1.bf16.xpose.msra.mxu0 0
        %4834 = vmatprep.subr.bf16.mxu0 0
        %4835 = vmatpush1.bf16.xpose.msra.mxu0 0
        %4836 = vmatprep.subr.bf16.mxu0 0
        %4837 = vmatpush1.bf16.xpose.msra.mxu0 0
        %4838 = vmatprep.subr.bf16.mxu0 0
        %4839 = vmatpush1.bf16.xpose.msra.mxu0 0
        %4840 = vmatprep.subr.bf16.mxu0 0
        %4841 = vmatpush1.bf16.xpose.msra.mxu0 0
        %4842 = vmatprep.subr.bf16.mxu0 0
        %4843 = vmatpush1.bf16.xpose.msra.mxu0 0
        %4844 = vmatprep.subr.bf16.mxu0 0
        %4845 = vmatpush1.bf16.xpose.msra.mxu0 0
        %4846 = vmatprep.mubr.bf16.mxu0 0
        %4847 = vmatmul.mubr.bf16.gmra.mrb[0].mxu0 %v4809
        %v4848 = vpop.f32.mrb[0].mxu0
        %v4849 = vadd.f32 0.0, %v4848
        %v4850 = vpop.f32.mrb[0].mxu0
        %v4851 = vpop.f32.mrb[0].mxu0
        %v4852 = vpop.f32.mrb[0].mxu0
        %4853 = vdwg.mxu0
        %v4854 = vsel %vm1026, %v4849, -inf
        %4855 = vmax.xlane.f32.xlu0 %v4854
        %v4856 = vpop.xlane.xlu0 %4855
        %v4857 = vsub.f32 %v4849, %v4856
        %v4858 = vmul.f32 %v4857, 1.442695
        %v4859 = vpow.pop %v4858
        %v4860 = vsel %vm1026, %v4859, 0.0
        %4861 = vadd.xlane.f32.xlu0 %v4860
        %v4862 = vpop.xlane.xlu0 %4861
        %v4863 = vrcp.pop %v4862
        %v4864 = vmul.f32 %v4859, %v4863
        %v4865 = vpack.c.bf16 %v4864, %v4864
        %4867 = vrot.lane.b32.xlu0 %v4807, 96
        %v4868 = vpop.permute.xlu0 %4867
        %v4870 = vsel %vm1026, %v4865, 0
        %v4873 = vsel %vm1090, %v4868, 0
        %4875 = vmatprep.subr.bf16.mxu0 0
        %4876 = vmatpush1.bf16.msra.mxu0 %v4873
        %4877 = vmatprep.subr.bf16.mxu0 0
        %4878 = vmatpush1.bf16.msra.mxu0 0
        %4879 = vmatprep.subr.bf16.mxu0 0
        %4880 = vmatpush1.bf16.msra.mxu0 0
        %4881 = vmatprep.subr.bf16.mxu0 0
        %4882 = vmatpush1.bf16.msra.mxu0 0
        %4883 = vmatprep.subr.bf16.mxu0 0
        %4884 = vmatpush1.bf16.msra.mxu0 0
        %4885 = vmatprep.subr.bf16.mxu0 0
        %4886 = vmatpush1.bf16.msra.mxu0 0
        %4887 = vmatprep.subr.bf16.mxu0 0
        %4888 = vmatpush1.bf16.msra.mxu0 0
        %4889 = vmatprep.subr.bf16.mxu0 0
        %4890 = vmatpush1.bf16.msra.mxu0 0
        %4891 = vmatprep.subr.bf16.mxu0 0
        %4892 = vmatpush1.bf16.msra.mxu0 0
        %4893 = vmatprep.subr.bf16.mxu0 0
        %4894 = vmatpush1.bf16.msra.mxu0 0
        %4895 = vmatprep.subr.bf16.mxu0 0
        %4896 = vmatpush1.bf16.msra.mxu0 0
        %4897 = vmatprep.subr.bf16.mxu0 0
        %4898 = vmatpush1.bf16.msra.mxu0 0
        %4899 = vmatprep.subr.bf16.mxu0 0
        %4900 = vmatpush1.bf16.msra.mxu0 0
        %4901 = vmatprep.subr.bf16.mxu0 0
        %4902 = vmatpush1.bf16.msra.mxu0 0
        %4903 = vmatprep.subr.bf16.mxu0 0
        %4904 = vmatpush1.bf16.msra.mxu0 0
        %4905 = vmatprep.subr.bf16.mxu0 0
        %4906 = vmatpush1.bf16.msra.mxu0 0
        %4907 = vmatprep.mubr.bf16.mxu0 0
        %4908 = vmatmul.mubr.bf16.gmra.mrb[0].mxu0 %v4870
        %v4909 = vpop.f32.mrb[0].mxu0
        %v4910 = vadd.f32 0.0, %v4909
        %v4911 = vpop.f32.mrb[0].mxu0
        %v4912 = vpop.f32.mrb[0].mxu0
        %v4913 = vpop.f32.mrb[0].mxu0
        %4914 = vdwg.mxu0
        %4916 = vrot.lane.b32.xlu0 %v4806, 120
        %v4917 = vpop.permute.xlu0 %4916
        %4918 = vrot.lane.b32.xlu0 %v4807, 120
        %v4919 = vpop.permute.xlu0 %4918
        %v4921 = vsel %vm1026, %v4917, 0
        %v4924 = vsel %vm1026, %v4919, 0
        %4926 = vmatprep.subr.bf16.mxu0 0
        %4927 = vmatpush1.bf16.xpose.msra.mxu0 %v4924
        %4928 = vmatprep.subr.bf16.mxu0 0
        %4929 = vmatpush1.bf16.xpose.msra.mxu0 0
        %4930 = vmatprep.subr.bf16.mxu0 0
        %4931 = vmatpush1.bf16.xpose.msra.mxu0 0
        %4932 = vmatprep.subr.bf16.mxu0 0
        %4933 = vmatpush1.bf16.xpose.msra.mxu0 0
        %4934 = vmatprep.subr.bf16.mxu0 0
        %4935 = vmatpush1.bf16.xpose.msra.mxu0 0
        %4936 = vmatprep.subr.bf16.mxu0 0
        %4937 = vmatpush1.bf16.xpose.msra.mxu0 0
        %4938 = vmatprep.subr.bf16.mxu0 0
        %4939 = vmatpush1.bf16.xpose.msra.mxu0 0
        %4940 = vmatprep.subr.bf16.mxu0 0
        %4941 = vmatpush1.bf16.xpose.msra.mxu0 0
        %4942 = vmatprep.subr.bf16.mxu0 0
        %4943 = vmatpush1.bf16.xpose.msra.mxu0 0
        %4944 = vmatprep.subr.bf16.mxu0 0
        %4945 = vmatpush1.bf16.xpose.msra.mxu0 0
        %4946 = vmatprep.subr.bf16.mxu0 0
        %4947 = vmatpush1.bf16.xpose.msra.mxu0 0
        %4948 = vmatprep.subr.bf16.mxu0 0
        %4949 = vmatpush1.bf16.xpose.msra.mxu0 0
        %4950 = vmatprep.subr.bf16.mxu0 0
        %4951 = vmatpush1.bf16.xpose.msra.mxu0 0
        %4952 = vmatprep.subr.bf16.mxu0 0
        %4953 = vmatpush1.bf16.xpose.msra.mxu0 0
        %4954 = vmatprep.subr.bf16.mxu0 0
        %4955 = vmatpush1.bf16.xpose.msra.mxu0 0
        %4956 = vmatprep.subr.bf16.mxu0 0
        %4957 = vmatpush1.bf16.xpose.msra.mxu0 0
        %4958 = vmatprep.mubr.bf16.mxu0 0
        %4959 = vmatmul.mubr.bf16.gmra.mrb[0].mxu0 %v4921
        %v4960 = vpop.f32.mrb[0].mxu0
        %v4961 = vadd.f32 0.0, %v4960
        %v4962 = vpop.f32.mrb[0].mxu0
        %v4963 = vpop.f32.mrb[0].mxu0
        %v4964 = vpop.f32.mrb[0].mxu0
        %4965 = vdwg.mxu0
        %v4966 = vsel %vm1026, %v4961, -inf
        %4967 = vmax.xlane.f32.xlu0 %v4966
        %v4968 = vpop.xlane.xlu0 %4967
        %v4969 = vsub.f32 %v4961, %v4968
        %v4970 = vmul.f32 %v4969, 1.442695
        %v4971 = vpow.pop %v4970
        %v4972 = vsel %vm1026, %v4971, 0.0
        %4973 = vadd.xlane.f32.xlu0 %v4972
        %v4974 = vpop.xlane.xlu0 %4973
        %v4975 = vrcp.pop %v4974
        %v4976 = vmul.f32 %v4971, %v4975
        %v4977 = vpack.c.bf16 %v4976, %v4976
        %4978 = vrot.lane.b32.xlu0 %v4807, 88
        %v4979 = vpop.permute.xlu0 %4978
        %v4981 = vsel %vm1026, %v4977, 0
        %v4984 = vsel %vm1090, %v4979, 0
        %4986 = vmatprep.subr.bf16.mxu0 0
        %4987 = vmatpush1.bf16.msra.mxu0 %v4984
        %4988 = vmatprep.subr.bf16.mxu0 0
        %4989 = vmatpush1.bf16.msra.mxu0 0
        %4990 = vmatprep.subr.bf16.mxu0 0
        %4991 = vmatpush1.bf16.msra.mxu0 0
        %4992 = vmatprep.subr.bf16.mxu0 0
        %4993 = vmatpush1.bf16.msra.mxu0 0
        %4994 = vmatprep.subr.bf16.mxu0 0
        %4995 = vmatpush1.bf16.msra.mxu0 0
        %4996 = vmatprep.subr.bf16.mxu0 0
        %4997 = vmatpush1.bf16.msra.mxu0 0
        %4998 = vmatprep.subr.bf16.mxu0 0
        %4999 = vmatpush1.bf16.msra.mxu0 0
        %5000 = vmatprep.subr.bf16.mxu0 0
        %5001 = vmatpush1.bf16.msra.mxu0 0
        %5002 = vmatprep.subr.bf16.mxu0 0
        %5003 = vmatpush1.bf16.msra.mxu0 0
        %5004 = vmatprep.subr.bf16.mxu0 0
        %5005 = vmatpush1.bf16.msra.mxu0 0
        %5006 = vmatprep.subr.bf16.mxu0 0
        %5007 = vmatpush1.bf16.msra.mxu0 0
        %5008 = vmatprep.subr.bf16.mxu0 0
        %5009 = vmatpush1.bf16.msra.mxu0 0
        %5010 = vmatprep.subr.bf16.mxu0 0
        %5011 = vmatpush1.bf16.msra.mxu0 0
        %5012 = vmatprep.subr.bf16.mxu0 0
        %5013 = vmatpush1.bf16.msra.mxu0 0
        %5014 = vmatprep.subr.bf16.mxu0 0
        %5015 = vmatpush1.bf16.msra.mxu0 0
        %5016 = vmatprep.subr.bf16.mxu0 0
        %5017 = vmatpush1.bf16.msra.mxu0 0
        %5018 = vmatprep.mubr.bf16.mxu0 0
        %5019 = vmatmul.mubr.bf16.gmra.mrb[0].mxu0 %v4981
        %v5020 = vpop.f32.mrb[0].mxu0
        %v5021 = vadd.f32 0.0, %v5020
        %v5022 = vpop.f32.mrb[0].mxu0
        %v5023 = vpop.f32.mrb[0].mxu0
        %v5024 = vpop.f32.mrb[0].mxu0
        %5025 = vdwg.mxu0
        %5026 = vrot.lane.b32.xlu0 %v4806, 112
        %v5027 = vpop.permute.xlu0 %5026
        %5028 = vrot.lane.b32.xlu0 %v4807, 112
        %v5029 = vpop.permute.xlu0 %5028
        %v5031 = vsel %vm1026, %v5027, 0
        %v5034 = vsel %vm1026, %v5029, 0
        %5036 = vmatprep.subr.bf16.mxu0 0
        %5037 = vmatpush1.bf16.xpose.msra.mxu0 %v5034
        %5038 = vmatprep.subr.bf16.mxu0 0
        %5039 = vmatpush1.bf16.xpose.msra.mxu0 0
        %5040 = vmatprep.subr.bf16.mxu0 0
        %5041 = vmatpush1.bf16.xpose.msra.mxu0 0
        %5042 = vmatprep.subr.bf16.mxu0 0
        %5043 = vmatpush1.bf16.xpose.msra.mxu0 0
        %5044 = vmatprep.subr.bf16.mxu0 0
        %5045 = vmatpush1.bf16.xpose.msra.mxu0 0
        %5046 = vmatprep.subr.bf16.mxu0 0
        %5047 = vmatpush1.bf16.xpose.msra.mxu0 0
        %5048 = vmatprep.subr.bf16.mxu0 0
        %5049 = vmatpush1.bf16.xpose.msra.mxu0 0
        %5050 = vmatprep.subr.bf16.mxu0 0
        %5051 = vmatpush1.bf16.xpose.msra.mxu0 0
        %5052 = vmatprep.subr.bf16.mxu0 0
        %5053 = vmatpush1.bf16.xpose.msra.mxu0 0
        %5054 = vmatprep.subr.bf16.mxu0 0
        %5055 = vmatpush1.bf16.xpose.msra.mxu0 0
        %5056 = vmatprep.subr.bf16.mxu0 0
        %5057 = vmatpush1.bf16.xpose.msra.mxu0 0
        %5058 = vmatprep.subr.bf16.mxu0 0
        %5059 = vmatpush1.bf16.xpose.msra.mxu0 0
        %5060 = vmatprep.subr.bf16.mxu0 0
        %5061 = vmatpush1.bf16.xpose.msra.mxu0 0
        %5062 = vmatprep.subr.bf16.mxu0 0
        %5063 = vmatpush1.bf16.xpose.msra.mxu0 0
        %5064 = vmatprep.subr.bf16.mxu0 0
        %5065 = vmatpush1.bf16.xpose.msra.mxu0 0
        %5066 = vmatprep.subr.bf16.mxu0 0
        %5067 = vmatpush1.bf16.xpose.msra.mxu0 0
        %5068 = vmatprep.mubr.bf16.mxu0 0
        %5069 = vmatmul.mubr.bf16.gmra.mrb[0].mxu0 %v5031
        %v5070 = vpop.f32.mrb[0].mxu0
        %v5071 = vadd.f32 0.0, %v5070
        %v5072 = vpop.f32.mrb[0].mxu0
        %v5073 = vpop.f32.mrb[0].mxu0
        %v5074 = vpop.f32.mrb[0].mxu0
        %5075 = vdwg.mxu0
        %v5076 = vsel %vm1026, %v5071, -inf
        %5077 = vmax.xlane.f32.xlu0 %v5076
        %v5078 = vpop.xlane.xlu0 %5077
        %v5079 = vsub.f32 %v5071, %v5078
        %v5080 = vmul.f32 %v5079, 1.442695
        %v5081 = vpow.pop %v5080
        %v5082 = vsel %vm1026, %v5081, 0.0
        %5083 = vadd.xlane.f32.xlu0 %v5082
        %v5084 = vpop.xlane.xlu0 %5083
        %v5085 = vrcp.pop %v5084
        %v5086 = vmul.f32 %v5081, %v5085
        %v5087 = vpack.c.bf16 %v5086, %v5086
        %5088 = vrot.lane.b32.xlu0 %v4807, 80
        %v5089 = vpop.permute.xlu0 %5088
        %v5091 = vsel %vm1026, %v5087, 0
        %v5094 = vsel %vm1090, %v5089, 0
        %5096 = vmatprep.subr.bf16.mxu0 0
        %5097 = vmatpush1.bf16.msra.mxu0 %v5094
        %5098 = vmatprep.subr.bf16.mxu0 0
        %5099 = vmatpush1.bf16.msra.mxu0 0
        %5100 = vmatprep.subr.bf16.mxu0 0
        %5101 = vmatpush1.bf16.msra.mxu0 0
        %5102 = vmatprep.subr.bf16.mxu0 0
        %5103 = vmatpush1.bf16.msra.mxu0 0
        %5104 = vmatprep.subr.bf16.mxu0 0
        %5105 = vmatpush1.bf16.msra.mxu0 0
        %5106 = vmatprep.subr.bf16.mxu0 0
        %5107 = vmatpush1.bf16.msra.mxu0 0
        %5108 = vmatprep.subr.bf16.mxu0 0
        %5109 = vmatpush1.bf16.msra.mxu0 0
        %5110 = vmatprep.subr.bf16.mxu0 0
        %5111 = vmatpush1.bf16.msra.mxu0 0
        %5112 = vmatprep.subr.bf16.mxu0 0
        %5113 = vmatpush1.bf16.msra.mxu0 0
        %5114 = vmatprep.subr.bf16.mxu0 0
        %5115 = vmatpush1.bf16.msra.mxu0 0
        %5116 = vmatprep.subr.bf16.mxu0 0
        %5117 = vmatpush1.bf16.msra.mxu0 0
        %5118 = vmatprep.subr.bf16.mxu0 0
        %5119 = vmatpush1.bf16.msra.mxu0 0
        %5120 = vmatprep.subr.bf16.mxu0 0
        %5121 = vmatpush1.bf16.msra.mxu0 0
        %5122 = vmatprep.subr.bf16.mxu0 0
        %5123 = vmatpush1.bf16.msra.mxu0 0
        %5124 = vmatprep.subr.bf16.mxu0 0
        %5125 = vmatpush1.bf16.msra.mxu0 0
        %5126 = vmatprep.subr.bf16.mxu0 0
        %5127 = vmatpush1.bf16.msra.mxu0 0
        %5128 = vmatprep.mubr.bf16.mxu0 0
        %5129 = vmatmul.mubr.bf16.gmra.mrb[0].mxu0 %v5091
        %v5130 = vpop.f32.mrb[0].mxu0
        %v5131 = vadd.f32 0.0, %v5130
        %v5132 = vpop.f32.mrb[0].mxu0
        %v5133 = vpop.f32.mrb[0].mxu0
        %v5134 = vpop.f32.mrb[0].mxu0
        %5135 = vdwg.mxu0
        %5136 = vrot.lane.b32.xlu0 %v4806, 104
        %v5137 = vpop.permute.xlu0 %5136
        %5138 = vrot.lane.b32.xlu0 %v4807, 104
        %v5139 = vpop.permute.xlu0 %5138
        %v5141 = vsel %vm1026, %v5137, 0
        %v5144 = vsel %vm1026, %v5139, 0
        %5146 = vmatprep.subr.bf16.mxu0 0
        %5147 = vmatpush1.bf16.xpose.msra.mxu0 %v5144
        %5148 = vmatprep.subr.bf16.mxu0 0
        %5149 = vmatpush1.bf16.xpose.msra.mxu0 0
        %5150 = vmatprep.subr.bf16.mxu0 0
        %5151 = vmatpush1.bf16.xpose.msra.mxu0 0
        %5152 = vmatprep.subr.bf16.mxu0 0
        %5153 = vmatpush1.bf16.xpose.msra.mxu0 0
        %5154 = vmatprep.subr.bf16.mxu0 0
        %5155 = vmatpush1.bf16.xpose.msra.mxu0 0
        %5156 = vmatprep.subr.bf16.mxu0 0
        %5157 = vmatpush1.bf16.xpose.msra.mxu0 0
        %5158 = vmatprep.subr.bf16.mxu0 0
        %5159 = vmatpush1.bf16.xpose.msra.mxu0 0
        %5160 = vmatprep.subr.bf16.mxu0 0
        %5161 = vmatpush1.bf16.xpose.msra.mxu0 0
        %5162 = vmatprep.subr.bf16.mxu0 0
        %5163 = vmatpush1.bf16.xpose.msra.mxu0 0
        %5164 = vmatprep.subr.bf16.mxu0 0
        %5165 = vmatpush1.bf16.xpose.msra.mxu0 0
        %5166 = vmatprep.subr.bf16.mxu0 0
        %5167 = vmatpush1.bf16.xpose.msra.mxu0 0
        %5168 = vmatprep.subr.bf16.mxu0 0
        %5169 = vmatpush1.bf16.xpose.msra.mxu0 0
        %5170 = vmatprep.subr.bf16.mxu0 0
        %5171 = vmatpush1.bf16.xpose.msra.mxu0 0
        %5172 = vmatprep.subr.bf16.mxu0 0
        %5173 = vmatpush1.bf16.xpose.msra.mxu0 0
        %5174 = vmatprep.subr.bf16.mxu0 0
        %5175 = vmatpush1.bf16.xpose.msra.mxu0 0
        %5176 = vmatprep.subr.bf16.mxu0 0
        %5177 = vmatpush1.bf16.xpose.msra.mxu0 0
        %5178 = vmatprep.mubr.bf16.mxu0 0
        %5179 = vmatmul.mubr.bf16.gmra.mrb[0].mxu0 %v5141
        %v5180 = vpop.f32.mrb[0].mxu0
        %v5181 = vadd.f32 0.0, %v5180
        %v5182 = vpop.f32.mrb[0].mxu0
        %v5183 = vpop.f32.mrb[0].mxu0
        %v5184 = vpop.f32.mrb[0].mxu0
        %5185 = vdwg.mxu0
        %v5186 = vsel %vm1026, %v5181, -inf
        %5187 = vmax.xlane.f32.xlu0 %v5186
        %v5188 = vpop.xlane.xlu0 %5187
        %v5189 = vsub.f32 %v5181, %v5188
        %v5190 = vmul.f32 %v5189, 1.442695
        %v5191 = vpow.pop %v5190
        %v5192 = vsel %vm1026, %v5191, 0.0
        %5193 = vadd.xlane.f32.xlu0 %v5192
        %v5194 = vpop.xlane.xlu0 %5193
        %v5195 = vrcp.pop %v5194
        %v5196 = vmul.f32 %v5191, %v5195
        %v5197 = vpack.c.bf16 %v5196, %v5196
        %5198 = vrot.lane.b32.xlu0 %v4807, 72
        %v5199 = vpop.permute.xlu0 %5198
        %v5201 = vsel %vm1026, %v5197, 0
        %v5204 = vsel %vm1090, %v5199, 0
        %5206 = vmatprep.subr.bf16.mxu0 0
        %5207 = vmatpush1.bf16.msra.mxu0 %v5204
        %5208 = vmatprep.subr.bf16.mxu0 0
        %5209 = vmatpush1.bf16.msra.mxu0 0
        %5210 = vmatprep.subr.bf16.mxu0 0
        %5211 = vmatpush1.bf16.msra.mxu0 0
        %5212 = vmatprep.subr.bf16.mxu0 0
        %5213 = vmatpush1.bf16.msra.mxu0 0
        %5214 = vmatprep.subr.bf16.mxu0 0
        %5215 = vmatpush1.bf16.msra.mxu0 0
        %5216 = vmatprep.subr.bf16.mxu0 0
        %5217 = vmatpush1.bf16.msra.mxu0 0
        %5218 = vmatprep.subr.bf16.mxu0 0
        %5219 = vmatpush1.bf16.msra.mxu0 0
        %5220 = vmatprep.subr.bf16.mxu0 0
        %5221 = vmatpush1.bf16.msra.mxu0 0
        %5222 = vmatprep.subr.bf16.mxu0 0
        %5223 = vmatpush1.bf16.msra.mxu0 0
        %5224 = vmatprep.subr.bf16.mxu0 0
        %5225 = vmatpush1.bf16.msra.mxu0 0
        %5226 = vmatprep.subr.bf16.mxu0 0
        %5227 = vmatpush1.bf16.msra.mxu0 0
        %5228 = vmatprep.subr.bf16.mxu0 0
        %5229 = vmatpush1.bf16.msra.mxu0 0
        %5230 = vmatprep.subr.bf16.mxu0 0
        %5231 = vmatpush1.bf16.msra.mxu0 0
        %5232 = vmatprep.subr.bf16.mxu0 0
        %5233 = vmatpush1.bf16.msra.mxu0 0
        %5234 = vmatprep.subr.bf16.mxu0 0
        %5235 = vmatpush1.bf16.msra.mxu0 0
        %5236 = vmatprep.subr.bf16.mxu0 0
        %5237 = vmatpush1.bf16.msra.mxu0 0
        %5238 = vmatprep.mubr.bf16.mxu0 0
        %5239 = vmatmul.mubr.bf16.gmra.mrb[0].mxu0 %v5201
        %v5240 = vpop.f32.mrb[0].mxu0
        %v5241 = vadd.f32 0.0, %v5240
        %v5242 = vpop.f32.mrb[0].mxu0
        %v5243 = vpop.f32.mrb[0].mxu0
        %v5244 = vpop.f32.mrb[0].mxu0
        %5245 = vdwg.mxu0
        %5247 = vrot.lane.b32.xlu0 %v5021, 8
        %v5248 = vpop.permute.xlu0 %5247
        %5251 = vrot.lane.b32.xlu0 %v5131, 16
        %v5252 = vpop.permute.xlu0 %5251
        %5255 = vrot.lane.b32.xlu0 %v5241, 24
        %v5256 = vpop.permute.xlu0 %5255
        %v5258 = vsel %vm1026, %v4910, %v5248
        %v5259 = vsel %vm1478, %v5258, %v5252
        %v5260 = vsel %vm1480, %v5259, %v5256
        %v5261 = vpack.c.bf16 %v5260, %v5260
        %s5262 = scalar_lea.vmem %s41, 16
        %v5263 = vld [vmem:[%s5262] sm:$0xf]
        %v5264 = vld [vmem:[%s5262 + $0x4] sm:$0xf]
        %v5265 = vld [vmem:[%s5262 + $0x8] sm:$0xf]
        %v5266 = vld [vmem:[%s5262 + $0xc] sm:$0xf]
        %s5267 = scalar_lea.vmem %s43, 1
        %v5268 = vld [vmem:[%s5267] sm:$0x1]
        %v5270 = vlaneseq
        %v5271 = vshrl.u32 %v5270, 7
        %v5272 = vsub.s32 0, %v5271
        %v5273 = vrot.slane %v5268, %v5272
        %v5279 = vunpack.c.l.b16 %v5263
        %v5280 = vunpack.c.l.b16 %v5264
        %v5281 = vunpack.c.l.b16 %v5265
        %v5282 = vunpack.c.l.b16 %v5266
        %v5283 = vpack.c.b16 %v5280, %v5279
        %v5284 = vpack.c.b16 %v5282, %v5281
        %v5288 = vsel %vm976, %v5261, 0
        %5290 = vmatprep.subr.bf16.mxu0 0
        %5291 = vmatpush1.bf16.msra.mxu0 %v5283
        %5292 = vmatprep.subr.bf16.mxu0 0
        %5293 = vmatpush1.bf16.msra.mxu0 %v5284
        %5294 = vmatprep.subr.bf16.mxu0 0
        %5295 = vmatpush1.bf16.msra.mxu0 0
        %5296 = vmatprep.subr.bf16.mxu0 0
        %5297 = vmatpush1.bf16.msra.mxu0 0
        %5298 = vmatprep.subr.bf16.mxu0 0
        %5299 = vmatpush1.bf16.msra.mxu0 0
        %5300 = vmatprep.subr.bf16.mxu0 0
        %5301 = vmatpush1.bf16.msra.mxu0 0
        %5302 = vmatprep.subr.bf16.mxu0 0
        %5303 = vmatpush1.bf16.msra.mxu0 0
        %5304 = vmatprep.subr.bf16.mxu0 0
        %5305 = vmatpush1.bf16.msra.mxu0 0
        %5306 = vmatprep.subr.bf16.mxu0 0
        %5307 = vmatpush1.bf16.msra.mxu0 0
        %5308 = vmatprep.subr.bf16.mxu0 0
        %5309 = vmatpush1.bf16.msra.mxu0 0
        %5310 = vmatprep.subr.bf16.mxu0 0
        %5311 = vmatpush1.bf16.msra.mxu0 0
        %5312 = vmatprep.subr.bf16.mxu0 0
        %5313 = vmatpush1.bf16.msra.mxu0 0
        %5314 = vmatprep.subr.bf16.mxu0 0
        %5315 = vmatpush1.bf16.msra.mxu0 0
        %5316 = vmatprep.subr.bf16.mxu0 0
        %5317 = vmatpush1.bf16.msra.mxu0 0
        %5318 = vmatprep.subr.bf16.mxu0 0
        %5319 = vmatpush1.bf16.msra.mxu0 0
        %5320 = vmatprep.subr.bf16.mxu0 0
        %5321 = vmatpush1.bf16.msra.mxu0 0
        %5322 = vmatprep.mubr.bf16.mxu0 0
        %5323 = vmatmul.mubr.bf16.gmra.mrb[0].mxu0 %v5288
        %v5324 = vpop.f32.mrb[0].mxu0
        %v5325 = vadd.f32 %v5273, %v5324
        %v5326 = vpop.f32.mrb[0].mxu0
        %v5327 = vpop.f32.mrb[0].mxu0
        %v5328 = vpop.f32.mrb[0].mxu0
        %5329 = vdwg.mxu0
        %v5330 = vadd.f32 %v4670, %v5325
        %v5331 = vsel %vm976, %v5330, 0.0
        %5332 = vadd.xlane.f32.xlu0 %v5331
        %v5333 = vpop.xlane.xlu0 %5332
        %v5334 = vmul.f32 %v5333, %v1553
        %v5335 = vsub.f32 %v5330, %v5334
        %v5336 = vmul.f32 %v5335, %v5335
        %v5337 = vsel %vm976, %v5336, 0.0
        %5338 = vadd.xlane.f32.xlu0 %v5337
        %v5339 = vpop.xlane.xlu0 %5338
        %v5340 = vmul.f32 %v5339, %v1553
        %v5341 = vadd.f32 %v5340, 1e-05
        %v5342 = vrsqrt.pop %v5341
        %v5343 = vmul.f32 %v5335, %v5342
        %v5344 = vlaneseq
        %v5345 = vshrl.u32 %v5344, 7
        %v5346 = vsub.s32 2, %v5345
        %v5347 = vrot.slane %v4050, %v5346
        %v5348 = vmul.f32 %v5343, %v5347
        %v5349 = vlaneseq
        %v5350 = vshrl.u32 %v5349, 7
        %v5351 = vsub.s32 3, %v5350
        %v5352 = vrot.slane %v4050, %v5351
        %v5353 = vadd.f32 %v5348, %v5352
        %v5354 = vpack.c.bf16 %v5353, %v5353
        %s5355 = scalar_lea.vmem %s45, 16
        %v5356 = vld [vmem:[%s5355] sm:$0xf]
        %v5357 = vld [vmem:[%s5355 + $0x4] sm:$0xf]
        %v5358 = vld [vmem:[%s5355 + $0x8] sm:$0xf]
        %v5359 = vld [vmem:[%s5355 + $0xc] sm:$0xf]
        %s5360 = scalar_lea.vmem %s47, 1
        %v5361 = vld [vmem:[%s5360] sm:$0x1]
        %v5363 = vlaneseq
        %v5364 = vshrl.u32 %v5363, 7
        %v5365 = vsub.s32 0, %v5364
        %v5366 = vrot.slane %v5361, %v5365
        %v5372 = vunpack.c.l.b16 %v5356
        %v5373 = vunpack.c.l.b16 %v5357
        %v5374 = vunpack.c.l.b16 %v5358
        %v5375 = vunpack.c.l.b16 %v5359
        %v5376 = vpack.c.b16 %v5373, %v5372
        %v5377 = vpack.c.b16 %v5375, %v5374
        %v5381 = vsel %vm976, %v5354, 0
        %5383 = vmatprep.subr.bf16.mxu0 0
        %5384 = vmatpush1.bf16.msra.mxu0 %v5376
        %5385 = vmatprep.subr.bf16.mxu0 0
        %5386 = vmatpush1.bf16.msra.mxu0 %v5377
        %5387 = vmatprep.subr.bf16.mxu0 0
        %5388 = vmatpush1.bf16.msra.mxu0 0
        %5389 = vmatprep.subr.bf16.mxu0 0
        %5390 = vmatpush1.bf16.msra.mxu0 0
        %5391 = vmatprep.subr.bf16.mxu0 0
        %5392 = vmatpush1.bf16.msra.mxu0 0
        %5393 = vmatprep.subr.bf16.mxu0 0
        %5394 = vmatpush1.bf16.msra.mxu0 0
        %5395 = vmatprep.subr.bf16.mxu0 0
        %5396 = vmatpush1.bf16.msra.mxu0 0
        %5397 = vmatprep.subr.bf16.mxu0 0
        %5398 = vmatpush1.bf16.msra.mxu0 0
        %5399 = vmatprep.subr.bf16.mxu0 0
        %5400 = vmatpush1.bf16.msra.mxu0 0
        %5401 = vmatprep.subr.bf16.mxu0 0
        %5402 = vmatpush1.bf16.msra.mxu0 0
        %5403 = vmatprep.subr.bf16.mxu0 0
        %5404 = vmatpush1.bf16.msra.mxu0 0
        %5405 = vmatprep.subr.bf16.mxu0 0
        %5406 = vmatpush1.bf16.msra.mxu0 0
        %5407 = vmatprep.subr.bf16.mxu0 0
        %5408 = vmatpush1.bf16.msra.mxu0 0
        %5409 = vmatprep.subr.bf16.mxu0 0
        %5410 = vmatpush1.bf16.msra.mxu0 0
        %5411 = vmatprep.subr.bf16.mxu0 0
        %5412 = vmatpush1.bf16.msra.mxu0 0
        %5413 = vmatprep.subr.bf16.mxu0 0
        %5414 = vmatpush1.bf16.msra.mxu0 0
        %5415 = vmatprep.mubr.bf16.mxu0 0
        %5416 = vmatmul.mubr.bf16.gmra.mrb[0].mxu0 %v5381
        %v5417 = vpop.f32.mrb[0].mxu0
        %v5418 = vadd.f32 %v5366, %v5417
        %v5419 = vpop.f32.mrb[0].mxu0
        %v5420 = vpop.f32.mrb[0].mxu0
        %v5421 = vpop.f32.mrb[0].mxu0
        %5422 = vdwg.mxu0
        %v5423 = vmax.f32 %v5418, 0.0
        %v5424 = vpack.c.bf16 %v5423, %v5423
        %s5425 = scalar_lea.vmem %s49, 32
        %v5426 = vld [vmem:[%s5425] sm:$0xf]
        %v5427 = vld [vmem:[%s5425 + $0x4] sm:$0xf]
        %v5428 = vld [vmem:[%s5425 + $0x8] sm:$0xf]
        %v5429 = vld [vmem:[%s5425 + $0xc] sm:$0xf]
        %v5430 = vld [vmem:[%s5425 + $0x10] sm:$0xf]
        %v5431 = vld [vmem:[%s5425 + $0x14] sm:$0xf]
        %v5432 = vld [vmem:[%s5425 + $0x18] sm:$0xf]
        %v5433 = vld [vmem:[%s5425 + $0x1c] sm:$0xf]
        %s5434 = scalar_lea.vmem %s51, 1
        %v5435 = vld [vmem:[%s5434] sm:$0x1]
        %v5437 = vlaneseq
        %v5438 = vshrl.u32 %v5437, 7
        %v5439 = vsub.s32 0, %v5438
        %v5440 = vrot.slane %v5435, %v5439
        %v5450 = vunpack.c.l.b16 %v5426
        %v5451 = vunpack.c.l.b16 %v5427
        %v5452 = vunpack.c.l.b16 %v5428
        %v5453 = vunpack.c.l.b16 %v5429
        %v5454 = vunpack.c.l.b16 %v5430
        %v5455 = vunpack.c.l.b16 %v5431
        %v5456 = vunpack.c.l.b16 %v5432
        %v5457 = vunpack.c.l.b16 %v5433
        %v5458 = vpack.c.b16 %v5451, %v5450
        %v5459 = vpack.c.b16 %v5453, %v5452
        %v5460 = vpack.c.b16 %v5455, %v5454
        %v5461 = vpack.c.b16 %v5457, %v5456
        %v5467 = vsel %vm1682, %v5424, 0
        %5469 = vmatprep.subr.bf16.mxu0 0
        %5470 = vmatpush1.bf16.msra.mxu0 %v5458
        %5471 = vmatprep.subr.bf16.mxu0 0
        %5472 = vmatpush1.bf16.msra.mxu0 %v5459
        %5473 = vmatprep.subr.bf16.mxu0 0
        %5474 = vmatpush1.bf16.msra.mxu0 %v5460
        %5475 = vmatprep.subr.bf16.mxu0 0
        %5476 = vmatpush1.bf16.msra.mxu0 %v5461
        %5477 = vmatprep.subr.bf16.mxu0 0
        %5478 = vmatpush1.bf16.msra.mxu0 0
        %5479 = vmatprep.subr.bf16.mxu0 0
        %5480 = vmatpush1.bf16.msra.mxu0 0
        %5481 = vmatprep.subr.bf16.mxu0 0
        %5482 = vmatpush1.bf16.msra.mxu0 0
        %5483 = vmatprep.subr.bf16.mxu0 0
        %5484 = vmatpush1.bf16.msra.mxu0 0
        %5485 = vmatprep.subr.bf16.mxu0 0
        %5486 = vmatpush1.bf16.msra.mxu0 0
        %5487 = vmatprep.subr.bf16.mxu0 0
        %5488 = vmatpush1.bf16.msra.mxu0 0
        %5489 = vmatprep.subr.bf16.mxu0 0
        %5490 = vmatpush1.bf16.msra.mxu0 0
        %5491 = vmatprep.subr.bf16.mxu0 0
        %5492 = vmatpush1.bf16.msra.mxu0 0
        %5493 = vmatprep.subr.bf16.mxu0 0
        %5494 = vmatpush1.bf16.msra.mxu0 0
        %5495 = vmatprep.subr.bf16.mxu0 0
        %5496 = vmatpush1.bf16.msra.mxu0 0
        %5497 = vmatprep.subr.bf16.mxu0 0
        %5498 = vmatpush1.bf16.msra.mxu0 0
        %5499 = vmatprep.subr.bf16.mxu0 0
        %5500 = vmatpush1.bf16.msra.mxu0 0
        %5501 = vmatprep.mubr.bf16.mxu0 0
        %5502 = vmatmul.mubr.bf16.gmra.mrb[0].mxu0 %v5467
        %v5503 = vpop.f32.mrb[0].mxu0
        %v5504 = vadd.f32 %v5440, %v5503
        %v5505 = vpop.f32.mrb[0].mxu0
        %v5506 = vpop.f32.mrb[0].mxu0
        %v5507 = vpop.f32.mrb[0].mxu0
        %5508 = vdwg.mxu0
        %v5509 = vadd.f32 %v5353, %v5504
        %v5510 = vsel %vm976, %v5509, 0.0
        %5511 = vadd.xlane.f32.xlu0 %v5510
        %v5512 = vpop.xlane.xlu0 %5511
        %v5513 = vmul.f32 %v5512, %v1553
        %v5514 = vsub.f32 %v5509, %v5513
        %v5515 = vmul.f32 %v5514, %v5514
        %v5516 = vsel %vm976, %v5515, 0.0
        %5517 = vadd.xlane.f32.xlu0 %v5516
        %v5518 = vpop.xlane.xlu0 %5517
        %v5519 = vmul.f32 %v5518, %v1553
        %v5520 = vadd.f32 %v5519, 1e-05
        %v5521 = vrsqrt.pop %v5520
        %v5522 = vmul.f32 %v5514, %v5521
        %v5523 = vlaneseq
        %v5524 = vshrl.u32 %v5523, 7
        %v5525 = vsub.s32 4, %v5524
        %v5526 = vrot.slane %v4050, %v5525
        %v5527 = vmul.f32 %v5522, %v5526
        %v5528 = vlaneseq
        %v5529 = vshrl.u32 %v5528, 7
        %v5530 = vsub.s32 5, %v5529
        %v5531 = vrot.slane %v4050, %v5530
        %v5532 = vadd.f32 %v5527, %v5531
        %v5533 = vld [vmem:[%s55] sm:$0x3]
        %v5534 = vsel %vm976, %v5532, 0.0
        %5535 = vadd.xlane.f32.xlu0 %v5534
        %v5536 = vpop.xlane.xlu0 %5535
        %v5537 = vmul.f32 %v5536, %v1553
        %v5538 = vsub.f32 %v5532, %v5537
        %v5539 = vmul.f32 %v5538, %v5538
        %v5540 = vsel %vm976, %v5539, 0.0
        %5541 = vadd.xlane.f32.xlu0 %v5540
        %v5542 = vpop.xlane.xlu0 %5541
        %v5543 = vmul.f32 %v5542, %v1553
        %v5544 = vadd.f32 %v5543, 1e-05
        %v5545 = vrsqrt.pop %v5544
        %v5546 = vmul.f32 %v5538, %v5545
        %v5547 = vlaneseq
        %v5548 = vshrl.u32 %v5547, 7
        %v5549 = vsub.s32 0, %v5548
        %v5550 = vrot.slane %v5533, %v5549
        %v5551 = vmul.f32 %v5546, %v5550
        %v5552 = vlaneseq
        %v5553 = vshrl.u32 %v5552, 7
        %v5554 = vsub.s32 1, %v5553
        %v5555 = vrot.slane %v5533, %v5554
        %v5556 = vadd.f32 %v5551, %v5555
        %v5557 = vpack.c.bf16 %v5556, %v5556
        %v5558 = vld [vmem:[%s57] sm:$0xf]
        %v5559 = vld [vmem:[%s57 + $0x4] sm:$0xf]
        %v5560 = vld [vmem:[%s57 + $0x8] sm:$0xf]
        %v5561 = vld [vmem:[%s57 + $0xc] sm:$0xf]
        %v5562 = vld [vmem:[%s59] sm:$0x1]
        %v5564 = vlaneseq
        %v5565 = vshrl.u32 %v5564, 7
        %v5566 = vsub.s32 0, %v5565
        %v5567 = vrot.slane %v5562, %v5566
        %v5573 = vunpack.c.l.b16 %v5558
        %v5574 = vunpack.c.l.b16 %v5559
        %v5575 = vunpack.c.l.b16 %v5560
        %v5576 = vunpack.c.l.b16 %v5561
        %v5577 = vpack.c.b16 %v5574, %v5573
        %v5578 = vpack.c.b16 %v5576, %v5575
        %v5582 = vsel %vm976, %v5557, 0
        %5584 = vmatprep.subr.bf16.mxu0 0
        %5585 = vmatpush1.bf16.msra.mxu0 %v5577
        %5586 = vmatprep.subr.bf16.mxu0 0
        %5587 = vmatpush1.bf16.msra.mxu0 %v5578
        %5588 = vmatprep.subr.bf16.mxu0 0
        %5589 = vmatpush1.bf16.msra.mxu0 0
        %5590 = vmatprep.subr.bf16.mxu0 0
        %5591 = vmatpush1.bf16.msra.mxu0 0
        %5592 = vmatprep.subr.bf16.mxu0 0
        %5593 = vmatpush1.bf16.msra.mxu0 0
        %5594 = vmatprep.subr.bf16.mxu0 0
        %5595 = vmatpush1.bf16.msra.mxu0 0
        %5596 = vmatprep.subr.bf16.mxu0 0
        %5597 = vmatpush1.bf16.msra.mxu0 0
        %5598 = vmatprep.subr.bf16.mxu0 0
        %5599 = vmatpush1.bf16.msra.mxu0 0
        %5600 = vmatprep.subr.bf16.mxu0 0
        %5601 = vmatpush1.bf16.msra.mxu0 0
        %5602 = vmatprep.subr.bf16.mxu0 0
        %5603 = vmatpush1.bf16.msra.mxu0 0
        %5604 = vmatprep.subr.bf16.mxu0 0
        %5605 = vmatpush1.bf16.msra.mxu0 0
        %5606 = vmatprep.subr.bf16.mxu0 0
        %5607 = vmatpush1.bf16.msra.mxu0 0
        %5608 = vmatprep.subr.bf16.mxu0 0
        %5609 = vmatpush1.bf16.msra.mxu0 0
        %5610 = vmatprep.subr.bf16.mxu0 0
        %5611 = vmatpush1.bf16.msra.mxu0 0
        %5612 = vmatprep.subr.bf16.mxu0 0
        %5613 = vmatpush1.bf16.msra.mxu0 0
        %5614 = vmatprep.subr.bf16.mxu0 0
        %5615 = vmatpush1.bf16.msra.mxu0 0
        %5616 = vmatprep.mubr.bf16.mxu0 0
        %5617 = vmatmul.mubr.bf16.gmra.mrb[0].mxu0 %v5582
        %v5618 = vpop.f32.mrb[0].mxu0
        %v5619 = vadd.f32 %v5567, %v5618
        %v5620 = vpop.f32.mrb[0].mxu0
        %v5621 = vpop.f32.mrb[0].mxu0
        %v5622 = vpop.f32.mrb[0].mxu0
        %5623 = vdwg.mxu0
        %5624 = vst [vmem:[%s934] sm:$0xff] %v5619
        %s5625 = sand.u32 %s723, 1
        %s5626 = scalar_lea.sflag [#allocation3], %s5625
        %s5627 = sand.u32 %s723, 1
        %s5628 = smul.addr %s5627, 8
        %s5629 = scalar_lea.vmem [#allocation2], %s5628
        // Predicated region
        $region141: #{transformer_model_forward.1} parent=139 // pred_check
          %p5630 = pneg %p733
        $region142: #{transformer_model_forward.1} parent=139 // pred_check_branch
          %5632 = sbr.rel (%p5630) target = $region144
        $region143: #{transformer_model_forward.1} parent=139 // pred_region
          %s5634 = ssub.s32 128, 128
          %5635 = vsyncadd %s5626, %s5634
          %s5636 = smul.addr %s75, 128
          %s5637 = scalar_lea.hbm %s61, %s5636
          %s5639 = sshll.u32 %s5629, 4
          %s5640 = int_to_ptr.vmem [resolvable:$true] %s5639
          %5642 = dma.vmem_to_hbm [thread:$0]  %s5640, 128, %s5637, %s5626
        $region144: #{transformer_model_forward.1} parent=139 // pred_fallthru
          _
      $region140: #{transformer_model_forward.1} parent=5 // pred_fallthru
        _
      %p5643 = scmp.le.s32.totalorder 2, %s70
      // Predicated region
      $region145: #{transformer_model_forward.1} parent=5 // pred_check
        %p5644 = pneg %p5643
      $region146: #{transformer_model_forward.1} parent=5 // pred_check_branch
        %5646 = sbr.rel (%p5644) target = $region148
      $region147: #{transformer_model_forward.1} parent=5 // pred_region
        %s5647 = ssub.s32 %s70, 2
        // Predicated region
        $region149: #{transformer_model_forward.1} parent=147 // pred_check
          %p5648 = pneg %p739
        $region150: #{transformer_model_forward.1} parent=147 // pred_check_branch
          %5650 = sbr.rel (%p5648) target = $region152
        $region151: #{transformer_model_forward.1} parent=147 // pred_region
          %s5651 = sand.u32 %s724, 1
          %s5652 = scalar_lea.sflag [#allocation3], %s5651
          %s5653 = sand.u32 %s724, 1
          %s5654 = smul.addr %s5653, 8
          %s5655 = scalar_lea.vmem [#allocation2], %s5654
          %5656 = dma.done %s5652, 128
        $region152: #{transformer_model_forward.1} parent=147 // pred_fallthru
          _
      $region148: #{transformer_model_forward.1} parent=5 // pred_fallthru
        _
    $region6: #{transformer_model_forward.1} parent=1 // loop_footer
      %s74 = sadd.s32 1, %s70
    $region7: #{transformer_model_forward.1} parent=1 // loop_footer_branch
      %69 = sbr.rel target = $region3
    $region8: #{transformer_model_forward.1} parent=1 // loop_exit
      _
    %5657 = vsyncpa [#allocation3], 1
    %s5658 = scalar_lea.sflag [#allocation3], 1
    %5659 = vsyncpa %s5658, 1

</llo_original>
